<compile_context>
chip_gen: v5e
topology: v5e:2x2
jax: 0.10.0
libtpu: 0.0.40
codegen_flags: <defaults>
</compile_context>

<pallas_src>
import jax
import jax.numpy as jnp
from jax.experimental import pallas as pl
from jax.experimental.pallas import tpu as pltpu

K = 7          # conv kernel size
PAD = 3        # "same" padding for 7x7
CIN_COL = 8    # input channels padded 3 -> 8
C1P = 16       # conv1 out channels padded 13 -> 16 (conv2 input channel width)
C2P = 32       # conv2 out channels padded 26 -> 32
NOUT = 128     # lane-dense logits width (10 -> 128)


# ---------------------------------------------------------------------------
# Fused forward kernel: B images per grid step, everything stays in VMEM.
# ---------------------------------------------------------------------------
def fused_cnn_kernel(xp_ref, t1_ref, b1_ref, t2_ref, b2_ref, wfc_ref, bfc_ref,
                     o_ref, xpad2_ref, acc1_ref, acc2_ref):
    # xp_ref  : (B, Hp, Wp*CIN_COL)  bf16  zero-padded input, rows = (w, c)
    # t1_ref  : (K, Wp*CIN_COL, W*C1P) bf16  banded conv1 weights
    # t2_ref  : (K, Wp*C1P,    W*C2P) bf16  banded conv2 weights
    # b*_ref  : (1, W*C1P)/(1, W*C2P) f32   biases tiled over w (pads zero)
    # wfc_ref : (W*C2P, NOUT) f32  fc weights tiled over w, scaled by 1/(H*W)
    # bfc_ref : (1, NOUT) f32
    # o_ref   : (1, B, NOUT) f32 lane-dense logits
    # xpad2   : (B, Hp, Wp*C1P) bf16 scratch (padded conv2 input)
    # acc1    : (B*H, W*C1P) f32 scratch     acc2: (B*H, W*C2P) f32 scratch
    B, Hp, WC1 = xp_ref.shape
    KK = t1_ref.shape[0]
    NO1 = t1_ref.shape[2]
    WC2 = t2_ref.shape[1]
    NO2 = t2_ref.shape[2]
    Wp = WC1 // CIN_COL
    H = Hp - 2 * PAD
    W = Wp - 2 * PAD
    c1p = NO1 // W

    # ----------------- conv1: 7 banded matmuls, f32 accumulation -----------
    for kh in range(KK):
        lhs = xp_ref[:, kh:kh + H, :].reshape(B * H, WC1)       # bf16
        part = jnp.dot(lhs, t1_ref[kh], preferred_element_type=jnp.float32)
        if kh == 0:
            acc1_ref[...] = part
        else:
            acc1_ref[...] += part
    act1 = jnp.maximum(acc1_ref[...] + b1_ref[...], 0.0)        # (B*H, W*C1P)

    # --------- padded conv2 input, lane-major rows (w, c), bf16 ------------
    # Padded channels of act1 (c >= 13) are exactly zero because the matching
    # T1 columns and b1 lanes are zero and ReLU(0) == 0.
    xpad2_ref[...] = jnp.zeros(xpad2_ref.shape, xpad2_ref.dtype)
    xpad2_ref[:, PAD:PAD + H, PAD * c1p:(PAD + W) * c1p] = (
        act1.astype(xpad2_ref.dtype).reshape(B, H, W * c1p))

    # ----------------- conv2 -----------------------------------------------
    for kh in range(KK):
        lhs = xpad2_ref[:, kh:kh + H, :].reshape(B * H, WC2)    # bf16
        part = jnp.dot(lhs, t2_ref[kh], preferred_element_type=jnp.float32)
        if kh == 0:
            acc2_ref[...] = part
        else:
            acc2_ref[...] += part
    act2 = jnp.maximum(acc2_ref[...] + b2_ref[...], 0.0)        # (B*H, W*C2P)

    # ------------- global average pool + fc --------------------------------
    # Pool over h = in-kernel row sum; pool over w and the 1/(H*W) scaling
    # are folded into wfc_ref (tiled over w) in the wrapper.
    s = jnp.sum(act2.reshape(B, H, NO2), axis=1)                # (B, NO2) f32
    o_ref[0] = (jnp.dot(s, wfc_ref[...],
                        preferred_element_type=jnp.float32) + bfc_ref[...])


# ---------------------------------------------------------------------------
# Wrapper: weight layout (block-Toeplitz slabs) + the single pallas_call.
# ---------------------------------------------------------------------------
def _toeplitz(w, cw, coutp, w_out, wp):
    """(K, K, cin, cout) conv weights -> (K, wp*cw, w_out*coutp) banded slabs.

    t[kh, (w+kw)*cw + c, w*coutp + co] = w[kh, kw, c, co]; everything else 0.
    """
    k, _, cin, cout = w.shape
    wpad = jnp.pad(w, ((0, 0), (0, 0), (0, cw - cin), (0, coutp - cout)))
    eye = jnp.eye(w_out, dtype=w.dtype)
    t = jnp.zeros((k, wp, cw, w_out, coutp), w.dtype)
    for kw in range(k):
        contrib = eye[:, None, :, None] * wpad[:, kw][:, None, :, None, :]
        t = t.at[:, kw:kw + w_out].add(contrib)
    return t.reshape(k, wp * cw, w_out * coutp)


@jax.jit
def cnn_kernel7x7_forward(x_nchw, w1, b1, w2, b2, wfc, bfc):
    N, Cin, H, W = x_nchw.shape
    Hp, Wp = H + 2 * PAD, W + 2 * PAD
    WC1, WC2 = Wp * CIN_COL, Wp * C1P
    NO1, NO2 = W * C1P, W * C2P

    # Images per grid step: enough rows (M = B*H) to feed the MXU, small
    # enough VMEM, and >= 2 "parallel" grid steps (v7x megacore) when N >= 2.
    if N >= 16:
        B = 8
    elif N >= 2:
        B = (N + 1) // 2
    else:
        B = 1
    G = -(-N // B)
    Nb = G * B

    # Input: NCHW -> NHWC, zero-pad batch/spatial/channels, flatten (w,c)
    # onto lanes, cast to bf16.  (Done wrapper-side: the kernel never sees a
    # minor dim of 3 and needs no conv1 padding pass.)
    x = jnp.transpose(x_nchw, (0, 2, 3, 1))
    x = jnp.pad(x, ((0, Nb - N), (PAD, PAD), (PAD, PAD), (0, CIN_COL - Cin)))
    xp = x.reshape(Nb, Hp, WC1).astype(jnp.bfloat16)

    # Banded (Toeplitz-in-kw) weight slabs, bf16; biases tiled over w, f32.
    # All pad columns/lanes are exactly zero (required for correctness).
    t1 = _toeplitz(w1, CIN_COL, C1P, W, Wp).astype(jnp.bfloat16)   # (7,176,256)
    t2 = _toeplitz(w2, C1P, C2P, W, Wp).astype(jnp.bfloat16)       # (7,352,512)
    b1row = jnp.tile(jnp.pad(b1, (0, C1P - b1.shape[0])), W).reshape(1, NO1)
    b2row = jnp.tile(jnp.pad(b2, (0, C2P - b2.shape[0])), W).reshape(1, NO2)
    # fc folded with the average pool over w (and the 1/(H*W) scale).
    wfce = jnp.tile(
        jnp.pad(wfc, ((0, C2P - wfc.shape[0]), (0, NOUT - wfc.shape[1]))),
        (W, 1)) / float(H * W)                                     # (512, 128)
    bfcr = jnp.pad(bfc, (0, NOUT - bfc.shape[0])).reshape(1, NOUT)

    out = pl.pallas_call(
        fused_cnn_kernel,
        out_shape=jax.ShapeDtypeStruct((G, B, NOUT), jnp.float32),
        grid_spec=pltpu.PrefetchScalarGridSpec(
            num_scalar_prefetch=0,
            grid=(G,),
            in_specs=[
                pl.BlockSpec((B, Hp, WC1), lambda n: (n, 0, 0)),
                pl.BlockSpec((K, WC1, NO1), lambda n: (0, 0, 0)),
                pl.BlockSpec((1, NO1), lambda n: (0, 0)),
                pl.BlockSpec((K, WC2, NO2), lambda n: (0, 0, 0)),
                pl.BlockSpec((1, NO2), lambda n: (0, 0)),
                pl.BlockSpec((NO2, NOUT), lambda n: (0, 0)),
                pl.BlockSpec((1, NOUT), lambda n: (0, 0)),
            ],
            out_specs=pl.BlockSpec((1, B, NOUT), lambda n: (n, 0, 0)),
            scratch_shapes=[
                pltpu.VMEM((B, Hp, WC2), jnp.bfloat16),   # padded conv2 input
                pltpu.VMEM((B * H, NO1), jnp.float32),    # conv1 accumulator
                pltpu.VMEM((B * H, NO2), jnp.float32),    # conv2 accumulator
            ]),
        compiler_params=pltpu.CompilerParams(
            dimension_semantics=("parallel",)),
    )(xp, t1, b1row, t2, b2row, wfce, bfcr)

    return out.reshape(Nb, NOUT)[:N, :wfc.shape[1]]


# ---------------------------------------------------------------------------
# Pure-JAX reference for a correctness sanity check.
# ---------------------------------------------------------------------------
def reference_forward(x_nchw, w1, b1, w2, b2, wfc, bfc):
    x = jnp.transpose(x_nchw, (0, 2, 3, 1))
    dn = ("NHWC", "HWIO", "NHWC")
    x = jax.lax.conv_general_dilated(x, w1, (1, 1), [(PAD, PAD), (PAD, PAD)],
                                     dimension_numbers=dn) + b1
    x = jnp.maximum(x, 0.0)
    x = jax.lax.conv_general_dilated(x, w2, (1, 1), [(PAD, PAD), (PAD, PAD)],
                                     dimension_numbers=dn) + b2
    x = jnp.maximum(x, 0.0)
    pooled = jnp.mean(x, axis=(1, 2))
    return pooled @ wfc + bfc


if __name__ == "__main__":
    key = jax.random.PRNGKey(0)
    k1, k2, k3, k4, k5, k6, k7 = jax.random.split(key, 7)

    # Small, module-consistent shapes: batch=2, 3 input channels, 16x16.
    N, Cin, H, W = 2, 3, 16, 16
    x_nchw = jax.random.normal(k1, (N, Cin, H, W), jnp.float32)

    # Parameters (shapes from the module's __init__):
    #   conv1: 3 -> 13, 7x7    conv2: 13 -> 26, 7x7    fc: 26 -> 10
    w1 = jax.random.normal(k2, (K, K, 3, 13), jnp.float32) * 0.08
    b1 = jax.random.normal(k3, (13,), jnp.float32) * 0.05
    w2 = jax.random.normal(k4, (K, K, 13, 26), jnp.float32) * 0.04
    b2 = jax.random.normal(k5, (26,), jnp.float32) * 0.05
    wfc = jax.random.normal(k6, (26, 10), jnp.float32) * 0.1
    bfc = jax.random.normal(k7, (10,), jnp.float32) * 0.05

    out = cnn_kernel7x7_forward(x_nchw, w1, b1, w2, b2, wfc, bfc)
    out = jax.block_until_ready(out)
    assert out.shape == (N, 10), out.shape

    ref = reference_forward(x_nchw, w1, b1, w2, b2, wfc, bfc)
    # bf16 matmul inputs with f32 accumulation -> loosened tolerance.
    assert jnp.allclose(out, ref, rtol=3e-2, atol=3e-2), \
        float(jnp.max(jnp.abs(out - ref)))

    print("KERNEL_OK")
</pallas_src>

<mosaic_0001>
module attributes {stable_mosaic.version = 11 : i64} {
  func.func @fused_cnn_kernel(%arg0: i32, %arg1: memref<1x22x176xbf16, #tpu.memory_space<vmem>>, %arg2: memref<7x176x256xbf16, #tpu.memory_space<vmem>>, %arg3: memref<1x256xf32, #tpu.memory_space<vmem>>, %arg4: memref<7x352x512xbf16, #tpu.memory_space<vmem>>, %arg5: memref<1x512xf32, #tpu.memory_space<vmem>>, %arg6: memref<512x128xf32, #tpu.memory_space<vmem>>, %arg7: memref<1x128xf32, #tpu.memory_space<vmem>>, %arg8: memref<1x1x128xf32, #tpu.memory_space<vmem>>, %arg9: memref<1x22x352xbf16, #tpu.memory_space<vmem>>, %arg10: memref<16x256xf32, #tpu.memory_space<vmem>>, %arg11: memref<16x512xf32, #tpu.memory_space<vmem>>) attributes {dimension_semantics = [#tpu.dimension_semantics<parallel>], iteration_bounds = array<i64: 2>, scalar_prefetch = 0 : i64, scratch_operands = 3 : i64, tpu.core_type = #tpu.core_type<tc>, window_params = [{transform_indices = @transform_0, window_bounds = array<i64: 1, 22, 176>}, {pipeline_mode = #tpu.pipeline_mode<synchronous>, transform_indices = @transform_1, window_bounds = array<i64: 7, 176, 256>}, {pipeline_mode = #tpu.pipeline_mode<synchronous>, transform_indices = @transform_2, window_bounds = array<i64: 1, 256>}, {pipeline_mode = #tpu.pipeline_mode<synchronous>, transform_indices = @transform_3, window_bounds = array<i64: 7, 352, 512>}, {pipeline_mode = #tpu.pipeline_mode<synchronous>, transform_indices = @transform_4, window_bounds = array<i64: 1, 512>}, {pipeline_mode = #tpu.pipeline_mode<synchronous>, transform_indices = @transform_5, window_bounds = array<i64: 512, 128>}, {pipeline_mode = #tpu.pipeline_mode<synchronous>, transform_indices = @transform_6, window_bounds = array<i64: 1, 128>}, {transform_indices = @transform_7, window_bounds = array<i64: 1, 1, 128>}]} {
    %c0 = arith.constant 0 : index
    %c0_0 = arith.constant 0 : index
    %c0_1 = arith.constant 0 : index
    %0 = vector.load %arg1[%c0, %c0_0, %c0_1] : memref<1x22x176xbf16, #tpu.memory_space<vmem>>, vector<1x16x176xbf16>
    %1 = vector.shape_cast %0 : vector<1x16x176xbf16> to vector<16x176xbf16>
    %c0_2 = arith.constant 0 : index
    %c0_3 = arith.constant 0 : index
    %c0_4 = arith.constant 0 : index
    %2 = vector.load %arg2[%c0_2, %c0_3, %c0_4] : memref<7x176x256xbf16, #tpu.memory_space<vmem>>, vector<1x176x256xbf16>
    %3 = vector.shape_cast %2 : vector<1x176x256xbf16> to vector<176x256xbf16>
    %cst = arith.constant dense<0.000000e+00> : vector<16x256xf32>
    %4 = tpu.matmul %1, %3, %cst {dimension_numbers = #tpu.dot_dimension_numbers<[1], [0], [0], [1], [0, 0, 1, 1], [], []>} : vector<16x176xbf16>, vector<176x256xbf16>, vector<16x256xf32> -> vector<16x256xf32>
    %c0_5 = arith.constant 0 : index
    %c0_6 = arith.constant 0 : index
    %5 = vector.load %arg10[%c0_5, %c0_6] : memref<16x256xf32, #tpu.memory_space<vmem>>, vector<16x256xf32>
    tpu.vector_store %arg10[%c0_5, %c0_6], %4 {strides = array<i32>} : memref<16x256xf32, #tpu.memory_space<vmem>>, vector<16x256xf32>,
    %c0_7 = arith.constant 0 : index
    %c1 = arith.constant 1 : index
    %c0_8 = arith.constant 0 : index
    %6 = vector.load %arg1[%c0_7, %c1, %c0_8] : memref<1x22x176xbf16, #tpu.memory_space<vmem>>, vector<1x16x176xbf16>
    %7 = vector.shape_cast %6 : vector<1x16x176xbf16> to vector<16x176xbf16>
    %c1_9 = arith.constant 1 : index
    %c0_10 = arith.constant 0 : index
    %c0_11 = arith.constant 0 : index
    %8 = vector.load %arg2[%c1_9, %c0_10, %c0_11] : memref<7x176x256xbf16, #tpu.memory_space<vmem>>, vector<1x176x256xbf16>
    %9 = vector.shape_cast %8 : vector<1x176x256xbf16> to vector<176x256xbf16>
    %cst_12 = arith.constant dense<0.000000e+00> : vector<16x256xf32>
    %10 = tpu.matmul %7, %9, %cst_12 {dimension_numbers = #tpu.dot_dimension_numbers<[1], [0], [0], [1], [0, 0, 1, 1], [], []>} : vector<16x176xbf16>, vector<176x256xbf16>, vector<16x256xf32> -> vector<16x256xf32>
    %c0_13 = arith.constant 0 : index
    %c0_14 = arith.constant 0 : index
    %11 = vector.load %arg10[%c0_13, %c0_14] : memref<16x256xf32, #tpu.memory_space<vmem>>, vector<16x256xf32>
    %12 = arith.addf %11, %10 : vector<16x256xf32>
    %c0_15 = arith.constant 0 : index
    %c0_16 = arith.constant 0 : index
    %13 = vector.load %arg10[%c0_15, %c0_16] : memref<16x256xf32, #tpu.memory_space<vmem>>, vector<16x256xf32>
    tpu.vector_store %arg10[%c0_15, %c0_16], %12 {strides = array<i32>} : memref<16x256xf32, #tpu.memory_space<vmem>>, vector<16x256xf32>,
    %c0_17 = arith.constant 0 : index
    %c2 = arith.constant 2 : index
    %c0_18 = arith.constant 0 : index
    %14 = vector.load %arg1[%c0_17, %c2, %c0_18] : memref<1x22x176xbf16, #tpu.memory_space<vmem>>, vector<1x16x176xbf16>
    %15 = vector.shape_cast %14 : vector<1x16x176xbf16> to vector<16x176xbf16>
    %c2_19 = arith.constant 2 : index
    %c0_20 = arith.constant 0 : index
    %c0_21 = arith.constant 0 : index
    %16 = vector.load %arg2[%c2_19, %c0_20, %c0_21] : memref<7x176x256xbf16, #tpu.memory_space<vmem>>, vector<1x176x256xbf16>
    %17 = vector.shape_cast %16 : vector<1x176x256xbf16> to vector<176x256xbf16>
    %cst_22 = arith.constant dense<0.000000e+00> : vector<16x256xf32>
    %18 = tpu.matmul %15, %17, %cst_22 {dimension_numbers = #tpu.dot_dimension_numbers<[1], [0], [0], [1], [0, 0, 1, 1], [], []>} : vector<16x176xbf16>, vector<176x256xbf16>, vector<16x256xf32> -> vector<16x256xf32>
    %c0_23 = arith.constant 0 : index
    %c0_24 = arith.constant 0 : index
    %19 = vector.load %arg10[%c0_23, %c0_24] : memref<16x256xf32, #tpu.memory_space<vmem>>, vector<16x256xf32>
    %20 = arith.addf %19, %18 : vector<16x256xf32>
    %c0_25 = arith.constant 0 : index
    %c0_26 = arith.constant 0 : index
    %21 = vector.load %arg10[%c0_25, %c0_26] : memref<16x256xf32, #tpu.memory_space<vmem>>, vector<16x256xf32>
    tpu.vector_store %arg10[%c0_25, %c0_26], %20 {strides = array<i32>} : memref<16x256xf32, #tpu.memory_space<vmem>>, vector<16x256xf32>,
    %c0_27 = arith.constant 0 : index
    %c3 = arith.constant 3 : index
    %c0_28 = arith.constant 0 : index
    %22 = vector.load %arg1[%c0_27, %c3, %c0_28] : memref<1x22x176xbf16, #tpu.memory_space<vmem>>, vector<1x16x176xbf16>
    %23 = vector.shape_cast %22 : vector<1x16x176xbf16> to vector<16x176xbf16>
    %c3_29 = arith.constant 3 : index
    %c0_30 = arith.constant 0 : index
    %c0_31 = arith.constant 0 : index
    %24 = vector.load %arg2[%c3_29, %c0_30, %c0_31] : memref<7x176x256xbf16, #tpu.memory_space<vmem>>, vector<1x176x256xbf16>
    %25 = vector.shape_cast %24 : vector<1x176x256xbf16> to vector<176x256xbf16>
    %cst_32 = arith.constant dense<0.000000e+00> : vector<16x256xf32>
    %26 = tpu.matmul %23, %25, %cst_32 {dimension_numbers = #tpu.dot_dimension_numbers<[1], [0], [0], [1], [0, 0, 1, 1], [], []>} : vector<16x176xbf16>, vector<176x256xbf16>, vector<16x256xf32> -> vector<16x256xf32>
    %c0_33 = arith.constant 0 : index
    %c0_34 = arith.constant 0 : index
    %27 = vector.load %arg10[%c0_33, %c0_34] : memref<16x256xf32, #tpu.memory_space<vmem>>, vector<16x256xf32>
    %28 = arith.addf %27, %26 : vector<16x256xf32>
    %c0_35 = arith.constant 0 : index
    %c0_36 = arith.constant 0 : index
    %29 = vector.load %arg10[%c0_35, %c0_36] : memref<16x256xf32, #tpu.memory_space<vmem>>, vector<16x256xf32>
    tpu.vector_store %arg10[%c0_35, %c0_36], %28 {strides = array<i32>} : memref<16x256xf32, #tpu.memory_space<vmem>>, vector<16x256xf32>,
    %c0_37 = arith.constant 0 : index
    %c4 = arith.constant 4 : index
    %c0_38 = arith.constant 0 : index
    %30 = vector.load %arg1[%c0_37, %c4, %c0_38] : memref<1x22x176xbf16, #tpu.memory_space<vmem>>, vector<1x16x176xbf16>
    %31 = vector.shape_cast %30 : vector<1x16x176xbf16> to vector<16x176xbf16>
    %c4_39 = arith.constant 4 : index
    %c0_40 = arith.constant 0 : index
    %c0_41 = arith.constant 0 : index
    %32 = vector.load %arg2[%c4_39, %c0_40, %c0_41] : memref<7x176x256xbf16, #tpu.memory_space<vmem>>, vector<1x176x256xbf16>
    %33 = vector.shape_cast %32 : vector<1x176x256xbf16> to vector<176x256xbf16>
    %cst_42 = arith.constant dense<0.000000e+00> : vector<16x256xf32>
    %34 = tpu.matmul %31, %33, %cst_42 {dimension_numbers = #tpu.dot_dimension_numbers<[1], [0], [0], [1], [0, 0, 1, 1], [], []>} : vector<16x176xbf16>, vector<176x256xbf16>, vector<16x256xf32> -> vector<16x256xf32>
    %c0_43 = arith.constant 0 : index
    %c0_44 = arith.constant 0 : index
    %35 = vector.load %arg10[%c0_43, %c0_44] : memref<16x256xf32, #tpu.memory_space<vmem>>, vector<16x256xf32>
    %36 = arith.addf %35, %34 : vector<16x256xf32>
    %c0_45 = arith.constant 0 : index
    %c0_46 = arith.constant 0 : index
    %37 = vector.load %arg10[%c0_45, %c0_46] : memref<16x256xf32, #tpu.memory_space<vmem>>, vector<16x256xf32>
    tpu.vector_store %arg10[%c0_45, %c0_46], %36 {strides = array<i32>} : memref<16x256xf32, #tpu.memory_space<vmem>>, vector<16x256xf32>,
    %c0_47 = arith.constant 0 : index
    %c5 = arith.constant 5 : index
    %c0_48 = arith.constant 0 : index
    %38 = vector.load %arg1[%c0_47, %c5, %c0_48] : memref<1x22x176xbf16, #tpu.memory_space<vmem>>, vector<1x16x176xbf16>
    %39 = vector.shape_cast %38 : vector<1x16x176xbf16> to vector<16x176xbf16>
    %c5_49 = arith.constant 5 : index
    %c0_50 = arith.constant 0 : index
    %c0_51 = arith.constant 0 : index
    %40 = vector.load %arg2[%c5_49, %c0_50, %c0_51] : memref<7x176x256xbf16, #tpu.memory_space<vmem>>, vector<1x176x256xbf16>
    %41 = vector.shape_cast %40 : vector<1x176x256xbf16> to vector<176x256xbf16>
    %cst_52 = arith.constant dense<0.000000e+00> : vector<16x256xf32>
    %42 = tpu.matmul %39, %41, %cst_52 {dimension_numbers = #tpu.dot_dimension_numbers<[1], [0], [0], [1], [0, 0, 1, 1], [], []>} : vector<16x176xbf16>, vector<176x256xbf16>, vector<16x256xf32> -> vector<16x256xf32>
    %c0_53 = arith.constant 0 : index
    %c0_54 = arith.constant 0 : index
    %43 = vector.load %arg10[%c0_53, %c0_54] : memref<16x256xf32, #tpu.memory_space<vmem>>, vector<16x256xf32>
    %44 = arith.addf %43, %42 : vector<16x256xf32>
    %c0_55 = arith.constant 0 : index
    %c0_56 = arith.constant 0 : index
    %45 = vector.load %arg10[%c0_55, %c0_56] : memref<16x256xf32, #tpu.memory_space<vmem>>, vector<16x256xf32>
    tpu.vector_store %arg10[%c0_55, %c0_56], %44 {strides = array<i32>} : memref<16x256xf32, #tpu.memory_space<vmem>>, vector<16x256xf32>,
    %c0_57 = arith.constant 0 : index
    %c6 = arith.constant 6 : index
    %c0_58 = arith.constant 0 : index
    %46 = vector.load %arg1[%c0_57, %c6, %c0_58] : memref<1x22x176xbf16, #tpu.memory_space<vmem>>, vector<1x16x176xbf16>
    %47 = vector.shape_cast %46 : vector<1x16x176xbf16> to vector<16x176xbf16>
    %c6_59 = arith.constant 6 : index
    %c0_60 = arith.constant 0 : index
    %c0_61 = arith.constant 0 : index
    %48 = vector.load %arg2[%c6_59, %c0_60, %c0_61] : memref<7x176x256xbf16, #tpu.memory_space<vmem>>, vector<1x176x256xbf16>
    %49 = vector.shape_cast %48 : vector<1x176x256xbf16> to vector<176x256xbf16>
    %cst_62 = arith.constant dense<0.000000e+00> : vector<16x256xf32>
    %50 = tpu.matmul %47, %49, %cst_62 {dimension_numbers = #tpu.dot_dimension_numbers<[1], [0], [0], [1], [0, 0, 1, 1], [], []>} : vector<16x176xbf16>, vector<176x256xbf16>, vector<16x256xf32> -> vector<16x256xf32>
    %c0_63 = arith.constant 0 : index
    %c0_64 = arith.constant 0 : index
    %51 = vector.load %arg10[%c0_63, %c0_64] : memref<16x256xf32, #tpu.memory_space<vmem>>, vector<16x256xf32>
    %52 = arith.addf %51, %50 : vector<16x256xf32>
    %c0_65 = arith.constant 0 : index
    %c0_66 = arith.constant 0 : index
    %53 = vector.load %arg10[%c0_65, %c0_66] : memref<16x256xf32, #tpu.memory_space<vmem>>, vector<16x256xf32>
    tpu.vector_store %arg10[%c0_65, %c0_66], %52 {strides = array<i32>} : memref<16x256xf32, #tpu.memory_space<vmem>>, vector<16x256xf32>,
    %c0_67 = arith.constant 0 : index
    %c0_68 = arith.constant 0 : index
    %54 = vector.load %arg10[%c0_67, %c0_68] : memref<16x256xf32, #tpu.memory_space<vmem>>, vector<16x256xf32>
    %c0_69 = arith.constant 0 : index
    %c0_70 = arith.constant 0 : index
    %55 = vector.load %arg3[%c0_69, %c0_70] : memref<1x256xf32, #tpu.memory_space<vmem>>, vector<1x256xf32>
    %56 = vector.broadcast %55 : vector<1x256xf32> to vector<16x256xf32>
    %57 = arith.addf %54, %56 : vector<16x256xf32>
    %cst_71 = arith.constant 0.000000e+00 : f32
    %58 = vector.broadcast %cst_71 : f32 to vector<16x256xf32>
    %59 = arith.maximumf %57, %58 : vector<16x256xf32>
    %cst_72 = arith.constant 0.000000e+00 : bf16
    %60 = vector.broadcast %cst_72 : bf16 to vector<1x22x352xbf16>
    %c0_73 = arith.constant 0 : index
    %c0_74 = arith.constant 0 : index
    %c0_75 = arith.constant 0 : index
    %61 = vector.load %arg9[%c0_73, %c0_74, %c0_75] : memref<1x22x352xbf16, #tpu.memory_space<vmem>>, vector<1x22x352xbf16>
    tpu.vector_store %arg9[%c0_73, %c0_74, %c0_75], %60 {strides = array<i32>} : memref<1x22x352xbf16, #tpu.memory_space<vmem>>, vector<1x22x352xbf16>,
    %62 = arith.truncf %59 : vector<16x256xf32> to vector<16x256xbf16>
    %63 = vector.shape_cast %62 : vector<16x256xbf16> to vector<1x16x256xbf16>
    %c0_76 = arith.constant 0 : index
    %c3_77 = arith.constant 3 : index
    %c48 = arith.constant 48 : index
    %64 = vector.load %arg9[%c0_76, %c3_77, %c48] : memref<1x22x352xbf16, #tpu.memory_space<vmem>>, vector<1x16x256xbf16>
    tpu.vector_store %arg9[%c0_76, %c3_77, %c48], %63 {strides = array<i32>} : memref<1x22x352xbf16, #tpu.memory_space<vmem>>, vector<1x16x256xbf16>,
    %c0_78 = arith.constant 0 : index
    %c0_79 = arith.constant 0 : index
    %c0_80 = arith.constant 0 : index
    %65 = vector.load %arg9[%c0_78, %c0_79, %c0_80] : memref<1x22x352xbf16, #tpu.memory_space<vmem>>, vector<1x16x352xbf16>
    %66 = vector.shape_cast %65 : vector<1x16x352xbf16> to vector<16x352xbf16>
    %c0_81 = arith.constant 0 : index
    %c0_82 = arith.constant 0 : index
    %c0_83 = arith.constant 0 : index
    %67 = vector.load %arg4[%c0_81, %c0_82, %c0_83] : memref<7x352x512xbf16, #tpu.memory_space<vmem>>, vector<1x352x512xbf16>
    %68 = vector.shape_cast %67 : vector<1x352x512xbf16> to vector<352x512xbf16>
    %cst_84 = arith.constant dense<0.000000e+00> : vector<16x512xf32>
    %69 = tpu.matmul %66, %68, %cst_84 {dimension_numbers = #tpu.dot_dimension_numbers<[1], [0], [0], [1], [0, 0, 1, 1], [], []>} : vector<16x352xbf16>, vector<352x512xbf16>, vector<16x512xf32> -> vector<16x512xf32>
    %c0_85 = arith.constant 0 : index
    %c0_86 = arith.constant 0 : index
    %70 = vector.load %arg11[%c0_85, %c0_86] : memref<16x512xf32, #tpu.memory_space<vmem>>, vector<16x512xf32>
    tpu.vector_store %arg11[%c0_85, %c0_86], %69 {strides = array<i32>} : memref<16x512xf32, #tpu.memory_space<vmem>>, vector<16x512xf32>,
    %c0_87 = arith.constant 0 : index
    %c1_88 = arith.constant 1 : index
    %c0_89 = arith.constant 0 : index
    %71 = vector.load %arg9[%c0_87, %c1_88, %c0_89] : memref<1x22x352xbf16, #tpu.memory_space<vmem>>, vector<1x16x352xbf16>
    %72 = vector.shape_cast %71 : vector<1x16x352xbf16> to vector<16x352xbf16>
    %c1_90 = arith.constant 1 : index
    %c0_91 = arith.constant 0 : index
    %c0_92 = arith.constant 0 : index
    %73 = vector.load %arg4[%c1_90, %c0_91, %c0_92] : memref<7x352x512xbf16, #tpu.memory_space<vmem>>, vector<1x352x512xbf16>
    %74 = vector.shape_cast %73 : vector<1x352x512xbf16> to vector<352x512xbf16>
    %cst_93 = arith.constant dense<0.000000e+00> : vector<16x512xf32>
    %75 = tpu.matmul %72, %74, %cst_93 {dimension_numbers = #tpu.dot_dimension_numbers<[1], [0], [0], [1], [0, 0, 1, 1], [], []>} : vector<16x352xbf16>, vector<352x512xbf16>, vector<16x512xf32> -> vector<16x512xf32>
    %c0_94 = arith.constant 0 : index
    %c0_95 = arith.constant 0 : index
    %76 = vector.load %arg11[%c0_94, %c0_95] : memref<16x512xf32, #tpu.memory_space<vmem>>, vector<16x512xf32>
    %77 = arith.addf %76, %75 : vector<16x512xf32>
    %c0_96 = arith.constant 0 : index
    %c0_97 = arith.constant 0 : index
    %78 = vector.load %arg11[%c0_96, %c0_97] : memref<16x512xf32, #tpu.memory_space<vmem>>, vector<16x512xf32>
    tpu.vector_store %arg11[%c0_96, %c0_97], %77 {strides = array<i32>} : memref<16x512xf32, #tpu.memory_space<vmem>>, vector<16x512xf32>,
    %c0_98 = arith.constant 0 : index
    %c2_99 = arith.constant 2 : index
    %c0_100 = arith.constant 0 : index
    %79 = vector.load %arg9[%c0_98, %c2_99, %c0_100] : memref<1x22x352xbf16, #tpu.memory_space<vmem>>, vector<1x16x352xbf16>
    %80 = vector.shape_cast %79 : vector<1x16x352xbf16> to vector<16x352xbf16>
    %c2_101 = arith.constant 2 : index
    %c0_102 = arith.constant 0 : index
    %c0_103 = arith.constant 0 : index
    %81 = vector.load %arg4[%c2_101, %c0_102, %c0_103] : memref<7x352x512xbf16, #tpu.memory_space<vmem>>, vector<1x352x512xbf16>
    %82 = vector.shape_cast %81 : vector<1x352x512xbf16> to vector<352x512xbf16>
    %cst_104 = arith.constant dense<0.000000e+00> : vector<16x512xf32>
    %83 = tpu.matmul %80, %82, %cst_104 {dimension_numbers = #tpu.dot_dimension_numbers<[1], [0], [0], [1], [0, 0, 1, 1], [], []>} : vector<16x352xbf16>, vector<352x512xbf16>, vector<16x512xf32> -> vector<16x512xf32>
    %c0_105 = arith.constant 0 : index
    %c0_106 = arith.constant 0 : index
    %84 = vector.load %arg11[%c0_105, %c0_106] : memref<16x512xf32, #tpu.memory_space<vmem>>, vector<16x512xf32>
    %85 = arith.addf %84, %83 : vector<16x512xf32>
    %c0_107 = arith.constant 0 : index
    %c0_108 = arith.constant 0 : index
    %86 = vector.load %arg11[%c0_107, %c0_108] : memref<16x512xf32, #tpu.memory_space<vmem>>, vector<16x512xf32>
    tpu.vector_store %arg11[%c0_107, %c0_108], %85 {strides = array<i32>} : memref<16x512xf32, #tpu.memory_space<vmem>>, vector<16x512xf32>,
    %c0_109 = arith.constant 0 : index
    %c3_110 = arith.constant 3 : index
    %c0_111 = arith.constant 0 : index
    %87 = vector.load %arg9[%c0_109, %c3_110, %c0_111] : memref<1x22x352xbf16, #tpu.memory_space<vmem>>, vector<1x16x352xbf16>
    %88 = vector.shape_cast %87 : vector<1x16x352xbf16> to vector<16x352xbf16>
    %c3_112 = arith.constant 3 : index
    %c0_113 = arith.constant 0 : index
    %c0_114 = arith.constant 0 : index
    %89 = vector.load %arg4[%c3_112, %c0_113, %c0_114] : memref<7x352x512xbf16, #tpu.memory_space<vmem>>, vector<1x352x512xbf16>
    %90 = vector.shape_cast %89 : vector<1x352x512xbf16> to vector<352x512xbf16>
    %cst_115 = arith.constant dense<0.000000e+00> : vector<16x512xf32>
    %91 = tpu.matmul %88, %90, %cst_115 {dimension_numbers = #tpu.dot_dimension_numbers<[1], [0], [0], [1], [0, 0, 1, 1], [], []>} : vector<16x352xbf16>, vector<352x512xbf16>, vector<16x512xf32> -> vector<16x512xf32>
    %c0_116 = arith.constant 0 : index
    %c0_117 = arith.constant 0 : index
    %92 = vector.load %arg11[%c0_116, %c0_117] : memref<16x512xf32, #tpu.memory_space<vmem>>, vector<16x512xf32>
    %93 = arith.addf %92, %91 : vector<16x512xf32>
    %c0_118 = arith.constant 0 : index
    %c0_119 = arith.constant 0 : index
    %94 = vector.load %arg11[%c0_118, %c0_119] : memref<16x512xf32, #tpu.memory_space<vmem>>, vector<16x512xf32>
    tpu.vector_store %arg11[%c0_118, %c0_119], %93 {strides = array<i32>} : memref<16x512xf32, #tpu.memory_space<vmem>>, vector<16x512xf32>,
    %c0_120 = arith.constant 0 : index
    %c4_121 = arith.constant 4 : index
    %c0_122 = arith.constant 0 : index
    %95 = vector.load %arg9[%c0_120, %c4_121, %c0_122] : memref<1x22x352xbf16, #tpu.memory_space<vmem>>, vector<1x16x352xbf16>
    %96 = vector.shape_cast %95 : vector<1x16x352xbf16> to vector<16x352xbf16>
    %c4_123 = arith.constant 4 : index
    %c0_124 = arith.constant 0 : index
    %c0_125 = arith.constant 0 : index
    %97 = vector.load %arg4[%c4_123, %c0_124, %c0_125] : memref<7x352x512xbf16, #tpu.memory_space<vmem>>, vector<1x352x512xbf16>
    %98 = vector.shape_cast %97 : vector<1x352x512xbf16> to vector<352x512xbf16>
    %cst_126 = arith.constant dense<0.000000e+00> : vector<16x512xf32>
    %99 = tpu.matmul %96, %98, %cst_126 {dimension_numbers = #tpu.dot_dimension_numbers<[1], [0], [0], [1], [0, 0, 1, 1], [], []>} : vector<16x352xbf16>, vector<352x512xbf16>, vector<16x512xf32> -> vector<16x512xf32>
    %c0_127 = arith.constant 0 : index
    %c0_128 = arith.constant 0 : index
    %100 = vector.load %arg11[%c0_127, %c0_128] : memref<16x512xf32, #tpu.memory_space<vmem>>, vector<16x512xf32>
    %101 = arith.addf %100, %99 : vector<16x512xf32>
    %c0_129 = arith.constant 0 : index
    %c0_130 = arith.constant 0 : index
    %102 = vector.load %arg11[%c0_129, %c0_130] : memref<16x512xf32, #tpu.memory_space<vmem>>, vector<16x512xf32>
    tpu.vector_store %arg11[%c0_129, %c0_130], %101 {strides = array<i32>} : memref<16x512xf32, #tpu.memory_space<vmem>>, vector<16x512xf32>,
    %c0_131 = arith.constant 0 : index
    %c5_132 = arith.constant 5 : index
    %c0_133 = arith.constant 0 : index
    %103 = vector.load %arg9[%c0_131, %c5_132, %c0_133] : memref<1x22x352xbf16, #tpu.memory_space<vmem>>, vector<1x16x352xbf16>
    %104 = vector.shape_cast %103 : vector<1x16x352xbf16> to vector<16x352xbf16>
    %c5_134 = arith.constant 5 : index
    %c0_135 = arith.constant 0 : index
    %c0_136 = arith.constant 0 : index
    %105 = vector.load %arg4[%c5_134, %c0_135, %c0_136] : memref<7x352x512xbf16, #tpu.memory_space<vmem>>, vector<1x352x512xbf16>
    %106 = vector.shape_cast %105 : vector<1x352x512xbf16> to vector<352x512xbf16>
    %cst_137 = arith.constant dense<0.000000e+00> : vector<16x512xf32>
    %107 = tpu.matmul %104, %106, %cst_137 {dimension_numbers = #tpu.dot_dimension_numbers<[1], [0], [0], [1], [0, 0, 1, 1], [], []>} : vector<16x352xbf16>, vector<352x512xbf16>, vector<16x512xf32> -> vector<16x512xf32>
    %c0_138 = arith.constant 0 : index
    %c0_139 = arith.constant 0 : index
    %108 = vector.load %arg11[%c0_138, %c0_139] : memref<16x512xf32, #tpu.memory_space<vmem>>, vector<16x512xf32>
    %109 = arith.addf %108, %107 : vector<16x512xf32>
    %c0_140 = arith.constant 0 : index
    %c0_141 = arith.constant 0 : index
    %110 = vector.load %arg11[%c0_140, %c0_141] : memref<16x512xf32, #tpu.memory_space<vmem>>, vector<16x512xf32>
    tpu.vector_store %arg11[%c0_140, %c0_141], %109 {strides = array<i32>} : memref<16x512xf32, #tpu.memory_space<vmem>>, vector<16x512xf32>,
    %c0_142 = arith.constant 0 : index
    %c6_143 = arith.constant 6 : index
    %c0_144 = arith.constant 0 : index
    %111 = vector.load %arg9[%c0_142, %c6_143, %c0_144] : memref<1x22x352xbf16, #tpu.memory_space<vmem>>, vector<1x16x352xbf16>
    %112 = vector.shape_cast %111 : vector<1x16x352xbf16> to vector<16x352xbf16>
    %c6_145 = arith.constant 6 : index
    %c0_146 = arith.constant 0 : index
    %c0_147 = arith.constant 0 : index
    %113 = vector.load %arg4[%c6_145, %c0_146, %c0_147] : memref<7x352x512xbf16, #tpu.memory_space<vmem>>, vector<1x352x512xbf16>
    %114 = vector.shape_cast %113 : vector<1x352x512xbf16> to vector<352x512xbf16>
    %cst_148 = arith.constant dense<0.000000e+00> : vector<16x512xf32>
    %115 = tpu.matmul %112, %114, %cst_148 {dimension_numbers = #tpu.dot_dimension_numbers<[1], [0], [0], [1], [0, 0, 1, 1], [], []>} : vector<16x352xbf16>, vector<352x512xbf16>, vector<16x512xf32> -> vector<16x512xf32>
    %c0_149 = arith.constant 0 : index
    %c0_150 = arith.constant 0 : index
    %116 = vector.load %arg11[%c0_149, %c0_150] : memref<16x512xf32, #tpu.memory_space<vmem>>, vector<16x512xf32>
    %117 = arith.addf %116, %115 : vector<16x512xf32>
    %c0_151 = arith.constant 0 : index
    %c0_152 = arith.constant 0 : index
    %118 = vector.load %arg11[%c0_151, %c0_152] : memref<16x512xf32, #tpu.memory_space<vmem>>, vector<16x512xf32>
    tpu.vector_store %arg11[%c0_151, %c0_152], %117 {strides = array<i32>} : memref<16x512xf32, #tpu.memory_space<vmem>>, vector<16x512xf32>,
    %c0_153 = arith.constant 0 : index
    %c0_154 = arith.constant 0 : index
    %119 = vector.load %arg11[%c0_153, %c0_154] : memref<16x512xf32, #tpu.memory_space<vmem>>, vector<16x512xf32>
    %c0_155 = arith.constant 0 : index
    %c0_156 = arith.constant 0 : index
    %120 = vector.load %arg5[%c0_155, %c0_156] : memref<1x512xf32, #tpu.memory_space<vmem>>, vector<1x512xf32>
    %121 = vector.broadcast %120 : vector<1x512xf32> to vector<16x512xf32>
    %122 = arith.addf %119, %121 : vector<16x512xf32>
    %cst_157 = arith.constant 0.000000e+00 : f32
    %123 = vector.broadcast %cst_157 : f32 to vector<16x512xf32>
    %124 = arith.maximumf %122, %123 : vector<16x512xf32>
    %125 = vector.shape_cast %124 : vector<16x512xf32> to vector<1x16x512xf32>
    %cst_158 = arith.constant dense<0.000000e+00> : vector<1x512xf32>
    %126 = vector.multi_reduction <add>, %125, %cst_158 [1] : vector<1x16x512xf32> to vector<1x512xf32>
    %c0_159 = arith.constant 0 : index
    %c0_160 = arith.constant 0 : index
    %127 = vector.load %arg6[%c0_159, %c0_160] : memref<512x128xf32, #tpu.memory_space<vmem>>, vector<512x128xf32>
    %cst_161 = arith.constant dense<0.000000e+00> : vector<1x128xf32>
    %128 = tpu.matmul %126, %127, %cst_161 {dimension_numbers = #tpu.dot_dimension_numbers<[1], [0], [0], [1], [0, 0, 1, 1], [], []>} : vector<1x512xf32>, vector<512x128xf32>, vector<1x128xf32> -> vector<1x128xf32>
    %c0_162 = arith.constant 0 : index
    %c0_163 = arith.constant 0 : index
    %129 = vector.load %arg7[%c0_162, %c0_163] : memref<1x128xf32, #tpu.memory_space<vmem>>, vector<1x128xf32>
    %130 = arith.addf %128, %129 : vector<1x128xf32>
    %c0_164 = arith.constant 0 : index
    %c0_165 = arith.constant 0 : index
    %c0_166 = arith.constant 0 : index
    %131 = vector.load %arg8[%c0_164, %c0_165, %c0_166] : memref<1x1x128xf32, #tpu.memory_space<vmem>>, vector<1x1x128xf32>
    %132 = vector.shape_cast %131 : vector<1x1x128xf32> to vector<1x128xf32>
    %133 = vector.shape_cast %130 : vector<1x128xf32> to vector<1x1x128xf32>
    tpu.vector_store %arg8[%c0_164, %c0_165, %c0_166], %133 {strides = array<i32>} : memref<1x1x128xf32, #tpu.memory_space<vmem>>, vector<1x1x128xf32>,
    return
  }
  func.func @transform_0(%arg0: i32) -> (i32, i32, i32) {
    %c0_i32 = arith.constant 0 : i32
    %c0_i32_0 = arith.constant 0 : i32
    %c0_i32_1 = arith.constant 0 : i32
    return %arg0, %c0_i32, %c0_i32_0 : i32, i32, i32
  }
  func.func @transform_1(%arg0: i32) -> (i32, i32, i32) {
    %c0_i32 = arith.constant 0 : i32
    %c0_i32_0 = arith.constant 0 : i32
    %c0_i32_1 = arith.constant 0 : i32
    %c0_i32_2 = arith.constant 0 : i32
    return %c0_i32, %c0_i32_0, %c0_i32_1 : i32, i32, i32
  }
  func.func @transform_2(%arg0: i32) -> (i32, i32) {
    %c0_i32 = arith.constant 0 : i32
    %c0_i32_0 = arith.constant 0 : i32
    %c0_i32_1 = arith.constant 0 : i32
    return %c0_i32, %c0_i32_0 : i32, i32
  }
  func.func @transform_3(%arg0: i32) -> (i32, i32, i32) {
    %c0_i32 = arith.constant 0 : i32
    %c0_i32_0 = arith.constant 0 : i32
    %c0_i32_1 = arith.constant 0 : i32
    %c0_i32_2 = arith.constant 0 : i32
    return %c0_i32, %c0_i32_0, %c0_i32_1 : i32, i32, i32
  }
  func.func @transform_4(%arg0: i32) -> (i32, i32) {
    %c0_i32 = arith.constant 0 : i32
    %c0_i32_0 = arith.constant 0 : i32
    %c0_i32_1 = arith.constant 0 : i32
    return %c0_i32, %c0_i32_0 : i32, i32
  }
  func.func @transform_5(%arg0: i32) -> (i32, i32) {
    %c0_i32 = arith.constant 0 : i32
    %c0_i32_0 = arith.constant 0 : i32
    %c0_i32_1 = arith.constant 0 : i32
    return %c0_i32, %c0_i32_0 : i32, i32
  }
  func.func @transform_6(%arg0: i32) -> (i32, i32) {
    %c0_i32 = arith.constant 0 : i32
    %c0_i32_0 = arith.constant 0 : i32
    %c0_i32_1 = arith.constant 0 : i32
    return %c0_i32, %c0_i32_0 : i32, i32
  }
  func.func @transform_7(%arg0: i32) -> (i32, i32, i32) {
    %c0_i32 = arith.constant 0 : i32
    %c0_i32_0 = arith.constant 0 : i32
    %c0_i32_1 = arith.constant 0 : i32
    return %arg0, %c0_i32, %c0_i32_0 : i32, i32, i32
  }
}

</mosaic_0001>

<llo_original>
// kernel: tile.23
$region0: #{tile.23}
  #allocation0 [shape = 's32[1]{0}', space=sflag, size = 0x4, scoped, tag = 'scoped memory for tile.23']
  %s0 = inlined_call_operand.vmem [shape: f32[32], index: 0, kind: input, shape index: {}]
  %s1 = inlined_call_operand.vmem [shape: f32[16,32], index: 1, kind: output, shape index: {}]
  // Predicated region
  $region2: #{tile.23} parent=0 // pred_check
    _
  $region3: #{tile.23} parent=0 // pred_check_branch
    %3 = sbr.rel (0) target = $region5
  $region4: #{tile.23} parent=0 // pred_region
    _
  $region5: #{tile.23} parent=0 // pred_fallthru
    _
  %v4 = vld [vmem:[%s0] ss:$0 sm:$0xff]
  %5 = vst [vmem:[%s1] sm:$0xff] %v4
  %s6 = scalar_lea.vmem %s1, 8
  %7 = vst [vmem:[%s6] sm:$0xff] %v4

// kernel: tile.24
$region0: #{tile.24}
  %s0 = inlined_call_operand.vmem [shape: f32[16,32], index: 0, kind: input, shape index: {}]
  %s1 = inlined_call_operand.vmem [shape: f32[1,512], index: 1, kind: output, shape index: {}]
  $region1: #{tile.24} parent=0
    #allocation0 [shape = 'u8[16384]{0}', space=vmem, size = 0x4000, scoped, tag = 'scoped mem for output reshape']
    %v2 = vld [vmem:[%s0] ss:$4 sm:$0xf]
    %vm3 = vcmask 261120
    %4 = vst.msk [vmem:[#allocation0] ss:$8 sm:$0xf] %vm3, %v2
    %s5 = scalar_lea.vmem %s0, 3
    %v6 = vld [vmem:[%s5] ss:$4 sm:$0xf]
    %7 = vrot.lane.b32.xlu0 %v6, 96
    %v8 = vpop.permute.xlu0 %7
    %vm9 = vcmask 1048320
    %10 = vst.msk [vmem:[#allocation0] ss:$8 sm:$0xf] %vm9, %v8
    %s11 = scalar_lea.vmem %s0, 2
    %v12 = vld [vmem:[%s11] ss:$4 sm:$0xf]
    %13 = vrot.lane.b32.xlu0 %v12, 64
    %v14 = vpop.permute.xlu0 %13
    %vm15 = vcmask 785920
    %16 = vst.msk [vmem:[#allocation0] ss:$8 sm:$0xf] %vm15, %v14
    %s17 = scalar_lea.vmem %s0, 1
    %v18 = vld [vmem:[%s17] ss:$4 sm:$0xf]
    %19 = vrot.lane.b32.xlu0 %v18, 32
    %v20 = vpop.permute.xlu0 %19
    %vm21 = vcmask 523520
    %22 = vst.msk [vmem:[#allocation0] ss:$8 sm:$0xf] %vm21, %v20
    %s24 = ssub.s32 2, 1
    %v25 = vld [vmem:[#allocation0] sm:%s24]
    %s27 = ssub.s32 2, 1
    %28 = vst [vmem:[%s1] sm:%s27] %v25
    %s29 = scalar_lea.vmem [#allocation0], 8
    %v30 = vld [vmem:[%s29] sm:%s24]
    %s32 = ssub.s32 2, 1
    %s33 = scalar_lea.vmem %s1, 1
    %34 = vst [vmem:[%s33] sm:%s32] %v30
    %s35 = scalar_lea.vmem [#allocation0], 16
    %v36 = vld [vmem:[%s35] sm:%s24]
    %s38 = ssub.s32 2, 1
    %s39 = scalar_lea.vmem %s1, 2
    %40 = vst [vmem:[%s39] sm:%s38] %v36
    %s41 = scalar_lea.vmem [#allocation0], 24
    %v42 = vld [vmem:[%s41] sm:%s24]
    %s44 = ssub.s32 2, 1
    %s45 = scalar_lea.vmem %s1, 3
    %46 = vst [vmem:[%s45] sm:%s44] %v42

// kernel: tile.18
$region0: #{tile.18}
  #allocation0 [shape = 's32[1]{0}', space=sflag, size = 0x4, scoped, tag = 'scoped memory for tile.18']
  %s0 = inlined_call_operand.vmem [shape: f32[16], index: 0, kind: input, shape index: {}]
  %s1 = inlined_call_operand.vmem [shape: f32[16,16], index: 1, kind: output, shape index: {}]
  // Predicated region
  $region2: #{tile.18} parent=0 // pred_check
    _
  $region3: #{tile.18} parent=0 // pred_check_branch
    %3 = sbr.rel (0) target = $region5
  $region4: #{tile.18} parent=0 // pred_region
    _
  $region5: #{tile.18} parent=0 // pred_fallthru
    _
  %v4 = vld [vmem:[%s0] ss:$0 sm:$0xff]
  %5 = vst [vmem:[%s1] sm:$0xff] %v4
  %s6 = scalar_lea.vmem %s1, 8
  %7 = vst [vmem:[%s6] sm:$0xff] %v4

// kernel: tile.19
$region0: #{tile.19}
  %s0 = inlined_call_operand.vmem [shape: f32[16,16], index: 0, kind: input, shape index: {}]
  %s1 = inlined_call_operand.vmem [shape: f32[1,256], index: 1, kind: output, shape index: {}]
  $region1: #{tile.19} parent=0
    #allocation0 [shape = 'u8[8192]{0}', space=vmem, size = 0x2000, scoped, tag = 'scoped mem for output reshape']
    %s2 = smov 3
    %v3 = vld [vmem:[%s0] ss:$8 sm:%s2]
    %vm4 = vcmask 130048
    %5 = vst.msk [vmem:[#allocation0] ss:$8 sm:$0x3] %vm4, %v3
    %s6 = scalar_lea.vmem %s0, 7
    %s7 = smov 3
    %v8 = vld [vmem:[%s6] ss:$8 sm:%s7]
    %9 = vrot.lane.b32.xlu0 %v8, 112
    %v10 = vpop.permute.xlu0 %9
    %vm11 = vcmask 1048448
    %12 = vst.msk [vmem:[#allocation0] ss:$8 sm:$0x3] %vm11, %v10
    %s13 = scalar_lea.vmem %s0, 6
    %s14 = smov 3
    %v15 = vld [vmem:[%s13] ss:$8 sm:%s14]
    %16 = vrot.lane.b32.xlu0 %v15, 96
    %v17 = vpop.permute.xlu0 %16
    %vm18 = vcmask 917248
    %19 = vst.msk [vmem:[#allocation0] ss:$8 sm:$0x3] %vm18, %v17
    %s20 = scalar_lea.vmem %s0, 5
    %s21 = smov 3
    %v22 = vld [vmem:[%s20] ss:$8 sm:%s21]
    %23 = vrot.lane.b32.xlu0 %v22, 80
    %v24 = vpop.permute.xlu0 %23
    %vm25 = vcmask 786048
    %26 = vst.msk [vmem:[#allocation0] ss:$8 sm:$0x3] %vm25, %v24
    %s27 = scalar_lea.vmem %s0, 4
    %s28 = smov 3
    %v29 = vld [vmem:[%s27] ss:$8 sm:%s28]
    %30 = vrot.lane.b32.xlu0 %v29, 64
    %v31 = vpop.permute.xlu0 %30
    %vm32 = vcmask 654848
    %33 = vst.msk [vmem:[#allocation0] ss:$8 sm:$0x3] %vm32, %v31
    %s34 = scalar_lea.vmem %s0, 3
    %s35 = smov 3
    %v36 = vld [vmem:[%s34] ss:$8 sm:%s35]
    %37 = vrot.lane.b32.xlu0 %v36, 48
    %v38 = vpop.permute.xlu0 %37
    %vm39 = vcmask 523648
    %40 = vst.msk [vmem:[#allocation0] ss:$8 sm:$0x3] %vm39, %v38
    %s41 = scalar_lea.vmem %s0, 2
    %s42 = smov 3
    %v43 = vld [vmem:[%s41] ss:$8 sm:%s42]
    %44 = vrot.lane.b32.xlu0 %v43, 32
    %v45 = vpop.permute.xlu0 %44
    %vm46 = vcmask 392448
    %47 = vst.msk [vmem:[#allocation0] ss:$8 sm:$0x3] %vm46, %v45
    %s48 = scalar_lea.vmem %s0, 1
    %s49 = smov 3
    %v50 = vld [vmem:[%s48] ss:$8 sm:%s49]
    %51 = vrot.lane.b32.xlu0 %v50, 16
    %v52 = vpop.permute.xlu0 %51
    %vm53 = vcmask 261248
    %54 = vst.msk [vmem:[#allocation0] ss:$8 sm:$0x3] %vm53, %v52
    %s56 = ssub.s32 2, 1
    %v57 = vld [vmem:[#allocation0] sm:%s56]
    %s59 = ssub.s32 2, 1
    %60 = vst [vmem:[%s1] sm:%s59] %v57
    %s61 = scalar_lea.vmem [#allocation0], 8
    %v62 = vld [vmem:[%s61] sm:%s56]
    %s64 = ssub.s32 2, 1
    %s65 = scalar_lea.vmem %s1, 1
    %66 = vst [vmem:[%s65] sm:%s64] %v62

// kernel: cnn_kernel7x7_forward.1
$region0: #{cnn_kernel7x7_forward.1}
  #allocation0 [shape = 'u32[]', space=smem, size = 0x4, offset = 0x4, fixed_abs, tag = 'smem constant byte address 0x4 - core index']
  #allocation1 [shape = 'u32[72,128]{1,0:T(1,128)}', space=vmem, size = 0x9000, scoped, tag = 'internal scratch']
  #allocation2 [shape = 'bf16[1,22,352]{2,1,0:T(8,128)(2,1)}', space=vmem, size = 0x4800, scoped, tag = 'scratch operand']
  #allocation3 [shape = 'f32[16,256]{1,0:T(8,128)}', space=vmem, size = 0x4000, scoped, tag = 'scratch operand']
  #allocation4 [shape = 'f32[16,512]{1,0:T(8,128)}', space=vmem, size = 0x8000, scoped, tag = 'scratch operand']
  %s0 = inlined_call_operand.vmem [shape: bf16[2,22,176], index: 0, kind: input, shape index: {}]
  %s1 = inlined_call_operand.vmem [shape: bf16[7,176,256], index: 1, kind: input, shape index: {}]
  %s2 = inlined_call_operand.vmem [shape: f32[1,256], index: 2, kind: input, shape index: {}]
  %s3 = inlined_call_operand.vmem [shape: bf16[7,352,512], index: 3, kind: input, shape index: {}]
  %s4 = inlined_call_operand.vmem [shape: f32[1,512], index: 4, kind: input, shape index: {}]
  %s5 = inlined_call_operand.vmem [shape: f32[512,128], index: 5, kind: input, shape index: {}]
  %s6 = inlined_call_operand.vmem [shape: f32[1,128], index: 6, kind: input, shape index: {}]
  %s7 = inlined_call_operand.hbm [shape: f32[2,1,128], index: 7, kind: output, shape index: {}]
  %s8 = sld [smem:[#allocation0]]
  $region61: #{cnn_kernel7x7_forward.1} parent=0
    _
  %s10 = ssub.s32 1, %s8
  %s11 = scalar_select 0, %s10, %s8
  $region1: #{cnn_kernel7x7_forward.1} parent=0
    #allocation5 [shape = 'u8[1024]{0}', space=vmem, size = 0x400, scoped, tag = 'output window, operand 0']
    #allocation6 [shape = 's32[2]{0}', space=sflag, size = 0x8, scoped, tag = 'scoped memory for cnn_kernel7x7_forward.1']
    %12 = vsyncpa [#allocation6], 0
    %s13 = scalar_lea.sflag [#allocation6], 1
    %14 = vsyncpa %s13, 0
    loop: start=0, step=1, limit=4
    $region2: #{cnn_kernel7x7_forward.1} parent=1 // loop_pre_header
      _
    $region3: #{cnn_kernel7x7_forward.1} parent=1 // loop_header
      %s16 = sphi 0, %s20
      %p17 = scmp.ge.s32.totalorder %s16, 4
      %s26 = sphi 0, %s28
      %s29 = sphi 0, %s26
      %s30 = sphi 0, %s29
      %s46 = sphi 0, %s30
      %s50 = sphi 0, %s50
      %s52 = sphi 0, %s50
      %s53 = sphi 0, %s52
      %s67 = sphi 0, %s53
      %s71 = sphi 0, %s71
      %s73 = sphi 0, %s71
      %s74 = sphi 0, %s73
      %s88 = sphi 0, %s74
      %s92 = sphi 0, %s92
      %s94 = sphi 0, %s92
      %s95 = sphi 0, %s94
      %s109 = sphi 0, %s95
      %s113 = sphi 0, %s113
      %s115 = sphi 0, %s113
      %s116 = sphi 0, %s115
      %s130 = sphi 0, %s116
      %s134 = sphi 0, %s134
      %s136 = sphi 0, %s134
      %s137 = sphi 0, %s136
      %s151 = sphi 0, %s137
      %s155 = sphi 0, %s155
      %s157 = sphi 0, %s155
      %s158 = sphi 0, %s157
      %s172 = sphi 0, %s158
      %s178 = sphi 0, %s180
      %s181 = sphi 0, %s178
      %s182 = sphi 0, %s181
      %s198 = sphi 0, %s182
    $region4: #{cnn_kernel7x7_forward.1} parent=1 // loop_header_branch
      %19 = sbr.rel (%p17) target = $region8
    $region5: #{cnn_kernel7x7_forward.1} parent=1 // loop_body
      %s21 = ssub.s32 %s16, 1
      %s22 = ssub.s32 %s16, 2
      %s23 = sadd.s32 %s16, 1
      %s24 = ssub.s32 %s16, %s23
      %p25 = scmp.eq.s32.totalorder %s24, 0
      %s27 = sadd.s32 %s26, 1
      %s28 = scalar_select %p25, %s26, %s27
      %p31 = pneg %p25
      %p32 = scmp.eq.s32.totalorder %s16, 1
      %p33 = por %p31, %p32
      %p34 = scmp.ne.s32.totalorder %s26, %s29
      %p35 = scmp.eq.s32.totalorder %s16, 0
      %p36 = por %p34, %p35
      %p37 = scmp.ne.s32.totalorder %s26, %s29
      %p38 = scmp.eq.s32.totalorder %s21, 1
      %p39 = por %p37, %p38
      %p40 = scmp.ne.s32.totalorder %s29, %s30
      %p41 = scmp.eq.s32.totalorder %s21, 0
      %p42 = por %p40, %p41
      %p43 = scmp.ne.s32.totalorder %s29, %s30
      %p44 = scmp.eq.s32.totalorder %s22, 1
      %p45 = por %p43, %p44
      %p47 = scmp.ne.s32.totalorder %s30, %s46
      %p48 = scmp.eq.s32.totalorder %s22, 0
      %p49 = por %p47, %p48
      %s51 = sadd.s32 %s50, 1
      %p54 = scmp.eq.s32.totalorder %s16, 1
      %p55 = scmp.ne.s32.totalorder %s50, %s52
      %p56 = scmp.eq.s32.totalorder %s16, 0
      %p57 = por %p55, %p56
      %p58 = scmp.ne.s32.totalorder %s50, %s52
      %p59 = scmp.eq.s32.totalorder %s21, 1
      %p60 = por %p58, %p59
      %p61 = scmp.ne.s32.totalorder %s52, %s53
      %p62 = scmp.eq.s32.totalorder %s21, 0
      %p63 = por %p61, %p62
      %p64 = scmp.ne.s32.totalorder %s52, %s53
      %p65 = scmp.eq.s32.totalorder %s22, 1
      %p66 = por %p64, %p65
      %p68 = scmp.ne.s32.totalorder %s53, %s67
      %p69 = scmp.eq.s32.totalorder %s22, 0
      %p70 = por %p68, %p69
      %s72 = sadd.s32 %s71, 1
      %p75 = scmp.eq.s32.totalorder %s16, 1
      %p76 = scmp.ne.s32.totalorder %s71, %s73
      %p77 = scmp.eq.s32.totalorder %s16, 0
      %p78 = por %p76, %p77
      %p79 = scmp.ne.s32.totalorder %s71, %s73
      %p80 = scmp.eq.s32.totalorder %s21, 1
      %p81 = por %p79, %p80
      %p82 = scmp.ne.s32.totalorder %s73, %s74
      %p83 = scmp.eq.s32.totalorder %s21, 0
      %p84 = por %p82, %p83
      %p85 = scmp.ne.s32.totalorder %s73, %s74
      %p86 = scmp.eq.s32.totalorder %s22, 1
      %p87 = por %p85, %p86
      %p89 = scmp.ne.s32.totalorder %s74, %s88
      %p90 = scmp.eq.s32.totalorder %s22, 0
      %p91 = por %p89, %p90
      %s93 = sadd.s32 %s92, 1
      %p96 = scmp.eq.s32.totalorder %s16, 1
      %p97 = scmp.ne.s32.totalorder %s92, %s94
      %p98 = scmp.eq.s32.totalorder %s16, 0
      %p99 = por %p97, %p98
      %p100 = scmp.ne.s32.totalorder %s92, %s94
      %p101 = scmp.eq.s32.totalorder %s21, 1
      %p102 = por %p100, %p101
      %p103 = scmp.ne.s32.totalorder %s94, %s95
      %p104 = scmp.eq.s32.totalorder %s21, 0
      %p105 = por %p103, %p104
      %p106 = scmp.ne.s32.totalorder %s94, %s95
      %p107 = scmp.eq.s32.totalorder %s22, 1
      %p108 = por %p106, %p107
      %p110 = scmp.ne.s32.totalorder %s95, %s109
      %p111 = scmp.eq.s32.totalorder %s22, 0
      %p112 = por %p110, %p111
      %s114 = sadd.s32 %s113, 1
      %p117 = scmp.eq.s32.totalorder %s16, 1
      %p118 = scmp.ne.s32.totalorder %s113, %s115
      %p119 = scmp.eq.s32.totalorder %s16, 0
      %p120 = por %p118, %p119
      %p121 = scmp.ne.s32.totalorder %s113, %s115
      %p122 = scmp.eq.s32.totalorder %s21, 1
      %p123 = por %p121, %p122
      %p124 = scmp.ne.s32.totalorder %s115, %s116
      %p125 = scmp.eq.s32.totalorder %s21, 0
      %p126 = por %p124, %p125
      %p127 = scmp.ne.s32.totalorder %s115, %s116
      %p128 = scmp.eq.s32.totalorder %s22, 1
      %p129 = por %p127, %p128
      %p131 = scmp.ne.s32.totalorder %s116, %s130
      %p132 = scmp.eq.s32.totalorder %s22, 0
      %p133 = por %p131, %p132
      %s135 = sadd.s32 %s134, 1
      %p138 = scmp.eq.s32.totalorder %s16, 1
      %p139 = scmp.ne.s32.totalorder %s134, %s136
      %p140 = scmp.eq.s32.totalorder %s16, 0
      %p141 = por %p139, %p140
      %p142 = scmp.ne.s32.totalorder %s134, %s136
      %p143 = scmp.eq.s32.totalorder %s21, 1
      %p144 = por %p142, %p143
      %p145 = scmp.ne.s32.totalorder %s136, %s137
      %p146 = scmp.eq.s32.totalorder %s21, 0
      %p147 = por %p145, %p146
      %p148 = scmp.ne.s32.totalorder %s136, %s137
      %p149 = scmp.eq.s32.totalorder %s22, 1
      %p150 = por %p148, %p149
      %p152 = scmp.ne.s32.totalorder %s137, %s151
      %p153 = scmp.eq.s32.totalorder %s22, 0
      %p154 = por %p152, %p153
      %s156 = sadd.s32 %s155, 1
      %p159 = scmp.eq.s32.totalorder %s16, 1
      %p160 = scmp.ne.s32.totalorder %s155, %s157
      %p161 = scmp.eq.s32.totalorder %s16, 0
      %p162 = por %p160, %p161
      %p163 = scmp.ne.s32.totalorder %s155, %s157
      %p164 = scmp.eq.s32.totalorder %s21, 1
      %p165 = por %p163, %p164
      %p166 = scmp.ne.s32.totalorder %s157, %s158
      %p167 = scmp.eq.s32.totalorder %s21, 0
      %p168 = por %p166, %p167
      %p169 = scmp.ne.s32.totalorder %s157, %s158
      %p170 = scmp.eq.s32.totalorder %s22, 1
      %p171 = por %p169, %p170
      %p173 = scmp.ne.s32.totalorder %s158, %s172
      %p174 = scmp.eq.s32.totalorder %s22, 0
      %p175 = por %p173, %p174
      %s176 = ssub.s32 %s16, %s23
      %p177 = scmp.eq.s32.totalorder %s176, 0
      %s179 = sadd.s32 %s178, 1
      %s180 = scalar_select %p177, %s178, %s179
      %p183 = pneg %p177
      %p184 = scmp.eq.s32.totalorder %s16, 1
      %p185 = por %p183, %p184
      %p186 = scmp.ne.s32.totalorder %s178, %s181
      %p187 = scmp.eq.s32.totalorder %s16, 0
      %p188 = por %p186, %p187
      %p189 = scmp.ne.s32.totalorder %s178, %s181
      %p190 = scmp.eq.s32.totalorder %s21, 1
      %p191 = por %p189, %p190
      %p192 = scmp.ne.s32.totalorder %s181, %s182
      %p193 = scmp.eq.s32.totalorder %s21, 0
      %p194 = por %p192, %p193
      %p195 = scmp.ne.s32.totalorder %s181, %s182
      %p196 = scmp.eq.s32.totalorder %s22, 1
      %p197 = por %p195, %p196
      %p199 = scmp.ne.s32.totalorder %s182, %s198
      %p200 = scmp.eq.s32.totalorder %s22, 0
      %p201 = por %p199, %p200
      %p202 = scmp.le.s32.totalorder 1, %s16
      %p203 = scmp.lt.s32.totalorder %s16, 3
      %p204 = pnand %p202, %p203
      %p205 = pneg %p204
      // Predicated region
      $region9: #{cnn_kernel7x7_forward.1} parent=5 // pred_check
        _
      $region10: #{cnn_kernel7x7_forward.1} parent=5 // pred_check_branch
        %207 = sbr.rel (%p204) target = $region12
      $region11: #{cnn_kernel7x7_forward.1} parent=5 // pred_region
        %s208 = ssub.s32 %s16, 1
        // Predicated region
        $region13: #{cnn_kernel7x7_forward.1} parent=11 // pred_check
          %p209 = pneg %p63
        $region14: #{cnn_kernel7x7_forward.1} parent=11 // pred_check_branch
          %211 = sbr.rel (%p209) target = $region16
        $region15: #{cnn_kernel7x7_forward.1} parent=11 // pred_region
          _
        $region16: #{cnn_kernel7x7_forward.1} parent=11 // pred_fallthru
          _
        // Predicated region
        $region17: #{cnn_kernel7x7_forward.1} parent=11 // pred_check
          %p212 = pneg %p84
        $region18: #{cnn_kernel7x7_forward.1} parent=11 // pred_check_branch
          %214 = sbr.rel (%p212) target = $region20
        $region19: #{cnn_kernel7x7_forward.1} parent=11 // pred_region
          _
        $region20: #{cnn_kernel7x7_forward.1} parent=11 // pred_fallthru
          _
        // Predicated region
        $region21: #{cnn_kernel7x7_forward.1} parent=11 // pred_check
          %p215 = pneg %p105
        $region22: #{cnn_kernel7x7_forward.1} parent=11 // pred_check_branch
          %217 = sbr.rel (%p215) target = $region24
        $region23: #{cnn_kernel7x7_forward.1} parent=11 // pred_region
          _
        $region24: #{cnn_kernel7x7_forward.1} parent=11 // pred_fallthru
          _
        // Predicated region
        $region25: #{cnn_kernel7x7_forward.1} parent=11 // pred_check
          %p218 = pneg %p126
        $region26: #{cnn_kernel7x7_forward.1} parent=11 // pred_check_branch
          %220 = sbr.rel (%p218) target = $region28
        $region27: #{cnn_kernel7x7_forward.1} parent=11 // pred_region
          _
        $region28: #{cnn_kernel7x7_forward.1} parent=11 // pred_fallthru
          _
        // Predicated region
        $region29: #{cnn_kernel7x7_forward.1} parent=11 // pred_check
          %p221 = pneg %p147
        $region30: #{cnn_kernel7x7_forward.1} parent=11 // pred_check_branch
          %223 = sbr.rel (%p221) target = $region32
        $region31: #{cnn_kernel7x7_forward.1} parent=11 // pred_region
          _
        $region32: #{cnn_kernel7x7_forward.1} parent=11 // pred_fallthru
          _
        // Predicated region
        $region33: #{cnn_kernel7x7_forward.1} parent=11 // pred_check
          %p224 = pneg %p168
        $region34: #{cnn_kernel7x7_forward.1} parent=11 // pred_check_branch
          %226 = sbr.rel (%p224) target = $region36
        $region35: #{cnn_kernel7x7_forward.1} parent=11 // pred_region
          _
        $region36: #{cnn_kernel7x7_forward.1} parent=11 // pred_fallthru
          _
      $region12: #{cnn_kernel7x7_forward.1} parent=5 // pred_fallthru
        _
      %p227 = scmp.lt.s32.totalorder %s16, 2
      // Predicated region
      $region37: #{cnn_kernel7x7_forward.1} parent=5 // pred_check
        %p228 = pneg %p227
      $region38: #{cnn_kernel7x7_forward.1} parent=5 // pred_check_branch
        %230 = sbr.rel (%p228) target = $region40
      $region39: #{cnn_kernel7x7_forward.1} parent=5 // pred_region
        // Predicated region
        $region41: #{cnn_kernel7x7_forward.1} parent=39 // pred_check
          %p231 = pneg %p36
        $region42: #{cnn_kernel7x7_forward.1} parent=39 // pred_check_branch
          %233 = sbr.rel (%p231) target = $region44
        $region43: #{cnn_kernel7x7_forward.1} parent=39 // pred_region
          %p234 = scmp.lt.s32.totalorder %s16, 1
          %s235 = scalar_select %p234, %s16, 1
          %s236 = smul.addr %s235, 6
          %s237 = smul.addr %s236, 4
          %s238 = scalar_lea.vmem %s0, %s237
        $region44: #{cnn_kernel7x7_forward.1} parent=39 // pred_fallthru
          _
      $region40: #{cnn_kernel7x7_forward.1} parent=5 // pred_fallthru
        _
      %p239 = scmp.le.s32.totalorder 1, %s16
      %p240 = scmp.lt.s32.totalorder %s16, 3
      %p241 = pnand %p239, %p240
      %p242 = pneg %p241
      // Predicated region
      $region45: #{cnn_kernel7x7_forward.1} parent=5 // pred_check
        _
      $region46: #{cnn_kernel7x7_forward.1} parent=5 // pred_check_branch
        %244 = sbr.rel (%p241) target = $region48
      $region47: #{cnn_kernel7x7_forward.1} parent=5 // pred_region
        %s245 = ssub.s32 %s16, 1
        %p246 = scmp.lt.s32.totalorder %s21, 1
        %s247 = scalar_select %p246, %s21, 1
        %s248 = smul.addr %s247, 6
        %s249 = smul.addr %s248, 4
        %s250 = scalar_lea.vmem %s0, %s249
        %p251 = pneg %p42
        %p252 = pneg %p39
        %p253 = pneg %p63
        %p254 = pneg %p60
        %p255 = pneg %p84
        %p256 = pneg %p81
        %p257 = pneg %p105
        %p258 = pneg %p102
        %p259 = pneg %p126
        %p260 = pneg %p123
        %p261 = pneg %p147
        %p262 = pneg %p144
        %p263 = pneg %p168
        %p264 = pneg %p165
        %p265 = pneg %p194
        %p266 = pneg %p191
        %s267 = sand.u32 %s181, 1
        %s268 = scalar_lea.sflag [#allocation6], %s267
        %s269 = sand.u32 %s181, 1
        %s270 = scalar_lea.vmem [#allocation5], %s269
        %p271 = scmp.lt.s32.totalorder %s21, 1
        %s272 = scalar_select %p271, %s21, 1
        %s273 = smul.addr %s272, 6
        %s274 = smul.addr %s273, 4
        %s275 = scalar_lea.vmem %s0, %s274
        %v277 = vld [vmem:[%s275] sm:$0xff]
        %v278 = vld [vmem:[%s275 + $0x8] sm:$0xff]
        %v279 = vld [vmem:[%s1] sm:$0xff]
        %v280 = vld [vmem:[%s1 + $0x8] sm:$0xff]
        %v281 = vld [vmem:[%s1 + $0x10] sm:$0xff]
        %v282 = vld [vmem:[%s1 + $0x18] sm:$0xff]
        %v283 = vld [vmem:[%s1 + $0x20] sm:$0xff]
        %v284 = vld [vmem:[%s1 + $0x28] sm:$0xff]
        %v285 = vld [vmem:[%s1 + $0x30] sm:$0xff]
        %v286 = vld [vmem:[%s1 + $0x38] sm:$0xff]
        %v287 = vld [vmem:[%s1 + $0x40] sm:$0xff]
        %v288 = vld [vmem:[%s1 + $0x48] sm:$0xff]
        %v289 = vld [vmem:[%s1 + $0x50] sm:$0xff]
        %v290 = vld [vmem:[%s1 + $0x58] sm:$0xff]
        %v291 = vld [vmem:[%s1 + $0x60] sm:$0xff]
        %v292 = vld [vmem:[%s1 + $0x68] sm:$0xff]
        %v293 = vld [vmem:[%s1 + $0x70] sm:$0xff]
        %v294 = vld [vmem:[%s1 + $0x78] sm:$0xff]
        %v295 = vld [vmem:[%s1 + $0x80] sm:$0xff]
        %v296 = vld [vmem:[%s1 + $0x88] sm:$0xff]
        %v297 = vld [vmem:[%s1 + $0x90] sm:$0xff]
        %v298 = vld [vmem:[%s1 + $0x98] sm:$0xff]
        %v299 = vld [vmem:[%s1 + $0xa0] sm:$0xff]
        %v300 = vld [vmem:[%s1 + $0xa8] sm:$0xff]
        %v303 = vunpack.c.l.b16 %v277
        %v304 = vunpack.c.h.b16 %v277
        %v305 = vunpack.c.l.b16 %v278
        %v306 = vunpack.c.h.b16 %v278
        %v307 = vpack.c.b16 %v305, %v303
        %v308 = vpack.c.b16 %v306, %v304
        %v332 = vunpack.c.l.b16 %v279
        %v333 = vunpack.c.h.b16 %v279
        %v334 = vunpack.c.l.b16 %v280
        %v335 = vunpack.c.h.b16 %v280
        %v336 = vunpack.c.l.b16 %v281
        %v337 = vunpack.c.h.b16 %v281
        %v338 = vunpack.c.l.b16 %v282
        %v339 = vunpack.c.h.b16 %v282
        %v340 = vunpack.c.l.b16 %v283
        %v341 = vunpack.c.h.b16 %v283
        %v342 = vunpack.c.l.b16 %v284
        %v343 = vunpack.c.h.b16 %v284
        %v344 = vunpack.c.l.b16 %v285
        %v345 = vunpack.c.h.b16 %v285
        %v346 = vunpack.c.l.b16 %v286
        %v347 = vunpack.c.h.b16 %v286
        %v348 = vunpack.c.l.b16 %v287
        %v349 = vunpack.c.h.b16 %v287
        %v350 = vunpack.c.l.b16 %v288
        %v351 = vunpack.c.h.b16 %v288
        %v352 = vunpack.c.l.b16 %v289
        %v353 = vunpack.c.h.b16 %v289
        %v354 = vunpack.c.l.b16 %v290
        %v355 = vunpack.c.h.b16 %v290
        %v356 = vunpack.c.l.b16 %v291
        %v357 = vunpack.c.h.b16 %v291
        %v358 = vunpack.c.l.b16 %v292
        %v359 = vunpack.c.h.b16 %v292
        %v360 = vunpack.c.l.b16 %v293
        %v361 = vunpack.c.h.b16 %v293
        %v362 = vunpack.c.l.b16 %v294
        %v363 = vunpack.c.h.b16 %v294
        %v364 = vunpack.c.l.b16 %v295
        %v365 = vunpack.c.h.b16 %v295
        %v366 = vunpack.c.l.b16 %v296
        %v367 = vunpack.c.h.b16 %v296
        %v368 = vunpack.c.l.b16 %v297
        %v369 = vunpack.c.h.b16 %v297
        %v370 = vunpack.c.l.b16 %v298
        %v371 = vunpack.c.h.b16 %v298
        %v372 = vunpack.c.l.b16 %v299
        %v373 = vunpack.c.h.b16 %v299
        %v374 = vunpack.c.l.b16 %v300
        %v375 = vunpack.c.h.b16 %v300
        %v376 = vpack.c.b16 %v334, %v332
        %v377 = vpack.c.b16 %v335, %v333
        %v378 = vpack.c.b16 %v338, %v336
        %v379 = vpack.c.b16 %v339, %v337
        %v380 = vpack.c.b16 %v342, %v340
        %v381 = vpack.c.b16 %v343, %v341
        %v382 = vpack.c.b16 %v346, %v344
        %v383 = vpack.c.b16 %v347, %v345
        %v384 = vpack.c.b16 %v350, %v348
        %v385 = vpack.c.b16 %v351, %v349
        %v386 = vpack.c.b16 %v354, %v352
        %v387 = vpack.c.b16 %v355, %v353
        %v388 = vpack.c.b16 %v358, %v356
        %v389 = vpack.c.b16 %v359, %v357
        %v390 = vpack.c.b16 %v362, %v360
        %v391 = vpack.c.b16 %v363, %v361
        %v392 = vpack.c.b16 %v366, %v364
        %v393 = vpack.c.b16 %v367, %v365
        %v394 = vpack.c.b16 %v370, %v368
        %v395 = vpack.c.b16 %v371, %v369
        %v396 = vpack.c.b16 %v374, %v372
        %v397 = vpack.c.b16 %v375, %v373
        %vm420 = vcmask 392192
        %v422 = vsel %vm420, %v308, 0
        %424 = vmatpush.bf16.msra.mxu0 %v390
        %425 = vmatpush.bf16.msra.mxu0 %v388
        %426 = vmatpush.bf16.msra.mxu0 %v386
        %427 = vmatpush.bf16.msra.mxu0 %v384
        %428 = vmatpush.bf16.msra.mxu0 %v382
        %429 = vmatpush.bf16.msra.mxu0 %v380
        %430 = vmatpush.bf16.msra.mxu0 %v378
        %431 = vmatpush.bf16.msra.mxu0 %v376
        %432 = vmatmul.bf16.gmra.mxu0 %v307
        %v433 = vpop.f32.mrf.mxu0
        %v434 = vadd.f32 0.0, %v433
        %v435 = vpop.f32.mrf.mxu0
        %v436 = vadd.f32 0.0, %v435
        %437 = vdwg.mxu0
        %438 = vmatpush.bf16.msra.mxu0 0
        %439 = vmatpush.bf16.msra.mxu0 0
        %440 = vmatpush.bf16.msra.mxu0 0
        %441 = vmatpush.bf16.msra.mxu0 0
        %442 = vmatpush.bf16.msra.mxu0 0
        %443 = vmatpush.bf16.msra.mxu0 %v396
        %444 = vmatpush.bf16.msra.mxu0 %v394
        %445 = vmatpush.bf16.msra.mxu0 %v392
        %446 = vmatmul.bf16.gmra.mxu0 %v422
        %v447 = vpop.f32.mrf.mxu0
        %v448 = vadd.f32 %v434, %v447
        %v449 = vpop.f32.mrf.mxu0
        %v450 = vadd.f32 %v436, %v449
        %451 = vdwg.mxu0
        %452 = vmatpush.bf16.msra.mxu0 %v391
        %453 = vmatpush.bf16.msra.mxu0 %v389
        %454 = vmatpush.bf16.msra.mxu0 %v387
        %455 = vmatpush.bf16.msra.mxu0 %v385
        %456 = vmatpush.bf16.msra.mxu0 %v383
        %457 = vmatpush.bf16.msra.mxu0 %v381
        %458 = vmatpush.bf16.msra.mxu0 %v379
        %459 = vmatpush.bf16.msra.mxu0 %v377
        %460 = vmatmul.bf16.gmra.mxu0 %v307
        %v461 = vpop.f32.mrf.mxu0
        %v462 = vadd.f32 0.0, %v461
        %v463 = vpop.f32.mrf.mxu0
        %v464 = vadd.f32 0.0, %v463
        %465 = vdwg.mxu0
        %466 = vmatpush.bf16.msra.mxu0 0
        %467 = vmatpush.bf16.msra.mxu0 0
        %468 = vmatpush.bf16.msra.mxu0 0
        %469 = vmatpush.bf16.msra.mxu0 0
        %470 = vmatpush.bf16.msra.mxu0 0
        %471 = vmatpush.bf16.msra.mxu0 %v397
        %472 = vmatpush.bf16.msra.mxu0 %v395
        %473 = vmatpush.bf16.msra.mxu0 %v393
        %474 = vmatmul.bf16.gmra.mxu0 %v422
        %v475 = vpop.f32.mrf.mxu0
        %v476 = vadd.f32 %v462, %v475
        %v477 = vpop.f32.mrf.mxu0
        %v478 = vadd.f32 %v464, %v477
        %479 = vdwg.mxu0
        %480 = vst [vmem:[#allocation3] sm:$0xff] %v448
        %481 = vst [vmem:[#allocation3 + $0x8] sm:$0xff] %v476
        %482 = vst [vmem:[#allocation3 + $0x10] sm:$0xff] %v450
        %483 = vst [vmem:[#allocation3 + $0x18] sm:$0xff] %v478
        %v484 = vld [vmem:[%s275] sm:$0xff]
        %v485 = vld [vmem:[%s275 + $0x8] sm:$0xff]
        %v486 = vld [vmem:[%s275 + $0x10] sm:$0x11]
        %s487 = scalar_lea.vmem %s1, 176
        %v488 = vld [vmem:[%s487] sm:$0xff]
        %v489 = vld [vmem:[%s487 + $0x8] sm:$0xff]
        %v490 = vld [vmem:[%s487 + $0x10] sm:$0xff]
        %v491 = vld [vmem:[%s487 + $0x18] sm:$0xff]
        %v492 = vld [vmem:[%s487 + $0x20] sm:$0xff]
        %v493 = vld [vmem:[%s487 + $0x28] sm:$0xff]
        %v494 = vld [vmem:[%s487 + $0x30] sm:$0xff]
        %v495 = vld [vmem:[%s487 + $0x38] sm:$0xff]
        %v496 = vld [vmem:[%s487 + $0x40] sm:$0xff]
        %v497 = vld [vmem:[%s487 + $0x48] sm:$0xff]
        %v498 = vld [vmem:[%s487 + $0x50] sm:$0xff]
        %v499 = vld [vmem:[%s487 + $0x58] sm:$0xff]
        %v500 = vld [vmem:[%s487 + $0x60] sm:$0xff]
        %v501 = vld [vmem:[%s487 + $0x68] sm:$0xff]
        %v502 = vld [vmem:[%s487 + $0x70] sm:$0xff]
        %v503 = vld [vmem:[%s487 + $0x78] sm:$0xff]
        %v504 = vld [vmem:[%s487 + $0x80] sm:$0xff]
        %v505 = vld [vmem:[%s487 + $0x88] sm:$0xff]
        %v506 = vld [vmem:[%s487 + $0x90] sm:$0xff]
        %v507 = vld [vmem:[%s487 + $0x98] sm:$0xff]
        %v508 = vld [vmem:[%s487 + $0xa0] sm:$0xff]
        %v509 = vld [vmem:[%s487 + $0xa8] sm:$0xff]
        %v513 = vunpack.c.l.b16 %v484
        %v514 = vunpack.c.h.b16 %v484
        %v515 = vunpack.c.l.b16 %v485
        %v516 = vunpack.c.h.b16 %v485
        %v517 = vunpack.c.l.b16 %v486
        %v518 = vunpack.c.h.b16 %v486
        %v519 = vpack.c.b16 %v515, %v513
        %v520 = vpack.c.b16 %v516, %v514
        %v521 = vpack.c.b16 %v517, %v517
        %v522 = vpack.c.b16 %v518, %v518
        %vm523 = vsmask.f32 7424
        %v525 = vshrl.u32 %v519, 16
        %v527 = vshll.u32 %v519, 16
        %v529 = vrot.slane %v527, 1
        %v530 = vor.u32 %v525, %v529
        %v532 = vshll.u32 %v521, 16
        %v534 = vrot.slane %v532, 1
        %v535 = vsel %vm523, %v530, %v534
        %v537 = vshrl.u32 %v520, 16
        %v539 = vshll.u32 %v520, 16
        %v541 = vrot.slane %v539, 1
        %v542 = vor.u32 %v537, %v541
        %v544 = vshll.u32 %v522, 16
        %v546 = vrot.slane %v544, 1
        %v547 = vsel %vm523, %v542, %v546
        %v571 = vunpack.c.l.b16 %v488
        %v572 = vunpack.c.h.b16 %v488
        %v573 = vunpack.c.l.b16 %v489
        %v574 = vunpack.c.h.b16 %v489
        %v575 = vunpack.c.l.b16 %v490
        %v576 = vunpack.c.h.b16 %v490
        %v577 = vunpack.c.l.b16 %v491
        %v578 = vunpack.c.h.b16 %v491
        %v579 = vunpack.c.l.b16 %v492
        %v580 = vunpack.c.h.b16 %v492
        %v581 = vunpack.c.l.b16 %v493
        %v582 = vunpack.c.h.b16 %v493
        %v583 = vunpack.c.l.b16 %v494
        %v584 = vunpack.c.h.b16 %v494
        %v585 = vunpack.c.l.b16 %v495
        %v586 = vunpack.c.h.b16 %v495
        %v587 = vunpack.c.l.b16 %v496
        %v588 = vunpack.c.h.b16 %v496
        %v589 = vunpack.c.l.b16 %v497
        %v590 = vunpack.c.h.b16 %v497
        %v591 = vunpack.c.l.b16 %v498
        %v592 = vunpack.c.h.b16 %v498
        %v593 = vunpack.c.l.b16 %v499
        %v594 = vunpack.c.h.b16 %v499
        %v595 = vunpack.c.l.b16 %v500
        %v596 = vunpack.c.h.b16 %v500
        %v597 = vunpack.c.l.b16 %v501
        %v598 = vunpack.c.h.b16 %v501
        %v599 = vunpack.c.l.b16 %v502
        %v600 = vunpack.c.h.b16 %v502
        %v601 = vunpack.c.l.b16 %v503
        %v602 = vunpack.c.h.b16 %v503
        %v603 = vunpack.c.l.b16 %v504
        %v604 = vunpack.c.h.b16 %v504
        %v605 = vunpack.c.l.b16 %v505
        %v606 = vunpack.c.h.b16 %v505
        %v607 = vunpack.c.l.b16 %v506
        %v608 = vunpack.c.h.b16 %v506
        %v609 = vunpack.c.l.b16 %v507
        %v610 = vunpack.c.h.b16 %v507
        %v611 = vunpack.c.l.b16 %v508
        %v612 = vunpack.c.h.b16 %v508
        %v613 = vunpack.c.l.b16 %v509
        %v614 = vunpack.c.h.b16 %v509
        %v615 = vpack.c.b16 %v573, %v571
        %v616 = vpack.c.b16 %v574, %v572
        %v617 = vpack.c.b16 %v577, %v575
        %v618 = vpack.c.b16 %v578, %v576
        %v619 = vpack.c.b16 %v581, %v579
        %v620 = vpack.c.b16 %v582, %v580
        %v621 = vpack.c.b16 %v585, %v583
        %v622 = vpack.c.b16 %v586, %v584
        %v623 = vpack.c.b16 %v589, %v587
        %v624 = vpack.c.b16 %v590, %v588
        %v625 = vpack.c.b16 %v593, %v591
        %v626 = vpack.c.b16 %v594, %v592
        %v627 = vpack.c.b16 %v597, %v595
        %v628 = vpack.c.b16 %v598, %v596
        %v629 = vpack.c.b16 %v601, %v599
        %v630 = vpack.c.b16 %v602, %v600
        %v631 = vpack.c.b16 %v605, %v603
        %v632 = vpack.c.b16 %v606, %v604
        %v633 = vpack.c.b16 %v609, %v607
        %v634 = vpack.c.b16 %v610, %v608
        %v635 = vpack.c.b16 %v613, %v611
        %v636 = vpack.c.b16 %v614, %v612
        %v660 = vsel %vm420, %v547, 0
        %662 = vmatpush.bf16.msra.mxu0 %v629
        %663 = vmatpush.bf16.msra.mxu0 %v627
        %664 = vmatpush.bf16.msra.mxu0 %v625
        %665 = vmatpush.bf16.msra.mxu0 %v623
        %666 = vmatpush.bf16.msra.mxu0 %v621
        %667 = vmatpush.bf16.msra.mxu0 %v619
        %668 = vmatpush.bf16.msra.mxu0 %v617
        %669 = vmatpush.bf16.msra.mxu0 %v615
        %670 = vmatmul.bf16.gmra.mxu0 %v535
        %v671 = vpop.f32.mrf.mxu0
        %v672 = vadd.f32 0.0, %v671
        %v673 = vpop.f32.mrf.mxu0
        %v674 = vadd.f32 0.0, %v673
        %675 = vdwg.mxu0
        %676 = vmatpush.bf16.msra.mxu0 0
        %677 = vmatpush.bf16.msra.mxu0 0
        %678 = vmatpush.bf16.msra.mxu0 0
        %679 = vmatpush.bf16.msra.mxu0 0
        %680 = vmatpush.bf16.msra.mxu0 0
        %681 = vmatpush.bf16.msra.mxu0 %v635
        %682 = vmatpush.bf16.msra.mxu0 %v633
        %683 = vmatpush.bf16.msra.mxu0 %v631
        %684 = vmatmul.bf16.gmra.mxu0 %v660
        %v685 = vpop.f32.mrf.mxu0
        %v686 = vadd.f32 %v672, %v685
        %v687 = vpop.f32.mrf.mxu0
        %v688 = vadd.f32 %v674, %v687
        %689 = vdwg.mxu0
        %690 = vmatpush.bf16.msra.mxu0 %v630
        %691 = vmatpush.bf16.msra.mxu0 %v628
        %692 = vmatpush.bf16.msra.mxu0 %v626
        %693 = vmatpush.bf16.msra.mxu0 %v624
        %694 = vmatpush.bf16.msra.mxu0 %v622
        %695 = vmatpush.bf16.msra.mxu0 %v620
        %696 = vmatpush.bf16.msra.mxu0 %v618
        %697 = vmatpush.bf16.msra.mxu0 %v616
        %698 = vmatmul.bf16.gmra.mxu0 %v535
        %v699 = vpop.f32.mrf.mxu0
        %v700 = vadd.f32 0.0, %v699
        %v701 = vpop.f32.mrf.mxu0
        %v702 = vadd.f32 0.0, %v701
        %703 = vdwg.mxu0
        %704 = vmatpush.bf16.msra.mxu0 0
        %705 = vmatpush.bf16.msra.mxu0 0
        %706 = vmatpush.bf16.msra.mxu0 0
        %707 = vmatpush.bf16.msra.mxu0 0
        %708 = vmatpush.bf16.msra.mxu0 0
        %709 = vmatpush.bf16.msra.mxu0 %v636
        %710 = vmatpush.bf16.msra.mxu0 %v634
        %711 = vmatpush.bf16.msra.mxu0 %v632
        %712 = vmatmul.bf16.gmra.mxu0 %v660
        %v713 = vpop.f32.mrf.mxu0
        %v714 = vadd.f32 %v700, %v713
        %v715 = vpop.f32.mrf.mxu0
        %v716 = vadd.f32 %v702, %v715
        %717 = vdwg.mxu0
        %v718 = vld [vmem:[#allocation3] sm:$0xff]
        %v719 = vld [vmem:[#allocation3 + $0x8] sm:$0xff]
        %v720 = vld [vmem:[#allocation3 + $0x10] sm:$0xff]
        %v721 = vld [vmem:[#allocation3 + $0x18] sm:$0xff]
        %v722 = vadd.f32 %v718, %v686
        %v723 = vadd.f32 %v719, %v714
        %v724 = vadd.f32 %v720, %v688
        %v725 = vadd.f32 %v721, %v716
        %726 = vst [vmem:[#allocation3] sm:$0xff] %v722
        %727 = vst [vmem:[#allocation3 + $0x8] sm:$0xff] %v723
        %728 = vst [vmem:[#allocation3 + $0x10] sm:$0xff] %v724
        %729 = vst [vmem:[#allocation3 + $0x18] sm:$0xff] %v725
        %v730 = vld [vmem:[%s275] sm:$0xee]
        %v731 = vld [vmem:[%s275 + $0x8] sm:$0xff]
        %v732 = vld [vmem:[%s275 + $0x10] sm:$0x11]
        %s733 = scalar_lea.vmem %s1, 352
        %v734 = vld [vmem:[%s733] sm:$0xff]
        %v735 = vld [vmem:[%s733 + $0x8] sm:$0xff]
        %v736 = vld [vmem:[%s733 + $0x10] sm:$0xff]
        %v737 = vld [vmem:[%s733 + $0x18] sm:$0xff]
        %v738 = vld [vmem:[%s733 + $0x20] sm:$0xff]
        %v739 = vld [vmem:[%s733 + $0x28] sm:$0xff]
        %v740 = vld [vmem:[%s733 + $0x30] sm:$0xff]
        %v741 = vld [vmem:[%s733 + $0x38] sm:$0xff]
        %v742 = vld [vmem:[%s733 + $0x40] sm:$0xff]
        %v743 = vld [vmem:[%s733 + $0x48] sm:$0xff]
        %v744 = vld [vmem:[%s733 + $0x50] sm:$0xff]
        %v745 = vld [vmem:[%s733 + $0x58] sm:$0xff]
        %v746 = vld [vmem:[%s733 + $0x60] sm:$0xff]
        %v747 = vld [vmem:[%s733 + $0x68] sm:$0xff]
        %v748 = vld [vmem:[%s733 + $0x70] sm:$0xff]
        %v749 = vld [vmem:[%s733 + $0x78] sm:$0xff]
        %v750 = vld [vmem:[%s733 + $0x80] sm:$0xff]
        %v751 = vld [vmem:[%s733 + $0x88] sm:$0xff]
        %v752 = vld [vmem:[%s733 + $0x90] sm:$0xff]
        %v753 = vld [vmem:[%s733 + $0x98] sm:$0xff]
        %v754 = vld [vmem:[%s733 + $0xa0] sm:$0xff]
        %v755 = vld [vmem:[%s733 + $0xa8] sm:$0xff]
        %v759 = vunpack.c.l.b16 %v730
        %v760 = vunpack.c.h.b16 %v730
        %v761 = vunpack.c.l.b16 %v731
        %v762 = vunpack.c.h.b16 %v731
        %v763 = vunpack.c.l.b16 %v732
        %v764 = vunpack.c.h.b16 %v732
        %v765 = vpack.c.b16 %v761, %v759
        %v766 = vpack.c.b16 %v762, %v760
        %v767 = vpack.c.b16 %v763, %v763
        %v768 = vpack.c.b16 %v764, %v764
        %vm769 = vcmask 1046528
        %v770 = vrot.slane %v765, 1
        %v771 = vrot.slane %v767, 1
        %v772 = vsel %vm769, %v770, %v771
        %v773 = vrot.slane %v766, 1
        %v774 = vrot.slane %v768, 1
        %v775 = vsel %vm769, %v773, %v774
        %v799 = vunpack.c.l.b16 %v734
        %v800 = vunpack.c.h.b16 %v734
        %v801 = vunpack.c.l.b16 %v735
        %v802 = vunpack.c.h.b16 %v735
        %v803 = vunpack.c.l.b16 %v736
        %v804 = vunpack.c.h.b16 %v736
        %v805 = vunpack.c.l.b16 %v737
        %v806 = vunpack.c.h.b16 %v737
        %v807 = vunpack.c.l.b16 %v738
        %v808 = vunpack.c.h.b16 %v738
        %v809 = vunpack.c.l.b16 %v739
        %v810 = vunpack.c.h.b16 %v739
        %v811 = vunpack.c.l.b16 %v740
        %v812 = vunpack.c.h.b16 %v740
        %v813 = vunpack.c.l.b16 %v741
        %v814 = vunpack.c.h.b16 %v741
        %v815 = vunpack.c.l.b16 %v742
        %v816 = vunpack.c.h.b16 %v742
        %v817 = vunpack.c.l.b16 %v743
        %v818 = vunpack.c.h.b16 %v743
        %v819 = vunpack.c.l.b16 %v744
        %v820 = vunpack.c.h.b16 %v744
        %v821 = vunpack.c.l.b16 %v745
        %v822 = vunpack.c.h.b16 %v745
        %v823 = vunpack.c.l.b16 %v746
        %v824 = vunpack.c.h.b16 %v746
        %v825 = vunpack.c.l.b16 %v747
        %v826 = vunpack.c.h.b16 %v747
        %v827 = vunpack.c.l.b16 %v748
        %v828 = vunpack.c.h.b16 %v748
        %v829 = vunpack.c.l.b16 %v749
        %v830 = vunpack.c.h.b16 %v749
        %v831 = vunpack.c.l.b16 %v750
        %v832 = vunpack.c.h.b16 %v750
        %v833 = vunpack.c.l.b16 %v751
        %v834 = vunpack.c.h.b16 %v751
        %v835 = vunpack.c.l.b16 %v752
        %v836 = vunpack.c.h.b16 %v752
        %v837 = vunpack.c.l.b16 %v753
        %v838 = vunpack.c.h.b16 %v753
        %v839 = vunpack.c.l.b16 %v754
        %v840 = vunpack.c.h.b16 %v754
        %v841 = vunpack.c.l.b16 %v755
        %v842 = vunpack.c.h.b16 %v755
        %v843 = vpack.c.b16 %v801, %v799
        %v844 = vpack.c.b16 %v802, %v800
        %v845 = vpack.c.b16 %v805, %v803
        %v846 = vpack.c.b16 %v806, %v804
        %v847 = vpack.c.b16 %v809, %v807
        %v848 = vpack.c.b16 %v810, %v808
        %v849 = vpack.c.b16 %v813, %v811
        %v850 = vpack.c.b16 %v814, %v812
        %v851 = vpack.c.b16 %v817, %v815
        %v852 = vpack.c.b16 %v818, %v816
        %v853 = vpack.c.b16 %v821, %v819
        %v854 = vpack.c.b16 %v822, %v820
        %v855 = vpack.c.b16 %v825, %v823
        %v856 = vpack.c.b16 %v826, %v824
        %v857 = vpack.c.b16 %v829, %v827
        %v858 = vpack.c.b16 %v830, %v828
        %v859 = vpack.c.b16 %v833, %v831
        %v860 = vpack.c.b16 %v834, %v832
        %v861 = vpack.c.b16 %v837, %v835
        %v862 = vpack.c.b16 %v838, %v836
        %v863 = vpack.c.b16 %v841, %v839
        %v864 = vpack.c.b16 %v842, %v840
        %v888 = vsel %vm420, %v775, 0
        %890 = vmatpush.bf16.msra.mxu0 %v857
        %891 = vmatpush.bf16.msra.mxu0 %v855
        %892 = vmatpush.bf16.msra.mxu0 %v853
        %893 = vmatpush.bf16.msra.mxu0 %v851
        %894 = vmatpush.bf16.msra.mxu0 %v849
        %895 = vmatpush.bf16.msra.mxu0 %v847
        %896 = vmatpush.bf16.msra.mxu0 %v845
        %897 = vmatpush.bf16.msra.mxu0 %v843
        %898 = vmatmul.bf16.gmra.mxu0 %v772
        %v899 = vpop.f32.mrf.mxu0
        %v900 = vadd.f32 0.0, %v899
        %v901 = vpop.f32.mrf.mxu0
        %v902 = vadd.f32 0.0, %v901
        %903 = vdwg.mxu0
        %904 = vmatpush.bf16.msra.mxu0 0
        %905 = vmatpush.bf16.msra.mxu0 0
        %906 = vmatpush.bf16.msra.mxu0 0
        %907 = vmatpush.bf16.msra.mxu0 0
        %908 = vmatpush.bf16.msra.mxu0 0
        %909 = vmatpush.bf16.msra.mxu0 %v863
        %910 = vmatpush.bf16.msra.mxu0 %v861
        %911 = vmatpush.bf16.msra.mxu0 %v859
        %912 = vmatmul.bf16.gmra.mxu0 %v888
        %v913 = vpop.f32.mrf.mxu0
        %v914 = vadd.f32 %v900, %v913
        %v915 = vpop.f32.mrf.mxu0
        %v916 = vadd.f32 %v902, %v915
        %917 = vdwg.mxu0
        %918 = vmatpush.bf16.msra.mxu0 %v858
        %919 = vmatpush.bf16.msra.mxu0 %v856
        %920 = vmatpush.bf16.msra.mxu0 %v854
        %921 = vmatpush.bf16.msra.mxu0 %v852
        %922 = vmatpush.bf16.msra.mxu0 %v850
        %923 = vmatpush.bf16.msra.mxu0 %v848
        %924 = vmatpush.bf16.msra.mxu0 %v846
        %925 = vmatpush.bf16.msra.mxu0 %v844
        %926 = vmatmul.bf16.gmra.mxu0 %v772
        %v927 = vpop.f32.mrf.mxu0
        %v928 = vadd.f32 0.0, %v927
        %v929 = vpop.f32.mrf.mxu0
        %v930 = vadd.f32 0.0, %v929
        %931 = vdwg.mxu0
        %932 = vmatpush.bf16.msra.mxu0 0
        %933 = vmatpush.bf16.msra.mxu0 0
        %934 = vmatpush.bf16.msra.mxu0 0
        %935 = vmatpush.bf16.msra.mxu0 0
        %936 = vmatpush.bf16.msra.mxu0 0
        %937 = vmatpush.bf16.msra.mxu0 %v864
        %938 = vmatpush.bf16.msra.mxu0 %v862
        %939 = vmatpush.bf16.msra.mxu0 %v860
        %940 = vmatmul.bf16.gmra.mxu0 %v888
        %v941 = vpop.f32.mrf.mxu0
        %v942 = vadd.f32 %v928, %v941
        %v943 = vpop.f32.mrf.mxu0
        %v944 = vadd.f32 %v930, %v943
        %945 = vdwg.mxu0
        %v946 = vld [vmem:[#allocation3] sm:$0xff]
        %v947 = vld [vmem:[#allocation3 + $0x8] sm:$0xff]
        %v948 = vld [vmem:[#allocation3 + $0x10] sm:$0xff]
        %v949 = vld [vmem:[#allocation3 + $0x18] sm:$0xff]
        %v950 = vadd.f32 %v946, %v914
        %v951 = vadd.f32 %v947, %v942
        %v952 = vadd.f32 %v948, %v916
        %v953 = vadd.f32 %v949, %v944
        %954 = vst [vmem:[#allocation3] sm:$0xff] %v950
        %955 = vst [vmem:[#allocation3 + $0x8] sm:$0xff] %v951
        %956 = vst [vmem:[#allocation3 + $0x10] sm:$0xff] %v952
        %957 = vst [vmem:[#allocation3 + $0x18] sm:$0xff] %v953
        %v958 = vld [vmem:[%s275] sm:$0xee]
        %v959 = vld [vmem:[%s275 + $0x8] sm:$0xff]
        %v960 = vld [vmem:[%s275 + $0x10] sm:$0x33]
        %s961 = scalar_lea.vmem %s1, 528
        %v962 = vld [vmem:[%s961] sm:$0xff]
        %v963 = vld [vmem:[%s961 + $0x8] sm:$0xff]
        %v964 = vld [vmem:[%s961 + $0x10] sm:$0xff]
        %v965 = vld [vmem:[%s961 + $0x18] sm:$0xff]
        %v966 = vld [vmem:[%s961 + $0x20] sm:$0xff]
        %v967 = vld [vmem:[%s961 + $0x28] sm:$0xff]
        %v968 = vld [vmem:[%s961 + $0x30] sm:$0xff]
        %v969 = vld [vmem:[%s961 + $0x38] sm:$0xff]
        %v970 = vld [vmem:[%s961 + $0x40] sm:$0xff]
        %v971 = vld [vmem:[%s961 + $0x48] sm:$0xff]
        %v972 = vld [vmem:[%s961 + $0x50] sm:$0xff]
        %v973 = vld [vmem:[%s961 + $0x58] sm:$0xff]
        %v974 = vld [vmem:[%s961 + $0x60] sm:$0xff]
        %v975 = vld [vmem:[%s961 + $0x68] sm:$0xff]
        %v976 = vld [vmem:[%s961 + $0x70] sm:$0xff]
        %v977 = vld [vmem:[%s961 + $0x78] sm:$0xff]
        %v978 = vld [vmem:[%s961 + $0x80] sm:$0xff]
        %v979 = vld [vmem:[%s961 + $0x88] sm:$0xff]
        %v980 = vld [vmem:[%s961 + $0x90] sm:$0xff]
        %v981 = vld [vmem:[%s961 + $0x98] sm:$0xff]
        %v982 = vld [vmem:[%s961 + $0xa0] sm:$0xff]
        %v983 = vld [vmem:[%s961 + $0xa8] sm:$0xff]
        %v987 = vunpack.c.l.b16 %v958
        %v988 = vunpack.c.h.b16 %v958
        %v989 = vunpack.c.l.b16 %v959
        %v990 = vunpack.c.h.b16 %v959
        %v991 = vunpack.c.l.b16 %v960
        %v992 = vunpack.c.h.b16 %v960
        %v993 = vpack.c.b16 %v989, %v987
        %v994 = vpack.c.b16 %v990, %v988
        %v995 = vpack.c.b16 %v991, %v991
        %v996 = vpack.c.b16 %v992, %v992
        %vm997 = vsmask.f32 6400
        %v999 = vshrl.u32 %v993, 16
        %v1001 = vrot.slane %v999, 1
        %v1002 = vshll.u32 %v993, 16
        %v1004 = vrot.slane %v1002, 2
        %v1005 = vor.u32 %v1001, %v1004
        %v1007 = vshrl.u32 %v995, 16
        %v1009 = vrot.slane %v1007, 1
        %v1010 = vshll.u32 %v995, 16
        %v1012 = vrot.slane %v1010, 2
        %v1013 = vor.u32 %v1009, %v1012
        %v1014 = vsel %vm997, %v1005, %v1013
        %v1016 = vshrl.u32 %v994, 16
        %v1018 = vrot.slane %v1016, 1
        %v1019 = vshll.u32 %v994, 16
        %v1021 = vrot.slane %v1019, 2
        %v1022 = vor.u32 %v1018, %v1021
        %v1024 = vshrl.u32 %v996, 16
        %v1026 = vrot.slane %v1024, 1
        %v1027 = vshll.u32 %v996, 16
        %v1029 = vrot.slane %v1027, 2
        %v1030 = vor.u32 %v1026, %v1029
        %v1031 = vsel %vm997, %v1022, %v1030
        %v1055 = vunpack.c.l.b16 %v962
        %v1056 = vunpack.c.h.b16 %v962
        %v1057 = vunpack.c.l.b16 %v963
        %v1058 = vunpack.c.h.b16 %v963
        %v1059 = vunpack.c.l.b16 %v964
        %v1060 = vunpack.c.h.b16 %v964
        %v1061 = vunpack.c.l.b16 %v965
        %v1062 = vunpack.c.h.b16 %v965
        %v1063 = vunpack.c.l.b16 %v966
        %v1064 = vunpack.c.h.b16 %v966
        %v1065 = vunpack.c.l.b16 %v967
        %v1066 = vunpack.c.h.b16 %v967
        %v1067 = vunpack.c.l.b16 %v968
        %v1068 = vunpack.c.h.b16 %v968
        %v1069 = vunpack.c.l.b16 %v969
        %v1070 = vunpack.c.h.b16 %v969
        %v1071 = vunpack.c.l.b16 %v970
        %v1072 = vunpack.c.h.b16 %v970
        %v1073 = vunpack.c.l.b16 %v971
        %v1074 = vunpack.c.h.b16 %v971
        %v1075 = vunpack.c.l.b16 %v972
        %v1076 = vunpack.c.h.b16 %v972
        %v1077 = vunpack.c.l.b16 %v973
        %v1078 = vunpack.c.h.b16 %v973
        %v1079 = vunpack.c.l.b16 %v974
        %v1080 = vunpack.c.h.b16 %v974
        %v1081 = vunpack.c.l.b16 %v975
        %v1082 = vunpack.c.h.b16 %v975
        %v1083 = vunpack.c.l.b16 %v976
        %v1084 = vunpack.c.h.b16 %v976
        %v1085 = vunpack.c.l.b16 %v977
        %v1086 = vunpack.c.h.b16 %v977
        %v1087 = vunpack.c.l.b16 %v978
        %v1088 = vunpack.c.h.b16 %v978
        %v1089 = vunpack.c.l.b16 %v979
        %v1090 = vunpack.c.h.b16 %v979
        %v1091 = vunpack.c.l.b16 %v980
        %v1092 = vunpack.c.h.b16 %v980
        %v1093 = vunpack.c.l.b16 %v981
        %v1094 = vunpack.c.h.b16 %v981
        %v1095 = vunpack.c.l.b16 %v982
        %v1096 = vunpack.c.h.b16 %v982
        %v1097 = vunpack.c.l.b16 %v983
        %v1098 = vunpack.c.h.b16 %v983
        %v1099 = vpack.c.b16 %v1057, %v1055
        %v1100 = vpack.c.b16 %v1058, %v1056
        %v1101 = vpack.c.b16 %v1061, %v1059
        %v1102 = vpack.c.b16 %v1062, %v1060
        %v1103 = vpack.c.b16 %v1065, %v1063
        %v1104 = vpack.c.b16 %v1066, %v1064
        %v1105 = vpack.c.b16 %v1069, %v1067
        %v1106 = vpack.c.b16 %v1070, %v1068
        %v1107 = vpack.c.b16 %v1073, %v1071
        %v1108 = vpack.c.b16 %v1074, %v1072
        %v1109 = vpack.c.b16 %v1077, %v1075
        %v1110 = vpack.c.b16 %v1078, %v1076
        %v1111 = vpack.c.b16 %v1081, %v1079
        %v1112 = vpack.c.b16 %v1082, %v1080
        %v1113 = vpack.c.b16 %v1085, %v1083
        %v1114 = vpack.c.b16 %v1086, %v1084
        %v1115 = vpack.c.b16 %v1089, %v1087
        %v1116 = vpack.c.b16 %v1090, %v1088
        %v1117 = vpack.c.b16 %v1093, %v1091
        %v1118 = vpack.c.b16 %v1094, %v1092
        %v1119 = vpack.c.b16 %v1097, %v1095
        %v1120 = vpack.c.b16 %v1098, %v1096
        %v1144 = vsel %vm420, %v1031, 0
        %1146 = vmatpush.bf16.msra.mxu0 %v1113
        %1147 = vmatpush.bf16.msra.mxu0 %v1111
        %1148 = vmatpush.bf16.msra.mxu0 %v1109
        %1149 = vmatpush.bf16.msra.mxu0 %v1107
        %1150 = vmatpush.bf16.msra.mxu0 %v1105
        %1151 = vmatpush.bf16.msra.mxu0 %v1103
        %1152 = vmatpush.bf16.msra.mxu0 %v1101
        %1153 = vmatpush.bf16.msra.mxu0 %v1099
        %1154 = vmatmul.bf16.gmra.mxu0 %v1014
        %v1155 = vpop.f32.mrf.mxu0
        %v1156 = vadd.f32 0.0, %v1155
        %v1157 = vpop.f32.mrf.mxu0
        %v1158 = vadd.f32 0.0, %v1157
        %1159 = vdwg.mxu0
        %1160 = vmatpush.bf16.msra.mxu0 0
        %1161 = vmatpush.bf16.msra.mxu0 0
        %1162 = vmatpush.bf16.msra.mxu0 0
        %1163 = vmatpush.bf16.msra.mxu0 0
        %1164 = vmatpush.bf16.msra.mxu0 0
        %1165 = vmatpush.bf16.msra.mxu0 %v1119
        %1166 = vmatpush.bf16.msra.mxu0 %v1117
        %1167 = vmatpush.bf16.msra.mxu0 %v1115
        %1168 = vmatmul.bf16.gmra.mxu0 %v1144
        %v1169 = vpop.f32.mrf.mxu0
        %v1170 = vadd.f32 %v1156, %v1169
        %v1171 = vpop.f32.mrf.mxu0
        %v1172 = vadd.f32 %v1158, %v1171
        %1173 = vdwg.mxu0
        %1174 = vmatpush.bf16.msra.mxu0 %v1114
        %1175 = vmatpush.bf16.msra.mxu0 %v1112
        %1176 = vmatpush.bf16.msra.mxu0 %v1110
        %1177 = vmatpush.bf16.msra.mxu0 %v1108
        %1178 = vmatpush.bf16.msra.mxu0 %v1106
        %1179 = vmatpush.bf16.msra.mxu0 %v1104
        %1180 = vmatpush.bf16.msra.mxu0 %v1102
        %1181 = vmatpush.bf16.msra.mxu0 %v1100
        %1182 = vmatmul.bf16.gmra.mxu0 %v1014
        %v1183 = vpop.f32.mrf.mxu0
        %v1184 = vadd.f32 0.0, %v1183
        %v1185 = vpop.f32.mrf.mxu0
        %v1186 = vadd.f32 0.0, %v1185
        %1187 = vdwg.mxu0
        %1188 = vmatpush.bf16.msra.mxu0 0
        %1189 = vmatpush.bf16.msra.mxu0 0
        %1190 = vmatpush.bf16.msra.mxu0 0
        %1191 = vmatpush.bf16.msra.mxu0 0
        %1192 = vmatpush.bf16.msra.mxu0 0
        %1193 = vmatpush.bf16.msra.mxu0 %v1120
        %1194 = vmatpush.bf16.msra.mxu0 %v1118
        %1195 = vmatpush.bf16.msra.mxu0 %v1116
        %1196 = vmatmul.bf16.gmra.mxu0 %v1144
        %v1197 = vpop.f32.mrf.mxu0
        %v1198 = vadd.f32 %v1184, %v1197
        %v1199 = vpop.f32.mrf.mxu0
        %v1200 = vadd.f32 %v1186, %v1199
        %1201 = vdwg.mxu0
        %v1202 = vld [vmem:[#allocation3] sm:$0xff]
        %v1203 = vld [vmem:[#allocation3 + $0x8] sm:$0xff]
        %v1204 = vld [vmem:[#allocation3 + $0x10] sm:$0xff]
        %v1205 = vld [vmem:[#allocation3 + $0x18] sm:$0xff]
        %v1206 = vadd.f32 %v1202, %v1170
        %v1207 = vadd.f32 %v1203, %v1198
        %v1208 = vadd.f32 %v1204, %v1172
        %v1209 = vadd.f32 %v1205, %v1200
        %1210 = vst [vmem:[#allocation3] sm:$0xff] %v1206
        %1211 = vst [vmem:[#allocation3 + $0x8] sm:$0xff] %v1207
        %1212 = vst [vmem:[#allocation3 + $0x10] sm:$0xff] %v1208
        %1213 = vst [vmem:[#allocation3 + $0x18] sm:$0xff] %v1209
        %v1214 = vld [vmem:[%s275] sm:$0xcc]
        %v1215 = vld [vmem:[%s275 + $0x8] sm:$0xff]
        %v1216 = vld [vmem:[%s275 + $0x10] sm:$0x33]
        %s1217 = scalar_lea.vmem %s1, 704
        %v1218 = vld [vmem:[%s1217] sm:$0xff]
        %v1219 = vld [vmem:[%s1217 + $0x8] sm:$0xff]
        %v1220 = vld [vmem:[%s1217 + $0x10] sm:$0xff]
        %v1221 = vld [vmem:[%s1217 + $0x18] sm:$0xff]
        %v1222 = vld [vmem:[%s1217 + $0x20] sm:$0xff]
        %v1223 = vld [vmem:[%s1217 + $0x28] sm:$0xff]
        %v1224 = vld [vmem:[%s1217 + $0x30] sm:$0xff]
        %v1225 = vld [vmem:[%s1217 + $0x38] sm:$0xff]
        %v1226 = vld [vmem:[%s1217 + $0x40] sm:$0xff]
        %v1227 = vld [vmem:[%s1217 + $0x48] sm:$0xff]
        %v1228 = vld [vmem:[%s1217 + $0x50] sm:$0xff]
        %v1229 = vld [vmem:[%s1217 + $0x58] sm:$0xff]
        %v1230 = vld [vmem:[%s1217 + $0x60] sm:$0xff]
        %v1231 = vld [vmem:[%s1217 + $0x68] sm:$0xff]
        %v1232 = vld [vmem:[%s1217 + $0x70] sm:$0xff]
        %v1233 = vld [vmem:[%s1217 + $0x78] sm:$0xff]
        %v1234 = vld [vmem:[%s1217 + $0x80] sm:$0xff]
        %v1235 = vld [vmem:[%s1217 + $0x88] sm:$0xff]
        %v1236 = vld [vmem:[%s1217 + $0x90] sm:$0xff]
        %v1237 = vld [vmem:[%s1217 + $0x98] sm:$0xff]
        %v1238 = vld [vmem:[%s1217 + $0xa0] sm:$0xff]
        %v1239 = vld [vmem:[%s1217 + $0xa8] sm:$0xff]
        %v1243 = vunpack.c.l.b16 %v1214
        %v1244 = vunpack.c.h.b16 %v1214
        %v1245 = vunpack.c.l.b16 %v1215
        %v1246 = vunpack.c.h.b16 %v1215
        %v1247 = vunpack.c.l.b16 %v1216
        %v1248 = vunpack.c.h.b16 %v1216
        %v1249 = vpack.c.b16 %v1245, %v1243
        %v1250 = vpack.c.b16 %v1246, %v1244
        %v1251 = vpack.c.b16 %v1247, %v1247
        %v1252 = vpack.c.b16 %v1248, %v1248
        %vm1253 = vcmask 1045504
        %v1254 = vrot.slane %v1249, 2
        %v1255 = vrot.slane %v1251, 2
        %v1256 = vsel %vm1253, %v1254, %v1255
        %v1257 = vrot.slane %v1250, 2
        %v1258 = vrot.slane %v1252, 2
        %v1259 = vsel %vm1253, %v1257, %v1258
        %v1283 = vunpack.c.l.b16 %v1218
        %v1284 = vunpack.c.h.b16 %v1218
        %v1285 = vunpack.c.l.b16 %v1219
        %v1286 = vunpack.c.h.b16 %v1219
        %v1287 = vunpack.c.l.b16 %v1220
        %v1288 = vunpack.c.h.b16 %v1220
        %v1289 = vunpack.c.l.b16 %v1221
        %v1290 = vunpack.c.h.b16 %v1221
        %v1291 = vunpack.c.l.b16 %v1222
        %v1292 = vunpack.c.h.b16 %v1222
        %v1293 = vunpack.c.l.b16 %v1223
        %v1294 = vunpack.c.h.b16 %v1223
        %v1295 = vunpack.c.l.b16 %v1224
        %v1296 = vunpack.c.h.b16 %v1224
        %v1297 = vunpack.c.l.b16 %v1225
        %v1298 = vunpack.c.h.b16 %v1225
        %v1299 = vunpack.c.l.b16 %v1226
        %v1300 = vunpack.c.h.b16 %v1226
        %v1301 = vunpack.c.l.b16 %v1227
        %v1302 = vunpack.c.h.b16 %v1227
        %v1303 = vunpack.c.l.b16 %v1228
        %v1304 = vunpack.c.h.b16 %v1228
        %v1305 = vunpack.c.l.b16 %v1229
        %v1306 = vunpack.c.h.b16 %v1229
        %v1307 = vunpack.c.l.b16 %v1230
        %v1308 = vunpack.c.h.b16 %v1230
        %v1309 = vunpack.c.l.b16 %v1231
        %v1310 = vunpack.c.h.b16 %v1231
        %v1311 = vunpack.c.l.b16 %v1232
        %v1312 = vunpack.c.h.b16 %v1232
        %v1313 = vunpack.c.l.b16 %v1233
        %v1314 = vunpack.c.h.b16 %v1233
        %v1315 = vunpack.c.l.b16 %v1234
        %v1316 = vunpack.c.h.b16 %v1234
        %v1317 = vunpack.c.l.b16 %v1235
        %v1318 = vunpack.c.h.b16 %v1235
        %v1319 = vunpack.c.l.b16 %v1236
        %v1320 = vunpack.c.h.b16 %v1236
        %v1321 = vunpack.c.l.b16 %v1237
        %v1322 = vunpack.c.h.b16 %v1237
        %v1323 = vunpack.c.l.b16 %v1238
        %v1324 = vunpack.c.h.b16 %v1238
        %v1325 = vunpack.c.l.b16 %v1239
        %v1326 = vunpack.c.h.b16 %v1239
        %v1327 = vpack.c.b16 %v1285, %v1283
        %v1328 = vpack.c.b16 %v1286, %v1284
        %v1329 = vpack.c.b16 %v1289, %v1287
        %v1330 = vpack.c.b16 %v1290, %v1288
        %v1331 = vpack.c.b16 %v1293, %v1291
        %v1332 = vpack.c.b16 %v1294, %v1292
        %v1333 = vpack.c.b16 %v1297, %v1295
        %v1334 = vpack.c.b16 %v1298, %v1296
        %v1335 = vpack.c.b16 %v1301, %v1299
        %v1336 = vpack.c.b16 %v1302, %v1300
        %v1337 = vpack.c.b16 %v1305, %v1303
        %v1338 = vpack.c.b16 %v1306, %v1304
        %v1339 = vpack.c.b16 %v1309, %v1307
        %v1340 = vpack.c.b16 %v1310, %v1308
        %v1341 = vpack.c.b16 %v1313, %v1311
        %v1342 = vpack.c.b16 %v1314, %v1312
        %v1343 = vpack.c.b16 %v1317, %v1315
        %v1344 = vpack.c.b16 %v1318, %v1316
        %v1345 = vpack.c.b16 %v1321, %v1319
        %v1346 = vpack.c.b16 %v1322, %v1320
        %v1347 = vpack.c.b16 %v1325, %v1323
        %v1348 = vpack.c.b16 %v1326, %v1324
        %v1372 = vsel %vm420, %v1259, 0
        %1374 = vmatpush.bf16.msra.mxu0 %v1341
        %1375 = vmatpush.bf16.msra.mxu0 %v1339
        %1376 = vmatpush.bf16.msra.mxu0 %v1337
        %1377 = vmatpush.bf16.msra.mxu0 %v1335
        %1378 = vmatpush.bf16.msra.mxu0 %v1333
        %1379 = vmatpush.bf16.msra.mxu0 %v1331
        %1380 = vmatpush.bf16.msra.mxu0 %v1329
        %1381 = vmatpush.bf16.msra.mxu0 %v1327
        %1382 = vmatmul.bf16.gmra.mxu0 %v1256
        %v1383 = vpop.f32.mrf.mxu0
        %v1384 = vadd.f32 0.0, %v1383
        %v1385 = vpop.f32.mrf.mxu0
        %v1386 = vadd.f32 0.0, %v1385
        %1387 = vdwg.mxu0
        %1388 = vmatpush.bf16.msra.mxu0 0
        %1389 = vmatpush.bf16.msra.mxu0 0
        %1390 = vmatpush.bf16.msra.mxu0 0
        %1391 = vmatpush.bf16.msra.mxu0 0
        %1392 = vmatpush.bf16.msra.mxu0 0
        %1393 = vmatpush.bf16.msra.mxu0 %v1347
        %1394 = vmatpush.bf16.msra.mxu0 %v1345
        %1395 = vmatpush.bf16.msra.mxu0 %v1343
        %1396 = vmatmul.bf16.gmra.mxu0 %v1372
        %v1397 = vpop.f32.mrf.mxu0
        %v1398 = vadd.f32 %v1384, %v1397
        %v1399 = vpop.f32.mrf.mxu0
        %v1400 = vadd.f32 %v1386, %v1399
        %1401 = vdwg.mxu0
        %1402 = vmatpush.bf16.msra.mxu0 %v1342
        %1403 = vmatpush.bf16.msra.mxu0 %v1340
        %1404 = vmatpush.bf16.msra.mxu0 %v1338
        %1405 = vmatpush.bf16.msra.mxu0 %v1336
        %1406 = vmatpush.bf16.msra.mxu0 %v1334
        %1407 = vmatpush.bf16.msra.mxu0 %v1332
        %1408 = vmatpush.bf16.msra.mxu0 %v1330
        %1409 = vmatpush.bf16.msra.mxu0 %v1328
        %1410 = vmatmul.bf16.gmra.mxu0 %v1256
        %v1411 = vpop.f32.mrf.mxu0
        %v1412 = vadd.f32 0.0, %v1411
        %v1413 = vpop.f32.mrf.mxu0
        %v1414 = vadd.f32 0.0, %v1413
        %1415 = vdwg.mxu0
        %1416 = vmatpush.bf16.msra.mxu0 0
        %1417 = vmatpush.bf16.msra.mxu0 0
        %1418 = vmatpush.bf16.msra.mxu0 0
        %1419 = vmatpush.bf16.msra.mxu0 0
        %1420 = vmatpush.bf16.msra.mxu0 0
        %1421 = vmatpush.bf16.msra.mxu0 %v1348
        %1422 = vmatpush.bf16.msra.mxu0 %v1346
        %1423 = vmatpush.bf16.msra.mxu0 %v1344
        %1424 = vmatmul.bf16.gmra.mxu0 %v1372
        %v1425 = vpop.f32.mrf.mxu0
        %v1426 = vadd.f32 %v1412, %v1425
        %v1427 = vpop.f32.mrf.mxu0
        %v1428 = vadd.f32 %v1414, %v1427
        %1429 = vdwg.mxu0
        %v1430 = vld [vmem:[#allocation3] sm:$0xff]
        %v1431 = vld [vmem:[#allocation3 + $0x8] sm:$0xff]
        %v1432 = vld [vmem:[#allocation3 + $0x10] sm:$0xff]
        %v1433 = vld [vmem:[#allocation3 + $0x18] sm:$0xff]
        %v1434 = vadd.f32 %v1430, %v1398
        %v1435 = vadd.f32 %v1431, %v1426
        %v1436 = vadd.f32 %v1432, %v1400
        %v1437 = vadd.f32 %v1433, %v1428
        %1438 = vst [vmem:[#allocation3] sm:$0xff] %v1434
        %1439 = vst [vmem:[#allocation3 + $0x8] sm:$0xff] %v1435
        %1440 = vst [vmem:[#allocation3 + $0x10] sm:$0xff] %v1436
        %1441 = vst [vmem:[#allocation3 + $0x18] sm:$0xff] %v1437
        %v1442 = vld [vmem:[%s275] sm:$0xcc]
        %v1443 = vld [vmem:[%s275 + $0x8] sm:$0xff]
        %v1444 = vld [vmem:[%s275 + $0x10] sm:$0x77]
        %s1445 = scalar_lea.vmem %s1, 880
        %v1446 = vld [vmem:[%s1445] sm:$0xff]
        %v1447 = vld [vmem:[%s1445 + $0x8] sm:$0xff]
        %v1448 = vld [vmem:[%s1445 + $0x10] sm:$0xff]
        %v1449 = vld [vmem:[%s1445 + $0x18] sm:$0xff]
        %v1450 = vld [vmem:[%s1445 + $0x20] sm:$0xff]
        %v1451 = vld [vmem:[%s1445 + $0x28] sm:$0xff]
        %v1452 = vld [vmem:[%s1445 + $0x30] sm:$0xff]
        %v1453 = vld [vmem:[%s1445 + $0x38] sm:$0xff]
        %v1454 = vld [vmem:[%s1445 + $0x40] sm:$0xff]
        %v1455 = vld [vmem:[%s1445 + $0x48] sm:$0xff]
        %v1456 = vld [vmem:[%s1445 + $0x50] sm:$0xff]
        %v1457 = vld [vmem:[%s1445 + $0x58] sm:$0xff]
        %v1458 = vld [vmem:[%s1445 + $0x60] sm:$0xff]
        %v1459 = vld [vmem:[%s1445 + $0x68] sm:$0xff]
        %v1460 = vld [vmem:[%s1445 + $0x70] sm:$0xff]
        %v1461 = vld [vmem:[%s1445 + $0x78] sm:$0xff]
        %v1462 = vld [vmem:[%s1445 + $0x80] sm:$0xff]
        %v1463 = vld [vmem:[%s1445 + $0x88] sm:$0xff]
        %v1464 = vld [vmem:[%s1445 + $0x90] sm:$0xff]
        %v1465 = vld [vmem:[%s1445 + $0x98] sm:$0xff]
        %v1466 = vld [vmem:[%s1445 + $0xa0] sm:$0xff]
        %v1467 = vld [vmem:[%s1445 + $0xa8] sm:$0xff]
        %v1471 = vunpack.c.l.b16 %v1442
        %v1472 = vunpack.c.h.b16 %v1442
        %v1473 = vunpack.c.l.b16 %v1443
        %v1474 = vunpack.c.h.b16 %v1443
        %v1475 = vunpack.c.l.b16 %v1444
        %v1476 = vunpack.c.h.b16 %v1444
        %v1477 = vpack.c.b16 %v1473, %v1471
        %v1478 = vpack.c.b16 %v1474, %v1472
        %v1479 = vpack.c.b16 %v1475, %v1475
        %v1480 = vpack.c.b16 %v1476, %v1476
        %vm1481 = vsmask.f32 5376
        %v1483 = vshrl.u32 %v1477, 16
        %v1485 = vrot.slane %v1483, 2
        %v1486 = vshll.u32 %v1477, 16
        %v1488 = vrot.slane %v1486, 3
        %v1489 = vor.u32 %v1485, %v1488
        %v1491 = vshrl.u32 %v1479, 16
        %v1493 = vrot.slane %v1491, 2
        %v1494 = vshll.u32 %v1479, 16
        %v1496 = vrot.slane %v1494, 3
        %v1497 = vor.u32 %v1493, %v1496
        %v1498 = vsel %vm1481, %v1489, %v1497
        %v1500 = vshrl.u32 %v1478, 16
        %v1502 = vrot.slane %v1500, 2
        %v1503 = vshll.u32 %v1478, 16
        %v1505 = vrot.slane %v1503, 3
        %v1506 = vor.u32 %v1502, %v1505
        %v1508 = vshrl.u32 %v1480, 16
        %v1510 = vrot.slane %v1508, 2
        %v1511 = vshll.u32 %v1480, 16
        %v1513 = vrot.slane %v1511, 3
        %v1514 = vor.u32 %v1510, %v1513
        %v1515 = vsel %vm1481, %v1506, %v1514
        %v1539 = vunpack.c.l.b16 %v1446
        %v1540 = vunpack.c.h.b16 %v1446
        %v1541 = vunpack.c.l.b16 %v1447
        %v1542 = vunpack.c.h.b16 %v1447
        %v1543 = vunpack.c.l.b16 %v1448
        %v1544 = vunpack.c.h.b16 %v1448
        %v1545 = vunpack.c.l.b16 %v1449
        %v1546 = vunpack.c.h.b16 %v1449
        %v1547 = vunpack.c.l.b16 %v1450
        %v1548 = vunpack.c.h.b16 %v1450
        %v1549 = vunpack.c.l.b16 %v1451
        %v1550 = vunpack.c.h.b16 %v1451
        %v1551 = vunpack.c.l.b16 %v1452
        %v1552 = vunpack.c.h.b16 %v1452
        %v1553 = vunpack.c.l.b16 %v1453
        %v1554 = vunpack.c.h.b16 %v1453
        %v1555 = vunpack.c.l.b16 %v1454
        %v1556 = vunpack.c.h.b16 %v1454
        %v1557 = vunpack.c.l.b16 %v1455
        %v1558 = vunpack.c.h.b16 %v1455
        %v1559 = vunpack.c.l.b16 %v1456
        %v1560 = vunpack.c.h.b16 %v1456
        %v1561 = vunpack.c.l.b16 %v1457
        %v1562 = vunpack.c.h.b16 %v1457
        %v1563 = vunpack.c.l.b16 %v1458
        %v1564 = vunpack.c.h.b16 %v1458
        %v1565 = vunpack.c.l.b16 %v1459
        %v1566 = vunpack.c.h.b16 %v1459
        %v1567 = vunpack.c.l.b16 %v1460
        %v1568 = vunpack.c.h.b16 %v1460
        %v1569 = vunpack.c.l.b16 %v1461
        %v1570 = vunpack.c.h.b16 %v1461
        %v1571 = vunpack.c.l.b16 %v1462
        %v1572 = vunpack.c.h.b16 %v1462
        %v1573 = vunpack.c.l.b16 %v1463
        %v1574 = vunpack.c.h.b16 %v1463
        %v1575 = vunpack.c.l.b16 %v1464
        %v1576 = vunpack.c.h.b16 %v1464
        %v1577 = vunpack.c.l.b16 %v1465
        %v1578 = vunpack.c.h.b16 %v1465
        %v1579 = vunpack.c.l.b16 %v1466
        %v1580 = vunpack.c.h.b16 %v1466
        %v1581 = vunpack.c.l.b16 %v1467
        %v1582 = vunpack.c.h.b16 %v1467
        %v1583 = vpack.c.b16 %v1541, %v1539
        %v1584 = vpack.c.b16 %v1542, %v1540
        %v1585 = vpack.c.b16 %v1545, %v1543
        %v1586 = vpack.c.b16 %v1546, %v1544
        %v1587 = vpack.c.b16 %v1549, %v1547
        %v1588 = vpack.c.b16 %v1550, %v1548
        %v1589 = vpack.c.b16 %v1553, %v1551
        %v1590 = vpack.c.b16 %v1554, %v1552
        %v1591 = vpack.c.b16 %v1557, %v1555
        %v1592 = vpack.c.b16 %v1558, %v1556
        %v1593 = vpack.c.b16 %v1561, %v1559
        %v1594 = vpack.c.b16 %v1562, %v1560
        %v1595 = vpack.c.b16 %v1565, %v1563
        %v1596 = vpack.c.b16 %v1566, %v1564
        %v1597 = vpack.c.b16 %v1569, %v1567
        %v1598 = vpack.c.b16 %v1570, %v1568
        %v1599 = vpack.c.b16 %v1573, %v1571
        %v1600 = vpack.c.b16 %v1574, %v1572
        %v1601 = vpack.c.b16 %v1577, %v1575
        %v1602 = vpack.c.b16 %v1578, %v1576
        %v1603 = vpack.c.b16 %v1581, %v1579
        %v1604 = vpack.c.b16 %v1582, %v1580
        %v1628 = vsel %vm420, %v1515, 0
        %1630 = vmatpush.bf16.msra.mxu0 %v1597
        %1631 = vmatpush.bf16.msra.mxu0 %v1595
        %1632 = vmatpush.bf16.msra.mxu0 %v1593
        %1633 = vmatpush.bf16.msra.mxu0 %v1591
        %1634 = vmatpush.bf16.msra.mxu0 %v1589
        %1635 = vmatpush.bf16.msra.mxu0 %v1587
        %1636 = vmatpush.bf16.msra.mxu0 %v1585
        %1637 = vmatpush.bf16.msra.mxu0 %v1583
        %1638 = vmatmul.bf16.gmra.mxu0 %v1498
        %v1639 = vpop.f32.mrf.mxu0
        %v1640 = vadd.f32 0.0, %v1639
        %v1641 = vpop.f32.mrf.mxu0
        %v1642 = vadd.f32 0.0, %v1641
        %1643 = vdwg.mxu0
        %1644 = vmatpush.bf16.msra.mxu0 0
        %1645 = vmatpush.bf16.msra.mxu0 0
        %1646 = vmatpush.bf16.msra.mxu0 0
        %1647 = vmatpush.bf16.msra.mxu0 0
        %1648 = vmatpush.bf16.msra.mxu0 0
        %1649 = vmatpush.bf16.msra.mxu0 %v1603
        %1650 = vmatpush.bf16.msra.mxu0 %v1601
        %1651 = vmatpush.bf16.msra.mxu0 %v1599
        %1652 = vmatmul.bf16.gmra.mxu0 %v1628
        %v1653 = vpop.f32.mrf.mxu0
        %v1654 = vadd.f32 %v1640, %v1653
        %v1655 = vpop.f32.mrf.mxu0
        %v1656 = vadd.f32 %v1642, %v1655
        %1657 = vdwg.mxu0
        %1658 = vmatpush.bf16.msra.mxu0 %v1598
        %1659 = vmatpush.bf16.msra.mxu0 %v1596
        %1660 = vmatpush.bf16.msra.mxu0 %v1594
        %1661 = vmatpush.bf16.msra.mxu0 %v1592
        %1662 = vmatpush.bf16.msra.mxu0 %v1590
        %1663 = vmatpush.bf16.msra.mxu0 %v1588
        %1664 = vmatpush.bf16.msra.mxu0 %v1586
        %1665 = vmatpush.bf16.msra.mxu0 %v1584
        %1666 = vmatmul.bf16.gmra.mxu0 %v1498
        %v1667 = vpop.f32.mrf.mxu0
        %v1668 = vadd.f32 0.0, %v1667
        %v1669 = vpop.f32.mrf.mxu0
        %v1670 = vadd.f32 0.0, %v1669
        %1671 = vdwg.mxu0
        %1672 = vmatpush.bf16.msra.mxu0 0
        %1673 = vmatpush.bf16.msra.mxu0 0
        %1674 = vmatpush.bf16.msra.mxu0 0
        %1675 = vmatpush.bf16.msra.mxu0 0
        %1676 = vmatpush.bf16.msra.mxu0 0
        %1677 = vmatpush.bf16.msra.mxu0 %v1604
        %1678 = vmatpush.bf16.msra.mxu0 %v1602
        %1679 = vmatpush.bf16.msra.mxu0 %v1600
        %1680 = vmatmul.bf16.gmra.mxu0 %v1628
        %v1681 = vpop.f32.mrf.mxu0
        %v1682 = vadd.f32 %v1668, %v1681
        %v1683 = vpop.f32.mrf.mxu0
        %v1684 = vadd.f32 %v1670, %v1683
        %1685 = vdwg.mxu0
        %v1686 = vld [vmem:[#allocation3] sm:$0xff]
        %v1687 = vld [vmem:[#allocation3 + $0x8] sm:$0xff]
        %v1688 = vld [vmem:[#allocation3 + $0x10] sm:$0xff]
        %v1689 = vld [vmem:[#allocation3 + $0x18] sm:$0xff]
        %v1690 = vadd.f32 %v1686, %v1654
        %v1691 = vadd.f32 %v1687, %v1682
        %v1692 = vadd.f32 %v1688, %v1656
        %v1693 = vadd.f32 %v1689, %v1684
        %1694 = vst [vmem:[#allocation3] sm:$0xff] %v1690
        %1695 = vst [vmem:[#allocation3 + $0x8] sm:$0xff] %v1691
        %1696 = vst [vmem:[#allocation3 + $0x10] sm:$0xff] %v1692
        %1697 = vst [vmem:[#allocation3 + $0x18] sm:$0xff] %v1693
        %v1698 = vld [vmem:[%s275] sm:$0x88]
        %v1699 = vld [vmem:[%s275 + $0x8] sm:$0xff]
        %v1700 = vld [vmem:[%s275 + $0x10] sm:$0x77]
        %s1701 = scalar_lea.vmem %s1, 1056
        %v1702 = vld [vmem:[%s1701] sm:$0xff]
        %v1703 = vld [vmem:[%s1701 + $0x8] sm:$0xff]
        %v1704 = vld [vmem:[%s1701 + $0x10] sm:$0xff]
        %v1705 = vld [vmem:[%s1701 + $0x18] sm:$0xff]
        %v1706 = vld [vmem:[%s1701 + $0x20] sm:$0xff]
        %v1707 = vld [vmem:[%s1701 + $0x28] sm:$0xff]
        %v1708 = vld [vmem:[%s1701 + $0x30] sm:$0xff]
        %v1709 = vld [vmem:[%s1701 + $0x38] sm:$0xff]
        %v1710 = vld [vmem:[%s1701 + $0x40] sm:$0xff]
        %v1711 = vld [vmem:[%s1701 + $0x48] sm:$0xff]
        %v1712 = vld [vmem:[%s1701 + $0x50] sm:$0xff]
        %v1713 = vld [vmem:[%s1701 + $0x58] sm:$0xff]
        %v1714 = vld [vmem:[%s1701 + $0x60] sm:$0xff]
        %v1715 = vld [vmem:[%s1701 + $0x68] sm:$0xff]
        %v1716 = vld [vmem:[%s1701 + $0x70] sm:$0xff]
        %v1717 = vld [vmem:[%s1701 + $0x78] sm:$0xff]
        %v1718 = vld [vmem:[%s1701 + $0x80] sm:$0xff]
        %v1719 = vld [vmem:[%s1701 + $0x88] sm:$0xff]
        %v1720 = vld [vmem:[%s1701 + $0x90] sm:$0xff]
        %v1721 = vld [vmem:[%s1701 + $0x98] sm:$0xff]
        %v1722 = vld [vmem:[%s1701 + $0xa0] sm:$0xff]
        %v1723 = vld [vmem:[%s1701 + $0xa8] sm:$0xff]
        %v1727 = vunpack.c.l.b16 %v1698
        %v1728 = vunpack.c.h.b16 %v1698
        %v1729 = vunpack.c.l.b16 %v1699
        %v1730 = vunpack.c.h.b16 %v1699
        %v1731 = vunpack.c.l.b16 %v1700
        %v1732 = vunpack.c.h.b16 %v1700
        %v1733 = vpack.c.b16 %v1729, %v1727
        %v1734 = vpack.c.b16 %v1730, %v1728
        %v1735 = vpack.c.b16 %v1731, %v1731
        %v1736 = vpack.c.b16 %v1732, %v1732
        %vm1737 = vcmask 1044480
        %v1738 = vrot.slane %v1733, 3
        %v1739 = vrot.slane %v1735, 3
        %v1740 = vsel %vm1737, %v1738, %v1739
        %v1741 = vrot.slane %v1734, 3
        %v1742 = vrot.slane %v1736, 3
        %v1743 = vsel %vm1737, %v1741, %v1742
        %v1767 = vunpack.c.l.b16 %v1702
        %v1768 = vunpack.c.h.b16 %v1702
        %v1769 = vunpack.c.l.b16 %v1703
        %v1770 = vunpack.c.h.b16 %v1703
        %v1771 = vunpack.c.l.b16 %v1704
        %v1772 = vunpack.c.h.b16 %v1704
        %v1773 = vunpack.c.l.b16 %v1705
        %v1774 = vunpack.c.h.b16 %v1705
        %v1775 = vunpack.c.l.b16 %v1706
        %v1776 = vunpack.c.h.b16 %v1706
        %v1777 = vunpack.c.l.b16 %v1707
        %v1778 = vunpack.c.h.b16 %v1707
        %v1779 = vunpack.c.l.b16 %v1708
        %v1780 = vunpack.c.h.b16 %v1708
        %v1781 = vunpack.c.l.b16 %v1709
        %v1782 = vunpack.c.h.b16 %v1709
        %v1783 = vunpack.c.l.b16 %v1710
        %v1784 = vunpack.c.h.b16 %v1710
        %v1785 = vunpack.c.l.b16 %v1711
        %v1786 = vunpack.c.h.b16 %v1711
        %v1787 = vunpack.c.l.b16 %v1712
        %v1788 = vunpack.c.h.b16 %v1712
        %v1789 = vunpack.c.l.b16 %v1713
        %v1790 = vunpack.c.h.b16 %v1713
        %v1791 = vunpack.c.l.b16 %v1714
        %v1792 = vunpack.c.h.b16 %v1714
        %v1793 = vunpack.c.l.b16 %v1715
        %v1794 = vunpack.c.h.b16 %v1715
        %v1795 = vunpack.c.l.b16 %v1716
        %v1796 = vunpack.c.h.b16 %v1716
        %v1797 = vunpack.c.l.b16 %v1717
        %v1798 = vunpack.c.h.b16 %v1717
        %v1799 = vunpack.c.l.b16 %v1718
        %v1800 = vunpack.c.h.b16 %v1718
        %v1801 = vunpack.c.l.b16 %v1719
        %v1802 = vunpack.c.h.b16 %v1719
        %v1803 = vunpack.c.l.b16 %v1720
        %v1804 = vunpack.c.h.b16 %v1720
        %v1805 = vunpack.c.l.b16 %v1721
        %v1806 = vunpack.c.h.b16 %v1721
        %v1807 = vunpack.c.l.b16 %v1722
        %v1808 = vunpack.c.h.b16 %v1722
        %v1809 = vunpack.c.l.b16 %v1723
        %v1810 = vunpack.c.h.b16 %v1723
        %v1811 = vpack.c.b16 %v1769, %v1767
        %v1812 = vpack.c.b16 %v1770, %v1768
        %v1813 = vpack.c.b16 %v1773, %v1771
        %v1814 = vpack.c.b16 %v1774, %v1772
        %v1815 = vpack.c.b16 %v1777, %v1775
        %v1816 = vpack.c.b16 %v1778, %v1776
        %v1817 = vpack.c.b16 %v1781, %v1779
        %v1818 = vpack.c.b16 %v1782, %v1780
        %v1819 = vpack.c.b16 %v1785, %v1783
        %v1820 = vpack.c.b16 %v1786, %v1784
        %v1821 = vpack.c.b16 %v1789, %v1787
        %v1822 = vpack.c.b16 %v1790, %v1788
        %v1823 = vpack.c.b16 %v1793, %v1791
        %v1824 = vpack.c.b16 %v1794, %v1792
        %v1825 = vpack.c.b16 %v1797, %v1795
        %v1826 = vpack.c.b16 %v1798, %v1796
        %v1827 = vpack.c.b16 %v1801, %v1799
        %v1828 = vpack.c.b16 %v1802, %v1800
        %v1829 = vpack.c.b16 %v1805, %v1803
        %v1830 = vpack.c.b16 %v1806, %v1804
        %v1831 = vpack.c.b16 %v1809, %v1807
        %v1832 = vpack.c.b16 %v1810, %v1808
        %v1856 = vsel %vm420, %v1743, 0
        %1858 = vmatpush.bf16.msra.mxu0 %v1825
        %1859 = vmatpush.bf16.msra.mxu0 %v1823
        %1860 = vmatpush.bf16.msra.mxu0 %v1821
        %1861 = vmatpush.bf16.msra.mxu0 %v1819
        %1862 = vmatpush.bf16.msra.mxu0 %v1817
        %1863 = vmatpush.bf16.msra.mxu0 %v1815
        %1864 = vmatpush.bf16.msra.mxu0 %v1813
        %1865 = vmatpush.bf16.msra.mxu0 %v1811
        %1866 = vmatmul.bf16.gmra.mxu0 %v1740
        %v1867 = vpop.f32.mrf.mxu0
        %v1868 = vadd.f32 0.0, %v1867
        %v1869 = vpop.f32.mrf.mxu0
        %v1870 = vadd.f32 0.0, %v1869
        %1871 = vdwg.mxu0
        %1872 = vmatpush.bf16.msra.mxu0 0
        %1873 = vmatpush.bf16.msra.mxu0 0
        %1874 = vmatpush.bf16.msra.mxu0 0
        %1875 = vmatpush.bf16.msra.mxu0 0
        %1876 = vmatpush.bf16.msra.mxu0 0
        %1877 = vmatpush.bf16.msra.mxu0 %v1831
        %1878 = vmatpush.bf16.msra.mxu0 %v1829
        %1879 = vmatpush.bf16.msra.mxu0 %v1827
        %1880 = vmatmul.bf16.gmra.mxu0 %v1856
        %v1881 = vpop.f32.mrf.mxu0
        %v1882 = vadd.f32 %v1868, %v1881
        %v1883 = vpop.f32.mrf.mxu0
        %v1884 = vadd.f32 %v1870, %v1883
        %1885 = vdwg.mxu0
        %1886 = vmatpush.bf16.msra.mxu0 %v1826
        %1887 = vmatpush.bf16.msra.mxu0 %v1824
        %1888 = vmatpush.bf16.msra.mxu0 %v1822
        %1889 = vmatpush.bf16.msra.mxu0 %v1820
        %1890 = vmatpush.bf16.msra.mxu0 %v1818
        %1891 = vmatpush.bf16.msra.mxu0 %v1816
        %1892 = vmatpush.bf16.msra.mxu0 %v1814
        %1893 = vmatpush.bf16.msra.mxu0 %v1812
        %1894 = vmatmul.bf16.gmra.mxu0 %v1740
        %v1895 = vpop.f32.mrf.mxu0
        %v1896 = vadd.f32 0.0, %v1895
        %v1897 = vpop.f32.mrf.mxu0
        %v1898 = vadd.f32 0.0, %v1897
        %1899 = vdwg.mxu0
        %1900 = vmatpush.bf16.msra.mxu0 0
        %1901 = vmatpush.bf16.msra.mxu0 0
        %1902 = vmatpush.bf16.msra.mxu0 0
        %1903 = vmatpush.bf16.msra.mxu0 0
        %1904 = vmatpush.bf16.msra.mxu0 0
        %1905 = vmatpush.bf16.msra.mxu0 %v1832
        %1906 = vmatpush.bf16.msra.mxu0 %v1830
        %1907 = vmatpush.bf16.msra.mxu0 %v1828
        %1908 = vmatmul.bf16.gmra.mxu0 %v1856
        %v1909 = vpop.f32.mrf.mxu0
        %v1910 = vadd.f32 %v1896, %v1909
        %v1911 = vpop.f32.mrf.mxu0
        %v1912 = vadd.f32 %v1898, %v1911
        %1913 = vdwg.mxu0
        %v1914 = vld [vmem:[#allocation3] sm:$0xff]
        %v1915 = vld [vmem:[#allocation3 + $0x8] sm:$0xff]
        %v1916 = vld [vmem:[#allocation3 + $0x10] sm:$0xff]
        %v1917 = vld [vmem:[#allocation3 + $0x18] sm:$0xff]
        %v1918 = vadd.f32 %v1914, %v1882
        %v1919 = vadd.f32 %v1915, %v1910
        %v1920 = vadd.f32 %v1916, %v1884
        %v1921 = vadd.f32 %v1917, %v1912
        %1922 = vst [vmem:[#allocation3] sm:$0xff] %v1918
        %1923 = vst [vmem:[#allocation3 + $0x8] sm:$0xff] %v1919
        %1924 = vst [vmem:[#allocation3 + $0x10] sm:$0xff] %v1920
        %1925 = vst [vmem:[#allocation3 + $0x18] sm:$0xff] %v1921
        %v1926 = vld [vmem:[#allocation3] sm:$0xff]
        %v1927 = vld [vmem:[#allocation3 + $0x8] sm:$0xff]
        %v1928 = vld [vmem:[#allocation3 + $0x10] sm:$0xff]
        %v1929 = vld [vmem:[#allocation3 + $0x18] sm:$0xff]
        %v1930 = vld [vmem:[%s2] sm:$0x3]
        %v1932 = vperm.slane %v1930, 0
        %v1933 = vperm.slane %v1930, 1
        %v1936 = vadd.f32 %v1926, %v1932
        %v1937 = vadd.f32 %v1927, %v1933
        %v1938 = vadd.f32 %v1928, %v1932
        %v1939 = vadd.f32 %v1929, %v1933
        %v1940 = vmax.f32 %v1936, 0.0
        %v1941 = vmax.f32 %v1937, 0.0
        %v1942 = vmax.f32 %v1938, 0.0
        %v1943 = vmax.f32 %v1939, 0.0
        %1944 = vst [vmem:[#allocation2] sm:$0xff] 0
        %vm1945 = vcmask 781312
        %1946 = vst.msk [vmem:[#allocation2 + $0x8] sm:$0xf] %vm1945, 0
        %1947 = vst [vmem:[#allocation2 + $0xc] sm:$0xff] 0
        %1948 = vst.msk [vmem:[#allocation2 + $0x14] sm:$0xf] %vm1945, 0
        %1949 = vst [vmem:[#allocation2 + $0x18] sm:$0x77] 0
        %vm1950 = vcmask 780288
        %1951 = vst.msk [vmem:[#allocation2 + $0x20] sm:$0x7] %vm1950, 0
        %v1952 = vpack.c.bf16 %v1941, %v1940
        %v1953 = vpack.c.bf16 %v1943, %v1942
        %vm1954 = vsmask.f32 1280
        %vm1955 = vsmask.f32 5392
        %vm1956 = vmor %vm1954, %vm1955
        %v1958 = vshrl.u32 %v1952, 16
        %v1960 = vrot.slane %v1958, 6
        %v1961 = vshll.u32 %v1952, 16
        %v1963 = vrot.slane %v1961, 7
        %v1964 = vor.u32 %v1960, %v1963
        %v1965 = vrot.slane %v1964, 4
        %v1967 = vshrl.u32 %v1953, 16
        %v1969 = vrot.slane %v1967, 6
        %v1970 = vshll.u32 %v1953, 16
        %v1972 = vrot.slane %v1970, 7
        %v1973 = vor.u32 %v1969, %v1972
        %v1974 = vsel %vm1956, %v1965, %v1973
        %v1975 = vrot.slane %v1973, 4
        %1976 = vrot.lane.b32.xlu0 %v1964, 48
        %v1977 = vpop.permute.xlu0 %1976
        %1978 = vrot.lane.b32.xlu0 %v1974, 48
        %v1979 = vpop.permute.xlu0 %1978
        %1980 = vrot.lane.b32.xlu0 %v1975, 48
        %v1981 = vpop.permute.xlu0 %1980
        %v1982 = vrot.slane %v1977, 4
        %v1983 = vrot.slane %v1979, 4
        %v1984 = vrot.slane %v1981, 4
        %vm1985 = vcmask 392192
        %v1986 = vsel %vm1985, %v1982, %v1977
        %v1987 = vsel %vm1985, %v1983, %v1979
        %v1988 = vsel %vm1985, %v1984, %v1981
        %vm1995 = vcmask 1043841
        %vm1996 = vsmask.f32 7942
        %vm1997 = vmand %vm1995, %vm1996
        %vm1998 = vcmask 1047557
        %vm1999 = vsmask.f32 7958
        %vm2000 = vmand %vm1998, %vm1999
        %vm2001 = vmor %vm2000, %vm1997
        %v2002 = vld [vmem:[#allocation2] sm:$0xee]
        %v2003 = vsel %vm2001, %v1986, %v2002
        %2004 = vst [vmem:[#allocation2] sm:$0xee] %v2003
        %vm2005 = vcmask 388097
        %vm2006 = vmand %vm2005, %vm1996
        %v2007 = vld [vmem:[#allocation2 + $0x8] sm:$0xe]
        %v2008 = vsel %vm2006, %v1982, %v2007
        %2009 = vst [vmem:[#allocation2 + $0x8] sm:$0xe] %v2008
        %vm2010 = vcmask 1043840
        %vm2011 = vcmask 1047556
        %vm2012 = vmor %vm2011, %vm2010
        %2013 = vst.msk [vmem:[#allocation2 + $0xc] sm:$0xff] %vm2012, %v1987
        %vm2014 = vcmask 388096
        %2015 = vst.msk [vmem:[#allocation2 + $0x14] sm:$0xf] %vm2014, %v1983
        %vm2016 = vcmask 1041792
        %vm2017 = vmand %vm2016, %vm1954
        %vm2018 = vcmask 1045508
        %vm2019 = vmand %vm2018, %vm1481
        %vm2020 = vmor %vm2019, %vm2017
        %v2021 = vld [vmem:[#allocation2 + $0x18] sm:$0x33]
        %v2022 = vsel %vm2020, %v1988, %v2021
        %2023 = vst [vmem:[#allocation2 + $0x18] sm:$0x33] %v2022
        %vm2024 = vcmask 386048
        %vm2025 = vmand %vm2024, %vm1954
        %v2026 = vld [vmem:[#allocation2 + $0x20] sm:$0x3]
        %v2027 = vsel %vm2025, %v1984, %v2026
        %2028 = vst [vmem:[#allocation2 + $0x20] sm:$0x3] %v2027
        %v2029 = vld [vmem:[#allocation2] sm:$0xff]
        %v2030 = vld [vmem:[#allocation2 + $0x8] sm:$0xf]
        %v2031 = vld [vmem:[#allocation2 + $0xc] sm:$0xff]
        %v2032 = vld [vmem:[#allocation2 + $0x14] sm:$0xf]
        %v2033 = vld [vmem:[%s3] sm:$0xff]
        %v2034 = vld [vmem:[%s3 + $0x8] sm:$0xff]
        %v2035 = vld [vmem:[%s3 + $0x10] sm:$0xff]
        %v2036 = vld [vmem:[%s3 + $0x18] sm:$0xff]
        %v2037 = vld [vmem:[%s3 + $0x20] sm:$0xff]
        %v2038 = vld [vmem:[%s3 + $0x28] sm:$0xff]
        %v2039 = vld [vmem:[%s3 + $0x30] sm:$0xff]
        %v2040 = vld [vmem:[%s3 + $0x38] sm:$0xff]
        %v2041 = vld [vmem:[%s3 + $0x40] sm:$0xff]
        %v2042 = vld [vmem:[%s3 + $0x48] sm:$0xff]
        %v2043 = vld [vmem:[%s3 + $0x50] sm:$0xff]
        %v2044 = vld [vmem:[%s3 + $0x58] sm:$0xff]
        %v2045 = vld [vmem:[%s3 + $0x60] sm:$0xff]
        %v2046 = vld [vmem:[%s3 + $0x68] sm:$0xff]
        %v2047 = vld [vmem:[%s3 + $0x70] sm:$0xff]
        %v2048 = vld [vmem:[%s3 + $0x78] sm:$0xff]
        %v2049 = vld [vmem:[%s3 + $0x80] sm:$0xff]
        %v2050 = vld [vmem:[%s3 + $0x88] sm:$0xff]
        %v2051 = vld [vmem:[%s3 + $0x90] sm:$0xff]
        %v2052 = vld [vmem:[%s3 + $0x98] sm:$0xff]
        %v2053 = vld [vmem:[%s3 + $0xa0] sm:$0xff]
        %v2054 = vld [vmem:[%s3 + $0xa8] sm:$0xff]
        %v2055 = vld [vmem:[%s3 + $0xb0] sm:$0xff]
        %v2056 = vld [vmem:[%s3 + $0xb8] sm:$0xff]
        %v2057 = vld [vmem:[%s3 + $0xc0] sm:$0xff]
        %v2058 = vld [vmem:[%s3 + $0xc8] sm:$0xff]
        %v2059 = vld [vmem:[%s3 + $0xd0] sm:$0xff]
        %v2060 = vld [vmem:[%s3 + $0xd8] sm:$0xff]
        %v2061 = vld [vmem:[%s3 + $0xe0] sm:$0xff]
        %v2062 = vld [vmem:[%s3 + $0xe8] sm:$0xff]
        %v2063 = vld [vmem:[%s3 + $0xf0] sm:$0xff]
        %v2064 = vld [vmem:[%s3 + $0xf8] sm:$0xff]
        %v2065 = vld [vmem:[%s3 + $0x100] sm:$0xff]
        %v2066 = vld [vmem:[%s3 + $0x108] sm:$0xff]
        %v2067 = vld [vmem:[%s3 + $0x110] sm:$0xff]
        %v2068 = vld [vmem:[%s3 + $0x118] sm:$0xff]
        %v2069 = vld [vmem:[%s3 + $0x120] sm:$0xff]
        %v2070 = vld [vmem:[%s3 + $0x128] sm:$0xff]
        %v2071 = vld [vmem:[%s3 + $0x130] sm:$0xff]
        %v2072 = vld [vmem:[%s3 + $0x138] sm:$0xff]
        %v2073 = vld [vmem:[%s3 + $0x140] sm:$0xff]
        %v2074 = vld [vmem:[%s3 + $0x148] sm:$0xff]
        %v2075 = vld [vmem:[%s3 + $0x150] sm:$0xff]
        %v2076 = vld [vmem:[%s3 + $0x158] sm:$0xff]
        %v2077 = vld [vmem:[%s3 + $0x160] sm:$0xff]
        %v2078 = vld [vmem:[%s3 + $0x168] sm:$0xff]
        %v2079 = vld [vmem:[%s3 + $0x170] sm:$0xff]
        %v2080 = vld [vmem:[%s3 + $0x178] sm:$0xff]
        %v2081 = vld [vmem:[%s3 + $0x180] sm:$0xff]
        %v2082 = vld [vmem:[%s3 + $0x188] sm:$0xff]
        %v2083 = vld [vmem:[%s3 + $0x190] sm:$0xff]
        %v2084 = vld [vmem:[%s3 + $0x198] sm:$0xff]
        %v2085 = vld [vmem:[%s3 + $0x1a0] sm:$0xff]
        %v2086 = vld [vmem:[%s3 + $0x1a8] sm:$0xff]
        %v2087 = vld [vmem:[%s3 + $0x1b0] sm:$0xff]
        %v2088 = vld [vmem:[%s3 + $0x1b8] sm:$0xff]
        %v2089 = vld [vmem:[%s3 + $0x1c0] sm:$0xff]
        %v2090 = vld [vmem:[%s3 + $0x1c8] sm:$0xff]
        %v2091 = vld [vmem:[%s3 + $0x1d0] sm:$0xff]
        %v2092 = vld [vmem:[%s3 + $0x1d8] sm:$0xff]
        %v2093 = vld [vmem:[%s3 + $0x1e0] sm:$0xff]
        %v2094 = vld [vmem:[%s3 + $0x1e8] sm:$0xff]
        %v2095 = vld [vmem:[%s3 + $0x1f0] sm:$0xff]
        %v2096 = vld [vmem:[%s3 + $0x1f8] sm:$0xff]
        %v2097 = vld [vmem:[%s3 + $0x200] sm:$0xff]
        %v2098 = vld [vmem:[%s3 + $0x208] sm:$0xff]
        %v2099 = vld [vmem:[%s3 + $0x210] sm:$0xff]
        %v2100 = vld [vmem:[%s3 + $0x218] sm:$0xff]
        %v2101 = vld [vmem:[%s3 + $0x220] sm:$0xff]
        %v2102 = vld [vmem:[%s3 + $0x228] sm:$0xff]
        %v2103 = vld [vmem:[%s3 + $0x230] sm:$0xff]
        %v2104 = vld [vmem:[%s3 + $0x238] sm:$0xff]
        %v2105 = vld [vmem:[%s3 + $0x240] sm:$0xff]
        %v2106 = vld [vmem:[%s3 + $0x248] sm:$0xff]
        %v2107 = vld [vmem:[%s3 + $0x250] sm:$0xff]
        %v2108 = vld [vmem:[%s3 + $0x258] sm:$0xff]
        %v2109 = vld [vmem:[%s3 + $0x260] sm:$0xff]
        %v2110 = vld [vmem:[%s3 + $0x268] sm:$0xff]
        %v2111 = vld [vmem:[%s3 + $0x270] sm:$0xff]
        %v2112 = vld [vmem:[%s3 + $0x278] sm:$0xff]
        %v2113 = vld [vmem:[%s3 + $0x280] sm:$0xff]
        %v2114 = vld [vmem:[%s3 + $0x288] sm:$0xff]
        %v2115 = vld [vmem:[%s3 + $0x290] sm:$0xff]
        %v2116 = vld [vmem:[%s3 + $0x298] sm:$0xff]
        %v2117 = vld [vmem:[%s3 + $0x2a0] sm:$0xff]
        %v2118 = vld [vmem:[%s3 + $0x2a8] sm:$0xff]
        %v2119 = vld [vmem:[%s3 + $0x2b0] sm:$0xff]
        %v2120 = vld [vmem:[%s3 + $0x2b8] sm:$0xff]
        %v2125 = vunpack.c.l.b16 %v2029
        %v2126 = vunpack.c.h.b16 %v2029
        %v2127 = vunpack.c.l.b16 %v2030
        %v2128 = vunpack.c.l.b16 %v2031
        %v2129 = vunpack.c.h.b16 %v2031
        %v2130 = vunpack.c.l.b16 %v2032
        %v2131 = vpack.c.b16 %v2128, %v2125
        %v2132 = vpack.c.b16 %v2129, %v2126
        %v2133 = vpack.c.b16 %v2130, %v2127
        %v2224 = vunpack.c.l.b16 %v2033
        %v2225 = vunpack.c.h.b16 %v2033
        %v2226 = vunpack.c.l.b16 %v2034
        %v2227 = vunpack.c.h.b16 %v2034
        %v2228 = vunpack.c.l.b16 %v2035
        %v2229 = vunpack.c.h.b16 %v2035
        %v2230 = vunpack.c.l.b16 %v2036
        %v2231 = vunpack.c.h.b16 %v2036
        %v2232 = vunpack.c.l.b16 %v2037
        %v2233 = vunpack.c.h.b16 %v2037
        %v2234 = vunpack.c.l.b16 %v2038
        %v2235 = vunpack.c.h.b16 %v2038
        %v2236 = vunpack.c.l.b16 %v2039
        %v2237 = vunpack.c.h.b16 %v2039
        %v2238 = vunpack.c.l.b16 %v2040
        %v2239 = vunpack.c.h.b16 %v2040
        %v2240 = vunpack.c.l.b16 %v2041
        %v2241 = vunpack.c.h.b16 %v2041
        %v2242 = vunpack.c.l.b16 %v2042
        %v2243 = vunpack.c.h.b16 %v2042
        %v2244 = vunpack.c.l.b16 %v2043
        %v2245 = vunpack.c.h.b16 %v2043
        %v2246 = vunpack.c.l.b16 %v2044
        %v2247 = vunpack.c.h.b16 %v2044
        %v2248 = vunpack.c.l.b16 %v2045
        %v2249 = vunpack.c.h.b16 %v2045
        %v2250 = vunpack.c.l.b16 %v2046
        %v2251 = vunpack.c.h.b16 %v2046
        %v2252 = vunpack.c.l.b16 %v2047
        %v2253 = vunpack.c.h.b16 %v2047
        %v2254 = vunpack.c.l.b16 %v2048
        %v2255 = vunpack.c.h.b16 %v2048
        %v2256 = vunpack.c.l.b16 %v2049
        %v2257 = vunpack.c.h.b16 %v2049
        %v2258 = vunpack.c.l.b16 %v2050
        %v2259 = vunpack.c.h.b16 %v2050
        %v2260 = vunpack.c.l.b16 %v2051
        %v2261 = vunpack.c.h.b16 %v2051
        %v2262 = vunpack.c.l.b16 %v2052
        %v2263 = vunpack.c.h.b16 %v2052
        %v2264 = vunpack.c.l.b16 %v2053
        %v2265 = vunpack.c.h.b16 %v2053
        %v2266 = vunpack.c.l.b16 %v2054
        %v2267 = vunpack.c.h.b16 %v2054
        %v2268 = vunpack.c.l.b16 %v2055
        %v2269 = vunpack.c.h.b16 %v2055
        %v2270 = vunpack.c.l.b16 %v2056
        %v2271 = vunpack.c.h.b16 %v2056
        %v2272 = vunpack.c.l.b16 %v2057
        %v2273 = vunpack.c.h.b16 %v2057
        %v2274 = vunpack.c.l.b16 %v2058
        %v2275 = vunpack.c.h.b16 %v2058
        %v2276 = vunpack.c.l.b16 %v2059
        %v2277 = vunpack.c.h.b16 %v2059
        %v2278 = vunpack.c.l.b16 %v2060
        %v2279 = vunpack.c.h.b16 %v2060
        %v2280 = vunpack.c.l.b16 %v2061
        %v2281 = vunpack.c.h.b16 %v2061
        %v2282 = vunpack.c.l.b16 %v2062
        %v2283 = vunpack.c.h.b16 %v2062
        %v2284 = vunpack.c.l.b16 %v2063
        %v2285 = vunpack.c.h.b16 %v2063
        %v2286 = vunpack.c.l.b16 %v2064
        %v2287 = vunpack.c.h.b16 %v2064
        %v2288 = vunpack.c.l.b16 %v2065
        %v2289 = vunpack.c.h.b16 %v2065
        %v2290 = vunpack.c.l.b16 %v2066
        %v2291 = vunpack.c.h.b16 %v2066
        %v2292 = vunpack.c.l.b16 %v2067
        %v2293 = vunpack.c.h.b16 %v2067
        %v2294 = vunpack.c.l.b16 %v2068
        %v2295 = vunpack.c.h.b16 %v2068
        %v2296 = vunpack.c.l.b16 %v2069
        %v2297 = vunpack.c.h.b16 %v2069
        %v2298 = vunpack.c.l.b16 %v2070
        %v2299 = vunpack.c.h.b16 %v2070
        %v2300 = vunpack.c.l.b16 %v2071
        %v2301 = vunpack.c.h.b16 %v2071
        %v2302 = vunpack.c.l.b16 %v2072
        %v2303 = vunpack.c.h.b16 %v2072
        %v2304 = vunpack.c.l.b16 %v2073
        %v2305 = vunpack.c.h.b16 %v2073
        %v2306 = vunpack.c.l.b16 %v2074
        %v2307 = vunpack.c.h.b16 %v2074
        %v2308 = vunpack.c.l.b16 %v2075
        %v2309 = vunpack.c.h.b16 %v2075
        %v2310 = vunpack.c.l.b16 %v2076
        %v2311 = vunpack.c.h.b16 %v2076
        %v2312 = vunpack.c.l.b16 %v2077
        %v2313 = vunpack.c.h.b16 %v2077
        %v2314 = vunpack.c.l.b16 %v2078
        %v2315 = vunpack.c.h.b16 %v2078
        %v2316 = vunpack.c.l.b16 %v2079
        %v2317 = vunpack.c.h.b16 %v2079
        %v2318 = vunpack.c.l.b16 %v2080
        %v2319 = vunpack.c.h.b16 %v2080
        %v2320 = vunpack.c.l.b16 %v2081
        %v2321 = vunpack.c.h.b16 %v2081
        %v2322 = vunpack.c.l.b16 %v2082
        %v2323 = vunpack.c.h.b16 %v2082
        %v2324 = vunpack.c.l.b16 %v2083
        %v2325 = vunpack.c.h.b16 %v2083
        %v2326 = vunpack.c.l.b16 %v2084
        %v2327 = vunpack.c.h.b16 %v2084
        %v2328 = vunpack.c.l.b16 %v2085
        %v2329 = vunpack.c.h.b16 %v2085
        %v2330 = vunpack.c.l.b16 %v2086
        %v2331 = vunpack.c.h.b16 %v2086
        %v2332 = vunpack.c.l.b16 %v2087
        %v2333 = vunpack.c.h.b16 %v2087
        %v2334 = vunpack.c.l.b16 %v2088
        %v2335 = vunpack.c.h.b16 %v2088
        %v2336 = vunpack.c.l.b16 %v2089
        %v2337 = vunpack.c.h.b16 %v2089
        %v2338 = vunpack.c.l.b16 %v2090
        %v2339 = vunpack.c.h.b16 %v2090
        %v2340 = vunpack.c.l.b16 %v2091
        %v2341 = vunpack.c.h.b16 %v2091
        %v2342 = vunpack.c.l.b16 %v2092
        %v2343 = vunpack.c.h.b16 %v2092
        %v2344 = vunpack.c.l.b16 %v2093
        %v2345 = vunpack.c.h.b16 %v2093
        %v2346 = vunpack.c.l.b16 %v2094
        %v2347 = vunpack.c.h.b16 %v2094
        %v2348 = vunpack.c.l.b16 %v2095
        %v2349 = vunpack.c.h.b16 %v2095
        %v2350 = vunpack.c.l.b16 %v2096
        %v2351 = vunpack.c.h.b16 %v2096
        %v2352 = vunpack.c.l.b16 %v2097
        %v2353 = vunpack.c.h.b16 %v2097
        %v2354 = vunpack.c.l.b16 %v2098
        %v2355 = vunpack.c.h.b16 %v2098
        %v2356 = vunpack.c.l.b16 %v2099
        %v2357 = vunpack.c.h.b16 %v2099
        %v2358 = vunpack.c.l.b16 %v2100
        %v2359 = vunpack.c.h.b16 %v2100
        %v2360 = vunpack.c.l.b16 %v2101
        %v2361 = vunpack.c.h.b16 %v2101
        %v2362 = vunpack.c.l.b16 %v2102
        %v2363 = vunpack.c.h.b16 %v2102
        %v2364 = vunpack.c.l.b16 %v2103
        %v2365 = vunpack.c.h.b16 %v2103
        %v2366 = vunpack.c.l.b16 %v2104
        %v2367 = vunpack.c.h.b16 %v2104
        %v2368 = vunpack.c.l.b16 %v2105
        %v2369 = vunpack.c.h.b16 %v2105
        %v2370 = vunpack.c.l.b16 %v2106
        %v2371 = vunpack.c.h.b16 %v2106
        %v2372 = vunpack.c.l.b16 %v2107
        %v2373 = vunpack.c.h.b16 %v2107
        %v2374 = vunpack.c.l.b16 %v2108
        %v2375 = vunpack.c.h.b16 %v2108
        %v2376 = vunpack.c.l.b16 %v2109
        %v2377 = vunpack.c.h.b16 %v2109
        %v2378 = vunpack.c.l.b16 %v2110
        %v2379 = vunpack.c.h.b16 %v2110
        %v2380 = vunpack.c.l.b16 %v2111
        %v2381 = vunpack.c.h.b16 %v2111
        %v2382 = vunpack.c.l.b16 %v2112
        %v2383 = vunpack.c.h.b16 %v2112
        %v2384 = vunpack.c.l.b16 %v2113
        %v2385 = vunpack.c.h.b16 %v2113
        %v2386 = vunpack.c.l.b16 %v2114
        %v2387 = vunpack.c.h.b16 %v2114
        %v2388 = vunpack.c.l.b16 %v2115
        %v2389 = vunpack.c.h.b16 %v2115
        %v2390 = vunpack.c.l.b16 %v2116
        %v2391 = vunpack.c.h.b16 %v2116
        %v2392 = vunpack.c.l.b16 %v2117
        %v2393 = vunpack.c.h.b16 %v2117
        %v2394 = vunpack.c.l.b16 %v2118
        %v2395 = vunpack.c.h.b16 %v2118
        %v2396 = vunpack.c.l.b16 %v2119
        %v2397 = vunpack.c.h.b16 %v2119
        %v2398 = vunpack.c.l.b16 %v2120
        %v2399 = vunpack.c.h.b16 %v2120
        %v2400 = vpack.c.b16 %v2228, %v2224
        %v2401 = vpack.c.b16 %v2229, %v2225
        %v2402 = vpack.c.b16 %v2230, %v2226
        %v2403 = vpack.c.b16 %v2231, %v2227
        %v2404 = vpack.c.b16 %v2236, %v2232
        %v2405 = vpack.c.b16 %v2237, %v2233
        %v2406 = vpack.c.b16 %v2238, %v2234
        %v2407 = vpack.c.b16 %v2239, %v2235
        %v2408 = vpack.c.b16 %v2244, %v2240
        %v2409 = vpack.c.b16 %v2245, %v2241
        %v2410 = vpack.c.b16 %v2246, %v2242
        %v2411 = vpack.c.b16 %v2247, %v2243
        %v2412 = vpack.c.b16 %v2252, %v2248
        %v2413 = vpack.c.b16 %v2253, %v2249
        %v2414 = vpack.c.b16 %v2254, %v2250
        %v2415 = vpack.c.b16 %v2255, %v2251
        %v2416 = vpack.c.b16 %v2260, %v2256
        %v2417 = vpack.c.b16 %v2261, %v2257
        %v2418 = vpack.c.b16 %v2262, %v2258
        %v2419 = vpack.c.b16 %v2263, %v2259
        %v2420 = vpack.c.b16 %v2268, %v2264
        %v2421 = vpack.c.b16 %v2269, %v2265
        %v2422 = vpack.c.b16 %v2270, %v2266
        %v2423 = vpack.c.b16 %v2271, %v2267
        %v2424 = vpack.c.b16 %v2276, %v2272
        %v2425 = vpack.c.b16 %v2277, %v2273
        %v2426 = vpack.c.b16 %v2278, %v2274
        %v2427 = vpack.c.b16 %v2279, %v2275
        %v2428 = vpack.c.b16 %v2284, %v2280
        %v2429 = vpack.c.b16 %v2285, %v2281
        %v2430 = vpack.c.b16 %v2286, %v2282
        %v2431 = vpack.c.b16 %v2287, %v2283
        %v2432 = vpack.c.b16 %v2292, %v2288
        %v2433 = vpack.c.b16 %v2293, %v2289
        %v2434 = vpack.c.b16 %v2294, %v2290
        %v2435 = vpack.c.b16 %v2295, %v2291
        %v2436 = vpack.c.b16 %v2300, %v2296
        %v2437 = vpack.c.b16 %v2301, %v2297
        %v2438 = vpack.c.b16 %v2302, %v2298
        %v2439 = vpack.c.b16 %v2303, %v2299
        %v2440 = vpack.c.b16 %v2308, %v2304
        %v2441 = vpack.c.b16 %v2309, %v2305
        %v2442 = vpack.c.b16 %v2310, %v2306
        %v2443 = vpack.c.b16 %v2311, %v2307
        %v2444 = vpack.c.b16 %v2316, %v2312
        %v2445 = vpack.c.b16 %v2317, %v2313
        %v2446 = vpack.c.b16 %v2318, %v2314
        %v2447 = vpack.c.b16 %v2319, %v2315
        %v2448 = vpack.c.b16 %v2324, %v2320
        %v2449 = vpack.c.b16 %v2325, %v2321
        %v2450 = vpack.c.b16 %v2326, %v2322
        %v2451 = vpack.c.b16 %v2327, %v2323
        %v2452 = vpack.c.b16 %v2332, %v2328
        %v2453 = vpack.c.b16 %v2333, %v2329
        %v2454 = vpack.c.b16 %v2334, %v2330
        %v2455 = vpack.c.b16 %v2335, %v2331
        %v2456 = vpack.c.b16 %v2340, %v2336
        %v2457 = vpack.c.b16 %v2341, %v2337
        %v2458 = vpack.c.b16 %v2342, %v2338
        %v2459 = vpack.c.b16 %v2343, %v2339
        %v2460 = vpack.c.b16 %v2348, %v2344
        %v2461 = vpack.c.b16 %v2349, %v2345
        %v2462 = vpack.c.b16 %v2350, %v2346
        %v2463 = vpack.c.b16 %v2351, %v2347
        %v2464 = vpack.c.b16 %v2356, %v2352
        %v2465 = vpack.c.b16 %v2357, %v2353
        %v2466 = vpack.c.b16 %v2358, %v2354
        %v2467 = vpack.c.b16 %v2359, %v2355
        %v2468 = vpack.c.b16 %v2364, %v2360
        %v2469 = vpack.c.b16 %v2365, %v2361
        %v2470 = vpack.c.b16 %v2366, %v2362
        %v2471 = vpack.c.b16 %v2367, %v2363
        %v2472 = vpack.c.b16 %v2372, %v2368
        %v2473 = vpack.c.b16 %v2373, %v2369
        %v2474 = vpack.c.b16 %v2374, %v2370
        %v2475 = vpack.c.b16 %v2375, %v2371
        %v2476 = vpack.c.b16 %v2380, %v2376
        %v2477 = vpack.c.b16 %v2381, %v2377
        %v2478 = vpack.c.b16 %v2382, %v2378
        %v2479 = vpack.c.b16 %v2383, %v2379
        %v2480 = vpack.c.b16 %v2388, %v2384
        %v2481 = vpack.c.b16 %v2389, %v2385
        %v2482 = vpack.c.b16 %v2390, %v2386
        %v2483 = vpack.c.b16 %v2391, %v2387
        %v2484 = vpack.c.b16 %v2396, %v2392
        %v2485 = vpack.c.b16 %v2397, %v2393
        %v2486 = vpack.c.b16 %v2398, %v2394
        %v2487 = vpack.c.b16 %v2399, %v2395
        %vm2576 = vcmask 785408
        %v2578 = vsel %vm2576, %v2133, 0
        %2580 = vmatpush.bf16.msra.mxu0 %v2428
        %2581 = vmatpush.bf16.msra.mxu0 %v2424
        %2582 = vmatpush.bf16.msra.mxu0 %v2420
        %2583 = vmatpush.bf16.msra.mxu0 %v2416
        %2584 = vmatpush.bf16.msra.mxu0 %v2412
        %2585 = vmatpush.bf16.msra.mxu0 %v2408
        %2586 = vmatpush.bf16.msra.mxu0 %v2404
        %2587 = vmatpush.bf16.msra.mxu0 %v2400
        %2588 = vmatmul.bf16.gmra.mxu0 %v2131
        %v2589 = vpop.f32.mrf.mxu0
        %v2590 = vadd.f32 0.0, %v2589
        %v2591 = vpop.f32.mrf.mxu0
        %v2592 = vadd.f32 0.0, %v2591
        %2593 = vdwg.mxu0
        %2594 = vmatpush.bf16.msra.mxu0 %v2460
        %2595 = vmatpush.bf16.msra.mxu0 %v2456
        %2596 = vmatpush.bf16.msra.mxu0 %v2452
        %2597 = vmatpush.bf16.msra.mxu0 %v2448
        %2598 = vmatpush.bf16.msra.mxu0 %v2444
        %2599 = vmatpush.bf16.msra.mxu0 %v2440
        %2600 = vmatpush.bf16.msra.mxu0 %v2436
        %2601 = vmatpush.bf16.msra.mxu0 %v2432
        %2602 = vmatmul.bf16.gmra.mxu0 %v2132
        %v2603 = vpop.f32.mrf.mxu0
        %v2604 = vadd.f32 %v2590, %v2603
        %v2605 = vpop.f32.mrf.mxu0
        %v2606 = vadd.f32 %v2592, %v2605
        %2607 = vdwg.mxu0
        %2608 = vmatpush.bf16.msra.mxu0 0
        %2609 = vmatpush.bf16.msra.mxu0 0
        %2610 = vmatpush.bf16.msra.mxu0 %v2484
        %2611 = vmatpush.bf16.msra.mxu0 %v2480
        %2612 = vmatpush.bf16.msra.mxu0 %v2476
        %2613 = vmatpush.bf16.msra.mxu0 %v2472
        %2614 = vmatpush.bf16.msra.mxu0 %v2468
        %2615 = vmatpush.bf16.msra.mxu0 %v2464
        %2616 = vmatmul.bf16.gmra.mxu0 %v2578
        %v2617 = vpop.f32.mrf.mxu0
        %v2618 = vadd.f32 %v2604, %v2617
        %v2619 = vpop.f32.mrf.mxu0
        %v2620 = vadd.f32 %v2606, %v2619
        %2621 = vdwg.mxu0
        %2622 = vmatpush.bf16.msra.mxu0 %v2429
        %2623 = vmatpush.bf16.msra.mxu0 %v2425
        %2624 = vmatpush.bf16.msra.mxu0 %v2421
        %2625 = vmatpush.bf16.msra.mxu0 %v2417
        %2626 = vmatpush.bf16.msra.mxu0 %v2413
        %2627 = vmatpush.bf16.msra.mxu0 %v2409
        %2628 = vmatpush.bf16.msra.mxu0 %v2405
        %2629 = vmatpush.bf16.msra.mxu0 %v2401
        %2630 = vmatmul.bf16.gmra.mxu0 %v2131
        %v2631 = vpop.f32.mrf.mxu0
        %v2632 = vadd.f32 0.0, %v2631
        %v2633 = vpop.f32.mrf.mxu0
        %v2634 = vadd.f32 0.0, %v2633
        %2635 = vdwg.mxu0
        %2636 = vmatpush.bf16.msra.mxu0 %v2461
        %2637 = vmatpush.bf16.msra.mxu0 %v2457
        %2638 = vmatpush.bf16.msra.mxu0 %v2453
        %2639 = vmatpush.bf16.msra.mxu0 %v2449
        %2640 = vmatpush.bf16.msra.mxu0 %v2445
        %2641 = vmatpush.bf16.msra.mxu0 %v2441
        %2642 = vmatpush.bf16.msra.mxu0 %v2437
        %2643 = vmatpush.bf16.msra.mxu0 %v2433
        %2644 = vmatmul.bf16.gmra.mxu0 %v2132
        %v2645 = vpop.f32.mrf.mxu0
        %v2646 = vadd.f32 %v2632, %v2645
        %v2647 = vpop.f32.mrf.mxu0
        %v2648 = vadd.f32 %v2634, %v2647
        %2649 = vdwg.mxu0
        %2650 = vmatpush.bf16.msra.mxu0 0
        %2651 = vmatpush.bf16.msra.mxu0 0
        %2652 = vmatpush.bf16.msra.mxu0 %v2485
        %2653 = vmatpush.bf16.msra.mxu0 %v2481
        %2654 = vmatpush.bf16.msra.mxu0 %v2477
        %2655 = vmatpush.bf16.msra.mxu0 %v2473
        %2656 = vmatpush.bf16.msra.mxu0 %v2469
        %2657 = vmatpush.bf16.msra.mxu0 %v2465
        %2658 = vmatmul.bf16.gmra.mxu0 %v2578
        %v2659 = vpop.f32.mrf.mxu0
        %v2660 = vadd.f32 %v2646, %v2659
        %v2661 = vpop.f32.mrf.mxu0
        %v2662 = vadd.f32 %v2648, %v2661
        %2663 = vdwg.mxu0
        %2664 = vmatpush.bf16.msra.mxu0 %v2430
        %2665 = vmatpush.bf16.msra.mxu0 %v2426
        %2666 = vmatpush.bf16.msra.mxu0 %v2422
        %2667 = vmatpush.bf16.msra.mxu0 %v2418
        %2668 = vmatpush.bf16.msra.mxu0 %v2414
        %2669 = vmatpush.bf16.msra.mxu0 %v2410
        %2670 = vmatpush.bf16.msra.mxu0 %v2406
        %2671 = vmatpush.bf16.msra.mxu0 %v2402
        %2672 = vmatmul.bf16.gmra.mxu0 %v2131
        %v2673 = vpop.f32.mrf.mxu0
        %v2674 = vadd.f32 0.0, %v2673
        %v2675 = vpop.f32.mrf.mxu0
        %v2676 = vadd.f32 0.0, %v2675
        %2677 = vdwg.mxu0
        %2678 = vmatpush.bf16.msra.mxu0 %v2462
        %2679 = vmatpush.bf16.msra.mxu0 %v2458
        %2680 = vmatpush.bf16.msra.mxu0 %v2454
        %2681 = vmatpush.bf16.msra.mxu0 %v2450
        %2682 = vmatpush.bf16.msra.mxu0 %v2446
        %2683 = vmatpush.bf16.msra.mxu0 %v2442
        %2684 = vmatpush.bf16.msra.mxu0 %v2438
        %2685 = vmatpush.bf16.msra.mxu0 %v2434
        %2686 = vmatmul.bf16.gmra.mxu0 %v2132
        %v2687 = vpop.f32.mrf.mxu0
        %v2688 = vadd.f32 %v2674, %v2687
        %v2689 = vpop.f32.mrf.mxu0
        %v2690 = vadd.f32 %v2676, %v2689
        %2691 = vdwg.mxu0
        %2692 = vmatpush.bf16.msra.mxu0 0
        %2693 = vmatpush.bf16.msra.mxu0 0
        %2694 = vmatpush.bf16.msra.mxu0 %v2486
        %2695 = vmatpush.bf16.msra.mxu0 %v2482
        %2696 = vmatpush.bf16.msra.mxu0 %v2478
        %2697 = vmatpush.bf16.msra.mxu0 %v2474
        %2698 = vmatpush.bf16.msra.mxu0 %v2470
        %2699 = vmatpush.bf16.msra.mxu0 %v2466
        %2700 = vmatmul.bf16.gmra.mxu0 %v2578
        %v2701 = vpop.f32.mrf.mxu0
        %v2702 = vadd.f32 %v2688, %v2701
        %v2703 = vpop.f32.mrf.mxu0
        %v2704 = vadd.f32 %v2690, %v2703
        %2705 = vdwg.mxu0
        %2706 = vmatpush.bf16.msra.mxu0 %v2431
        %2707 = vmatpush.bf16.msra.mxu0 %v2427
        %2708 = vmatpush.bf16.msra.mxu0 %v2423
        %2709 = vmatpush.bf16.msra.mxu0 %v2419
        %2710 = vmatpush.bf16.msra.mxu0 %v2415
        %2711 = vmatpush.bf16.msra.mxu0 %v2411
        %2712 = vmatpush.bf16.msra.mxu0 %v2407
        %2713 = vmatpush.bf16.msra.mxu0 %v2403
        %2714 = vmatmul.bf16.gmra.mxu0 %v2131
        %v2715 = vpop.f32.mrf.mxu0
        %v2716 = vadd.f32 0.0, %v2715
        %v2717 = vpop.f32.mrf.mxu0
        %v2718 = vadd.f32 0.0, %v2717
        %2719 = vdwg.mxu0
        %2720 = vmatpush.bf16.msra.mxu0 %v2463
        %2721 = vmatpush.bf16.msra.mxu0 %v2459
        %2722 = vmatpush.bf16.msra.mxu0 %v2455
        %2723 = vmatpush.bf16.msra.mxu0 %v2451
        %2724 = vmatpush.bf16.msra.mxu0 %v2447
        %2725 = vmatpush.bf16.msra.mxu0 %v2443
        %2726 = vmatpush.bf16.msra.mxu0 %v2439
        %2727 = vmatpush.bf16.msra.mxu0 %v2435
        %2728 = vmatmul.bf16.gmra.mxu0 %v2132
        %v2729 = vpop.f32.mrf.mxu0
        %v2730 = vadd.f32 %v2716, %v2729
        %v2731 = vpop.f32.mrf.mxu0
        %v2732 = vadd.f32 %v2718, %v2731
        %2733 = vdwg.mxu0
        %2734 = vmatpush.bf16.msra.mxu0 0
        %2735 = vmatpush.bf16.msra.mxu0 0
        %2736 = vmatpush.bf16.msra.mxu0 %v2487
        %2737 = vmatpush.bf16.msra.mxu0 %v2483
        %2738 = vmatpush.bf16.msra.mxu0 %v2479
        %2739 = vmatpush.bf16.msra.mxu0 %v2475
        %2740 = vmatpush.bf16.msra.mxu0 %v2471
        %2741 = vmatpush.bf16.msra.mxu0 %v2467
        %2742 = vmatmul.bf16.gmra.mxu0 %v2578
        %v2743 = vpop.f32.mrf.mxu0
        %v2744 = vadd.f32 %v2730, %v2743
        %v2745 = vpop.f32.mrf.mxu0
        %v2746 = vadd.f32 %v2732, %v2745
        %2747 = vdwg.mxu0
        %2748 = vst [vmem:[#allocation4] sm:$0xff] %v2618
        %2749 = vst [vmem:[#allocation4 + $0x8] sm:$0xff] %v2660
        %2750 = vst [vmem:[#allocation4 + $0x10] sm:$0xff] %v2702
        %2751 = vst [vmem:[#allocation4 + $0x18] sm:$0xff] %v2744
        %2752 = vst [vmem:[#allocation4 + $0x20] sm:$0xff] %v2620
        %2753 = vst [vmem:[#allocation4 + $0x28] sm:$0xff] %v2662
        %2754 = vst [vmem:[#allocation4 + $0x30] sm:$0xff] %v2704
        %2755 = vst [vmem:[#allocation4 + $0x38] sm:$0xff] %v2746
        %v2756 = vld [vmem:[#allocation2] sm:$0xff]
        %v2757 = vld [vmem:[#allocation2 + $0x8] sm:$0xf]
        %v2758 = vld [vmem:[#allocation2 + $0xc] sm:$0xff]
        %v2759 = vld [vmem:[#allocation2 + $0x14] sm:$0xf]
        %v2760 = vld [vmem:[#allocation2 + $0x18] sm:$0x11]
        %v2761 = vld [vmem:[#allocation2 + $0x20] sm:$0x1]
        %s2762 = scalar_lea.vmem %s3, 704
        %v2763 = vld [vmem:[%s2762] sm:$0xff]
        %v2764 = vld [vmem:[%s2762 + $0x8] sm:$0xff]
        %v2765 = vld [vmem:[%s2762 + $0x10] sm:$0xff]
        %v2766 = vld [vmem:[%s2762 + $0x18] sm:$0xff]
        %v2767 = vld [vmem:[%s2762 + $0x20] sm:$0xff]
        %v2768 = vld [vmem:[%s2762 + $0x28] sm:$0xff]
        %v2769 = vld [vmem:[%s2762 + $0x30] sm:$0xff]
        %v2770 = vld [vmem:[%s2762 + $0x38] sm:$0xff]
        %v2771 = vld [vmem:[%s2762 + $0x40] sm:$0xff]
        %v2772 = vld [vmem:[%s2762 + $0x48] sm:$0xff]
        %v2773 = vld [vmem:[%s2762 + $0x50] sm:$0xff]
        %v2774 = vld [vmem:[%s2762 + $0x58] sm:$0xff]
        %v2775 = vld [vmem:[%s2762 + $0x60] sm:$0xff]
        %v2776 = vld [vmem:[%s2762 + $0x68] sm:$0xff]
        %v2777 = vld [vmem:[%s2762 + $0x70] sm:$0xff]
        %v2778 = vld [vmem:[%s2762 + $0x78] sm:$0xff]
        %v2779 = vld [vmem:[%s2762 + $0x80] sm:$0xff]
        %v2780 = vld [vmem:[%s2762 + $0x88] sm:$0xff]
        %v2781 = vld [vmem:[%s2762 + $0x90] sm:$0xff]
        %v2782 = vld [vmem:[%s2762 + $0x98] sm:$0xff]
        %v2783 = vld [vmem:[%s2762 + $0xa0] sm:$0xff]
        %v2784 = vld [vmem:[%s2762 + $0xa8] sm:$0xff]
        %v2785 = vld [vmem:[%s2762 + $0xb0] sm:$0xff]
        %v2786 = vld [vmem:[%s2762 + $0xb8] sm:$0xff]
        %v2787 = vld [vmem:[%s2762 + $0xc0] sm:$0xff]
        %v2788 = vld [vmem:[%s2762 + $0xc8] sm:$0xff]
        %v2789 = vld [vmem:[%s2762 + $0xd0] sm:$0xff]
        %v2790 = vld [vmem:[%s2762 + $0xd8] sm:$0xff]
        %v2791 = vld [vmem:[%s2762 + $0xe0] sm:$0xff]
        %v2792 = vld [vmem:[%s2762 + $0xe8] sm:$0xff]
        %v2793 = vld [vmem:[%s2762 + $0xf0] sm:$0xff]
        %v2794 = vld [vmem:[%s2762 + $0xf8] sm:$0xff]
        %v2795 = vld [vmem:[%s2762 + $0x100] sm:$0xff]
        %v2796 = vld [vmem:[%s2762 + $0x108] sm:$0xff]
        %v2797 = vld [vmem:[%s2762 + $0x110] sm:$0xff]
        %v2798 = vld [vmem:[%s2762 + $0x118] sm:$0xff]
        %v2799 = vld [vmem:[%s2762 + $0x120] sm:$0xff]
        %v2800 = vld [vmem:[%s2762 + $0x128] sm:$0xff]
        %v2801 = vld [vmem:[%s2762 + $0x130] sm:$0xff]
        %v2802 = vld [vmem:[%s2762 + $0x138] sm:$0xff]
        %v2803 = vld [vmem:[%s2762 + $0x140] sm:$0xff]
        %v2804 = vld [vmem:[%s2762 + $0x148] sm:$0xff]
        %v2805 = vld [vmem:[%s2762 + $0x150] sm:$0xff]
        %v2806 = vld [vmem:[%s2762 + $0x158] sm:$0xff]
        %v2807 = vld [vmem:[%s2762 + $0x160] sm:$0xff]
        %v2808 = vld [vmem:[%s2762 + $0x168] sm:$0xff]
        %v2809 = vld [vmem:[%s2762 + $0x170] sm:$0xff]
        %v2810 = vld [vmem:[%s2762 + $0x178] sm:$0xff]
        %v2811 = vld [vmem:[%s2762 + $0x180] sm:$0xff]
        %v2812 = vld [vmem:[%s2762 + $0x188] sm:$0xff]
        %v2813 = vld [vmem:[%s2762 + $0x190] sm:$0xff]
        %v2814 = vld [vmem:[%s2762 + $0x198] sm:$0xff]
        %v2815 = vld [vmem:[%s2762 + $0x1a0] sm:$0xff]
        %v2816 = vld [vmem:[%s2762 + $0x1a8] sm:$0xff]
        %v2817 = vld [vmem:[%s2762 + $0x1b0] sm:$0xff]
        %v2818 = vld [vmem:[%s2762 + $0x1b8] sm:$0xff]
        %v2819 = vld [vmem:[%s2762 + $0x1c0] sm:$0xff]
        %v2820 = vld [vmem:[%s2762 + $0x1c8] sm:$0xff]
        %v2821 = vld [vmem:[%s2762 + $0x1d0] sm:$0xff]
        %v2822 = vld [vmem:[%s2762 + $0x1d8] sm:$0xff]
        %v2823 = vld [vmem:[%s2762 + $0x1e0] sm:$0xff]
        %v2824 = vld [vmem:[%s2762 + $0x1e8] sm:$0xff]
        %v2825 = vld [vmem:[%s2762 + $0x1f0] sm:$0xff]
        %v2826 = vld [vmem:[%s2762 + $0x1f8] sm:$0xff]
        %v2827 = vld [vmem:[%s2762 + $0x200] sm:$0xff]
        %v2828 = vld [vmem:[%s2762 + $0x208] sm:$0xff]
        %v2829 = vld [vmem:[%s2762 + $0x210] sm:$0xff]
        %v2830 = vld [vmem:[%s2762 + $0x218] sm:$0xff]
        %v2831 = vld [vmem:[%s2762 + $0x220] sm:$0xff]
        %v2832 = vld [vmem:[%s2762 + $0x228] sm:$0xff]
        %v2833 = vld [vmem:[%s2762 + $0x230] sm:$0xff]
        %v2834 = vld [vmem:[%s2762 + $0x238] sm:$0xff]
        %v2835 = vld [vmem:[%s2762 + $0x240] sm:$0xff]
        %v2836 = vld [vmem:[%s2762 + $0x248] sm:$0xff]
        %v2837 = vld [vmem:[%s2762 + $0x250] sm:$0xff]
        %v2838 = vld [vmem:[%s2762 + $0x258] sm:$0xff]
        %v2839 = vld [vmem:[%s2762 + $0x260] sm:$0xff]
        %v2840 = vld [vmem:[%s2762 + $0x268] sm:$0xff]
        %v2841 = vld [vmem:[%s2762 + $0x270] sm:$0xff]
        %v2842 = vld [vmem:[%s2762 + $0x278] sm:$0xff]
        %v2843 = vld [vmem:[%s2762 + $0x280] sm:$0xff]
        %v2844 = vld [vmem:[%s2762 + $0x288] sm:$0xff]
        %v2845 = vld [vmem:[%s2762 + $0x290] sm:$0xff]
        %v2846 = vld [vmem:[%s2762 + $0x298] sm:$0xff]
        %v2847 = vld [vmem:[%s2762 + $0x2a0] sm:$0xff]
        %v2848 = vld [vmem:[%s2762 + $0x2a8] sm:$0xff]
        %v2849 = vld [vmem:[%s2762 + $0x2b0] sm:$0xff]
        %v2850 = vld [vmem:[%s2762 + $0x2b8] sm:$0xff]
        %v2857 = vunpack.c.l.b16 %v2756
        %v2858 = vunpack.c.h.b16 %v2756
        %v2859 = vunpack.c.l.b16 %v2757
        %v2860 = vunpack.c.l.b16 %v2758
        %v2861 = vunpack.c.h.b16 %v2758
        %v2862 = vunpack.c.l.b16 %v2759
        %v2863 = vunpack.c.l.b16 %v2760
        %v2864 = vunpack.c.h.b16 %v2760
        %v2865 = vunpack.c.l.b16 %v2761
        %v2866 = vpack.c.b16 %v2860, %v2857
        %v2867 = vpack.c.b16 %v2861, %v2858
        %v2868 = vpack.c.b16 %v2862, %v2859
        %v2869 = vpack.c.b16 %v2863, %v2863
        %v2870 = vpack.c.b16 %v2864, %v2864
        %v2871 = vpack.c.b16 %v2865, %v2865
        %v2873 = vshrl.u32 %v2866, 16
        %v2875 = vshll.u32 %v2866, 16
        %v2877 = vrot.slane %v2875, 1
        %v2878 = vor.u32 %v2873, %v2877
        %v2880 = vshll.u32 %v2869, 16
        %v2882 = vrot.slane %v2880, 1
        %v2883 = vsel %vm523, %v2878, %v2882
        %v2885 = vshrl.u32 %v2867, 16
        %v2887 = vshll.u32 %v2867, 16
        %v2889 = vrot.slane %v2887, 1
        %v2890 = vor.u32 %v2885, %v2889
        %v2892 = vshll.u32 %v2870, 16
        %v2894 = vrot.slane %v2892, 1
        %v2895 = vsel %vm523, %v2890, %v2894
        %v2897 = vshrl.u32 %v2868, 16
        %v2899 = vshll.u32 %v2868, 16
        %v2901 = vrot.slane %v2899, 1
        %v2902 = vor.u32 %v2897, %v2901
        %v2904 = vshll.u32 %v2871, 16
        %v2906 = vrot.slane %v2904, 1
        %v2907 = vsel %vm523, %v2902, %v2906
        %v2998 = vunpack.c.l.b16 %v2763
        %v2999 = vunpack.c.h.b16 %v2763
        %v3000 = vunpack.c.l.b16 %v2764
        %v3001 = vunpack.c.h.b16 %v2764
        %v3002 = vunpack.c.l.b16 %v2765
        %v3003 = vunpack.c.h.b16 %v2765
        %v3004 = vunpack.c.l.b16 %v2766
        %v3005 = vunpack.c.h.b16 %v2766
        %v3006 = vunpack.c.l.b16 %v2767
        %v3007 = vunpack.c.h.b16 %v2767
        %v3008 = vunpack.c.l.b16 %v2768
        %v3009 = vunpack.c.h.b16 %v2768
        %v3010 = vunpack.c.l.b16 %v2769
        %v3011 = vunpack.c.h.b16 %v2769
        %v3012 = vunpack.c.l.b16 %v2770
        %v3013 = vunpack.c.h.b16 %v2770
        %v3014 = vunpack.c.l.b16 %v2771
        %v3015 = vunpack.c.h.b16 %v2771
        %v3016 = vunpack.c.l.b16 %v2772
        %v3017 = vunpack.c.h.b16 %v2772
        %v3018 = vunpack.c.l.b16 %v2773
        %v3019 = vunpack.c.h.b16 %v2773
        %v3020 = vunpack.c.l.b16 %v2774
        %v3021 = vunpack.c.h.b16 %v2774
        %v3022 = vunpack.c.l.b16 %v2775
        %v3023 = vunpack.c.h.b16 %v2775
        %v3024 = vunpack.c.l.b16 %v2776
        %v3025 = vunpack.c.h.b16 %v2776
        %v3026 = vunpack.c.l.b16 %v2777
        %v3027 = vunpack.c.h.b16 %v2777
        %v3028 = vunpack.c.l.b16 %v2778
        %v3029 = vunpack.c.h.b16 %v2778
        %v3030 = vunpack.c.l.b16 %v2779
        %v3031 = vunpack.c.h.b16 %v2779
        %v3032 = vunpack.c.l.b16 %v2780
        %v3033 = vunpack.c.h.b16 %v2780
        %v3034 = vunpack.c.l.b16 %v2781
        %v3035 = vunpack.c.h.b16 %v2781
        %v3036 = vunpack.c.l.b16 %v2782
        %v3037 = vunpack.c.h.b16 %v2782
        %v3038 = vunpack.c.l.b16 %v2783
        %v3039 = vunpack.c.h.b16 %v2783
        %v3040 = vunpack.c.l.b16 %v2784
        %v3041 = vunpack.c.h.b16 %v2784
        %v3042 = vunpack.c.l.b16 %v2785
        %v3043 = vunpack.c.h.b16 %v2785
        %v3044 = vunpack.c.l.b16 %v2786
        %v3045 = vunpack.c.h.b16 %v2786
        %v3046 = vunpack.c.l.b16 %v2787
        %v3047 = vunpack.c.h.b16 %v2787
        %v3048 = vunpack.c.l.b16 %v2788
        %v3049 = vunpack.c.h.b16 %v2788
        %v3050 = vunpack.c.l.b16 %v2789
        %v3051 = vunpack.c.h.b16 %v2789
        %v3052 = vunpack.c.l.b16 %v2790
        %v3053 = vunpack.c.h.b16 %v2790
        %v3054 = vunpack.c.l.b16 %v2791
        %v3055 = vunpack.c.h.b16 %v2791
        %v3056 = vunpack.c.l.b16 %v2792
        %v3057 = vunpack.c.h.b16 %v2792
        %v3058 = vunpack.c.l.b16 %v2793
        %v3059 = vunpack.c.h.b16 %v2793
        %v3060 = vunpack.c.l.b16 %v2794
        %v3061 = vunpack.c.h.b16 %v2794
        %v3062 = vunpack.c.l.b16 %v2795
        %v3063 = vunpack.c.h.b16 %v2795
        %v3064 = vunpack.c.l.b16 %v2796
        %v3065 = vunpack.c.h.b16 %v2796
        %v3066 = vunpack.c.l.b16 %v2797
        %v3067 = vunpack.c.h.b16 %v2797
        %v3068 = vunpack.c.l.b16 %v2798
        %v3069 = vunpack.c.h.b16 %v2798
        %v3070 = vunpack.c.l.b16 %v2799
        %v3071 = vunpack.c.h.b16 %v2799
        %v3072 = vunpack.c.l.b16 %v2800
        %v3073 = vunpack.c.h.b16 %v2800
        %v3074 = vunpack.c.l.b16 %v2801
        %v3075 = vunpack.c.h.b16 %v2801
        %v3076 = vunpack.c.l.b16 %v2802
        %v3077 = vunpack.c.h.b16 %v2802
        %v3078 = vunpack.c.l.b16 %v2803
        %v3079 = vunpack.c.h.b16 %v2803
        %v3080 = vunpack.c.l.b16 %v2804
        %v3081 = vunpack.c.h.b16 %v2804
        %v3082 = vunpack.c.l.b16 %v2805
        %v3083 = vunpack.c.h.b16 %v2805
        %v3084 = vunpack.c.l.b16 %v2806
        %v3085 = vunpack.c.h.b16 %v2806
        %v3086 = vunpack.c.l.b16 %v2807
        %v3087 = vunpack.c.h.b16 %v2807
        %v3088 = vunpack.c.l.b16 %v2808
        %v3089 = vunpack.c.h.b16 %v2808
        %v3090 = vunpack.c.l.b16 %v2809
        %v3091 = vunpack.c.h.b16 %v2809
        %v3092 = vunpack.c.l.b16 %v2810
        %v3093 = vunpack.c.h.b16 %v2810
        %v3094 = vunpack.c.l.b16 %v2811
        %v3095 = vunpack.c.h.b16 %v2811
        %v3096 = vunpack.c.l.b16 %v2812
        %v3097 = vunpack.c.h.b16 %v2812
        %v3098 = vunpack.c.l.b16 %v2813
        %v3099 = vunpack.c.h.b16 %v2813
        %v3100 = vunpack.c.l.b16 %v2814
        %v3101 = vunpack.c.h.b16 %v2814
        %v3102 = vunpack.c.l.b16 %v2815
        %v3103 = vunpack.c.h.b16 %v2815
        %v3104 = vunpack.c.l.b16 %v2816
        %v3105 = vunpack.c.h.b16 %v2816
        %v3106 = vunpack.c.l.b16 %v2817
        %v3107 = vunpack.c.h.b16 %v2817
        %v3108 = vunpack.c.l.b16 %v2818
        %v3109 = vunpack.c.h.b16 %v2818
        %v3110 = vunpack.c.l.b16 %v2819
        %v3111 = vunpack.c.h.b16 %v2819
        %v3112 = vunpack.c.l.b16 %v2820
        %v3113 = vunpack.c.h.b16 %v2820
        %v3114 = vunpack.c.l.b16 %v2821
        %v3115 = vunpack.c.h.b16 %v2821
        %v3116 = vunpack.c.l.b16 %v2822
        %v3117 = vunpack.c.h.b16 %v2822
        %v3118 = vunpack.c.l.b16 %v2823
        %v3119 = vunpack.c.h.b16 %v2823
        %v3120 = vunpack.c.l.b16 %v2824
        %v3121 = vunpack.c.h.b16 %v2824
        %v3122 = vunpack.c.l.b16 %v2825
        %v3123 = vunpack.c.h.b16 %v2825
        %v3124 = vunpack.c.l.b16 %v2826
        %v3125 = vunpack.c.h.b16 %v2826
        %v3126 = vunpack.c.l.b16 %v2827
        %v3127 = vunpack.c.h.b16 %v2827
        %v3128 = vunpack.c.l.b16 %v2828
        %v3129 = vunpack.c.h.b16 %v2828
        %v3130 = vunpack.c.l.b16 %v2829
        %v3131 = vunpack.c.h.b16 %v2829
        %v3132 = vunpack.c.l.b16 %v2830
        %v3133 = vunpack.c.h.b16 %v2830
        %v3134 = vunpack.c.l.b16 %v2831
        %v3135 = vunpack.c.h.b16 %v2831
        %v3136 = vunpack.c.l.b16 %v2832
        %v3137 = vunpack.c.h.b16 %v2832
        %v3138 = vunpack.c.l.b16 %v2833
        %v3139 = vunpack.c.h.b16 %v2833
        %v3140 = vunpack.c.l.b16 %v2834
        %v3141 = vunpack.c.h.b16 %v2834
        %v3142 = vunpack.c.l.b16 %v2835
        %v3143 = vunpack.c.h.b16 %v2835
        %v3144 = vunpack.c.l.b16 %v2836
        %v3145 = vunpack.c.h.b16 %v2836
        %v3146 = vunpack.c.l.b16 %v2837
        %v3147 = vunpack.c.h.b16 %v2837
        %v3148 = vunpack.c.l.b16 %v2838
        %v3149 = vunpack.c.h.b16 %v2838
        %v3150 = vunpack.c.l.b16 %v2839
        %v3151 = vunpack.c.h.b16 %v2839
        %v3152 = vunpack.c.l.b16 %v2840
        %v3153 = vunpack.c.h.b16 %v2840
        %v3154 = vunpack.c.l.b16 %v2841
        %v3155 = vunpack.c.h.b16 %v2841
        %v3156 = vunpack.c.l.b16 %v2842
        %v3157 = vunpack.c.h.b16 %v2842
        %v3158 = vunpack.c.l.b16 %v2843
        %v3159 = vunpack.c.h.b16 %v2843
        %v3160 = vunpack.c.l.b16 %v2844
        %v3161 = vunpack.c.h.b16 %v2844
        %v3162 = vunpack.c.l.b16 %v2845
        %v3163 = vunpack.c.h.b16 %v2845
        %v3164 = vunpack.c.l.b16 %v2846
        %v3165 = vunpack.c.h.b16 %v2846
        %v3166 = vunpack.c.l.b16 %v2847
        %v3167 = vunpack.c.h.b16 %v2847
        %v3168 = vunpack.c.l.b16 %v2848
        %v3169 = vunpack.c.h.b16 %v2848
        %v3170 = vunpack.c.l.b16 %v2849
        %v3171 = vunpack.c.h.b16 %v2849
        %v3172 = vunpack.c.l.b16 %v2850
        %v3173 = vunpack.c.h.b16 %v2850
        %v3174 = vpack.c.b16 %v3002, %v2998
        %v3175 = vpack.c.b16 %v3003, %v2999
        %v3176 = vpack.c.b16 %v3004, %v3000
        %v3177 = vpack.c.b16 %v3005, %v3001
        %v3178 = vpack.c.b16 %v3010, %v3006
        %v3179 = vpack.c.b16 %v3011, %v3007
        %v3180 = vpack.c.b16 %v3012, %v3008
        %v3181 = vpack.c.b16 %v3013, %v3009
        %v3182 = vpack.c.b16 %v3018, %v3014
        %v3183 = vpack.c.b16 %v3019, %v3015
        %v3184 = vpack.c.b16 %v3020, %v3016
        %v3185 = vpack.c.b16 %v3021, %v3017
        %v3186 = vpack.c.b16 %v3026, %v3022
        %v3187 = vpack.c.b16 %v3027, %v3023
        %v3188 = vpack.c.b16 %v3028, %v3024
        %v3189 = vpack.c.b16 %v3029, %v3025
        %v3190 = vpack.c.b16 %v3034, %v3030
        %v3191 = vpack.c.b16 %v3035, %v3031
        %v3192 = vpack.c.b16 %v3036, %v3032
        %v3193 = vpack.c.b16 %v3037, %v3033
        %v3194 = vpack.c.b16 %v3042, %v3038
        %v3195 = vpack.c.b16 %v3043, %v3039
        %v3196 = vpack.c.b16 %v3044, %v3040
        %v3197 = vpack.c.b16 %v3045, %v3041
        %v3198 = vpack.c.b16 %v3050, %v3046
        %v3199 = vpack.c.b16 %v3051, %v3047
        %v3200 = vpack.c.b16 %v3052, %v3048
        %v3201 = vpack.c.b16 %v3053, %v3049
        %v3202 = vpack.c.b16 %v3058, %v3054
        %v3203 = vpack.c.b16 %v3059, %v3055
        %v3204 = vpack.c.b16 %v3060, %v3056
        %v3205 = vpack.c.b16 %v3061, %v3057
        %v3206 = vpack.c.b16 %v3066, %v3062
        %v3207 = vpack.c.b16 %v3067, %v3063
        %v3208 = vpack.c.b16 %v3068, %v3064
        %v3209 = vpack.c.b16 %v3069, %v3065
        %v3210 = vpack.c.b16 %v3074, %v3070
        %v3211 = vpack.c.b16 %v3075, %v3071
        %v3212 = vpack.c.b16 %v3076, %v3072
        %v3213 = vpack.c.b16 %v3077, %v3073
        %v3214 = vpack.c.b16 %v3082, %v3078
        %v3215 = vpack.c.b16 %v3083, %v3079
        %v3216 = vpack.c.b16 %v3084, %v3080
        %v3217 = vpack.c.b16 %v3085, %v3081
        %v3218 = vpack.c.b16 %v3090, %v3086
        %v3219 = vpack.c.b16 %v3091, %v3087
        %v3220 = vpack.c.b16 %v3092, %v3088
        %v3221 = vpack.c.b16 %v3093, %v3089
        %v3222 = vpack.c.b16 %v3098, %v3094
        %v3223 = vpack.c.b16 %v3099, %v3095
        %v3224 = vpack.c.b16 %v3100, %v3096
        %v3225 = vpack.c.b16 %v3101, %v3097
        %v3226 = vpack.c.b16 %v3106, %v3102
        %v3227 = vpack.c.b16 %v3107, %v3103
        %v3228 = vpack.c.b16 %v3108, %v3104
        %v3229 = vpack.c.b16 %v3109, %v3105
        %v3230 = vpack.c.b16 %v3114, %v3110
        %v3231 = vpack.c.b16 %v3115, %v3111
        %v3232 = vpack.c.b16 %v3116, %v3112
        %v3233 = vpack.c.b16 %v3117, %v3113
        %v3234 = vpack.c.b16 %v3122, %v3118
        %v3235 = vpack.c.b16 %v3123, %v3119
        %v3236 = vpack.c.b16 %v3124, %v3120
        %v3237 = vpack.c.b16 %v3125, %v3121
        %v3238 = vpack.c.b16 %v3130, %v3126
        %v3239 = vpack.c.b16 %v3131, %v3127
        %v3240 = vpack.c.b16 %v3132, %v3128
        %v3241 = vpack.c.b16 %v3133, %v3129
        %v3242 = vpack.c.b16 %v3138, %v3134
        %v3243 = vpack.c.b16 %v3139, %v3135
        %v3244 = vpack.c.b16 %v3140, %v3136
        %v3245 = vpack.c.b16 %v3141, %v3137
        %v3246 = vpack.c.b16 %v3146, %v3142
        %v3247 = vpack.c.b16 %v3147, %v3143
        %v3248 = vpack.c.b16 %v3148, %v3144
        %v3249 = vpack.c.b16 %v3149, %v3145
        %v3250 = vpack.c.b16 %v3154, %v3150
        %v3251 = vpack.c.b16 %v3155, %v3151
        %v3252 = vpack.c.b16 %v3156, %v3152
        %v3253 = vpack.c.b16 %v3157, %v3153
        %v3254 = vpack.c.b16 %v3162, %v3158
        %v3255 = vpack.c.b16 %v3163, %v3159
        %v3256 = vpack.c.b16 %v3164, %v3160
        %v3257 = vpack.c.b16 %v3165, %v3161
        %v3258 = vpack.c.b16 %v3170, %v3166
        %v3259 = vpack.c.b16 %v3171, %v3167
        %v3260 = vpack.c.b16 %v3172, %v3168
        %v3261 = vpack.c.b16 %v3173, %v3169
        %v3351 = vsel %vm2576, %v2907, 0
        %3353 = vmatpush.bf16.msra.mxu0 %v3202
        %3354 = vmatpush.bf16.msra.mxu0 %v3198
        %3355 = vmatpush.bf16.msra.mxu0 %v3194
        %3356 = vmatpush.bf16.msra.mxu0 %v3190
        %3357 = vmatpush.bf16.msra.mxu0 %v3186
        %3358 = vmatpush.bf16.msra.mxu0 %v3182
        %3359 = vmatpush.bf16.msra.mxu0 %v3178
        %3360 = vmatpush.bf16.msra.mxu0 %v3174
        %3361 = vmatmul.bf16.gmra.mxu0 %v2883
        %v3362 = vpop.f32.mrf.mxu0
        %v3363 = vadd.f32 0.0, %v3362
        %v3364 = vpop.f32.mrf.mxu0
        %v3365 = vadd.f32 0.0, %v3364
        %3366 = vdwg.mxu0
        %3367 = vmatpush.bf16.msra.mxu0 %v3234
        %3368 = vmatpush.bf16.msra.mxu0 %v3230
        %3369 = vmatpush.bf16.msra.mxu0 %v3226
        %3370 = vmatpush.bf16.msra.mxu0 %v3222
        %3371 = vmatpush.bf16.msra.mxu0 %v3218
        %3372 = vmatpush.bf16.msra.mxu0 %v3214
        %3373 = vmatpush.bf16.msra.mxu0 %v3210
        %3374 = vmatpush.bf16.msra.mxu0 %v3206
        %3375 = vmatmul.bf16.gmra.mxu0 %v2895
        %v3376 = vpop.f32.mrf.mxu0
        %v3377 = vadd.f32 %v3363, %v3376
        %v3378 = vpop.f32.mrf.mxu0
        %v3379 = vadd.f32 %v3365, %v3378
        %3380 = vdwg.mxu0
        %3381 = vmatpush.bf16.msra.mxu0 0
        %3382 = vmatpush.bf16.msra.mxu0 0
        %3383 = vmatpush.bf16.msra.mxu0 %v3258
        %3384 = vmatpush.bf16.msra.mxu0 %v3254
        %3385 = vmatpush.bf16.msra.mxu0 %v3250
        %3386 = vmatpush.bf16.msra.mxu0 %v3246
        %3387 = vmatpush.bf16.msra.mxu0 %v3242
        %3388 = vmatpush.bf16.msra.mxu0 %v3238
        %3389 = vmatmul.bf16.gmra.mxu0 %v3351
        %v3390 = vpop.f32.mrf.mxu0
        %v3391 = vadd.f32 %v3377, %v3390
        %v3392 = vpop.f32.mrf.mxu0
        %v3393 = vadd.f32 %v3379, %v3392
        %3394 = vdwg.mxu0
        %3395 = vmatpush.bf16.msra.mxu0 %v3203
        %3396 = vmatpush.bf16.msra.mxu0 %v3199
        %3397 = vmatpush.bf16.msra.mxu0 %v3195
        %3398 = vmatpush.bf16.msra.mxu0 %v3191
        %3399 = vmatpush.bf16.msra.mxu0 %v3187
        %3400 = vmatpush.bf16.msra.mxu0 %v3183
        %3401 = vmatpush.bf16.msra.mxu0 %v3179
        %3402 = vmatpush.bf16.msra.mxu0 %v3175
        %3403 = vmatmul.bf16.gmra.mxu0 %v2883
        %v3404 = vpop.f32.mrf.mxu0
        %v3405 = vadd.f32 0.0, %v3404
        %v3406 = vpop.f32.mrf.mxu0
        %v3407 = vadd.f32 0.0, %v3406
        %3408 = vdwg.mxu0
        %3409 = vmatpush.bf16.msra.mxu0 %v3235
        %3410 = vmatpush.bf16.msra.mxu0 %v3231
        %3411 = vmatpush.bf16.msra.mxu0 %v3227
        %3412 = vmatpush.bf16.msra.mxu0 %v3223
        %3413 = vmatpush.bf16.msra.mxu0 %v3219
        %3414 = vmatpush.bf16.msra.mxu0 %v3215
        %3415 = vmatpush.bf16.msra.mxu0 %v3211
        %3416 = vmatpush.bf16.msra.mxu0 %v3207
        %3417 = vmatmul.bf16.gmra.mxu0 %v2895
        %v3418 = vpop.f32.mrf.mxu0
        %v3419 = vadd.f32 %v3405, %v3418
        %v3420 = vpop.f32.mrf.mxu0
        %v3421 = vadd.f32 %v3407, %v3420
        %3422 = vdwg.mxu0
        %3423 = vmatpush.bf16.msra.mxu0 0
        %3424 = vmatpush.bf16.msra.mxu0 0
        %3425 = vmatpush.bf16.msra.mxu0 %v3259
        %3426 = vmatpush.bf16.msra.mxu0 %v3255
        %3427 = vmatpush.bf16.msra.mxu0 %v3251
        %3428 = vmatpush.bf16.msra.mxu0 %v3247
        %3429 = vmatpush.bf16.msra.mxu0 %v3243
        %3430 = vmatpush.bf16.msra.mxu0 %v3239
        %3431 = vmatmul.bf16.gmra.mxu0 %v3351
        %v3432 = vpop.f32.mrf.mxu0
        %v3433 = vadd.f32 %v3419, %v3432
        %v3434 = vpop.f32.mrf.mxu0
        %v3435 = vadd.f32 %v3421, %v3434
        %3436 = vdwg.mxu0
        %3437 = vmatpush.bf16.msra.mxu0 %v3204
        %3438 = vmatpush.bf16.msra.mxu0 %v3200
        %3439 = vmatpush.bf16.msra.mxu0 %v3196
        %3440 = vmatpush.bf16.msra.mxu0 %v3192
        %3441 = vmatpush.bf16.msra.mxu0 %v3188
        %3442 = vmatpush.bf16.msra.mxu0 %v3184
        %3443 = vmatpush.bf16.msra.mxu0 %v3180
        %3444 = vmatpush.bf16.msra.mxu0 %v3176
        %3445 = vmatmul.bf16.gmra.mxu0 %v2883
        %v3446 = vpop.f32.mrf.mxu0
        %v3447 = vadd.f32 0.0, %v3446
        %v3448 = vpop.f32.mrf.mxu0
        %v3449 = vadd.f32 0.0, %v3448
        %3450 = vdwg.mxu0
        %3451 = vmatpush.bf16.msra.mxu0 %v3236
        %3452 = vmatpush.bf16.msra.mxu0 %v3232
        %3453 = vmatpush.bf16.msra.mxu0 %v3228
        %3454 = vmatpush.bf16.msra.mxu0 %v3224
        %3455 = vmatpush.bf16.msra.mxu0 %v3220
        %3456 = vmatpush.bf16.msra.mxu0 %v3216
        %3457 = vmatpush.bf16.msra.mxu0 %v3212
        %3458 = vmatpush.bf16.msra.mxu0 %v3208
        %3459 = vmatmul.bf16.gmra.mxu0 %v2895
        %v3460 = vpop.f32.mrf.mxu0
        %v3461 = vadd.f32 %v3447, %v3460
        %v3462 = vpop.f32.mrf.mxu0
        %v3463 = vadd.f32 %v3449, %v3462
        %3464 = vdwg.mxu0
        %3465 = vmatpush.bf16.msra.mxu0 0
        %3466 = vmatpush.bf16.msra.mxu0 0
        %3467 = vmatpush.bf16.msra.mxu0 %v3260
        %3468 = vmatpush.bf16.msra.mxu0 %v3256
        %3469 = vmatpush.bf16.msra.mxu0 %v3252
        %3470 = vmatpush.bf16.msra.mxu0 %v3248
        %3471 = vmatpush.bf16.msra.mxu0 %v3244
        %3472 = vmatpush.bf16.msra.mxu0 %v3240
        %3473 = vmatmul.bf16.gmra.mxu0 %v3351
        %v3474 = vpop.f32.mrf.mxu0
        %v3475 = vadd.f32 %v3461, %v3474
        %v3476 = vpop.f32.mrf.mxu0
        %v3477 = vadd.f32 %v3463, %v3476
        %3478 = vdwg.mxu0
        %3479 = vmatpush.bf16.msra.mxu0 %v3205
        %3480 = vmatpush.bf16.msra.mxu0 %v3201
        %3481 = vmatpush.bf16.msra.mxu0 %v3197
        %3482 = vmatpush.bf16.msra.mxu0 %v3193
        %3483 = vmatpush.bf16.msra.mxu0 %v3189
        %3484 = vmatpush.bf16.msra.mxu0 %v3185
        %3485 = vmatpush.bf16.msra.mxu0 %v3181
        %3486 = vmatpush.bf16.msra.mxu0 %v3177
        %3487 = vmatmul.bf16.gmra.mxu0 %v2883
        %v3488 = vpop.f32.mrf.mxu0
        %v3489 = vadd.f32 0.0, %v3488
        %v3490 = vpop.f32.mrf.mxu0
        %v3491 = vadd.f32 0.0, %v3490
        %3492 = vdwg.mxu0
        %3493 = vmatpush.bf16.msra.mxu0 %v3237
        %3494 = vmatpush.bf16.msra.mxu0 %v3233
        %3495 = vmatpush.bf16.msra.mxu0 %v3229
        %3496 = vmatpush.bf16.msra.mxu0 %v3225
        %3497 = vmatpush.bf16.msra.mxu0 %v3221
        %3498 = vmatpush.bf16.msra.mxu0 %v3217
        %3499 = vmatpush.bf16.msra.mxu0 %v3213
        %3500 = vmatpush.bf16.msra.mxu0 %v3209
        %3501 = vmatmul.bf16.gmra.mxu0 %v2895
        %v3502 = vpop.f32.mrf.mxu0
        %v3503 = vadd.f32 %v3489, %v3502
        %v3504 = vpop.f32.mrf.mxu0
        %v3505 = vadd.f32 %v3491, %v3504
        %3506 = vdwg.mxu0
        %3507 = vmatpush.bf16.msra.mxu0 0
        %3508 = vmatpush.bf16.msra.mxu0 0
        %3509 = vmatpush.bf16.msra.mxu0 %v3261
        %3510 = vmatpush.bf16.msra.mxu0 %v3257
        %3511 = vmatpush.bf16.msra.mxu0 %v3253
        %3512 = vmatpush.bf16.msra.mxu0 %v3249
        %3513 = vmatpush.bf16.msra.mxu0 %v3245
        %3514 = vmatpush.bf16.msra.mxu0 %v3241
        %3515 = vmatmul.bf16.gmra.mxu0 %v3351
        %v3516 = vpop.f32.mrf.mxu0
        %v3517 = vadd.f32 %v3503, %v3516
        %v3518 = vpop.f32.mrf.mxu0
        %v3519 = vadd.f32 %v3505, %v3518
        %3520 = vdwg.mxu0
        %v3521 = vld [vmem:[#allocation4] sm:$0xff]
        %v3522 = vld [vmem:[#allocation4 + $0x8] sm:$0xff]
        %v3523 = vld [vmem:[#allocation4 + $0x10] sm:$0xff]
        %v3524 = vld [vmem:[#allocation4 + $0x18] sm:$0xff]
        %v3525 = vld [vmem:[#allocation4 + $0x20] sm:$0xff]
        %v3526 = vld [vmem:[#allocation4 + $0x28] sm:$0xff]
        %v3527 = vld [vmem:[#allocation4 + $0x30] sm:$0xff]
        %v3528 = vld [vmem:[#allocation4 + $0x38] sm:$0xff]
        %v3529 = vadd.f32 %v3521, %v3391
        %v3530 = vadd.f32 %v3522, %v3433
        %v3531 = vadd.f32 %v3523, %v3475
        %v3532 = vadd.f32 %v3524, %v3517
        %v3533 = vadd.f32 %v3525, %v3393
        %v3534 = vadd.f32 %v3526, %v3435
        %v3535 = vadd.f32 %v3527, %v3477
        %v3536 = vadd.f32 %v3528, %v3519
        %3537 = vst [vmem:[#allocation4] sm:$0xff] %v3529
        %3538 = vst [vmem:[#allocation4 + $0x8] sm:$0xff] %v3530
        %3539 = vst [vmem:[#allocation4 + $0x10] sm:$0xff] %v3531
        %3540 = vst [vmem:[#allocation4 + $0x18] sm:$0xff] %v3532
        %3541 = vst [vmem:[#allocation4 + $0x20] sm:$0xff] %v3533
        %3542 = vst [vmem:[#allocation4 + $0x28] sm:$0xff] %v3534
        %3543 = vst [vmem:[#allocation4 + $0x30] sm:$0xff] %v3535
        %3544 = vst [vmem:[#allocation4 + $0x38] sm:$0xff] %v3536
        %v3545 = vld [vmem:[#allocation2] sm:$0xee]
        %v3546 = vld [vmem:[#allocation2 + $0x8] sm:$0xe]
        %v3547 = vld [vmem:[#allocation2 + $0xc] sm:$0xff]
        %v3548 = vld [vmem:[#allocation2 + $0x14] sm:$0xf]
        %v3549 = vld [vmem:[#allocation2 + $0x18] sm:$0x11]
        %v3550 = vld [vmem:[#allocation2 + $0x20] sm:$0x1]
        %s3551 = scalar_lea.vmem %s3, 1408
        %v3552 = vld [vmem:[%s3551] sm:$0xff]
        %v3553 = vld [vmem:[%s3551 + $0x8] sm:$0xff]
        %v3554 = vld [vmem:[%s3551 + $0x10] sm:$0xff]
        %v3555 = vld [vmem:[%s3551 + $0x18] sm:$0xff]
        %v3556 = vld [vmem:[%s3551 + $0x20] sm:$0xff]
        %v3557 = vld [vmem:[%s3551 + $0x28] sm:$0xff]
        %v3558 = vld [vmem:[%s3551 + $0x30] sm:$0xff]
        %v3559 = vld [vmem:[%s3551 + $0x38] sm:$0xff]
        %v3560 = vld [vmem:[%s3551 + $0x40] sm:$0xff]
        %v3561 = vld [vmem:[%s3551 + $0x48] sm:$0xff]
        %v3562 = vld [vmem:[%s3551 + $0x50] sm:$0xff]
        %v3563 = vld [vmem:[%s3551 + $0x58] sm:$0xff]
        %v3564 = vld [vmem:[%s3551 + $0x60] sm:$0xff]
        %v3565 = vld [vmem:[%s3551 + $0x68] sm:$0xff]
        %v3566 = vld [vmem:[%s3551 + $0x70] sm:$0xff]
        %v3567 = vld [vmem:[%s3551 + $0x78] sm:$0xff]
        %v3568 = vld [vmem:[%s3551 + $0x80] sm:$0xff]
        %v3569 = vld [vmem:[%s3551 + $0x88] sm:$0xff]
        %v3570 = vld [vmem:[%s3551 + $0x90] sm:$0xff]
        %v3571 = vld [vmem:[%s3551 + $0x98] sm:$0xff]
        %v3572 = vld [vmem:[%s3551 + $0xa0] sm:$0xff]
        %v3573 = vld [vmem:[%s3551 + $0xa8] sm:$0xff]
        %v3574 = vld [vmem:[%s3551 + $0xb0] sm:$0xff]
        %v3575 = vld [vmem:[%s3551 + $0xb8] sm:$0xff]
        %v3576 = vld [vmem:[%s3551 + $0xc0] sm:$0xff]
        %v3577 = vld [vmem:[%s3551 + $0xc8] sm:$0xff]
        %v3578 = vld [vmem:[%s3551 + $0xd0] sm:$0xff]
        %v3579 = vld [vmem:[%s3551 + $0xd8] sm:$0xff]
        %v3580 = vld [vmem:[%s3551 + $0xe0] sm:$0xff]
        %v3581 = vld [vmem:[%s3551 + $0xe8] sm:$0xff]
        %v3582 = vld [vmem:[%s3551 + $0xf0] sm:$0xff]
        %v3583 = vld [vmem:[%s3551 + $0xf8] sm:$0xff]
        %v3584 = vld [vmem:[%s3551 + $0x100] sm:$0xff]
        %v3585 = vld [vmem:[%s3551 + $0x108] sm:$0xff]
        %v3586 = vld [vmem:[%s3551 + $0x110] sm:$0xff]
        %v3587 = vld [vmem:[%s3551 + $0x118] sm:$0xff]
        %v3588 = vld [vmem:[%s3551 + $0x120] sm:$0xff]
        %v3589 = vld [vmem:[%s3551 + $0x128] sm:$0xff]
        %v3590 = vld [vmem:[%s3551 + $0x130] sm:$0xff]
        %v3591 = vld [vmem:[%s3551 + $0x138] sm:$0xff]
        %v3592 = vld [vmem:[%s3551 + $0x140] sm:$0xff]
        %v3593 = vld [vmem:[%s3551 + $0x148] sm:$0xff]
        %v3594 = vld [vmem:[%s3551 + $0x150] sm:$0xff]
        %v3595 = vld [vmem:[%s3551 + $0x158] sm:$0xff]
        %v3596 = vld [vmem:[%s3551 + $0x160] sm:$0xff]
        %v3597 = vld [vmem:[%s3551 + $0x168] sm:$0xff]
        %v3598 = vld [vmem:[%s3551 + $0x170] sm:$0xff]
        %v3599 = vld [vmem:[%s3551 + $0x178] sm:$0xff]
        %v3600 = vld [vmem:[%s3551 + $0x180] sm:$0xff]
        %v3601 = vld [vmem:[%s3551 + $0x188] sm:$0xff]
        %v3602 = vld [vmem:[%s3551 + $0x190] sm:$0xff]
        %v3603 = vld [vmem:[%s3551 + $0x198] sm:$0xff]
        %v3604 = vld [vmem:[%s3551 + $0x1a0] sm:$0xff]
        %v3605 = vld [vmem:[%s3551 + $0x1a8] sm:$0xff]
        %v3606 = vld [vmem:[%s3551 + $0x1b0] sm:$0xff]
        %v3607 = vld [vmem:[%s3551 + $0x1b8] sm:$0xff]
        %v3608 = vld [vmem:[%s3551 + $0x1c0] sm:$0xff]
        %v3609 = vld [vmem:[%s3551 + $0x1c8] sm:$0xff]
        %v3610 = vld [vmem:[%s3551 + $0x1d0] sm:$0xff]
        %v3611 = vld [vmem:[%s3551 + $0x1d8] sm:$0xff]
        %v3612 = vld [vmem:[%s3551 + $0x1e0] sm:$0xff]
        %v3613 = vld [vmem:[%s3551 + $0x1e8] sm:$0xff]
        %v3614 = vld [vmem:[%s3551 + $0x1f0] sm:$0xff]
        %v3615 = vld [vmem:[%s3551 + $0x1f8] sm:$0xff]
        %v3616 = vld [vmem:[%s3551 + $0x200] sm:$0xff]
        %v3617 = vld [vmem:[%s3551 + $0x208] sm:$0xff]
        %v3618 = vld [vmem:[%s3551 + $0x210] sm:$0xff]
        %v3619 = vld [vmem:[%s3551 + $0x218] sm:$0xff]
        %v3620 = vld [vmem:[%s3551 + $0x220] sm:$0xff]
        %v3621 = vld [vmem:[%s3551 + $0x228] sm:$0xff]
        %v3622 = vld [vmem:[%s3551 + $0x230] sm:$0xff]
        %v3623 = vld [vmem:[%s3551 + $0x238] sm:$0xff]
        %v3624 = vld [vmem:[%s3551 + $0x240] sm:$0xff]
        %v3625 = vld [vmem:[%s3551 + $0x248] sm:$0xff]
        %v3626 = vld [vmem:[%s3551 + $0x250] sm:$0xff]
        %v3627 = vld [vmem:[%s3551 + $0x258] sm:$0xff]
        %v3628 = vld [vmem:[%s3551 + $0x260] sm:$0xff]
        %v3629 = vld [vmem:[%s3551 + $0x268] sm:$0xff]
        %v3630 = vld [vmem:[%s3551 + $0x270] sm:$0xff]
        %v3631 = vld [vmem:[%s3551 + $0x278] sm:$0xff]
        %v3632 = vld [vmem:[%s3551 + $0x280] sm:$0xff]
        %v3633 = vld [vmem:[%s3551 + $0x288] sm:$0xff]
        %v3634 = vld [vmem:[%s3551 + $0x290] sm:$0xff]
        %v3635 = vld [vmem:[%s3551 + $0x298] sm:$0xff]
        %v3636 = vld [vmem:[%s3551 + $0x2a0] sm:$0xff]
        %v3637 = vld [vmem:[%s3551 + $0x2a8] sm:$0xff]
        %v3638 = vld [vmem:[%s3551 + $0x2b0] sm:$0xff]
        %v3639 = vld [vmem:[%s3551 + $0x2b8] sm:$0xff]
        %v3646 = vunpack.c.l.b16 %v3545
        %v3647 = vunpack.c.h.b16 %v3545
        %v3648 = vunpack.c.l.b16 %v3546
        %v3649 = vunpack.c.l.b16 %v3547
        %v3650 = vunpack.c.h.b16 %v3547
        %v3651 = vunpack.c.l.b16 %v3548
        %v3652 = vunpack.c.l.b16 %v3549
        %v3653 = vunpack.c.h.b16 %v3549
        %v3654 = vunpack.c.l.b16 %v3550
        %v3655 = vpack.c.b16 %v3649, %v3646
        %v3656 = vpack.c.b16 %v3650, %v3647
        %v3657 = vpack.c.b16 %v3651, %v3648
        %v3658 = vpack.c.b16 %v3652, %v3652
        %v3659 = vpack.c.b16 %v3653, %v3653
        %v3660 = vpack.c.b16 %v3654, %v3654
        %v3661 = vrot.slane %v3655, 1
        %v3662 = vrot.slane %v3658, 1
        %v3663 = vsel %vm769, %v3661, %v3662
        %v3664 = vrot.slane %v3656, 1
        %v3665 = vrot.slane %v3659, 1
        %v3666 = vsel %vm769, %v3664, %v3665
        %v3667 = vrot.slane %v3657, 1
        %v3668 = vrot.slane %v3660, 1
        %v3669 = vsel %vm769, %v3667, %v3668
        %v3760 = vunpack.c.l.b16 %v3552
        %v3761 = vunpack.c.h.b16 %v3552
        %v3762 = vunpack.c.l.b16 %v3553
        %v3763 = vunpack.c.h.b16 %v3553
        %v3764 = vunpack.c.l.b16 %v3554
        %v3765 = vunpack.c.h.b16 %v3554
        %v3766 = vunpack.c.l.b16 %v3555
        %v3767 = vunpack.c.h.b16 %v3555
        %v3768 = vunpack.c.l.b16 %v3556
        %v3769 = vunpack.c.h.b16 %v3556
        %v3770 = vunpack.c.l.b16 %v3557
        %v3771 = vunpack.c.h.b16 %v3557
        %v3772 = vunpack.c.l.b16 %v3558
        %v3773 = vunpack.c.h.b16 %v3558
        %v3774 = vunpack.c.l.b16 %v3559
        %v3775 = vunpack.c.h.b16 %v3559
        %v3776 = vunpack.c.l.b16 %v3560
        %v3777 = vunpack.c.h.b16 %v3560
        %v3778 = vunpack.c.l.b16 %v3561
        %v3779 = vunpack.c.h.b16 %v3561
        %v3780 = vunpack.c.l.b16 %v3562
        %v3781 = vunpack.c.h.b16 %v3562
        %v3782 = vunpack.c.l.b16 %v3563
        %v3783 = vunpack.c.h.b16 %v3563
        %v3784 = vunpack.c.l.b16 %v3564
        %v3785 = vunpack.c.h.b16 %v3564
        %v3786 = vunpack.c.l.b16 %v3565
        %v3787 = vunpack.c.h.b16 %v3565
        %v3788 = vunpack.c.l.b16 %v3566
        %v3789 = vunpack.c.h.b16 %v3566
        %v3790 = vunpack.c.l.b16 %v3567
        %v3791 = vunpack.c.h.b16 %v3567
        %v3792 = vunpack.c.l.b16 %v3568
        %v3793 = vunpack.c.h.b16 %v3568
        %v3794 = vunpack.c.l.b16 %v3569
        %v3795 = vunpack.c.h.b16 %v3569
        %v3796 = vunpack.c.l.b16 %v3570
        %v3797 = vunpack.c.h.b16 %v3570
        %v3798 = vunpack.c.l.b16 %v3571
        %v3799 = vunpack.c.h.b16 %v3571
        %v3800 = vunpack.c.l.b16 %v3572
        %v3801 = vunpack.c.h.b16 %v3572
        %v3802 = vunpack.c.l.b16 %v3573
        %v3803 = vunpack.c.h.b16 %v3573
        %v3804 = vunpack.c.l.b16 %v3574
        %v3805 = vunpack.c.h.b16 %v3574
        %v3806 = vunpack.c.l.b16 %v3575
        %v3807 = vunpack.c.h.b16 %v3575
        %v3808 = vunpack.c.l.b16 %v3576
        %v3809 = vunpack.c.h.b16 %v3576
        %v3810 = vunpack.c.l.b16 %v3577
        %v3811 = vunpack.c.h.b16 %v3577
        %v3812 = vunpack.c.l.b16 %v3578
        %v3813 = vunpack.c.h.b16 %v3578
        %v3814 = vunpack.c.l.b16 %v3579
        %v3815 = vunpack.c.h.b16 %v3579
        %v3816 = vunpack.c.l.b16 %v3580
        %v3817 = vunpack.c.h.b16 %v3580
        %v3818 = vunpack.c.l.b16 %v3581
        %v3819 = vunpack.c.h.b16 %v3581
        %v3820 = vunpack.c.l.b16 %v3582
        %v3821 = vunpack.c.h.b16 %v3582
        %v3822 = vunpack.c.l.b16 %v3583
        %v3823 = vunpack.c.h.b16 %v3583
        %v3824 = vunpack.c.l.b16 %v3584
        %v3825 = vunpack.c.h.b16 %v3584
        %v3826 = vunpack.c.l.b16 %v3585
        %v3827 = vunpack.c.h.b16 %v3585
        %v3828 = vunpack.c.l.b16 %v3586
        %v3829 = vunpack.c.h.b16 %v3586
        %v3830 = vunpack.c.l.b16 %v3587
        %v3831 = vunpack.c.h.b16 %v3587
        %v3832 = vunpack.c.l.b16 %v3588
        %v3833 = vunpack.c.h.b16 %v3588
        %v3834 = vunpack.c.l.b16 %v3589
        %v3835 = vunpack.c.h.b16 %v3589
        %v3836 = vunpack.c.l.b16 %v3590
        %v3837 = vunpack.c.h.b16 %v3590
        %v3838 = vunpack.c.l.b16 %v3591
        %v3839 = vunpack.c.h.b16 %v3591
        %v3840 = vunpack.c.l.b16 %v3592
        %v3841 = vunpack.c.h.b16 %v3592
        %v3842 = vunpack.c.l.b16 %v3593
        %v3843 = vunpack.c.h.b16 %v3593
        %v3844 = vunpack.c.l.b16 %v3594
        %v3845 = vunpack.c.h.b16 %v3594
        %v3846 = vunpack.c.l.b16 %v3595
        %v3847 = vunpack.c.h.b16 %v3595
        %v3848 = vunpack.c.l.b16 %v3596
        %v3849 = vunpack.c.h.b16 %v3596
        %v3850 = vunpack.c.l.b16 %v3597
        %v3851 = vunpack.c.h.b16 %v3597
        %v3852 = vunpack.c.l.b16 %v3598
        %v3853 = vunpack.c.h.b16 %v3598
        %v3854 = vunpack.c.l.b16 %v3599
        %v3855 = vunpack.c.h.b16 %v3599
        %v3856 = vunpack.c.l.b16 %v3600
        %v3857 = vunpack.c.h.b16 %v3600
        %v3858 = vunpack.c.l.b16 %v3601
        %v3859 = vunpack.c.h.b16 %v3601
        %v3860 = vunpack.c.l.b16 %v3602
        %v3861 = vunpack.c.h.b16 %v3602
        %v3862 = vunpack.c.l.b16 %v3603
        %v3863 = vunpack.c.h.b16 %v3603
        %v3864 = vunpack.c.l.b16 %v3604
        %v3865 = vunpack.c.h.b16 %v3604
        %v3866 = vunpack.c.l.b16 %v3605
        %v3867 = vunpack.c.h.b16 %v3605
        %v3868 = vunpack.c.l.b16 %v3606
        %v3869 = vunpack.c.h.b16 %v3606
        %v3870 = vunpack.c.l.b16 %v3607
        %v3871 = vunpack.c.h.b16 %v3607
        %v3872 = vunpack.c.l.b16 %v3608
        %v3873 = vunpack.c.h.b16 %v3608
        %v3874 = vunpack.c.l.b16 %v3609
        %v3875 = vunpack.c.h.b16 %v3609
        %v3876 = vunpack.c.l.b16 %v3610
        %v3877 = vunpack.c.h.b16 %v3610
        %v3878 = vunpack.c.l.b16 %v3611
        %v3879 = vunpack.c.h.b16 %v3611
        %v3880 = vunpack.c.l.b16 %v3612
        %v3881 = vunpack.c.h.b16 %v3612
        %v3882 = vunpack.c.l.b16 %v3613
        %v3883 = vunpack.c.h.b16 %v3613
        %v3884 = vunpack.c.l.b16 %v3614
        %v3885 = vunpack.c.h.b16 %v3614
        %v3886 = vunpack.c.l.b16 %v3615
        %v3887 = vunpack.c.h.b16 %v3615
        %v3888 = vunpack.c.l.b16 %v3616
        %v3889 = vunpack.c.h.b16 %v3616
        %v3890 = vunpack.c.l.b16 %v3617
        %v3891 = vunpack.c.h.b16 %v3617
        %v3892 = vunpack.c.l.b16 %v3618
        %v3893 = vunpack.c.h.b16 %v3618
        %v3894 = vunpack.c.l.b16 %v3619
        %v3895 = vunpack.c.h.b16 %v3619
        %v3896 = vunpack.c.l.b16 %v3620
        %v3897 = vunpack.c.h.b16 %v3620
        %v3898 = vunpack.c.l.b16 %v3621
        %v3899 = vunpack.c.h.b16 %v3621
        %v3900 = vunpack.c.l.b16 %v3622
        %v3901 = vunpack.c.h.b16 %v3622
        %v3902 = vunpack.c.l.b16 %v3623
        %v3903 = vunpack.c.h.b16 %v3623
        %v3904 = vunpack.c.l.b16 %v3624
        %v3905 = vunpack.c.h.b16 %v3624
        %v3906 = vunpack.c.l.b16 %v3625
        %v3907 = vunpack.c.h.b16 %v3625
        %v3908 = vunpack.c.l.b16 %v3626
        %v3909 = vunpack.c.h.b16 %v3626
        %v3910 = vunpack.c.l.b16 %v3627
        %v3911 = vunpack.c.h.b16 %v3627
        %v3912 = vunpack.c.l.b16 %v3628
        %v3913 = vunpack.c.h.b16 %v3628
        %v3914 = vunpack.c.l.b16 %v3629
        %v3915 = vunpack.c.h.b16 %v3629
        %v3916 = vunpack.c.l.b16 %v3630
        %v3917 = vunpack.c.h.b16 %v3630
        %v3918 = vunpack.c.l.b16 %v3631
        %v3919 = vunpack.c.h.b16 %v3631
        %v3920 = vunpack.c.l.b16 %v3632
        %v3921 = vunpack.c.h.b16 %v3632
        %v3922 = vunpack.c.l.b16 %v3633
        %v3923 = vunpack.c.h.b16 %v3633
        %v3924 = vunpack.c.l.b16 %v3634
        %v3925 = vunpack.c.h.b16 %v3634
        %v3926 = vunpack.c.l.b16 %v3635
        %v3927 = vunpack.c.h.b16 %v3635
        %v3928 = vunpack.c.l.b16 %v3636
        %v3929 = vunpack.c.h.b16 %v3636
        %v3930 = vunpack.c.l.b16 %v3637
        %v3931 = vunpack.c.h.b16 %v3637
        %v3932 = vunpack.c.l.b16 %v3638
        %v3933 = vunpack.c.h.b16 %v3638
        %v3934 = vunpack.c.l.b16 %v3639
        %v3935 = vunpack.c.h.b16 %v3639
        %v3936 = vpack.c.b16 %v3764, %v3760
        %v3937 = vpack.c.b16 %v3765, %v3761
        %v3938 = vpack.c.b16 %v3766, %v3762
        %v3939 = vpack.c.b16 %v3767, %v3763
        %v3940 = vpack.c.b16 %v3772, %v3768
        %v3941 = vpack.c.b16 %v3773, %v3769
        %v3942 = vpack.c.b16 %v3774, %v3770
        %v3943 = vpack.c.b16 %v3775, %v3771
        %v3944 = vpack.c.b16 %v3780, %v3776
        %v3945 = vpack.c.b16 %v3781, %v3777
        %v3946 = vpack.c.b16 %v3782, %v3778
        %v3947 = vpack.c.b16 %v3783, %v3779
        %v3948 = vpack.c.b16 %v3788, %v3784
        %v3949 = vpack.c.b16 %v3789, %v3785
        %v3950 = vpack.c.b16 %v3790, %v3786
        %v3951 = vpack.c.b16 %v3791, %v3787
        %v3952 = vpack.c.b16 %v3796, %v3792
        %v3953 = vpack.c.b16 %v3797, %v3793
        %v3954 = vpack.c.b16 %v3798, %v3794
        %v3955 = vpack.c.b16 %v3799, %v3795
        %v3956 = vpack.c.b16 %v3804, %v3800
        %v3957 = vpack.c.b16 %v3805, %v3801
        %v3958 = vpack.c.b16 %v3806, %v3802
        %v3959 = vpack.c.b16 %v3807, %v3803
        %v3960 = vpack.c.b16 %v3812, %v3808
        %v3961 = vpack.c.b16 %v3813, %v3809
        %v3962 = vpack.c.b16 %v3814, %v3810
        %v3963 = vpack.c.b16 %v3815, %v3811
        %v3964 = vpack.c.b16 %v3820, %v3816
        %v3965 = vpack.c.b16 %v3821, %v3817
        %v3966 = vpack.c.b16 %v3822, %v3818
        %v3967 = vpack.c.b16 %v3823, %v3819
        %v3968 = vpack.c.b16 %v3828, %v3824
        %v3969 = vpack.c.b16 %v3829, %v3825
        %v3970 = vpack.c.b16 %v3830, %v3826
        %v3971 = vpack.c.b16 %v3831, %v3827
        %v3972 = vpack.c.b16 %v3836, %v3832
        %v3973 = vpack.c.b16 %v3837, %v3833
        %v3974 = vpack.c.b16 %v3838, %v3834
        %v3975 = vpack.c.b16 %v3839, %v3835
        %v3976 = vpack.c.b16 %v3844, %v3840
        %v3977 = vpack.c.b16 %v3845, %v3841
        %v3978 = vpack.c.b16 %v3846, %v3842
        %v3979 = vpack.c.b16 %v3847, %v3843
        %v3980 = vpack.c.b16 %v3852, %v3848
        %v3981 = vpack.c.b16 %v3853, %v3849
        %v3982 = vpack.c.b16 %v3854, %v3850
        %v3983 = vpack.c.b16 %v3855, %v3851
        %v3984 = vpack.c.b16 %v3860, %v3856
        %v3985 = vpack.c.b16 %v3861, %v3857
        %v3986 = vpack.c.b16 %v3862, %v3858
        %v3987 = vpack.c.b16 %v3863, %v3859
        %v3988 = vpack.c.b16 %v3868, %v3864
        %v3989 = vpack.c.b16 %v3869, %v3865
        %v3990 = vpack.c.b16 %v3870, %v3866
        %v3991 = vpack.c.b16 %v3871, %v3867
        %v3992 = vpack.c.b16 %v3876, %v3872
        %v3993 = vpack.c.b16 %v3877, %v3873
        %v3994 = vpack.c.b16 %v3878, %v3874
        %v3995 = vpack.c.b16 %v3879, %v3875
        %v3996 = vpack.c.b16 %v3884, %v3880
        %v3997 = vpack.c.b16 %v3885, %v3881
        %v3998 = vpack.c.b16 %v3886, %v3882
        %v3999 = vpack.c.b16 %v3887, %v3883
        %v4000 = vpack.c.b16 %v3892, %v3888
        %v4001 = vpack.c.b16 %v3893, %v3889
        %v4002 = vpack.c.b16 %v3894, %v3890
        %v4003 = vpack.c.b16 %v3895, %v3891
        %v4004 = vpack.c.b16 %v3900, %v3896
        %v4005 = vpack.c.b16 %v3901, %v3897
        %v4006 = vpack.c.b16 %v3902, %v3898
        %v4007 = vpack.c.b16 %v3903, %v3899
        %v4008 = vpack.c.b16 %v3908, %v3904
        %v4009 = vpack.c.b16 %v3909, %v3905
        %v4010 = vpack.c.b16 %v3910, %v3906
        %v4011 = vpack.c.b16 %v3911, %v3907
        %v4012 = vpack.c.b16 %v3916, %v3912
        %v4013 = vpack.c.b16 %v3917, %v3913
        %v4014 = vpack.c.b16 %v3918, %v3914
        %v4015 = vpack.c.b16 %v3919, %v3915
        %v4016 = vpack.c.b16 %v3924, %v3920
        %v4017 = vpack.c.b16 %v3925, %v3921
        %v4018 = vpack.c.b16 %v3926, %v3922
        %v4019 = vpack.c.b16 %v3927, %v3923
        %v4020 = vpack.c.b16 %v3932, %v3928
        %v4021 = vpack.c.b16 %v3933, %v3929
        %v4022 = vpack.c.b16 %v3934, %v3930
        %v4023 = vpack.c.b16 %v3935, %v3931
        %v4113 = vsel %vm2576, %v3669, 0
        %4115 = vmatpush.bf16.msra.mxu0 %v3964
        %4116 = vmatpush.bf16.msra.mxu0 %v3960
        %4117 = vmatpush.bf16.msra.mxu0 %v3956
        %4118 = vmatpush.bf16.msra.mxu0 %v3952
        %4119 = vmatpush.bf16.msra.mxu0 %v3948
        %4120 = vmatpush.bf16.msra.mxu0 %v3944
        %4121 = vmatpush.bf16.msra.mxu0 %v3940
        %4122 = vmatpush.bf16.msra.mxu0 %v3936
        %4123 = vmatmul.bf16.gmra.mxu0 %v3663
        %v4124 = vpop.f32.mrf.mxu0
        %v4125 = vadd.f32 0.0, %v4124
        %v4126 = vpop.f32.mrf.mxu0
        %v4127 = vadd.f32 0.0, %v4126
        %4128 = vdwg.mxu0
        %4129 = vmatpush.bf16.msra.mxu0 %v3996
        %4130 = vmatpush.bf16.msra.mxu0 %v3992
        %4131 = vmatpush.bf16.msra.mxu0 %v3988
        %4132 = vmatpush.bf16.msra.mxu0 %v3984
        %4133 = vmatpush.bf16.msra.mxu0 %v3980
        %4134 = vmatpush.bf16.msra.mxu0 %v3976
        %4135 = vmatpush.bf16.msra.mxu0 %v3972
        %4136 = vmatpush.bf16.msra.mxu0 %v3968
        %4137 = vmatmul.bf16.gmra.mxu0 %v3666
        %v4138 = vpop.f32.mrf.mxu0
        %v4139 = vadd.f32 %v4125, %v4138
        %v4140 = vpop.f32.mrf.mxu0
        %v4141 = vadd.f32 %v4127, %v4140
        %4142 = vdwg.mxu0
        %4143 = vmatpush.bf16.msra.mxu0 0
        %4144 = vmatpush.bf16.msra.mxu0 0
        %4145 = vmatpush.bf16.msra.mxu0 %v4020
        %4146 = vmatpush.bf16.msra.mxu0 %v4016
        %4147 = vmatpush.bf16.msra.mxu0 %v4012
        %4148 = vmatpush.bf16.msra.mxu0 %v4008
        %4149 = vmatpush.bf16.msra.mxu0 %v4004
        %4150 = vmatpush.bf16.msra.mxu0 %v4000
        %4151 = vmatmul.bf16.gmra.mxu0 %v4113
        %v4152 = vpop.f32.mrf.mxu0
        %v4153 = vadd.f32 %v4139, %v4152
        %v4154 = vpop.f32.mrf.mxu0
        %v4155 = vadd.f32 %v4141, %v4154
        %4156 = vdwg.mxu0
        %4157 = vmatpush.bf16.msra.mxu0 %v3965
        %4158 = vmatpush.bf16.msra.mxu0 %v3961
        %4159 = vmatpush.bf16.msra.mxu0 %v3957
        %4160 = vmatpush.bf16.msra.mxu0 %v3953
        %4161 = vmatpush.bf16.msra.mxu0 %v3949
        %4162 = vmatpush.bf16.msra.mxu0 %v3945
        %4163 = vmatpush.bf16.msra.mxu0 %v3941
        %4164 = vmatpush.bf16.msra.mxu0 %v3937
        %4165 = vmatmul.bf16.gmra.mxu0 %v3663
        %v4166 = vpop.f32.mrf.mxu0
        %v4167 = vadd.f32 0.0, %v4166
        %v4168 = vpop.f32.mrf.mxu0
        %v4169 = vadd.f32 0.0, %v4168
        %4170 = vdwg.mxu0
        %4171 = vmatpush.bf16.msra.mxu0 %v3997
        %4172 = vmatpush.bf16.msra.mxu0 %v3993
        %4173 = vmatpush.bf16.msra.mxu0 %v3989
        %4174 = vmatpush.bf16.msra.mxu0 %v3985
        %4175 = vmatpush.bf16.msra.mxu0 %v3981
        %4176 = vmatpush.bf16.msra.mxu0 %v3977
        %4177 = vmatpush.bf16.msra.mxu0 %v3973
        %4178 = vmatpush.bf16.msra.mxu0 %v3969
        %4179 = vmatmul.bf16.gmra.mxu0 %v3666
        %v4180 = vpop.f32.mrf.mxu0
        %v4181 = vadd.f32 %v4167, %v4180
        %v4182 = vpop.f32.mrf.mxu0
        %v4183 = vadd.f32 %v4169, %v4182
        %4184 = vdwg.mxu0
        %4185 = vmatpush.bf16.msra.mxu0 0
        %4186 = vmatpush.bf16.msra.mxu0 0
        %4187 = vmatpush.bf16.msra.mxu0 %v4021
        %4188 = vmatpush.bf16.msra.mxu0 %v4017
        %4189 = vmatpush.bf16.msra.mxu0 %v4013
        %4190 = vmatpush.bf16.msra.mxu0 %v4009
        %4191 = vmatpush.bf16.msra.mxu0 %v4005
        %4192 = vmatpush.bf16.msra.mxu0 %v4001
        %4193 = vmatmul.bf16.gmra.mxu0 %v4113
        %v4194 = vpop.f32.mrf.mxu0
        %v4195 = vadd.f32 %v4181, %v4194
        %v4196 = vpop.f32.mrf.mxu0
        %v4197 = vadd.f32 %v4183, %v4196
        %4198 = vdwg.mxu0
        %4199 = vmatpush.bf16.msra.mxu0 %v3966
        %4200 = vmatpush.bf16.msra.mxu0 %v3962
        %4201 = vmatpush.bf16.msra.mxu0 %v3958
        %4202 = vmatpush.bf16.msra.mxu0 %v3954
        %4203 = vmatpush.bf16.msra.mxu0 %v3950
        %4204 = vmatpush.bf16.msra.mxu0 %v3946
        %4205 = vmatpush.bf16.msra.mxu0 %v3942
        %4206 = vmatpush.bf16.msra.mxu0 %v3938
        %4207 = vmatmul.bf16.gmra.mxu0 %v3663
        %v4208 = vpop.f32.mrf.mxu0
        %v4209 = vadd.f32 0.0, %v4208
        %v4210 = vpop.f32.mrf.mxu0
        %v4211 = vadd.f32 0.0, %v4210
        %4212 = vdwg.mxu0
        %4213 = vmatpush.bf16.msra.mxu0 %v3998
        %4214 = vmatpush.bf16.msra.mxu0 %v3994
        %4215 = vmatpush.bf16.msra.mxu0 %v3990
        %4216 = vmatpush.bf16.msra.mxu0 %v3986
        %4217 = vmatpush.bf16.msra.mxu0 %v3982
        %4218 = vmatpush.bf16.msra.mxu0 %v3978
        %4219 = vmatpush.bf16.msra.mxu0 %v3974
        %4220 = vmatpush.bf16.msra.mxu0 %v3970
        %4221 = vmatmul.bf16.gmra.mxu0 %v3666
        %v4222 = vpop.f32.mrf.mxu0
        %v4223 = vadd.f32 %v4209, %v4222
        %v4224 = vpop.f32.mrf.mxu0
        %v4225 = vadd.f32 %v4211, %v4224
        %4226 = vdwg.mxu0
        %4227 = vmatpush.bf16.msra.mxu0 0
        %4228 = vmatpush.bf16.msra.mxu0 0
        %4229 = vmatpush.bf16.msra.mxu0 %v4022
        %4230 = vmatpush.bf16.msra.mxu0 %v4018
        %4231 = vmatpush.bf16.msra.mxu0 %v4014
        %4232 = vmatpush.bf16.msra.mxu0 %v4010
        %4233 = vmatpush.bf16.msra.mxu0 %v4006
        %4234 = vmatpush.bf16.msra.mxu0 %v4002
        %4235 = vmatmul.bf16.gmra.mxu0 %v4113
        %v4236 = vpop.f32.mrf.mxu0
        %v4237 = vadd.f32 %v4223, %v4236
        %v4238 = vpop.f32.mrf.mxu0
        %v4239 = vadd.f32 %v4225, %v4238
        %4240 = vdwg.mxu0
        %4241 = vmatpush.bf16.msra.mxu0 %v3967
        %4242 = vmatpush.bf16.msra.mxu0 %v3963
        %4243 = vmatpush.bf16.msra.mxu0 %v3959
        %4244 = vmatpush.bf16.msra.mxu0 %v3955
        %4245 = vmatpush.bf16.msra.mxu0 %v3951
        %4246 = vmatpush.bf16.msra.mxu0 %v3947
        %4247 = vmatpush.bf16.msra.mxu0 %v3943
        %4248 = vmatpush.bf16.msra.mxu0 %v3939
        %4249 = vmatmul.bf16.gmra.mxu0 %v3663
        %v4250 = vpop.f32.mrf.mxu0
        %v4251 = vadd.f32 0.0, %v4250
        %v4252 = vpop.f32.mrf.mxu0
        %v4253 = vadd.f32 0.0, %v4252
        %4254 = vdwg.mxu0
        %4255 = vmatpush.bf16.msra.mxu0 %v3999
        %4256 = vmatpush.bf16.msra.mxu0 %v3995
        %4257 = vmatpush.bf16.msra.mxu0 %v3991
        %4258 = vmatpush.bf16.msra.mxu0 %v3987
        %4259 = vmatpush.bf16.msra.mxu0 %v3983
        %4260 = vmatpush.bf16.msra.mxu0 %v3979
        %4261 = vmatpush.bf16.msra.mxu0 %v3975
        %4262 = vmatpush.bf16.msra.mxu0 %v3971
        %4263 = vmatmul.bf16.gmra.mxu0 %v3666
        %v4264 = vpop.f32.mrf.mxu0
        %v4265 = vadd.f32 %v4251, %v4264
        %v4266 = vpop.f32.mrf.mxu0
        %v4267 = vadd.f32 %v4253, %v4266
        %4268 = vdwg.mxu0
        %4269 = vmatpush.bf16.msra.mxu0 0
        %4270 = vmatpush.bf16.msra.mxu0 0
        %4271 = vmatpush.bf16.msra.mxu0 %v4023
        %4272 = vmatpush.bf16.msra.mxu0 %v4019
        %4273 = vmatpush.bf16.msra.mxu0 %v4015
        %4274 = vmatpush.bf16.msra.mxu0 %v4011
        %4275 = vmatpush.bf16.msra.mxu0 %v4007
        %4276 = vmatpush.bf16.msra.mxu0 %v4003
        %4277 = vmatmul.bf16.gmra.mxu0 %v4113
        %v4278 = vpop.f32.mrf.mxu0
        %v4279 = vadd.f32 %v4265, %v4278
        %v4280 = vpop.f32.mrf.mxu0
        %v4281 = vadd.f32 %v4267, %v4280
        %4282 = vdwg.mxu0
        %v4283 = vld [vmem:[#allocation4] sm:$0xff]
        %v4284 = vld [vmem:[#allocation4 + $0x8] sm:$0xff]
        %v4285 = vld [vmem:[#allocation4 + $0x10] sm:$0xff]
        %v4286 = vld [vmem:[#allocation4 + $0x18] sm:$0xff]
        %v4287 = vld [vmem:[#allocation4 + $0x20] sm:$0xff]
        %v4288 = vld [vmem:[#allocation4 + $0x28] sm:$0xff]
        %v4289 = vld [vmem:[#allocation4 + $0x30] sm:$0xff]
        %v4290 = vld [vmem:[#allocation4 + $0x38] sm:$0xff]
        %v4291 = vadd.f32 %v4283, %v4153
        %v4292 = vadd.f32 %v4284, %v4195
        %v4293 = vadd.f32 %v4285, %v4237
        %v4294 = vadd.f32 %v4286, %v4279
        %v4295 = vadd.f32 %v4287, %v4155
        %v4296 = vadd.f32 %v4288, %v4197
        %v4297 = vadd.f32 %v4289, %v4239
        %v4298 = vadd.f32 %v4290, %v4281
        %4299 = vst [vmem:[#allocation4] sm:$0xff] %v4291
        %4300 = vst [vmem:[#allocation4 + $0x8] sm:$0xff] %v4292
        %4301 = vst [vmem:[#allocation4 + $0x10] sm:$0xff] %v4293
        %4302 = vst [vmem:[#allocation4 + $0x18] sm:$0xff] %v4294
        %4303 = vst [vmem:[#allocation4 + $0x20] sm:$0xff] %v4295
        %4304 = vst [vmem:[#allocation4 + $0x28] sm:$0xff] %v4296
        %4305 = vst [vmem:[#allocation4 + $0x30] sm:$0xff] %v4297
        %4306 = vst [vmem:[#allocation4 + $0x38] sm:$0xff] %v4298
        %v4307 = vld [vmem:[#allocation2] sm:$0xee]
        %v4308 = vld [vmem:[#allocation2 + $0x8] sm:$0xe]
        %v4309 = vld [vmem:[#allocation2 + $0xc] sm:$0xff]
        %v4310 = vld [vmem:[#allocation2 + $0x14] sm:$0xf]
        %v4311 = vld [vmem:[#allocation2 + $0x18] sm:$0x33]
        %v4312 = vld [vmem:[#allocation2 + $0x20] sm:$0x3]
        %s4313 = scalar_lea.vmem %s3, 2112
        %v4314 = vld [vmem:[%s4313] sm:$0xff]
        %v4315 = vld [vmem:[%s4313 + $0x8] sm:$0xff]
        %v4316 = vld [vmem:[%s4313 + $0x10] sm:$0xff]
        %v4317 = vld [vmem:[%s4313 + $0x18] sm:$0xff]
        %v4318 = vld [vmem:[%s4313 + $0x20] sm:$0xff]
        %v4319 = vld [vmem:[%s4313 + $0x28] sm:$0xff]
        %v4320 = vld [vmem:[%s4313 + $0x30] sm:$0xff]
        %v4321 = vld [vmem:[%s4313 + $0x38] sm:$0xff]
        %v4322 = vld [vmem:[%s4313 + $0x40] sm:$0xff]
        %v4323 = vld [vmem:[%s4313 + $0x48] sm:$0xff]
        %v4324 = vld [vmem:[%s4313 + $0x50] sm:$0xff]
        %v4325 = vld [vmem:[%s4313 + $0x58] sm:$0xff]
        %v4326 = vld [vmem:[%s4313 + $0x60] sm:$0xff]
        %v4327 = vld [vmem:[%s4313 + $0x68] sm:$0xff]
        %v4328 = vld [vmem:[%s4313 + $0x70] sm:$0xff]
        %v4329 = vld [vmem:[%s4313 + $0x78] sm:$0xff]
        %v4330 = vld [vmem:[%s4313 + $0x80] sm:$0xff]
        %v4331 = vld [vmem:[%s4313 + $0x88] sm:$0xff]
        %v4332 = vld [vmem:[%s4313 + $0x90] sm:$0xff]
        %v4333 = vld [vmem:[%s4313 + $0x98] sm:$0xff]
        %v4334 = vld [vmem:[%s4313 + $0xa0] sm:$0xff]
        %v4335 = vld [vmem:[%s4313 + $0xa8] sm:$0xff]
        %v4336 = vld [vmem:[%s4313 + $0xb0] sm:$0xff]
        %v4337 = vld [vmem:[%s4313 + $0xb8] sm:$0xff]
        %v4338 = vld [vmem:[%s4313 + $0xc0] sm:$0xff]
        %v4339 = vld [vmem:[%s4313 + $0xc8] sm:$0xff]
        %v4340 = vld [vmem:[%s4313 + $0xd0] sm:$0xff]
        %v4341 = vld [vmem:[%s4313 + $0xd8] sm:$0xff]
        %v4342 = vld [vmem:[%s4313 + $0xe0] sm:$0xff]
        %v4343 = vld [vmem:[%s4313 + $0xe8] sm:$0xff]
        %v4344 = vld [vmem:[%s4313 + $0xf0] sm:$0xff]
        %v4345 = vld [vmem:[%s4313 + $0xf8] sm:$0xff]
        %v4346 = vld [vmem:[%s4313 + $0x100] sm:$0xff]
        %v4347 = vld [vmem:[%s4313 + $0x108] sm:$0xff]
        %v4348 = vld [vmem:[%s4313 + $0x110] sm:$0xff]
        %v4349 = vld [vmem:[%s4313 + $0x118] sm:$0xff]
        %v4350 = vld [vmem:[%s4313 + $0x120] sm:$0xff]
        %v4351 = vld [vmem:[%s4313 + $0x128] sm:$0xff]
        %v4352 = vld [vmem:[%s4313 + $0x130] sm:$0xff]
        %v4353 = vld [vmem:[%s4313 + $0x138] sm:$0xff]
        %v4354 = vld [vmem:[%s4313 + $0x140] sm:$0xff]
        %v4355 = vld [vmem:[%s4313 + $0x148] sm:$0xff]
        %v4356 = vld [vmem:[%s4313 + $0x150] sm:$0xff]
        %v4357 = vld [vmem:[%s4313 + $0x158] sm:$0xff]
        %v4358 = vld [vmem:[%s4313 + $0x160] sm:$0xff]
        %v4359 = vld [vmem:[%s4313 + $0x168] sm:$0xff]
        %v4360 = vld [vmem:[%s4313 + $0x170] sm:$0xff]
        %v4361 = vld [vmem:[%s4313 + $0x178] sm:$0xff]
        %v4362 = vld [vmem:[%s4313 + $0x180] sm:$0xff]
        %v4363 = vld [vmem:[%s4313 + $0x188] sm:$0xff]
        %v4364 = vld [vmem:[%s4313 + $0x190] sm:$0xff]
        %v4365 = vld [vmem:[%s4313 + $0x198] sm:$0xff]
        %v4366 = vld [vmem:[%s4313 + $0x1a0] sm:$0xff]
        %v4367 = vld [vmem:[%s4313 + $0x1a8] sm:$0xff]
        %v4368 = vld [vmem:[%s4313 + $0x1b0] sm:$0xff]
        %v4369 = vld [vmem:[%s4313 + $0x1b8] sm:$0xff]
        %v4370 = vld [vmem:[%s4313 + $0x1c0] sm:$0xff]
        %v4371 = vld [vmem:[%s4313 + $0x1c8] sm:$0xff]
        %v4372 = vld [vmem:[%s4313 + $0x1d0] sm:$0xff]
        %v4373 = vld [vmem:[%s4313 + $0x1d8] sm:$0xff]
        %v4374 = vld [vmem:[%s4313 + $0x1e0] sm:$0xff]
        %v4375 = vld [vmem:[%s4313 + $0x1e8] sm:$0xff]
        %v4376 = vld [vmem:[%s4313 + $0x1f0] sm:$0xff]
        %v4377 = vld [vmem:[%s4313 + $0x1f8] sm:$0xff]
        %v4378 = vld [vmem:[%s4313 + $0x200] sm:$0xff]
        %v4379 = vld [vmem:[%s4313 + $0x208] sm:$0xff]
        %v4380 = vld [vmem:[%s4313 + $0x210] sm:$0xff]
        %v4381 = vld [vmem:[%s4313 + $0x218] sm:$0xff]
        %v4382 = vld [vmem:[%s4313 + $0x220] sm:$0xff]
        %v4383 = vld [vmem:[%s4313 + $0x228] sm:$0xff]
        %v4384 = vld [vmem:[%s4313 + $0x230] sm:$0xff]
        %v4385 = vld [vmem:[%s4313 + $0x238] sm:$0xff]
        %v4386 = vld [vmem:[%s4313 + $0x240] sm:$0xff]
        %v4387 = vld [vmem:[%s4313 + $0x248] sm:$0xff]
        %v4388 = vld [vmem:[%s4313 + $0x250] sm:$0xff]
        %v4389 = vld [vmem:[%s4313 + $0x258] sm:$0xff]
        %v4390 = vld [vmem:[%s4313 + $0x260] sm:$0xff]
        %v4391 = vld [vmem:[%s4313 + $0x268] sm:$0xff]
        %v4392 = vld [vmem:[%s4313 + $0x270] sm:$0xff]
        %v4393 = vld [vmem:[%s4313 + $0x278] sm:$0xff]
        %v4394 = vld [vmem:[%s4313 + $0x280] sm:$0xff]
        %v4395 = vld [vmem:[%s4313 + $0x288] sm:$0xff]
        %v4396 = vld [vmem:[%s4313 + $0x290] sm:$0xff]
        %v4397 = vld [vmem:[%s4313 + $0x298] sm:$0xff]
        %v4398 = vld [vmem:[%s4313 + $0x2a0] sm:$0xff]
        %v4399 = vld [vmem:[%s4313 + $0x2a8] sm:$0xff]
        %v4400 = vld [vmem:[%s4313 + $0x2b0] sm:$0xff]
        %v4401 = vld [vmem:[%s4313 + $0x2b8] sm:$0xff]
        %v4408 = vunpack.c.l.b16 %v4307
        %v4409 = vunpack.c.h.b16 %v4307
        %v4410 = vunpack.c.l.b16 %v4308
        %v4411 = vunpack.c.l.b16 %v4309
        %v4412 = vunpack.c.h.b16 %v4309
        %v4413 = vunpack.c.l.b16 %v4310
        %v4414 = vunpack.c.l.b16 %v4311
        %v4415 = vunpack.c.h.b16 %v4311
        %v4416 = vunpack.c.l.b16 %v4312
        %v4417 = vpack.c.b16 %v4411, %v4408
        %v4418 = vpack.c.b16 %v4412, %v4409
        %v4419 = vpack.c.b16 %v4413, %v4410
        %v4420 = vpack.c.b16 %v4414, %v4414
        %v4421 = vpack.c.b16 %v4415, %v4415
        %v4422 = vpack.c.b16 %v4416, %v4416
        %v4424 = vshrl.u32 %v4417, 16
        %v4426 = vrot.slane %v4424, 1
        %v4427 = vshll.u32 %v4417, 16
        %v4429 = vrot.slane %v4427, 2
        %v4430 = vor.u32 %v4426, %v4429
        %v4432 = vshrl.u32 %v4420, 16
        %v4434 = vrot.slane %v4432, 1
        %v4435 = vshll.u32 %v4420, 16
        %v4437 = vrot.slane %v4435, 2
        %v4438 = vor.u32 %v4434, %v4437
        %v4439 = vsel %vm997, %v4430, %v4438
        %v4441 = vshrl.u32 %v4418, 16
        %v4443 = vrot.slane %v4441, 1
        %v4444 = vshll.u32 %v4418, 16
        %v4446 = vrot.slane %v4444, 2
        %v4447 = vor.u32 %v4443, %v4446
        %v4449 = vshrl.u32 %v4421, 16
        %v4451 = vrot.slane %v4449, 1
        %v4452 = vshll.u32 %v4421, 16
        %v4454 = vrot.slane %v4452, 2
        %v4455 = vor.u32 %v4451, %v4454
        %v4456 = vsel %vm997, %v4447, %v4455
        %v4458 = vshrl.u32 %v4419, 16
        %v4460 = vrot.slane %v4458, 1
        %v4461 = vshll.u32 %v4419, 16
        %v4463 = vrot.slane %v4461, 2
        %v4464 = vor.u32 %v4460, %v4463
        %v4466 = vshrl.u32 %v4422, 16
        %v4468 = vrot.slane %v4466, 1
        %v4469 = vshll.u32 %v4422, 16
        %v4471 = vrot.slane %v4469, 2
        %v4472 = vor.u32 %v4468, %v4471
        %v4473 = vsel %vm997, %v4464, %v4472
        %v4564 = vunpack.c.l.b16 %v4314
        %v4565 = vunpack.c.h.b16 %v4314
        %v4566 = vunpack.c.l.b16 %v4315
        %v4567 = vunpack.c.h.b16 %v4315
        %v4568 = vunpack.c.l.b16 %v4316
        %v4569 = vunpack.c.h.b16 %v4316
        %v4570 = vunpack.c.l.b16 %v4317
        %v4571 = vunpack.c.h.b16 %v4317
        %v4572 = vunpack.c.l.b16 %v4318
        %v4573 = vunpack.c.h.b16 %v4318
        %v4574 = vunpack.c.l.b16 %v4319
        %v4575 = vunpack.c.h.b16 %v4319
        %v4576 = vunpack.c.l.b16 %v4320
        %v4577 = vunpack.c.h.b16 %v4320
        %v4578 = vunpack.c.l.b16 %v4321
        %v4579 = vunpack.c.h.b16 %v4321
        %v4580 = vunpack.c.l.b16 %v4322
        %v4581 = vunpack.c.h.b16 %v4322
        %v4582 = vunpack.c.l.b16 %v4323
        %v4583 = vunpack.c.h.b16 %v4323
        %v4584 = vunpack.c.l.b16 %v4324
        %v4585 = vunpack.c.h.b16 %v4324
        %v4586 = vunpack.c.l.b16 %v4325
        %v4587 = vunpack.c.h.b16 %v4325
        %v4588 = vunpack.c.l.b16 %v4326
        %v4589 = vunpack.c.h.b16 %v4326
        %v4590 = vunpack.c.l.b16 %v4327
        %v4591 = vunpack.c.h.b16 %v4327
        %v4592 = vunpack.c.l.b16 %v4328
        %v4593 = vunpack.c.h.b16 %v4328
        %v4594 = vunpack.c.l.b16 %v4329
        %v4595 = vunpack.c.h.b16 %v4329
        %v4596 = vunpack.c.l.b16 %v4330
        %v4597 = vunpack.c.h.b16 %v4330
        %v4598 = vunpack.c.l.b16 %v4331
        %v4599 = vunpack.c.h.b16 %v4331
        %v4600 = vunpack.c.l.b16 %v4332
        %v4601 = vunpack.c.h.b16 %v4332
        %v4602 = vunpack.c.l.b16 %v4333
        %v4603 = vunpack.c.h.b16 %v4333
        %v4604 = vunpack.c.l.b16 %v4334
        %v4605 = vunpack.c.h.b16 %v4334
        %v4606 = vunpack.c.l.b16 %v4335
        %v4607 = vunpack.c.h.b16 %v4335
        %v4608 = vunpack.c.l.b16 %v4336
        %v4609 = vunpack.c.h.b16 %v4336
        %v4610 = vunpack.c.l.b16 %v4337
        %v4611 = vunpack.c.h.b16 %v4337
        %v4612 = vunpack.c.l.b16 %v4338
        %v4613 = vunpack.c.h.b16 %v4338
        %v4614 = vunpack.c.l.b16 %v4339
        %v4615 = vunpack.c.h.b16 %v4339
        %v4616 = vunpack.c.l.b16 %v4340
        %v4617 = vunpack.c.h.b16 %v4340
        %v4618 = vunpack.c.l.b16 %v4341
        %v4619 = vunpack.c.h.b16 %v4341
        %v4620 = vunpack.c.l.b16 %v4342
        %v4621 = vunpack.c.h.b16 %v4342
        %v4622 = vunpack.c.l.b16 %v4343
        %v4623 = vunpack.c.h.b16 %v4343
        %v4624 = vunpack.c.l.b16 %v4344
        %v4625 = vunpack.c.h.b16 %v4344
        %v4626 = vunpack.c.l.b16 %v4345
        %v4627 = vunpack.c.h.b16 %v4345
        %v4628 = vunpack.c.l.b16 %v4346
        %v4629 = vunpack.c.h.b16 %v4346
        %v4630 = vunpack.c.l.b16 %v4347
        %v4631 = vunpack.c.h.b16 %v4347
        %v4632 = vunpack.c.l.b16 %v4348
        %v4633 = vunpack.c.h.b16 %v4348
        %v4634 = vunpack.c.l.b16 %v4349
        %v4635 = vunpack.c.h.b16 %v4349
        %v4636 = vunpack.c.l.b16 %v4350
        %v4637 = vunpack.c.h.b16 %v4350
        %v4638 = vunpack.c.l.b16 %v4351
        %v4639 = vunpack.c.h.b16 %v4351
        %v4640 = vunpack.c.l.b16 %v4352
        %v4641 = vunpack.c.h.b16 %v4352
        %v4642 = vunpack.c.l.b16 %v4353
        %v4643 = vunpack.c.h.b16 %v4353
        %v4644 = vunpack.c.l.b16 %v4354
        %v4645 = vunpack.c.h.b16 %v4354
        %v4646 = vunpack.c.l.b16 %v4355
        %v4647 = vunpack.c.h.b16 %v4355
        %v4648 = vunpack.c.l.b16 %v4356
        %v4649 = vunpack.c.h.b16 %v4356
        %v4650 = vunpack.c.l.b16 %v4357
        %v4651 = vunpack.c.h.b16 %v4357
        %v4652 = vunpack.c.l.b16 %v4358
        %v4653 = vunpack.c.h.b16 %v4358
        %v4654 = vunpack.c.l.b16 %v4359
        %v4655 = vunpack.c.h.b16 %v4359
        %v4656 = vunpack.c.l.b16 %v4360
        %v4657 = vunpack.c.h.b16 %v4360
        %v4658 = vunpack.c.l.b16 %v4361
        %v4659 = vunpack.c.h.b16 %v4361
        %v4660 = vunpack.c.l.b16 %v4362
        %v4661 = vunpack.c.h.b16 %v4362
        %v4662 = vunpack.c.l.b16 %v4363
        %v4663 = vunpack.c.h.b16 %v4363
        %v4664 = vunpack.c.l.b16 %v4364
        %v4665 = vunpack.c.h.b16 %v4364
        %v4666 = vunpack.c.l.b16 %v4365
        %v4667 = vunpack.c.h.b16 %v4365
        %v4668 = vunpack.c.l.b16 %v4366
        %v4669 = vunpack.c.h.b16 %v4366
        %v4670 = vunpack.c.l.b16 %v4367
        %v4671 = vunpack.c.h.b16 %v4367
        %v4672 = vunpack.c.l.b16 %v4368
        %v4673 = vunpack.c.h.b16 %v4368
        %v4674 = vunpack.c.l.b16 %v4369
        %v4675 = vunpack.c.h.b16 %v4369
        %v4676 = vunpack.c.l.b16 %v4370
        %v4677 = vunpack.c.h.b16 %v4370
        %v4678 = vunpack.c.l.b16 %v4371
        %v4679 = vunpack.c.h.b16 %v4371
        %v4680 = vunpack.c.l.b16 %v4372
        %v4681 = vunpack.c.h.b16 %v4372
        %v4682 = vunpack.c.l.b16 %v4373
        %v4683 = vunpack.c.h.b16 %v4373
        %v4684 = vunpack.c.l.b16 %v4374
        %v4685 = vunpack.c.h.b16 %v4374
        %v4686 = vunpack.c.l.b16 %v4375
        %v4687 = vunpack.c.h.b16 %v4375
        %v4688 = vunpack.c.l.b16 %v4376
        %v4689 = vunpack.c.h.b16 %v4376
        %v4690 = vunpack.c.l.b16 %v4377
        %v4691 = vunpack.c.h.b16 %v4377
        %v4692 = vunpack.c.l.b16 %v4378
        %v4693 = vunpack.c.h.b16 %v4378
        %v4694 = vunpack.c.l.b16 %v4379
        %v4695 = vunpack.c.h.b16 %v4379
        %v4696 = vunpack.c.l.b16 %v4380
        %v4697 = vunpack.c.h.b16 %v4380
        %v4698 = vunpack.c.l.b16 %v4381
        %v4699 = vunpack.c.h.b16 %v4381
        %v4700 = vunpack.c.l.b16 %v4382
        %v4701 = vunpack.c.h.b16 %v4382
        %v4702 = vunpack.c.l.b16 %v4383
        %v4703 = vunpack.c.h.b16 %v4383
        %v4704 = vunpack.c.l.b16 %v4384
        %v4705 = vunpack.c.h.b16 %v4384
        %v4706 = vunpack.c.l.b16 %v4385
        %v4707 = vunpack.c.h.b16 %v4385
        %v4708 = vunpack.c.l.b16 %v4386
        %v4709 = vunpack.c.h.b16 %v4386
        %v4710 = vunpack.c.l.b16 %v4387
        %v4711 = vunpack.c.h.b16 %v4387
        %v4712 = vunpack.c.l.b16 %v4388
        %v4713 = vunpack.c.h.b16 %v4388
        %v4714 = vunpack.c.l.b16 %v4389
        %v4715 = vunpack.c.h.b16 %v4389
        %v4716 = vunpack.c.l.b16 %v4390
        %v4717 = vunpack.c.h.b16 %v4390
        %v4718 = vunpack.c.l.b16 %v4391
        %v4719 = vunpack.c.h.b16 %v4391
        %v4720 = vunpack.c.l.b16 %v4392
        %v4721 = vunpack.c.h.b16 %v4392
        %v4722 = vunpack.c.l.b16 %v4393
        %v4723 = vunpack.c.h.b16 %v4393
        %v4724 = vunpack.c.l.b16 %v4394
        %v4725 = vunpack.c.h.b16 %v4394
        %v4726 = vunpack.c.l.b16 %v4395
        %v4727 = vunpack.c.h.b16 %v4395
        %v4728 = vunpack.c.l.b16 %v4396
        %v4729 = vunpack.c.h.b16 %v4396
        %v4730 = vunpack.c.l.b16 %v4397
        %v4731 = vunpack.c.h.b16 %v4397
        %v4732 = vunpack.c.l.b16 %v4398
        %v4733 = vunpack.c.h.b16 %v4398
        %v4734 = vunpack.c.l.b16 %v4399
        %v4735 = vunpack.c.h.b16 %v4399
        %v4736 = vunpack.c.l.b16 %v4400
        %v4737 = vunpack.c.h.b16 %v4400
        %v4738 = vunpack.c.l.b16 %v4401
        %v4739 = vunpack.c.h.b16 %v4401
        %v4740 = vpack.c.b16 %v4568, %v4564
        %v4741 = vpack.c.b16 %v4569, %v4565
        %v4742 = vpack.c.b16 %v4570, %v4566
        %v4743 = vpack.c.b16 %v4571, %v4567
        %v4744 = vpack.c.b16 %v4576, %v4572
        %v4745 = vpack.c.b16 %v4577, %v4573
        %v4746 = vpack.c.b16 %v4578, %v4574
        %v4747 = vpack.c.b16 %v4579, %v4575
        %v4748 = vpack.c.b16 %v4584, %v4580
        %v4749 = vpack.c.b16 %v4585, %v4581
        %v4750 = vpack.c.b16 %v4586, %v4582
        %v4751 = vpack.c.b16 %v4587, %v4583
        %v4752 = vpack.c.b16 %v4592, %v4588
        %v4753 = vpack.c.b16 %v4593, %v4589
        %v4754 = vpack.c.b16 %v4594, %v4590
        %v4755 = vpack.c.b16 %v4595, %v4591
        %v4756 = vpack.c.b16 %v4600, %v4596
        %v4757 = vpack.c.b16 %v4601, %v4597
        %v4758 = vpack.c.b16 %v4602, %v4598
        %v4759 = vpack.c.b16 %v4603, %v4599
        %v4760 = vpack.c.b16 %v4608, %v4604
        %v4761 = vpack.c.b16 %v4609, %v4605
        %v4762 = vpack.c.b16 %v4610, %v4606
        %v4763 = vpack.c.b16 %v4611, %v4607
        %v4764 = vpack.c.b16 %v4616, %v4612
        %v4765 = vpack.c.b16 %v4617, %v4613
        %v4766 = vpack.c.b16 %v4618, %v4614
        %v4767 = vpack.c.b16 %v4619, %v4615
        %v4768 = vpack.c.b16 %v4624, %v4620
        %v4769 = vpack.c.b16 %v4625, %v4621
        %v4770 = vpack.c.b16 %v4626, %v4622
        %v4771 = vpack.c.b16 %v4627, %v4623
        %v4772 = vpack.c.b16 %v4632, %v4628
        %v4773 = vpack.c.b16 %v4633, %v4629
        %v4774 = vpack.c.b16 %v4634, %v4630
        %v4775 = vpack.c.b16 %v4635, %v4631
        %v4776 = vpack.c.b16 %v4640, %v4636
        %v4777 = vpack.c.b16 %v4641, %v4637
        %v4778 = vpack.c.b16 %v4642, %v4638
        %v4779 = vpack.c.b16 %v4643, %v4639
        %v4780 = vpack.c.b16 %v4648, %v4644
        %v4781 = vpack.c.b16 %v4649, %v4645
        %v4782 = vpack.c.b16 %v4650, %v4646
        %v4783 = vpack.c.b16 %v4651, %v4647
        %v4784 = vpack.c.b16 %v4656, %v4652
        %v4785 = vpack.c.b16 %v4657, %v4653
        %v4786 = vpack.c.b16 %v4658, %v4654
        %v4787 = vpack.c.b16 %v4659, %v4655
        %v4788 = vpack.c.b16 %v4664, %v4660
        %v4789 = vpack.c.b16 %v4665, %v4661
        %v4790 = vpack.c.b16 %v4666, %v4662
        %v4791 = vpack.c.b16 %v4667, %v4663
        %v4792 = vpack.c.b16 %v4672, %v4668
        %v4793 = vpack.c.b16 %v4673, %v4669
        %v4794 = vpack.c.b16 %v4674, %v4670
        %v4795 = vpack.c.b16 %v4675, %v4671
        %v4796 = vpack.c.b16 %v4680, %v4676
        %v4797 = vpack.c.b16 %v4681, %v4677
        %v4798 = vpack.c.b16 %v4682, %v4678
        %v4799 = vpack.c.b16 %v4683, %v4679
        %v4800 = vpack.c.b16 %v4688, %v4684
        %v4801 = vpack.c.b16 %v4689, %v4685
        %v4802 = vpack.c.b16 %v4690, %v4686
        %v4803 = vpack.c.b16 %v4691, %v4687
        %v4804 = vpack.c.b16 %v4696, %v4692
        %v4805 = vpack.c.b16 %v4697, %v4693
        %v4806 = vpack.c.b16 %v4698, %v4694
        %v4807 = vpack.c.b16 %v4699, %v4695
        %v4808 = vpack.c.b16 %v4704, %v4700
        %v4809 = vpack.c.b16 %v4705, %v4701
        %v4810 = vpack.c.b16 %v4706, %v4702
        %v4811 = vpack.c.b16 %v4707, %v4703
        %v4812 = vpack.c.b16 %v4712, %v4708
        %v4813 = vpack.c.b16 %v4713, %v4709
        %v4814 = vpack.c.b16 %v4714, %v4710
        %v4815 = vpack.c.b16 %v4715, %v4711
        %v4816 = vpack.c.b16 %v4720, %v4716
        %v4817 = vpack.c.b16 %v4721, %v4717
        %v4818 = vpack.c.b16 %v4722, %v4718
        %v4819 = vpack.c.b16 %v4723, %v4719
        %v4820 = vpack.c.b16 %v4728, %v4724
        %v4821 = vpack.c.b16 %v4729, %v4725
        %v4822 = vpack.c.b16 %v4730, %v4726
        %v4823 = vpack.c.b16 %v4731, %v4727
        %v4824 = vpack.c.b16 %v4736, %v4732
        %v4825 = vpack.c.b16 %v4737, %v4733
        %v4826 = vpack.c.b16 %v4738, %v4734
        %v4827 = vpack.c.b16 %v4739, %v4735
        %v4917 = vsel %vm2576, %v4473, 0
        %4919 = vmatpush.bf16.msra.mxu0 %v4768
        %4920 = vmatpush.bf16.msra.mxu0 %v4764
        %4921 = vmatpush.bf16.msra.mxu0 %v4760
        %4922 = vmatpush.bf16.msra.mxu0 %v4756
        %4923 = vmatpush.bf16.msra.mxu0 %v4752
        %4924 = vmatpush.bf16.msra.mxu0 %v4748
        %4925 = vmatpush.bf16.msra.mxu0 %v4744
        %4926 = vmatpush.bf16.msra.mxu0 %v4740
        %4927 = vmatmul.bf16.gmra.mxu0 %v4439
        %v4928 = vpop.f32.mrf.mxu0
        %v4929 = vadd.f32 0.0, %v4928
        %v4930 = vpop.f32.mrf.mxu0
        %v4931 = vadd.f32 0.0, %v4930
        %4932 = vdwg.mxu0
        %4933 = vmatpush.bf16.msra.mxu0 %v4800
        %4934 = vmatpush.bf16.msra.mxu0 %v4796
        %4935 = vmatpush.bf16.msra.mxu0 %v4792
        %4936 = vmatpush.bf16.msra.mxu0 %v4788
        %4937 = vmatpush.bf16.msra.mxu0 %v4784
        %4938 = vmatpush.bf16.msra.mxu0 %v4780
        %4939 = vmatpush.bf16.msra.mxu0 %v4776
        %4940 = vmatpush.bf16.msra.mxu0 %v4772
        %4941 = vmatmul.bf16.gmra.mxu0 %v4456
        %v4942 = vpop.f32.mrf.mxu0
        %v4943 = vadd.f32 %v4929, %v4942
        %v4944 = vpop.f32.mrf.mxu0
        %v4945 = vadd.f32 %v4931, %v4944
        %4946 = vdwg.mxu0
        %4947 = vmatpush.bf16.msra.mxu0 0
        %4948 = vmatpush.bf16.msra.mxu0 0
        %4949 = vmatpush.bf16.msra.mxu0 %v4824
        %4950 = vmatpush.bf16.msra.mxu0 %v4820
        %4951 = vmatpush.bf16.msra.mxu0 %v4816
        %4952 = vmatpush.bf16.msra.mxu0 %v4812
        %4953 = vmatpush.bf16.msra.mxu0 %v4808
        %4954 = vmatpush.bf16.msra.mxu0 %v4804
        %4955 = vmatmul.bf16.gmra.mxu0 %v4917
        %v4956 = vpop.f32.mrf.mxu0
        %v4957 = vadd.f32 %v4943, %v4956
        %v4958 = vpop.f32.mrf.mxu0
        %v4959 = vadd.f32 %v4945, %v4958
        %4960 = vdwg.mxu0
        %4961 = vmatpush.bf16.msra.mxu0 %v4769
        %4962 = vmatpush.bf16.msra.mxu0 %v4765
        %4963 = vmatpush.bf16.msra.mxu0 %v4761
        %4964 = vmatpush.bf16.msra.mxu0 %v4757
        %4965 = vmatpush.bf16.msra.mxu0 %v4753
        %4966 = vmatpush.bf16.msra.mxu0 %v4749
        %4967 = vmatpush.bf16.msra.mxu0 %v4745
        %4968 = vmatpush.bf16.msra.mxu0 %v4741
        %4969 = vmatmul.bf16.gmra.mxu0 %v4439
        %v4970 = vpop.f32.mrf.mxu0
        %v4971 = vadd.f32 0.0, %v4970
        %v4972 = vpop.f32.mrf.mxu0
        %v4973 = vadd.f32 0.0, %v4972
        %4974 = vdwg.mxu0
        %4975 = vmatpush.bf16.msra.mxu0 %v4801
        %4976 = vmatpush.bf16.msra.mxu0 %v4797
        %4977 = vmatpush.bf16.msra.mxu0 %v4793
        %4978 = vmatpush.bf16.msra.mxu0 %v4789
        %4979 = vmatpush.bf16.msra.mxu0 %v4785
        %4980 = vmatpush.bf16.msra.mxu0 %v4781
        %4981 = vmatpush.bf16.msra.mxu0 %v4777
        %4982 = vmatpush.bf16.msra.mxu0 %v4773
        %4983 = vmatmul.bf16.gmra.mxu0 %v4456
        %v4984 = vpop.f32.mrf.mxu0
        %v4985 = vadd.f32 %v4971, %v4984
        %v4986 = vpop.f32.mrf.mxu0
        %v4987 = vadd.f32 %v4973, %v4986
        %4988 = vdwg.mxu0
        %4989 = vmatpush.bf16.msra.mxu0 0
        %4990 = vmatpush.bf16.msra.mxu0 0
        %4991 = vmatpush.bf16.msra.mxu0 %v4825
        %4992 = vmatpush.bf16.msra.mxu0 %v4821
        %4993 = vmatpush.bf16.msra.mxu0 %v4817
        %4994 = vmatpush.bf16.msra.mxu0 %v4813
        %4995 = vmatpush.bf16.msra.mxu0 %v4809
        %4996 = vmatpush.bf16.msra.mxu0 %v4805
        %4997 = vmatmul.bf16.gmra.mxu0 %v4917
        %v4998 = vpop.f32.mrf.mxu0
        %v4999 = vadd.f32 %v4985, %v4998
        %v5000 = vpop.f32.mrf.mxu0
        %v5001 = vadd.f32 %v4987, %v5000
        %5002 = vdwg.mxu0
        %5003 = vmatpush.bf16.msra.mxu0 %v4770
        %5004 = vmatpush.bf16.msra.mxu0 %v4766
        %5005 = vmatpush.bf16.msra.mxu0 %v4762
        %5006 = vmatpush.bf16.msra.mxu0 %v4758
        %5007 = vmatpush.bf16.msra.mxu0 %v4754
        %5008 = vmatpush.bf16.msra.mxu0 %v4750
        %5009 = vmatpush.bf16.msra.mxu0 %v4746
        %5010 = vmatpush.bf16.msra.mxu0 %v4742
        %5011 = vmatmul.bf16.gmra.mxu0 %v4439
        %v5012 = vpop.f32.mrf.mxu0
        %v5013 = vadd.f32 0.0, %v5012
        %v5014 = vpop.f32.mrf.mxu0
        %v5015 = vadd.f32 0.0, %v5014
        %5016 = vdwg.mxu0
        %5017 = vmatpush.bf16.msra.mxu0 %v4802
        %5018 = vmatpush.bf16.msra.mxu0 %v4798
        %5019 = vmatpush.bf16.msra.mxu0 %v4794
        %5020 = vmatpush.bf16.msra.mxu0 %v4790
        %5021 = vmatpush.bf16.msra.mxu0 %v4786
        %5022 = vmatpush.bf16.msra.mxu0 %v4782
        %5023 = vmatpush.bf16.msra.mxu0 %v4778
        %5024 = vmatpush.bf16.msra.mxu0 %v4774
        %5025 = vmatmul.bf16.gmra.mxu0 %v4456
        %v5026 = vpop.f32.mrf.mxu0
        %v5027 = vadd.f32 %v5013, %v5026
        %v5028 = vpop.f32.mrf.mxu0
        %v5029 = vadd.f32 %v5015, %v5028
        %5030 = vdwg.mxu0
        %5031 = vmatpush.bf16.msra.mxu0 0
        %5032 = vmatpush.bf16.msra.mxu0 0
        %5033 = vmatpush.bf16.msra.mxu0 %v4826
        %5034 = vmatpush.bf16.msra.mxu0 %v4822
        %5035 = vmatpush.bf16.msra.mxu0 %v4818
        %5036 = vmatpush.bf16.msra.mxu0 %v4814
        %5037 = vmatpush.bf16.msra.mxu0 %v4810
        %5038 = vmatpush.bf16.msra.mxu0 %v4806
        %5039 = vmatmul.bf16.gmra.mxu0 %v4917
        %v5040 = vpop.f32.mrf.mxu0
        %v5041 = vadd.f32 %v5027, %v5040
        %v5042 = vpop.f32.mrf.mxu0
        %v5043 = vadd.f32 %v5029, %v5042
        %5044 = vdwg.mxu0
        %5045 = vmatpush.bf16.msra.mxu0 %v4771
        %5046 = vmatpush.bf16.msra.mxu0 %v4767
        %5047 = vmatpush.bf16.msra.mxu0 %v4763
        %5048 = vmatpush.bf16.msra.mxu0 %v4759
        %5049 = vmatpush.bf16.msra.mxu0 %v4755
        %5050 = vmatpush.bf16.msra.mxu0 %v4751
        %5051 = vmatpush.bf16.msra.mxu0 %v4747
        %5052 = vmatpush.bf16.msra.mxu0 %v4743
        %5053 = vmatmul.bf16.gmra.mxu0 %v4439
        %v5054 = vpop.f32.mrf.mxu0
        %v5055 = vadd.f32 0.0, %v5054
        %v5056 = vpop.f32.mrf.mxu0
        %v5057 = vadd.f32 0.0, %v5056
        %5058 = vdwg.mxu0
        %5059 = vmatpush.bf16.msra.mxu0 %v4803
        %5060 = vmatpush.bf16.msra.mxu0 %v4799
        %5061 = vmatpush.bf16.msra.mxu0 %v4795
        %5062 = vmatpush.bf16.msra.mxu0 %v4791
        %5063 = vmatpush.bf16.msra.mxu0 %v4787
        %5064 = vmatpush.bf16.msra.mxu0 %v4783
        %5065 = vmatpush.bf16.msra.mxu0 %v4779
        %5066 = vmatpush.bf16.msra.mxu0 %v4775
        %5067 = vmatmul.bf16.gmra.mxu0 %v4456
        %v5068 = vpop.f32.mrf.mxu0
        %v5069 = vadd.f32 %v5055, %v5068
        %v5070 = vpop.f32.mrf.mxu0
        %v5071 = vadd.f32 %v5057, %v5070
        %5072 = vdwg.mxu0
        %5073 = vmatpush.bf16.msra.mxu0 0
        %5074 = vmatpush.bf16.msra.mxu0 0
        %5075 = vmatpush.bf16.msra.mxu0 %v4827
        %5076 = vmatpush.bf16.msra.mxu0 %v4823
        %5077 = vmatpush.bf16.msra.mxu0 %v4819
        %5078 = vmatpush.bf16.msra.mxu0 %v4815
        %5079 = vmatpush.bf16.msra.mxu0 %v4811
        %5080 = vmatpush.bf16.msra.mxu0 %v4807
        %5081 = vmatmul.bf16.gmra.mxu0 %v4917
        %v5082 = vpop.f32.mrf.mxu0
        %v5083 = vadd.f32 %v5069, %v5082
        %v5084 = vpop.f32.mrf.mxu0
        %v5085 = vadd.f32 %v5071, %v5084
        %5086 = vdwg.mxu0
        %v5087 = vld [vmem:[#allocation4] sm:$0xff]
        %v5088 = vld [vmem:[#allocation4 + $0x8] sm:$0xff]
        %v5089 = vld [vmem:[#allocation4 + $0x10] sm:$0xff]
        %v5090 = vld [vmem:[#allocation4 + $0x18] sm:$0xff]
        %v5091 = vld [vmem:[#allocation4 + $0x20] sm:$0xff]
        %v5092 = vld [vmem:[#allocation4 + $0x28] sm:$0xff]
        %v5093 = vld [vmem:[#allocation4 + $0x30] sm:$0xff]
        %v5094 = vld [vmem:[#allocation4 + $0x38] sm:$0xff]
        %v5095 = vadd.f32 %v5087, %v4957
        %v5096 = vadd.f32 %v5088, %v4999
        %v5097 = vadd.f32 %v5089, %v5041
        %v5098 = vadd.f32 %v5090, %v5083
        %v5099 = vadd.f32 %v5091, %v4959
        %v5100 = vadd.f32 %v5092, %v5001
        %v5101 = vadd.f32 %v5093, %v5043
        %v5102 = vadd.f32 %v5094, %v5085
        %5103 = vst [vmem:[#allocation4] sm:$0xff] %v5095
        %5104 = vst [vmem:[#allocation4 + $0x8] sm:$0xff] %v5096
        %5105 = vst [vmem:[#allocation4 + $0x10] sm:$0xff] %v5097
        %5106 = vst [vmem:[#allocation4 + $0x18] sm:$0xff] %v5098
        %5107 = vst [vmem:[#allocation4 + $0x20] sm:$0xff] %v5099
        %5108 = vst [vmem:[#allocation4 + $0x28] sm:$0xff] %v5100
        %5109 = vst [vmem:[#allocation4 + $0x30] sm:$0xff] %v5101
        %5110 = vst [vmem:[#allocation4 + $0x38] sm:$0xff] %v5102
        %v5111 = vld [vmem:[#allocation2] sm:$0xcc]
        %v5112 = vld [vmem:[#allocation2 + $0x8] sm:$0xc]
        %v5113 = vld [vmem:[#allocation2 + $0xc] sm:$0xff]
        %v5114 = vld [vmem:[#allocation2 + $0x14] sm:$0xf]
        %v5115 = vld [vmem:[#allocation2 + $0x18] sm:$0x33]
        %v5116 = vld [vmem:[#allocation2 + $0x20] sm:$0x3]
        %s5117 = scalar_lea.vmem %s3, 2816
        %v5118 = vld [vmem:[%s5117] sm:$0xff]
        %v5119 = vld [vmem:[%s5117 + $0x8] sm:$0xff]
        %v5120 = vld [vmem:[%s5117 + $0x10] sm:$0xff]
        %v5121 = vld [vmem:[%s5117 + $0x18] sm:$0xff]
        %v5122 = vld [vmem:[%s5117 + $0x20] sm:$0xff]
        %v5123 = vld [vmem:[%s5117 + $0x28] sm:$0xff]
        %v5124 = vld [vmem:[%s5117 + $0x30] sm:$0xff]
        %v5125 = vld [vmem:[%s5117 + $0x38] sm:$0xff]
        %v5126 = vld [vmem:[%s5117 + $0x40] sm:$0xff]
        %v5127 = vld [vmem:[%s5117 + $0x48] sm:$0xff]
        %v5128 = vld [vmem:[%s5117 + $0x50] sm:$0xff]
        %v5129 = vld [vmem:[%s5117 + $0x58] sm:$0xff]
        %v5130 = vld [vmem:[%s5117 + $0x60] sm:$0xff]
        %v5131 = vld [vmem:[%s5117 + $0x68] sm:$0xff]
        %v5132 = vld [vmem:[%s5117 + $0x70] sm:$0xff]
        %v5133 = vld [vmem:[%s5117 + $0x78] sm:$0xff]
        %v5134 = vld [vmem:[%s5117 + $0x80] sm:$0xff]
        %v5135 = vld [vmem:[%s5117 + $0x88] sm:$0xff]
        %v5136 = vld [vmem:[%s5117 + $0x90] sm:$0xff]
        %v5137 = vld [vmem:[%s5117 + $0x98] sm:$0xff]
        %v5138 = vld [vmem:[%s5117 + $0xa0] sm:$0xff]
        %v5139 = vld [vmem:[%s5117 + $0xa8] sm:$0xff]
        %v5140 = vld [vmem:[%s5117 + $0xb0] sm:$0xff]
        %v5141 = vld [vmem:[%s5117 + $0xb8] sm:$0xff]
        %v5142 = vld [vmem:[%s5117 + $0xc0] sm:$0xff]
        %v5143 = vld [vmem:[%s5117 + $0xc8] sm:$0xff]
        %v5144 = vld [vmem:[%s5117 + $0xd0] sm:$0xff]
        %v5145 = vld [vmem:[%s5117 + $0xd8] sm:$0xff]
        %v5146 = vld [vmem:[%s5117 + $0xe0] sm:$0xff]
        %v5147 = vld [vmem:[%s5117 + $0xe8] sm:$0xff]
        %v5148 = vld [vmem:[%s5117 + $0xf0] sm:$0xff]
        %v5149 = vld [vmem:[%s5117 + $0xf8] sm:$0xff]
        %v5150 = vld [vmem:[%s5117 + $0x100] sm:$0xff]
        %v5151 = vld [vmem:[%s5117 + $0x108] sm:$0xff]
        %v5152 = vld [vmem:[%s5117 + $0x110] sm:$0xff]
        %v5153 = vld [vmem:[%s5117 + $0x118] sm:$0xff]
        %v5154 = vld [vmem:[%s5117 + $0x120] sm:$0xff]
        %v5155 = vld [vmem:[%s5117 + $0x128] sm:$0xff]
        %v5156 = vld [vmem:[%s5117 + $0x130] sm:$0xff]
        %v5157 = vld [vmem:[%s5117 + $0x138] sm:$0xff]
        %v5158 = vld [vmem:[%s5117 + $0x140] sm:$0xff]
        %v5159 = vld [vmem:[%s5117 + $0x148] sm:$0xff]
        %v5160 = vld [vmem:[%s5117 + $0x150] sm:$0xff]
        %v5161 = vld [vmem:[%s5117 + $0x158] sm:$0xff]
        %v5162 = vld [vmem:[%s5117 + $0x160] sm:$0xff]
        %v5163 = vld [vmem:[%s5117 + $0x168] sm:$0xff]
        %v5164 = vld [vmem:[%s5117 + $0x170] sm:$0xff]
        %v5165 = vld [vmem:[%s5117 + $0x178] sm:$0xff]
        %v5166 = vld [vmem:[%s5117 + $0x180] sm:$0xff]
        %v5167 = vld [vmem:[%s5117 + $0x188] sm:$0xff]
        %v5168 = vld [vmem:[%s5117 + $0x190] sm:$0xff]
        %v5169 = vld [vmem:[%s5117 + $0x198] sm:$0xff]
        %v5170 = vld [vmem:[%s5117 + $0x1a0] sm:$0xff]
        %v5171 = vld [vmem:[%s5117 + $0x1a8] sm:$0xff]
        %v5172 = vld [vmem:[%s5117 + $0x1b0] sm:$0xff]
        %v5173 = vld [vmem:[%s5117 + $0x1b8] sm:$0xff]
        %v5174 = vld [vmem:[%s5117 + $0x1c0] sm:$0xff]
        %v5175 = vld [vmem:[%s5117 + $0x1c8] sm:$0xff]
        %v5176 = vld [vmem:[%s5117 + $0x1d0] sm:$0xff]
        %v5177 = vld [vmem:[%s5117 + $0x1d8] sm:$0xff]
        %v5178 = vld [vmem:[%s5117 + $0x1e0] sm:$0xff]
        %v5179 = vld [vmem:[%s5117 + $0x1e8] sm:$0xff]
        %v5180 = vld [vmem:[%s5117 + $0x1f0] sm:$0xff]
        %v5181 = vld [vmem:[%s5117 + $0x1f8] sm:$0xff]
        %v5182 = vld [vmem:[%s5117 + $0x200] sm:$0xff]
        %v5183 = vld [vmem:[%s5117 + $0x208] sm:$0xff]
        %v5184 = vld [vmem:[%s5117 + $0x210] sm:$0xff]
        %v5185 = vld [vmem:[%s5117 + $0x218] sm:$0xff]
        %v5186 = vld [vmem:[%s5117 + $0x220] sm:$0xff]
        %v5187 = vld [vmem:[%s5117 + $0x228] sm:$0xff]
        %v5188 = vld [vmem:[%s5117 + $0x230] sm:$0xff]
        %v5189 = vld [vmem:[%s5117 + $0x238] sm:$0xff]
        %v5190 = vld [vmem:[%s5117 + $0x240] sm:$0xff]
        %v5191 = vld [vmem:[%s5117 + $0x248] sm:$0xff]
        %v5192 = vld [vmem:[%s5117 + $0x250] sm:$0xff]
        %v5193 = vld [vmem:[%s5117 + $0x258] sm:$0xff]
        %v5194 = vld [vmem:[%s5117 + $0x260] sm:$0xff]
        %v5195 = vld [vmem:[%s5117 + $0x268] sm:$0xff]
        %v5196 = vld [vmem:[%s5117 + $0x270] sm:$0xff]
        %v5197 = vld [vmem:[%s5117 + $0x278] sm:$0xff]
        %v5198 = vld [vmem:[%s5117 + $0x280] sm:$0xff]
        %v5199 = vld [vmem:[%s5117 + $0x288] sm:$0xff]
        %v5200 = vld [vmem:[%s5117 + $0x290] sm:$0xff]
        %v5201 = vld [vmem:[%s5117 + $0x298] sm:$0xff]
        %v5202 = vld [vmem:[%s5117 + $0x2a0] sm:$0xff]
        %v5203 = vld [vmem:[%s5117 + $0x2a8] sm:$0xff]
        %v5204 = vld [vmem:[%s5117 + $0x2b0] sm:$0xff]
        %v5205 = vld [vmem:[%s5117 + $0x2b8] sm:$0xff]
        %v5212 = vunpack.c.l.b16 %v5111
        %v5213 = vunpack.c.h.b16 %v5111
        %v5214 = vunpack.c.l.b16 %v5112
        %v5215 = vunpack.c.l.b16 %v5113
        %v5216 = vunpack.c.h.b16 %v5113
        %v5217 = vunpack.c.l.b16 %v5114
        %v5218 = vunpack.c.l.b16 %v5115
        %v5219 = vunpack.c.h.b16 %v5115
        %v5220 = vunpack.c.l.b16 %v5116
        %v5221 = vpack.c.b16 %v5215, %v5212
        %v5222 = vpack.c.b16 %v5216, %v5213
        %v5223 = vpack.c.b16 %v5217, %v5214
        %v5224 = vpack.c.b16 %v5218, %v5218
        %v5225 = vpack.c.b16 %v5219, %v5219
        %v5226 = vpack.c.b16 %v5220, %v5220
        %v5227 = vrot.slane %v5221, 2
        %v5228 = vrot.slane %v5224, 2
        %v5229 = vsel %vm1253, %v5227, %v5228
        %v5230 = vrot.slane %v5222, 2
        %v5231 = vrot.slane %v5225, 2
        %v5232 = vsel %vm1253, %v5230, %v5231
        %v5233 = vrot.slane %v5223, 2
        %v5234 = vrot.slane %v5226, 2
        %v5235 = vsel %vm1253, %v5233, %v5234
        %v5326 = vunpack.c.l.b16 %v5118
        %v5327 = vunpack.c.h.b16 %v5118
        %v5328 = vunpack.c.l.b16 %v5119
        %v5329 = vunpack.c.h.b16 %v5119
        %v5330 = vunpack.c.l.b16 %v5120
        %v5331 = vunpack.c.h.b16 %v5120
        %v5332 = vunpack.c.l.b16 %v5121
        %v5333 = vunpack.c.h.b16 %v5121
        %v5334 = vunpack.c.l.b16 %v5122
        %v5335 = vunpack.c.h.b16 %v5122
        %v5336 = vunpack.c.l.b16 %v5123
        %v5337 = vunpack.c.h.b16 %v5123
        %v5338 = vunpack.c.l.b16 %v5124
        %v5339 = vunpack.c.h.b16 %v5124
        %v5340 = vunpack.c.l.b16 %v5125
        %v5341 = vunpack.c.h.b16 %v5125
        %v5342 = vunpack.c.l.b16 %v5126
        %v5343 = vunpack.c.h.b16 %v5126
        %v5344 = vunpack.c.l.b16 %v5127
        %v5345 = vunpack.c.h.b16 %v5127
        %v5346 = vunpack.c.l.b16 %v5128
        %v5347 = vunpack.c.h.b16 %v5128
        %v5348 = vunpack.c.l.b16 %v5129
        %v5349 = vunpack.c.h.b16 %v5129
        %v5350 = vunpack.c.l.b16 %v5130
        %v5351 = vunpack.c.h.b16 %v5130
        %v5352 = vunpack.c.l.b16 %v5131
        %v5353 = vunpack.c.h.b16 %v5131
        %v5354 = vunpack.c.l.b16 %v5132
        %v5355 = vunpack.c.h.b16 %v5132
        %v5356 = vunpack.c.l.b16 %v5133
        %v5357 = vunpack.c.h.b16 %v5133
        %v5358 = vunpack.c.l.b16 %v5134
        %v5359 = vunpack.c.h.b16 %v5134
        %v5360 = vunpack.c.l.b16 %v5135
        %v5361 = vunpack.c.h.b16 %v5135
        %v5362 = vunpack.c.l.b16 %v5136
        %v5363 = vunpack.c.h.b16 %v5136
        %v5364 = vunpack.c.l.b16 %v5137
        %v5365 = vunpack.c.h.b16 %v5137
        %v5366 = vunpack.c.l.b16 %v5138
        %v5367 = vunpack.c.h.b16 %v5138
        %v5368 = vunpack.c.l.b16 %v5139
        %v5369 = vunpack.c.h.b16 %v5139
        %v5370 = vunpack.c.l.b16 %v5140
        %v5371 = vunpack.c.h.b16 %v5140
        %v5372 = vunpack.c.l.b16 %v5141
        %v5373 = vunpack.c.h.b16 %v5141
        %v5374 = vunpack.c.l.b16 %v5142
        %v5375 = vunpack.c.h.b16 %v5142
        %v5376 = vunpack.c.l.b16 %v5143
        %v5377 = vunpack.c.h.b16 %v5143
        %v5378 = vunpack.c.l.b16 %v5144
        %v5379 = vunpack.c.h.b16 %v5144
        %v5380 = vunpack.c.l.b16 %v5145
        %v5381 = vunpack.c.h.b16 %v5145
        %v5382 = vunpack.c.l.b16 %v5146
        %v5383 = vunpack.c.h.b16 %v5146
        %v5384 = vunpack.c.l.b16 %v5147
        %v5385 = vunpack.c.h.b16 %v5147
        %v5386 = vunpack.c.l.b16 %v5148
        %v5387 = vunpack.c.h.b16 %v5148
        %v5388 = vunpack.c.l.b16 %v5149
        %v5389 = vunpack.c.h.b16 %v5149
        %v5390 = vunpack.c.l.b16 %v5150
        %v5391 = vunpack.c.h.b16 %v5150
        %v5392 = vunpack.c.l.b16 %v5151
        %v5393 = vunpack.c.h.b16 %v5151
        %v5394 = vunpack.c.l.b16 %v5152
        %v5395 = vunpack.c.h.b16 %v5152
        %v5396 = vunpack.c.l.b16 %v5153
        %v5397 = vunpack.c.h.b16 %v5153
        %v5398 = vunpack.c.l.b16 %v5154
        %v5399 = vunpack.c.h.b16 %v5154
        %v5400 = vunpack.c.l.b16 %v5155
        %v5401 = vunpack.c.h.b16 %v5155
        %v5402 = vunpack.c.l.b16 %v5156
        %v5403 = vunpack.c.h.b16 %v5156
        %v5404 = vunpack.c.l.b16 %v5157
        %v5405 = vunpack.c.h.b16 %v5157
        %v5406 = vunpack.c.l.b16 %v5158
        %v5407 = vunpack.c.h.b16 %v5158
        %v5408 = vunpack.c.l.b16 %v5159
        %v5409 = vunpack.c.h.b16 %v5159
        %v5410 = vunpack.c.l.b16 %v5160
        %v5411 = vunpack.c.h.b16 %v5160
        %v5412 = vunpack.c.l.b16 %v5161
        %v5413 = vunpack.c.h.b16 %v5161
        %v5414 = vunpack.c.l.b16 %v5162
        %v5415 = vunpack.c.h.b16 %v5162
        %v5416 = vunpack.c.l.b16 %v5163
        %v5417 = vunpack.c.h.b16 %v5163
        %v5418 = vunpack.c.l.b16 %v5164
        %v5419 = vunpack.c.h.b16 %v5164
        %v5420 = vunpack.c.l.b16 %v5165
        %v5421 = vunpack.c.h.b16 %v5165
        %v5422 = vunpack.c.l.b16 %v5166
        %v5423 = vunpack.c.h.b16 %v5166
        %v5424 = vunpack.c.l.b16 %v5167
        %v5425 = vunpack.c.h.b16 %v5167
        %v5426 = vunpack.c.l.b16 %v5168
        %v5427 = vunpack.c.h.b16 %v5168
        %v5428 = vunpack.c.l.b16 %v5169
        %v5429 = vunpack.c.h.b16 %v5169
        %v5430 = vunpack.c.l.b16 %v5170
        %v5431 = vunpack.c.h.b16 %v5170
        %v5432 = vunpack.c.l.b16 %v5171
        %v5433 = vunpack.c.h.b16 %v5171
        %v5434 = vunpack.c.l.b16 %v5172
        %v5435 = vunpack.c.h.b16 %v5172
        %v5436 = vunpack.c.l.b16 %v5173
        %v5437 = vunpack.c.h.b16 %v5173
        %v5438 = vunpack.c.l.b16 %v5174
        %v5439 = vunpack.c.h.b16 %v5174
        %v5440 = vunpack.c.l.b16 %v5175
        %v5441 = vunpack.c.h.b16 %v5175
        %v5442 = vunpack.c.l.b16 %v5176
        %v5443 = vunpack.c.h.b16 %v5176
        %v5444 = vunpack.c.l.b16 %v5177
        %v5445 = vunpack.c.h.b16 %v5177
        %v5446 = vunpack.c.l.b16 %v5178
        %v5447 = vunpack.c.h.b16 %v5178
        %v5448 = vunpack.c.l.b16 %v5179
        %v5449 = vunpack.c.h.b16 %v5179
        %v5450 = vunpack.c.l.b16 %v5180
        %v5451 = vunpack.c.h.b16 %v5180
        %v5452 = vunpack.c.l.b16 %v5181
        %v5453 = vunpack.c.h.b16 %v5181
        %v5454 = vunpack.c.l.b16 %v5182
        %v5455 = vunpack.c.h.b16 %v5182
        %v5456 = vunpack.c.l.b16 %v5183
        %v5457 = vunpack.c.h.b16 %v5183
        %v5458 = vunpack.c.l.b16 %v5184
        %v5459 = vunpack.c.h.b16 %v5184
        %v5460 = vunpack.c.l.b16 %v5185
        %v5461 = vunpack.c.h.b16 %v5185
        %v5462 = vunpack.c.l.b16 %v5186
        %v5463 = vunpack.c.h.b16 %v5186
        %v5464 = vunpack.c.l.b16 %v5187
        %v5465 = vunpack.c.h.b16 %v5187
        %v5466 = vunpack.c.l.b16 %v5188
        %v5467 = vunpack.c.h.b16 %v5188
        %v5468 = vunpack.c.l.b16 %v5189
        %v5469 = vunpack.c.h.b16 %v5189
        %v5470 = vunpack.c.l.b16 %v5190
        %v5471 = vunpack.c.h.b16 %v5190
        %v5472 = vunpack.c.l.b16 %v5191
        %v5473 = vunpack.c.h.b16 %v5191
        %v5474 = vunpack.c.l.b16 %v5192
        %v5475 = vunpack.c.h.b16 %v5192
        %v5476 = vunpack.c.l.b16 %v5193
        %v5477 = vunpack.c.h.b16 %v5193
        %v5478 = vunpack.c.l.b16 %v5194
        %v5479 = vunpack.c.h.b16 %v5194
        %v5480 = vunpack.c.l.b16 %v5195
        %v5481 = vunpack.c.h.b16 %v5195
        %v5482 = vunpack.c.l.b16 %v5196
        %v5483 = vunpack.c.h.b16 %v5196
        %v5484 = vunpack.c.l.b16 %v5197
        %v5485 = vunpack.c.h.b16 %v5197
        %v5486 = vunpack.c.l.b16 %v5198
        %v5487 = vunpack.c.h.b16 %v5198
        %v5488 = vunpack.c.l.b16 %v5199
        %v5489 = vunpack.c.h.b16 %v5199
        %v5490 = vunpack.c.l.b16 %v5200
        %v5491 = vunpack.c.h.b16 %v5200
        %v5492 = vunpack.c.l.b16 %v5201
        %v5493 = vunpack.c.h.b16 %v5201
        %v5494 = vunpack.c.l.b16 %v5202
        %v5495 = vunpack.c.h.b16 %v5202
        %v5496 = vunpack.c.l.b16 %v5203
        %v5497 = vunpack.c.h.b16 %v5203
        %v5498 = vunpack.c.l.b16 %v5204
        %v5499 = vunpack.c.h.b16 %v5204
        %v5500 = vunpack.c.l.b16 %v5205
        %v5501 = vunpack.c.h.b16 %v5205
        %v5502 = vpack.c.b16 %v5330, %v5326
        %v5503 = vpack.c.b16 %v5331, %v5327
        %v5504 = vpack.c.b16 %v5332, %v5328
        %v5505 = vpack.c.b16 %v5333, %v5329
        %v5506 = vpack.c.b16 %v5338, %v5334
        %v5507 = vpack.c.b16 %v5339, %v5335
        %v5508 = vpack.c.b16 %v5340, %v5336
        %v5509 = vpack.c.b16 %v5341, %v5337
        %v5510 = vpack.c.b16 %v5346, %v5342
        %v5511 = vpack.c.b16 %v5347, %v5343
        %v5512 = vpack.c.b16 %v5348, %v5344
        %v5513 = vpack.c.b16 %v5349, %v5345
        %v5514 = vpack.c.b16 %v5354, %v5350
        %v5515 = vpack.c.b16 %v5355, %v5351
        %v5516 = vpack.c.b16 %v5356, %v5352
        %v5517 = vpack.c.b16 %v5357, %v5353
        %v5518 = vpack.c.b16 %v5362, %v5358
        %v5519 = vpack.c.b16 %v5363, %v5359
        %v5520 = vpack.c.b16 %v5364, %v5360
        %v5521 = vpack.c.b16 %v5365, %v5361
        %v5522 = vpack.c.b16 %v5370, %v5366
        %v5523 = vpack.c.b16 %v5371, %v5367
        %v5524 = vpack.c.b16 %v5372, %v5368
        %v5525 = vpack.c.b16 %v5373, %v5369
        %v5526 = vpack.c.b16 %v5378, %v5374
        %v5527 = vpack.c.b16 %v5379, %v5375
        %v5528 = vpack.c.b16 %v5380, %v5376
        %v5529 = vpack.c.b16 %v5381, %v5377
        %v5530 = vpack.c.b16 %v5386, %v5382
        %v5531 = vpack.c.b16 %v5387, %v5383
        %v5532 = vpack.c.b16 %v5388, %v5384
        %v5533 = vpack.c.b16 %v5389, %v5385
        %v5534 = vpack.c.b16 %v5394, %v5390
        %v5535 = vpack.c.b16 %v5395, %v5391
        %v5536 = vpack.c.b16 %v5396, %v5392
        %v5537 = vpack.c.b16 %v5397, %v5393
        %v5538 = vpack.c.b16 %v5402, %v5398
        %v5539 = vpack.c.b16 %v5403, %v5399
        %v5540 = vpack.c.b16 %v5404, %v5400
        %v5541 = vpack.c.b16 %v5405, %v5401
        %v5542 = vpack.c.b16 %v5410, %v5406
        %v5543 = vpack.c.b16 %v5411, %v5407
        %v5544 = vpack.c.b16 %v5412, %v5408
        %v5545 = vpack.c.b16 %v5413, %v5409
        %v5546 = vpack.c.b16 %v5418, %v5414
        %v5547 = vpack.c.b16 %v5419, %v5415
        %v5548 = vpack.c.b16 %v5420, %v5416
        %v5549 = vpack.c.b16 %v5421, %v5417
        %v5550 = vpack.c.b16 %v5426, %v5422
        %v5551 = vpack.c.b16 %v5427, %v5423
        %v5552 = vpack.c.b16 %v5428, %v5424
        %v5553 = vpack.c.b16 %v5429, %v5425
        %v5554 = vpack.c.b16 %v5434, %v5430
        %v5555 = vpack.c.b16 %v5435, %v5431
        %v5556 = vpack.c.b16 %v5436, %v5432
        %v5557 = vpack.c.b16 %v5437, %v5433
        %v5558 = vpack.c.b16 %v5442, %v5438
        %v5559 = vpack.c.b16 %v5443, %v5439
        %v5560 = vpack.c.b16 %v5444, %v5440
        %v5561 = vpack.c.b16 %v5445, %v5441
        %v5562 = vpack.c.b16 %v5450, %v5446
        %v5563 = vpack.c.b16 %v5451, %v5447
        %v5564 = vpack.c.b16 %v5452, %v5448
        %v5565 = vpack.c.b16 %v5453, %v5449
        %v5566 = vpack.c.b16 %v5458, %v5454
        %v5567 = vpack.c.b16 %v5459, %v5455
        %v5568 = vpack.c.b16 %v5460, %v5456
        %v5569 = vpack.c.b16 %v5461, %v5457
        %v5570 = vpack.c.b16 %v5466, %v5462
        %v5571 = vpack.c.b16 %v5467, %v5463
        %v5572 = vpack.c.b16 %v5468, %v5464
        %v5573 = vpack.c.b16 %v5469, %v5465
        %v5574 = vpack.c.b16 %v5474, %v5470
        %v5575 = vpack.c.b16 %v5475, %v5471
        %v5576 = vpack.c.b16 %v5476, %v5472
        %v5577 = vpack.c.b16 %v5477, %v5473
        %v5578 = vpack.c.b16 %v5482, %v5478
        %v5579 = vpack.c.b16 %v5483, %v5479
        %v5580 = vpack.c.b16 %v5484, %v5480
        %v5581 = vpack.c.b16 %v5485, %v5481
        %v5582 = vpack.c.b16 %v5490, %v5486
        %v5583 = vpack.c.b16 %v5491, %v5487
        %v5584 = vpack.c.b16 %v5492, %v5488
        %v5585 = vpack.c.b16 %v5493, %v5489
        %v5586 = vpack.c.b16 %v5498, %v5494
        %v5587 = vpack.c.b16 %v5499, %v5495
        %v5588 = vpack.c.b16 %v5500, %v5496
        %v5589 = vpack.c.b16 %v5501, %v5497
        %v5679 = vsel %vm2576, %v5235, 0
        %5681 = vmatpush.bf16.msra.mxu0 %v5530
        %5682 = vmatpush.bf16.msra.mxu0 %v5526
        %5683 = vmatpush.bf16.msra.mxu0 %v5522
        %5684 = vmatpush.bf16.msra.mxu0 %v5518
        %5685 = vmatpush.bf16.msra.mxu0 %v5514
        %5686 = vmatpush.bf16.msra.mxu0 %v5510
        %5687 = vmatpush.bf16.msra.mxu0 %v5506
        %5688 = vmatpush.bf16.msra.mxu0 %v5502
        %5689 = vmatmul.bf16.gmra.mxu0 %v5229
        %v5690 = vpop.f32.mrf.mxu0
        %v5691 = vadd.f32 0.0, %v5690
        %v5692 = vpop.f32.mrf.mxu0
        %v5693 = vadd.f32 0.0, %v5692
        %5694 = vdwg.mxu0
        %5695 = vmatpush.bf16.msra.mxu0 %v5562
        %5696 = vmatpush.bf16.msra.mxu0 %v5558
        %5697 = vmatpush.bf16.msra.mxu0 %v5554
        %5698 = vmatpush.bf16.msra.mxu0 %v5550
        %5699 = vmatpush.bf16.msra.mxu0 %v5546
        %5700 = vmatpush.bf16.msra.mxu0 %v5542
        %5701 = vmatpush.bf16.msra.mxu0 %v5538
        %5702 = vmatpush.bf16.msra.mxu0 %v5534
        %5703 = vmatmul.bf16.gmra.mxu0 %v5232
        %v5704 = vpop.f32.mrf.mxu0
        %v5705 = vadd.f32 %v5691, %v5704
        %v5706 = vpop.f32.mrf.mxu0
        %v5707 = vadd.f32 %v5693, %v5706
        %5708 = vdwg.mxu0
        %5709 = vmatpush.bf16.msra.mxu0 0
        %5710 = vmatpush.bf16.msra.mxu0 0
        %5711 = vmatpush.bf16.msra.mxu0 %v5586
        %5712 = vmatpush.bf16.msra.mxu0 %v5582
        %5713 = vmatpush.bf16.msra.mxu0 %v5578
        %5714 = vmatpush.bf16.msra.mxu0 %v5574
        %5715 = vmatpush.bf16.msra.mxu0 %v5570
        %5716 = vmatpush.bf16.msra.mxu0 %v5566
        %5717 = vmatmul.bf16.gmra.mxu0 %v5679
        %v5718 = vpop.f32.mrf.mxu0
        %v5719 = vadd.f32 %v5705, %v5718
        %v5720 = vpop.f32.mrf.mxu0
        %v5721 = vadd.f32 %v5707, %v5720
        %5722 = vdwg.mxu0
        %5723 = vmatpush.bf16.msra.mxu0 %v5531
        %5724 = vmatpush.bf16.msra.mxu0 %v5527
        %5725 = vmatpush.bf16.msra.mxu0 %v5523
        %5726 = vmatpush.bf16.msra.mxu0 %v5519
        %5727 = vmatpush.bf16.msra.mxu0 %v5515
        %5728 = vmatpush.bf16.msra.mxu0 %v5511
        %5729 = vmatpush.bf16.msra.mxu0 %v5507
        %5730 = vmatpush.bf16.msra.mxu0 %v5503
        %5731 = vmatmul.bf16.gmra.mxu0 %v5229
        %v5732 = vpop.f32.mrf.mxu0
        %v5733 = vadd.f32 0.0, %v5732
        %v5734 = vpop.f32.mrf.mxu0
        %v5735 = vadd.f32 0.0, %v5734
        %5736 = vdwg.mxu0
        %5737 = vmatpush.bf16.msra.mxu0 %v5563
        %5738 = vmatpush.bf16.msra.mxu0 %v5559
        %5739 = vmatpush.bf16.msra.mxu0 %v5555
        %5740 = vmatpush.bf16.msra.mxu0 %v5551
        %5741 = vmatpush.bf16.msra.mxu0 %v5547
        %5742 = vmatpush.bf16.msra.mxu0 %v5543
        %5743 = vmatpush.bf16.msra.mxu0 %v5539
        %5744 = vmatpush.bf16.msra.mxu0 %v5535
        %5745 = vmatmul.bf16.gmra.mxu0 %v5232
        %v5746 = vpop.f32.mrf.mxu0
        %v5747 = vadd.f32 %v5733, %v5746
        %v5748 = vpop.f32.mrf.mxu0
        %v5749 = vadd.f32 %v5735, %v5748
        %5750 = vdwg.mxu0
        %5751 = vmatpush.bf16.msra.mxu0 0
        %5752 = vmatpush.bf16.msra.mxu0 0
        %5753 = vmatpush.bf16.msra.mxu0 %v5587
        %5754 = vmatpush.bf16.msra.mxu0 %v5583
        %5755 = vmatpush.bf16.msra.mxu0 %v5579
        %5756 = vmatpush.bf16.msra.mxu0 %v5575
        %5757 = vmatpush.bf16.msra.mxu0 %v5571
        %5758 = vmatpush.bf16.msra.mxu0 %v5567
        %5759 = vmatmul.bf16.gmra.mxu0 %v5679
        %v5760 = vpop.f32.mrf.mxu0
        %v5761 = vadd.f32 %v5747, %v5760
        %v5762 = vpop.f32.mrf.mxu0
        %v5763 = vadd.f32 %v5749, %v5762
        %5764 = vdwg.mxu0
        %5765 = vmatpush.bf16.msra.mxu0 %v5532
        %5766 = vmatpush.bf16.msra.mxu0 %v5528
        %5767 = vmatpush.bf16.msra.mxu0 %v5524
        %5768 = vmatpush.bf16.msra.mxu0 %v5520
        %5769 = vmatpush.bf16.msra.mxu0 %v5516
        %5770 = vmatpush.bf16.msra.mxu0 %v5512
        %5771 = vmatpush.bf16.msra.mxu0 %v5508
        %5772 = vmatpush.bf16.msra.mxu0 %v5504
        %5773 = vmatmul.bf16.gmra.mxu0 %v5229
        %v5774 = vpop.f32.mrf.mxu0
        %v5775 = vadd.f32 0.0, %v5774
        %v5776 = vpop.f32.mrf.mxu0
        %v5777 = vadd.f32 0.0, %v5776
        %5778 = vdwg.mxu0
        %5779 = vmatpush.bf16.msra.mxu0 %v5564
        %5780 = vmatpush.bf16.msra.mxu0 %v5560
        %5781 = vmatpush.bf16.msra.mxu0 %v5556
        %5782 = vmatpush.bf16.msra.mxu0 %v5552
        %5783 = vmatpush.bf16.msra.mxu0 %v5548
        %5784 = vmatpush.bf16.msra.mxu0 %v5544
        %5785 = vmatpush.bf16.msra.mxu0 %v5540
        %5786 = vmatpush.bf16.msra.mxu0 %v5536
        %5787 = vmatmul.bf16.gmra.mxu0 %v5232
        %v5788 = vpop.f32.mrf.mxu0
        %v5789 = vadd.f32 %v5775, %v5788
        %v5790 = vpop.f32.mrf.mxu0
        %v5791 = vadd.f32 %v5777, %v5790
        %5792 = vdwg.mxu0
        %5793 = vmatpush.bf16.msra.mxu0 0
        %5794 = vmatpush.bf16.msra.mxu0 0
        %5795 = vmatpush.bf16.msra.mxu0 %v5588
        %5796 = vmatpush.bf16.msra.mxu0 %v5584
        %5797 = vmatpush.bf16.msra.mxu0 %v5580
        %5798 = vmatpush.bf16.msra.mxu0 %v5576
        %5799 = vmatpush.bf16.msra.mxu0 %v5572
        %5800 = vmatpush.bf16.msra.mxu0 %v5568
        %5801 = vmatmul.bf16.gmra.mxu0 %v5679
        %v5802 = vpop.f32.mrf.mxu0
        %v5803 = vadd.f32 %v5789, %v5802
        %v5804 = vpop.f32.mrf.mxu0
        %v5805 = vadd.f32 %v5791, %v5804
        %5806 = vdwg.mxu0
        %5807 = vmatpush.bf16.msra.mxu0 %v5533
        %5808 = vmatpush.bf16.msra.mxu0 %v5529
        %5809 = vmatpush.bf16.msra.mxu0 %v5525
        %5810 = vmatpush.bf16.msra.mxu0 %v5521
        %5811 = vmatpush.bf16.msra.mxu0 %v5517
        %5812 = vmatpush.bf16.msra.mxu0 %v5513
        %5813 = vmatpush.bf16.msra.mxu0 %v5509
        %5814 = vmatpush.bf16.msra.mxu0 %v5505
        %5815 = vmatmul.bf16.gmra.mxu0 %v5229
        %v5816 = vpop.f32.mrf.mxu0
        %v5817 = vadd.f32 0.0, %v5816
        %v5818 = vpop.f32.mrf.mxu0
        %v5819 = vadd.f32 0.0, %v5818
        %5820 = vdwg.mxu0
        %5821 = vmatpush.bf16.msra.mxu0 %v5565
        %5822 = vmatpush.bf16.msra.mxu0 %v5561
        %5823 = vmatpush.bf16.msra.mxu0 %v5557
        %5824 = vmatpush.bf16.msra.mxu0 %v5553
        %5825 = vmatpush.bf16.msra.mxu0 %v5549
        %5826 = vmatpush.bf16.msra.mxu0 %v5545
        %5827 = vmatpush.bf16.msra.mxu0 %v5541
        %5828 = vmatpush.bf16.msra.mxu0 %v5537
        %5829 = vmatmul.bf16.gmra.mxu0 %v5232
        %v5830 = vpop.f32.mrf.mxu0
        %v5831 = vadd.f32 %v5817, %v5830
        %v5832 = vpop.f32.mrf.mxu0
        %v5833 = vadd.f32 %v5819, %v5832
        %5834 = vdwg.mxu0
        %5835 = vmatpush.bf16.msra.mxu0 0
        %5836 = vmatpush.bf16.msra.mxu0 0
        %5837 = vmatpush.bf16.msra.mxu0 %v5589
        %5838 = vmatpush.bf16.msra.mxu0 %v5585
        %5839 = vmatpush.bf16.msra.mxu0 %v5581
        %5840 = vmatpush.bf16.msra.mxu0 %v5577
        %5841 = vmatpush.bf16.msra.mxu0 %v5573
        %5842 = vmatpush.bf16.msra.mxu0 %v5569
        %5843 = vmatmul.bf16.gmra.mxu0 %v5679
        %v5844 = vpop.f32.mrf.mxu0
        %v5845 = vadd.f32 %v5831, %v5844
        %v5846 = vpop.f32.mrf.mxu0
        %v5847 = vadd.f32 %v5833, %v5846
        %5848 = vdwg.mxu0
        %v5849 = vld [vmem:[#allocation4] sm:$0xff]
        %v5850 = vld [vmem:[#allocation4 + $0x8] sm:$0xff]
        %v5851 = vld [vmem:[#allocation4 + $0x10] sm:$0xff]
        %v5852 = vld [vmem:[#allocation4 + $0x18] sm:$0xff]
        %v5853 = vld [vmem:[#allocation4 + $0x20] sm:$0xff]
        %v5854 = vld [vmem:[#allocation4 + $0x28] sm:$0xff]
        %v5855 = vld [vmem:[#allocation4 + $0x30] sm:$0xff]
        %v5856 = vld [vmem:[#allocation4 + $0x38] sm:$0xff]
        %v5857 = vadd.f32 %v5849, %v5719
        %v5858 = vadd.f32 %v5850, %v5761
        %v5859 = vadd.f32 %v5851, %v5803
        %v5860 = vadd.f32 %v5852, %v5845
        %v5861 = vadd.f32 %v5853, %v5721
        %v5862 = vadd.f32 %v5854, %v5763
        %v5863 = vadd.f32 %v5855, %v5805
        %v5864 = vadd.f32 %v5856, %v5847
        %5865 = vst [vmem:[#allocation4] sm:$0xff] %v5857
        %5866 = vst [vmem:[#allocation4 + $0x8] sm:$0xff] %v5858
        %5867 = vst [vmem:[#allocation4 + $0x10] sm:$0xff] %v5859
        %5868 = vst [vmem:[#allocation4 + $0x18] sm:$0xff] %v5860
        %5869 = vst [vmem:[#allocation4 + $0x20] sm:$0xff] %v5861
        %5870 = vst [vmem:[#allocation4 + $0x28] sm:$0xff] %v5862
        %5871 = vst [vmem:[#allocation4 + $0x30] sm:$0xff] %v5863
        %5872 = vst [vmem:[#allocation4 + $0x38] sm:$0xff] %v5864
        %v5873 = vld [vmem:[#allocation2] sm:$0xcc]
        %v5874 = vld [vmem:[#allocation2 + $0x8] sm:$0xc]
        %v5875 = vld [vmem:[#allocation2 + $0xc] sm:$0xff]
        %v5876 = vld [vmem:[#allocation2 + $0x14] sm:$0xf]
        %v5877 = vld [vmem:[#allocation2 + $0x18] sm:$0x77]
        %v5878 = vld [vmem:[#allocation2 + $0x20] sm:$0x7]
        %s5879 = scalar_lea.vmem %s3, 3520
        %v5880 = vld [vmem:[%s5879] sm:$0xff]
        %v5881 = vld [vmem:[%s5879 + $0x8] sm:$0xff]
        %v5882 = vld [vmem:[%s5879 + $0x10] sm:$0xff]
        %v5883 = vld [vmem:[%s5879 + $0x18] sm:$0xff]
        %v5884 = vld [vmem:[%s5879 + $0x20] sm:$0xff]
        %v5885 = vld [vmem:[%s5879 + $0x28] sm:$0xff]
        %v5886 = vld [vmem:[%s5879 + $0x30] sm:$0xff]
        %v5887 = vld [vmem:[%s5879 + $0x38] sm:$0xff]
        %v5888 = vld [vmem:[%s5879 + $0x40] sm:$0xff]
        %v5889 = vld [vmem:[%s5879 + $0x48] sm:$0xff]
        %v5890 = vld [vmem:[%s5879 + $0x50] sm:$0xff]
        %v5891 = vld [vmem:[%s5879 + $0x58] sm:$0xff]
        %v5892 = vld [vmem:[%s5879 + $0x60] sm:$0xff]
        %v5893 = vld [vmem:[%s5879 + $0x68] sm:$0xff]
        %v5894 = vld [vmem:[%s5879 + $0x70] sm:$0xff]
        %v5895 = vld [vmem:[%s5879 + $0x78] sm:$0xff]
        %v5896 = vld [vmem:[%s5879 + $0x80] sm:$0xff]
        %v5897 = vld [vmem:[%s5879 + $0x88] sm:$0xff]
        %v5898 = vld [vmem:[%s5879 + $0x90] sm:$0xff]
        %v5899 = vld [vmem:[%s5879 + $0x98] sm:$0xff]
        %v5900 = vld [vmem:[%s5879 + $0xa0] sm:$0xff]
        %v5901 = vld [vmem:[%s5879 + $0xa8] sm:$0xff]
        %v5902 = vld [vmem:[%s5879 + $0xb0] sm:$0xff]
        %v5903 = vld [vmem:[%s5879 + $0xb8] sm:$0xff]
        %v5904 = vld [vmem:[%s5879 + $0xc0] sm:$0xff]
        %v5905 = vld [vmem:[%s5879 + $0xc8] sm:$0xff]
        %v5906 = vld [vmem:[%s5879 + $0xd0] sm:$0xff]
        %v5907 = vld [vmem:[%s5879 + $0xd8] sm:$0xff]
        %v5908 = vld [vmem:[%s5879 + $0xe0] sm:$0xff]
        %v5909 = vld [vmem:[%s5879 + $0xe8] sm:$0xff]
        %v5910 = vld [vmem:[%s5879 + $0xf0] sm:$0xff]
        %v5911 = vld [vmem:[%s5879 + $0xf8] sm:$0xff]
        %v5912 = vld [vmem:[%s5879 + $0x100] sm:$0xff]
        %v5913 = vld [vmem:[%s5879 + $0x108] sm:$0xff]
        %v5914 = vld [vmem:[%s5879 + $0x110] sm:$0xff]
        %v5915 = vld [vmem:[%s5879 + $0x118] sm:$0xff]
        %v5916 = vld [vmem:[%s5879 + $0x120] sm:$0xff]
        %v5917 = vld [vmem:[%s5879 + $0x128] sm:$0xff]
        %v5918 = vld [vmem:[%s5879 + $0x130] sm:$0xff]
        %v5919 = vld [vmem:[%s5879 + $0x138] sm:$0xff]
        %v5920 = vld [vmem:[%s5879 + $0x140] sm:$0xff]
        %v5921 = vld [vmem:[%s5879 + $0x148] sm:$0xff]
        %v5922 = vld [vmem:[%s5879 + $0x150] sm:$0xff]
        %v5923 = vld [vmem:[%s5879 + $0x158] sm:$0xff]
        %v5924 = vld [vmem:[%s5879 + $0x160] sm:$0xff]
        %v5925 = vld [vmem:[%s5879 + $0x168] sm:$0xff]
        %v5926 = vld [vmem:[%s5879 + $0x170] sm:$0xff]
        %v5927 = vld [vmem:[%s5879 + $0x178] sm:$0xff]
        %v5928 = vld [vmem:[%s5879 + $0x180] sm:$0xff]
        %v5929 = vld [vmem:[%s5879 + $0x188] sm:$0xff]
        %v5930 = vld [vmem:[%s5879 + $0x190] sm:$0xff]
        %v5931 = vld [vmem:[%s5879 + $0x198] sm:$0xff]
        %v5932 = vld [vmem:[%s5879 + $0x1a0] sm:$0xff]
        %v5933 = vld [vmem:[%s5879 + $0x1a8] sm:$0xff]
        %v5934 = vld [vmem:[%s5879 + $0x1b0] sm:$0xff]
        %v5935 = vld [vmem:[%s5879 + $0x1b8] sm:$0xff]
        %v5936 = vld [vmem:[%s5879 + $0x1c0] sm:$0xff]
        %v5937 = vld [vmem:[%s5879 + $0x1c8] sm:$0xff]
        %v5938 = vld [vmem:[%s5879 + $0x1d0] sm:$0xff]
        %v5939 = vld [vmem:[%s5879 + $0x1d8] sm:$0xff]
        %v5940 = vld [vmem:[%s5879 + $0x1e0] sm:$0xff]
        %v5941 = vld [vmem:[%s5879 + $0x1e8] sm:$0xff]
        %v5942 = vld [vmem:[%s5879 + $0x1f0] sm:$0xff]
        %v5943 = vld [vmem:[%s5879 + $0x1f8] sm:$0xff]
        %v5944 = vld [vmem:[%s5879 + $0x200] sm:$0xff]
        %v5945 = vld [vmem:[%s5879 + $0x208] sm:$0xff]
        %v5946 = vld [vmem:[%s5879 + $0x210] sm:$0xff]
        %v5947 = vld [vmem:[%s5879 + $0x218] sm:$0xff]
        %v5948 = vld [vmem:[%s5879 + $0x220] sm:$0xff]
        %v5949 = vld [vmem:[%s5879 + $0x228] sm:$0xff]
        %v5950 = vld [vmem:[%s5879 + $0x230] sm:$0xff]
        %v5951 = vld [vmem:[%s5879 + $0x238] sm:$0xff]
        %v5952 = vld [vmem:[%s5879 + $0x240] sm:$0xff]
        %v5953 = vld [vmem:[%s5879 + $0x248] sm:$0xff]
        %v5954 = vld [vmem:[%s5879 + $0x250] sm:$0xff]
        %v5955 = vld [vmem:[%s5879 + $0x258] sm:$0xff]
        %v5956 = vld [vmem:[%s5879 + $0x260] sm:$0xff]
        %v5957 = vld [vmem:[%s5879 + $0x268] sm:$0xff]
        %v5958 = vld [vmem:[%s5879 + $0x270] sm:$0xff]
        %v5959 = vld [vmem:[%s5879 + $0x278] sm:$0xff]
        %v5960 = vld [vmem:[%s5879 + $0x280] sm:$0xff]
        %v5961 = vld [vmem:[%s5879 + $0x288] sm:$0xff]
        %v5962 = vld [vmem:[%s5879 + $0x290] sm:$0xff]
        %v5963 = vld [vmem:[%s5879 + $0x298] sm:$0xff]
        %v5964 = vld [vmem:[%s5879 + $0x2a0] sm:$0xff]
        %v5965 = vld [vmem:[%s5879 + $0x2a8] sm:$0xff]
        %v5966 = vld [vmem:[%s5879 + $0x2b0] sm:$0xff]
        %v5967 = vld [vmem:[%s5879 + $0x2b8] sm:$0xff]
        %v5974 = vunpack.c.l.b16 %v5873
        %v5975 = vunpack.c.h.b16 %v5873
        %v5976 = vunpack.c.l.b16 %v5874
        %v5977 = vunpack.c.l.b16 %v5875
        %v5978 = vunpack.c.h.b16 %v5875
        %v5979 = vunpack.c.l.b16 %v5876
        %v5980 = vunpack.c.l.b16 %v5877
        %v5981 = vunpack.c.h.b16 %v5877
        %v5982 = vunpack.c.l.b16 %v5878
        %v5983 = vpack.c.b16 %v5977, %v5974
        %v5984 = vpack.c.b16 %v5978, %v5975
        %v5985 = vpack.c.b16 %v5979, %v5976
        %v5986 = vpack.c.b16 %v5980, %v5980
        %v5987 = vpack.c.b16 %v5981, %v5981
        %v5988 = vpack.c.b16 %v5982, %v5982
        %v5990 = vshrl.u32 %v5983, 16
        %v5992 = vrot.slane %v5990, 2
        %v5993 = vshll.u32 %v5983, 16
        %v5995 = vrot.slane %v5993, 3
        %v5996 = vor.u32 %v5992, %v5995
        %v5998 = vshrl.u32 %v5986, 16
        %v6000 = vrot.slane %v5998, 2
        %v6001 = vshll.u32 %v5986, 16
        %v6003 = vrot.slane %v6001, 3
        %v6004 = vor.u32 %v6000, %v6003
        %v6005 = vsel %vm1481, %v5996, %v6004
        %v6007 = vshrl.u32 %v5984, 16
        %v6009 = vrot.slane %v6007, 2
        %v6010 = vshll.u32 %v5984, 16
        %v6012 = vrot.slane %v6010, 3
        %v6013 = vor.u32 %v6009, %v6012
        %v6015 = vshrl.u32 %v5987, 16
        %v6017 = vrot.slane %v6015, 2
        %v6018 = vshll.u32 %v5987, 16
        %v6020 = vrot.slane %v6018, 3
        %v6021 = vor.u32 %v6017, %v6020
        %v6022 = vsel %vm1481, %v6013, %v6021
        %v6024 = vshrl.u32 %v5985, 16
        %v6026 = vrot.slane %v6024, 2
        %v6027 = vshll.u32 %v5985, 16
        %v6029 = vrot.slane %v6027, 3
        %v6030 = vor.u32 %v6026, %v6029
        %v6032 = vshrl.u32 %v5988, 16
        %v6034 = vrot.slane %v6032, 2
        %v6035 = vshll.u32 %v5988, 16
        %v6037 = vrot.slane %v6035, 3
        %v6038 = vor.u32 %v6034, %v6037
        %v6039 = vsel %vm1481, %v6030, %v6038
        %v6130 = vunpack.c.l.b16 %v5880
        %v6131 = vunpack.c.h.b16 %v5880
        %v6132 = vunpack.c.l.b16 %v5881
        %v6133 = vunpack.c.h.b16 %v5881
        %v6134 = vunpack.c.l.b16 %v5882
        %v6135 = vunpack.c.h.b16 %v5882
        %v6136 = vunpack.c.l.b16 %v5883
        %v6137 = vunpack.c.h.b16 %v5883
        %v6138 = vunpack.c.l.b16 %v5884
        %v6139 = vunpack.c.h.b16 %v5884
        %v6140 = vunpack.c.l.b16 %v5885
        %v6141 = vunpack.c.h.b16 %v5885
        %v6142 = vunpack.c.l.b16 %v5886
        %v6143 = vunpack.c.h.b16 %v5886
        %v6144 = vunpack.c.l.b16 %v5887
        %v6145 = vunpack.c.h.b16 %v5887
        %v6146 = vunpack.c.l.b16 %v5888
        %v6147 = vunpack.c.h.b16 %v5888
        %v6148 = vunpack.c.l.b16 %v5889
        %v6149 = vunpack.c.h.b16 %v5889
        %v6150 = vunpack.c.l.b16 %v5890
        %v6151 = vunpack.c.h.b16 %v5890
        %v6152 = vunpack.c.l.b16 %v5891
        %v6153 = vunpack.c.h.b16 %v5891
        %v6154 = vunpack.c.l.b16 %v5892
        %v6155 = vunpack.c.h.b16 %v5892
        %v6156 = vunpack.c.l.b16 %v5893
        %v6157 = vunpack.c.h.b16 %v5893
        %v6158 = vunpack.c.l.b16 %v5894
        %v6159 = vunpack.c.h.b16 %v5894
        %v6160 = vunpack.c.l.b16 %v5895
        %v6161 = vunpack.c.h.b16 %v5895
        %v6162 = vunpack.c.l.b16 %v5896
        %v6163 = vunpack.c.h.b16 %v5896
        %v6164 = vunpack.c.l.b16 %v5897
        %v6165 = vunpack.c.h.b16 %v5897
        %v6166 = vunpack.c.l.b16 %v5898
        %v6167 = vunpack.c.h.b16 %v5898
        %v6168 = vunpack.c.l.b16 %v5899
        %v6169 = vunpack.c.h.b16 %v5899
        %v6170 = vunpack.c.l.b16 %v5900
        %v6171 = vunpack.c.h.b16 %v5900
        %v6172 = vunpack.c.l.b16 %v5901
        %v6173 = vunpack.c.h.b16 %v5901
        %v6174 = vunpack.c.l.b16 %v5902
        %v6175 = vunpack.c.h.b16 %v5902
        %v6176 = vunpack.c.l.b16 %v5903
        %v6177 = vunpack.c.h.b16 %v5903
        %v6178 = vunpack.c.l.b16 %v5904
        %v6179 = vunpack.c.h.b16 %v5904
        %v6180 = vunpack.c.l.b16 %v5905
        %v6181 = vunpack.c.h.b16 %v5905
        %v6182 = vunpack.c.l.b16 %v5906
        %v6183 = vunpack.c.h.b16 %v5906
        %v6184 = vunpack.c.l.b16 %v5907
        %v6185 = vunpack.c.h.b16 %v5907
        %v6186 = vunpack.c.l.b16 %v5908
        %v6187 = vunpack.c.h.b16 %v5908
        %v6188 = vunpack.c.l.b16 %v5909
        %v6189 = vunpack.c.h.b16 %v5909
        %v6190 = vunpack.c.l.b16 %v5910
        %v6191 = vunpack.c.h.b16 %v5910
        %v6192 = vunpack.c.l.b16 %v5911
        %v6193 = vunpack.c.h.b16 %v5911
        %v6194 = vunpack.c.l.b16 %v5912
        %v6195 = vunpack.c.h.b16 %v5912
        %v6196 = vunpack.c.l.b16 %v5913
        %v6197 = vunpack.c.h.b16 %v5913
        %v6198 = vunpack.c.l.b16 %v5914
        %v6199 = vunpack.c.h.b16 %v5914
        %v6200 = vunpack.c.l.b16 %v5915
        %v6201 = vunpack.c.h.b16 %v5915
        %v6202 = vunpack.c.l.b16 %v5916
        %v6203 = vunpack.c.h.b16 %v5916
        %v6204 = vunpack.c.l.b16 %v5917
        %v6205 = vunpack.c.h.b16 %v5917
        %v6206 = vunpack.c.l.b16 %v5918
        %v6207 = vunpack.c.h.b16 %v5918
        %v6208 = vunpack.c.l.b16 %v5919
        %v6209 = vunpack.c.h.b16 %v5919
        %v6210 = vunpack.c.l.b16 %v5920
        %v6211 = vunpack.c.h.b16 %v5920
        %v6212 = vunpack.c.l.b16 %v5921
        %v6213 = vunpack.c.h.b16 %v5921
        %v6214 = vunpack.c.l.b16 %v5922
        %v6215 = vunpack.c.h.b16 %v5922
        %v6216 = vunpack.c.l.b16 %v5923
        %v6217 = vunpack.c.h.b16 %v5923
        %v6218 = vunpack.c.l.b16 %v5924
        %v6219 = vunpack.c.h.b16 %v5924
        %v6220 = vunpack.c.l.b16 %v5925
        %v6221 = vunpack.c.h.b16 %v5925
        %v6222 = vunpack.c.l.b16 %v5926
        %v6223 = vunpack.c.h.b16 %v5926
        %v6224 = vunpack.c.l.b16 %v5927
        %v6225 = vunpack.c.h.b16 %v5927
        %v6226 = vunpack.c.l.b16 %v5928
        %v6227 = vunpack.c.h.b16 %v5928
        %v6228 = vunpack.c.l.b16 %v5929
        %v6229 = vunpack.c.h.b16 %v5929
        %v6230 = vunpack.c.l.b16 %v5930
        %v6231 = vunpack.c.h.b16 %v5930
        %v6232 = vunpack.c.l.b16 %v5931
        %v6233 = vunpack.c.h.b16 %v5931
        %v6234 = vunpack.c.l.b16 %v5932
        %v6235 = vunpack.c.h.b16 %v5932
        %v6236 = vunpack.c.l.b16 %v5933
        %v6237 = vunpack.c.h.b16 %v5933
        %v6238 = vunpack.c.l.b16 %v5934
        %v6239 = vunpack.c.h.b16 %v5934
        %v6240 = vunpack.c.l.b16 %v5935
        %v6241 = vunpack.c.h.b16 %v5935
        %v6242 = vunpack.c.l.b16 %v5936
        %v6243 = vunpack.c.h.b16 %v5936
        %v6244 = vunpack.c.l.b16 %v5937
        %v6245 = vunpack.c.h.b16 %v5937
        %v6246 = vunpack.c.l.b16 %v5938
        %v6247 = vunpack.c.h.b16 %v5938
        %v6248 = vunpack.c.l.b16 %v5939
        %v6249 = vunpack.c.h.b16 %v5939
        %v6250 = vunpack.c.l.b16 %v5940
        %v6251 = vunpack.c.h.b16 %v5940
        %v6252 = vunpack.c.l.b16 %v5941
        %v6253 = vunpack.c.h.b16 %v5941
        %v6254 = vunpack.c.l.b16 %v5942
        %v6255 = vunpack.c.h.b16 %v5942
        %v6256 = vunpack.c.l.b16 %v5943
        %v6257 = vunpack.c.h.b16 %v5943
        %v6258 = vunpack.c.l.b16 %v5944
        %v6259 = vunpack.c.h.b16 %v5944
        %v6260 = vunpack.c.l.b16 %v5945
        %v6261 = vunpack.c.h.b16 %v5945
        %v6262 = vunpack.c.l.b16 %v5946
        %v6263 = vunpack.c.h.b16 %v5946
        %v6264 = vunpack.c.l.b16 %v5947
        %v6265 = vunpack.c.h.b16 %v5947
        %v6266 = vunpack.c.l.b16 %v5948
        %v6267 = vunpack.c.h.b16 %v5948
        %v6268 = vunpack.c.l.b16 %v5949
        %v6269 = vunpack.c.h.b16 %v5949
        %v6270 = vunpack.c.l.b16 %v5950
        %v6271 = vunpack.c.h.b16 %v5950
        %v6272 = vunpack.c.l.b16 %v5951
        %v6273 = vunpack.c.h.b16 %v5951
        %v6274 = vunpack.c.l.b16 %v5952
        %v6275 = vunpack.c.h.b16 %v5952
        %v6276 = vunpack.c.l.b16 %v5953
        %v6277 = vunpack.c.h.b16 %v5953
        %v6278 = vunpack.c.l.b16 %v5954
        %v6279 = vunpack.c.h.b16 %v5954
        %v6280 = vunpack.c.l.b16 %v5955
        %v6281 = vunpack.c.h.b16 %v5955
        %v6282 = vunpack.c.l.b16 %v5956
        %v6283 = vunpack.c.h.b16 %v5956
        %v6284 = vunpack.c.l.b16 %v5957
        %v6285 = vunpack.c.h.b16 %v5957
        %v6286 = vunpack.c.l.b16 %v5958
        %v6287 = vunpack.c.h.b16 %v5958
        %v6288 = vunpack.c.l.b16 %v5959
        %v6289 = vunpack.c.h.b16 %v5959
        %v6290 = vunpack.c.l.b16 %v5960
        %v6291 = vunpack.c.h.b16 %v5960
        %v6292 = vunpack.c.l.b16 %v5961
        %v6293 = vunpack.c.h.b16 %v5961
        %v6294 = vunpack.c.l.b16 %v5962
        %v6295 = vunpack.c.h.b16 %v5962
        %v6296 = vunpack.c.l.b16 %v5963
        %v6297 = vunpack.c.h.b16 %v5963
        %v6298 = vunpack.c.l.b16 %v5964
        %v6299 = vunpack.c.h.b16 %v5964
        %v6300 = vunpack.c.l.b16 %v5965
        %v6301 = vunpack.c.h.b16 %v5965
        %v6302 = vunpack.c.l.b16 %v5966
        %v6303 = vunpack.c.h.b16 %v5966
        %v6304 = vunpack.c.l.b16 %v5967
        %v6305 = vunpack.c.h.b16 %v5967
        %v6306 = vpack.c.b16 %v6134, %v6130
        %v6307 = vpack.c.b16 %v6135, %v6131
        %v6308 = vpack.c.b16 %v6136, %v6132
        %v6309 = vpack.c.b16 %v6137, %v6133
        %v6310 = vpack.c.b16 %v6142, %v6138
        %v6311 = vpack.c.b16 %v6143, %v6139
        %v6312 = vpack.c.b16 %v6144, %v6140
        %v6313 = vpack.c.b16 %v6145, %v6141
        %v6314 = vpack.c.b16 %v6150, %v6146
        %v6315 = vpack.c.b16 %v6151, %v6147
        %v6316 = vpack.c.b16 %v6152, %v6148
        %v6317 = vpack.c.b16 %v6153, %v6149
        %v6318 = vpack.c.b16 %v6158, %v6154
        %v6319 = vpack.c.b16 %v6159, %v6155
        %v6320 = vpack.c.b16 %v6160, %v6156
        %v6321 = vpack.c.b16 %v6161, %v6157
        %v6322 = vpack.c.b16 %v6166, %v6162
        %v6323 = vpack.c.b16 %v6167, %v6163
        %v6324 = vpack.c.b16 %v6168, %v6164
        %v6325 = vpack.c.b16 %v6169, %v6165
        %v6326 = vpack.c.b16 %v6174, %v6170
        %v6327 = vpack.c.b16 %v6175, %v6171
        %v6328 = vpack.c.b16 %v6176, %v6172
        %v6329 = vpack.c.b16 %v6177, %v6173
        %v6330 = vpack.c.b16 %v6182, %v6178
        %v6331 = vpack.c.b16 %v6183, %v6179
        %v6332 = vpack.c.b16 %v6184, %v6180
        %v6333 = vpack.c.b16 %v6185, %v6181
        %v6334 = vpack.c.b16 %v6190, %v6186
        %v6335 = vpack.c.b16 %v6191, %v6187
        %v6336 = vpack.c.b16 %v6192, %v6188
        %v6337 = vpack.c.b16 %v6193, %v6189
        %v6338 = vpack.c.b16 %v6198, %v6194
        %v6339 = vpack.c.b16 %v6199, %v6195
        %v6340 = vpack.c.b16 %v6200, %v6196
        %v6341 = vpack.c.b16 %v6201, %v6197
        %v6342 = vpack.c.b16 %v6206, %v6202
        %v6343 = vpack.c.b16 %v6207, %v6203
        %v6344 = vpack.c.b16 %v6208, %v6204
        %v6345 = vpack.c.b16 %v6209, %v6205
        %v6346 = vpack.c.b16 %v6214, %v6210
        %v6347 = vpack.c.b16 %v6215, %v6211
        %v6348 = vpack.c.b16 %v6216, %v6212
        %v6349 = vpack.c.b16 %v6217, %v6213
        %v6350 = vpack.c.b16 %v6222, %v6218
        %v6351 = vpack.c.b16 %v6223, %v6219
        %v6352 = vpack.c.b16 %v6224, %v6220
        %v6353 = vpack.c.b16 %v6225, %v6221
        %v6354 = vpack.c.b16 %v6230, %v6226
        %v6355 = vpack.c.b16 %v6231, %v6227
        %v6356 = vpack.c.b16 %v6232, %v6228
        %v6357 = vpack.c.b16 %v6233, %v6229
        %v6358 = vpack.c.b16 %v6238, %v6234
        %v6359 = vpack.c.b16 %v6239, %v6235
        %v6360 = vpack.c.b16 %v6240, %v6236
        %v6361 = vpack.c.b16 %v6241, %v6237
        %v6362 = vpack.c.b16 %v6246, %v6242
        %v6363 = vpack.c.b16 %v6247, %v6243
        %v6364 = vpack.c.b16 %v6248, %v6244
        %v6365 = vpack.c.b16 %v6249, %v6245
        %v6366 = vpack.c.b16 %v6254, %v6250
        %v6367 = vpack.c.b16 %v6255, %v6251
        %v6368 = vpack.c.b16 %v6256, %v6252
        %v6369 = vpack.c.b16 %v6257, %v6253
        %v6370 = vpack.c.b16 %v6262, %v6258
        %v6371 = vpack.c.b16 %v6263, %v6259
        %v6372 = vpack.c.b16 %v6264, %v6260
        %v6373 = vpack.c.b16 %v6265, %v6261
        %v6374 = vpack.c.b16 %v6270, %v6266
        %v6375 = vpack.c.b16 %v6271, %v6267
        %v6376 = vpack.c.b16 %v6272, %v6268
        %v6377 = vpack.c.b16 %v6273, %v6269
        %v6378 = vpack.c.b16 %v6278, %v6274
        %v6379 = vpack.c.b16 %v6279, %v6275
        %v6380 = vpack.c.b16 %v6280, %v6276
        %v6381 = vpack.c.b16 %v6281, %v6277
        %v6382 = vpack.c.b16 %v6286, %v6282
        %v6383 = vpack.c.b16 %v6287, %v6283
        %v6384 = vpack.c.b16 %v6288, %v6284
        %v6385 = vpack.c.b16 %v6289, %v6285
        %v6386 = vpack.c.b16 %v6294, %v6290
        %v6387 = vpack.c.b16 %v6295, %v6291
        %v6388 = vpack.c.b16 %v6296, %v6292
        %v6389 = vpack.c.b16 %v6297, %v6293
        %v6390 = vpack.c.b16 %v6302, %v6298
        %v6391 = vpack.c.b16 %v6303, %v6299
        %v6392 = vpack.c.b16 %v6304, %v6300
        %v6393 = vpack.c.b16 %v6305, %v6301
        %v6483 = vsel %vm2576, %v6039, 0
        %6485 = vmatpush.bf16.msra.mxu0 %v6334
        %6486 = vmatpush.bf16.msra.mxu0 %v6330
        %6487 = vmatpush.bf16.msra.mxu0 %v6326
        %6488 = vmatpush.bf16.msra.mxu0 %v6322
        %6489 = vmatpush.bf16.msra.mxu0 %v6318
        %6490 = vmatpush.bf16.msra.mxu0 %v6314
        %6491 = vmatpush.bf16.msra.mxu0 %v6310
        %6492 = vmatpush.bf16.msra.mxu0 %v6306
        %6493 = vmatmul.bf16.gmra.mxu0 %v6005
        %v6494 = vpop.f32.mrf.mxu0
        %v6495 = vadd.f32 0.0, %v6494
        %v6496 = vpop.f32.mrf.mxu0
        %v6497 = vadd.f32 0.0, %v6496
        %6498 = vdwg.mxu0
        %6499 = vmatpush.bf16.msra.mxu0 %v6366
        %6500 = vmatpush.bf16.msra.mxu0 %v6362
        %6501 = vmatpush.bf16.msra.mxu0 %v6358
        %6502 = vmatpush.bf16.msra.mxu0 %v6354
        %6503 = vmatpush.bf16.msra.mxu0 %v6350
        %6504 = vmatpush.bf16.msra.mxu0 %v6346
        %6505 = vmatpush.bf16.msra.mxu0 %v6342
        %6506 = vmatpush.bf16.msra.mxu0 %v6338
        %6507 = vmatmul.bf16.gmra.mxu0 %v6022
        %v6508 = vpop.f32.mrf.mxu0
        %v6509 = vadd.f32 %v6495, %v6508
        %v6510 = vpop.f32.mrf.mxu0
        %v6511 = vadd.f32 %v6497, %v6510
        %6512 = vdwg.mxu0
        %6513 = vmatpush.bf16.msra.mxu0 0
        %6514 = vmatpush.bf16.msra.mxu0 0
        %6515 = vmatpush.bf16.msra.mxu0 %v6390
        %6516 = vmatpush.bf16.msra.mxu0 %v6386
        %6517 = vmatpush.bf16.msra.mxu0 %v6382
        %6518 = vmatpush.bf16.msra.mxu0 %v6378
        %6519 = vmatpush.bf16.msra.mxu0 %v6374
        %6520 = vmatpush.bf16.msra.mxu0 %v6370
        %6521 = vmatmul.bf16.gmra.mxu0 %v6483
        %v6522 = vpop.f32.mrf.mxu0
        %v6523 = vadd.f32 %v6509, %v6522
        %v6524 = vpop.f32.mrf.mxu0
        %v6525 = vadd.f32 %v6511, %v6524
        %6526 = vdwg.mxu0
        %6527 = vmatpush.bf16.msra.mxu0 %v6335
        %6528 = vmatpush.bf16.msra.mxu0 %v6331
        %6529 = vmatpush.bf16.msra.mxu0 %v6327
        %6530 = vmatpush.bf16.msra.mxu0 %v6323
        %6531 = vmatpush.bf16.msra.mxu0 %v6319
        %6532 = vmatpush.bf16.msra.mxu0 %v6315
        %6533 = vmatpush.bf16.msra.mxu0 %v6311
        %6534 = vmatpush.bf16.msra.mxu0 %v6307
        %6535 = vmatmul.bf16.gmra.mxu0 %v6005
        %v6536 = vpop.f32.mrf.mxu0
        %v6537 = vadd.f32 0.0, %v6536
        %v6538 = vpop.f32.mrf.mxu0
        %v6539 = vadd.f32 0.0, %v6538
        %6540 = vdwg.mxu0
        %6541 = vmatpush.bf16.msra.mxu0 %v6367
        %6542 = vmatpush.bf16.msra.mxu0 %v6363
        %6543 = vmatpush.bf16.msra.mxu0 %v6359
        %6544 = vmatpush.bf16.msra.mxu0 %v6355
        %6545 = vmatpush.bf16.msra.mxu0 %v6351
        %6546 = vmatpush.bf16.msra.mxu0 %v6347
        %6547 = vmatpush.bf16.msra.mxu0 %v6343
        %6548 = vmatpush.bf16.msra.mxu0 %v6339
        %6549 = vmatmul.bf16.gmra.mxu0 %v6022
        %v6550 = vpop.f32.mrf.mxu0
        %v6551 = vadd.f32 %v6537, %v6550
        %v6552 = vpop.f32.mrf.mxu0
        %v6553 = vadd.f32 %v6539, %v6552
        %6554 = vdwg.mxu0
        %6555 = vmatpush.bf16.msra.mxu0 0
        %6556 = vmatpush.bf16.msra.mxu0 0
        %6557 = vmatpush.bf16.msra.mxu0 %v6391
        %6558 = vmatpush.bf16.msra.mxu0 %v6387
        %6559 = vmatpush.bf16.msra.mxu0 %v6383
        %6560 = vmatpush.bf16.msra.mxu0 %v6379
        %6561 = vmatpush.bf16.msra.mxu0 %v6375
        %6562 = vmatpush.bf16.msra.mxu0 %v6371
        %6563 = vmatmul.bf16.gmra.mxu0 %v6483
        %v6564 = vpop.f32.mrf.mxu0
        %v6565 = vadd.f32 %v6551, %v6564
        %v6566 = vpop.f32.mrf.mxu0
        %v6567 = vadd.f32 %v6553, %v6566
        %6568 = vdwg.mxu0
        %6569 = vmatpush.bf16.msra.mxu0 %v6336
        %6570 = vmatpush.bf16.msra.mxu0 %v6332
        %6571 = vmatpush.bf16.msra.mxu0 %v6328
        %6572 = vmatpush.bf16.msra.mxu0 %v6324
        %6573 = vmatpush.bf16.msra.mxu0 %v6320
        %6574 = vmatpush.bf16.msra.mxu0 %v6316
        %6575 = vmatpush.bf16.msra.mxu0 %v6312
        %6576 = vmatpush.bf16.msra.mxu0 %v6308
        %6577 = vmatmul.bf16.gmra.mxu0 %v6005
        %v6578 = vpop.f32.mrf.mxu0
        %v6579 = vadd.f32 0.0, %v6578
        %v6580 = vpop.f32.mrf.mxu0
        %v6581 = vadd.f32 0.0, %v6580
        %6582 = vdwg.mxu0
        %6583 = vmatpush.bf16.msra.mxu0 %v6368
        %6584 = vmatpush.bf16.msra.mxu0 %v6364
        %6585 = vmatpush.bf16.msra.mxu0 %v6360
        %6586 = vmatpush.bf16.msra.mxu0 %v6356
        %6587 = vmatpush.bf16.msra.mxu0 %v6352
        %6588 = vmatpush.bf16.msra.mxu0 %v6348
        %6589 = vmatpush.bf16.msra.mxu0 %v6344
        %6590 = vmatpush.bf16.msra.mxu0 %v6340
        %6591 = vmatmul.bf16.gmra.mxu0 %v6022
        %v6592 = vpop.f32.mrf.mxu0
        %v6593 = vadd.f32 %v6579, %v6592
        %v6594 = vpop.f32.mrf.mxu0
        %v6595 = vadd.f32 %v6581, %v6594
        %6596 = vdwg.mxu0
        %6597 = vmatpush.bf16.msra.mxu0 0
        %6598 = vmatpush.bf16.msra.mxu0 0
        %6599 = vmatpush.bf16.msra.mxu0 %v6392
        %6600 = vmatpush.bf16.msra.mxu0 %v6388
        %6601 = vmatpush.bf16.msra.mxu0 %v6384
        %6602 = vmatpush.bf16.msra.mxu0 %v6380
        %6603 = vmatpush.bf16.msra.mxu0 %v6376
        %6604 = vmatpush.bf16.msra.mxu0 %v6372
        %6605 = vmatmul.bf16.gmra.mxu0 %v6483
        %v6606 = vpop.f32.mrf.mxu0
        %v6607 = vadd.f32 %v6593, %v6606
        %v6608 = vpop.f32.mrf.mxu0
        %v6609 = vadd.f32 %v6595, %v6608
        %6610 = vdwg.mxu0
        %6611 = vmatpush.bf16.msra.mxu0 %v6337
        %6612 = vmatpush.bf16.msra.mxu0 %v6333
        %6613 = vmatpush.bf16.msra.mxu0 %v6329
        %6614 = vmatpush.bf16.msra.mxu0 %v6325
        %6615 = vmatpush.bf16.msra.mxu0 %v6321
        %6616 = vmatpush.bf16.msra.mxu0 %v6317
        %6617 = vmatpush.bf16.msra.mxu0 %v6313
        %6618 = vmatpush.bf16.msra.mxu0 %v6309
        %6619 = vmatmul.bf16.gmra.mxu0 %v6005
        %v6620 = vpop.f32.mrf.mxu0
        %v6621 = vadd.f32 0.0, %v6620
        %v6622 = vpop.f32.mrf.mxu0
        %v6623 = vadd.f32 0.0, %v6622
        %6624 = vdwg.mxu0
        %6625 = vmatpush.bf16.msra.mxu0 %v6369
        %6626 = vmatpush.bf16.msra.mxu0 %v6365
        %6627 = vmatpush.bf16.msra.mxu0 %v6361
        %6628 = vmatpush.bf16.msra.mxu0 %v6357
        %6629 = vmatpush.bf16.msra.mxu0 %v6353
        %6630 = vmatpush.bf16.msra.mxu0 %v6349
        %6631 = vmatpush.bf16.msra.mxu0 %v6345
        %6632 = vmatpush.bf16.msra.mxu0 %v6341
        %6633 = vmatmul.bf16.gmra.mxu0 %v6022
        %v6634 = vpop.f32.mrf.mxu0
        %v6635 = vadd.f32 %v6621, %v6634
        %v6636 = vpop.f32.mrf.mxu0
        %v6637 = vadd.f32 %v6623, %v6636
        %6638 = vdwg.mxu0
        %6639 = vmatpush.bf16.msra.mxu0 0
        %6640 = vmatpush.bf16.msra.mxu0 0
        %6641 = vmatpush.bf16.msra.mxu0 %v6393
        %6642 = vmatpush.bf16.msra.mxu0 %v6389
        %6643 = vmatpush.bf16.msra.mxu0 %v6385
        %6644 = vmatpush.bf16.msra.mxu0 %v6381
        %6645 = vmatpush.bf16.msra.mxu0 %v6377
        %6646 = vmatpush.bf16.msra.mxu0 %v6373
        %6647 = vmatmul.bf16.gmra.mxu0 %v6483
        %v6648 = vpop.f32.mrf.mxu0
        %v6649 = vadd.f32 %v6635, %v6648
        %v6650 = vpop.f32.mrf.mxu0
        %v6651 = vadd.f32 %v6637, %v6650
        %6652 = vdwg.mxu0
        %v6653 = vld [vmem:[#allocation4] sm:$0xff]
        %v6654 = vld [vmem:[#allocation4 + $0x8] sm:$0xff]
        %v6655 = vld [vmem:[#allocation4 + $0x10] sm:$0xff]
        %v6656 = vld [vmem:[#allocation4 + $0x18] sm:$0xff]
        %v6657 = vld [vmem:[#allocation4 + $0x20] sm:$0xff]
        %v6658 = vld [vmem:[#allocation4 + $0x28] sm:$0xff]
        %v6659 = vld [vmem:[#allocation4 + $0x30] sm:$0xff]
        %v6660 = vld [vmem:[#allocation4 + $0x38] sm:$0xff]
        %v6661 = vadd.f32 %v6653, %v6523
        %v6662 = vadd.f32 %v6654, %v6565
        %v6663 = vadd.f32 %v6655, %v6607
        %v6664 = vadd.f32 %v6656, %v6649
        %v6665 = vadd.f32 %v6657, %v6525
        %v6666 = vadd.f32 %v6658, %v6567
        %v6667 = vadd.f32 %v6659, %v6609
        %v6668 = vadd.f32 %v6660, %v6651
        %6669 = vst [vmem:[#allocation4] sm:$0xff] %v6661
        %6670 = vst [vmem:[#allocation4 + $0x8] sm:$0xff] %v6662
        %6671 = vst [vmem:[#allocation4 + $0x10] sm:$0xff] %v6663
        %6672 = vst [vmem:[#allocation4 + $0x18] sm:$0xff] %v6664
        %6673 = vst [vmem:[#allocation4 + $0x20] sm:$0xff] %v6665
        %6674 = vst [vmem:[#allocation4 + $0x28] sm:$0xff] %v6666
        %6675 = vst [vmem:[#allocation4 + $0x30] sm:$0xff] %v6667
        %6676 = vst [vmem:[#allocation4 + $0x38] sm:$0xff] %v6668
        %v6677 = vld [vmem:[#allocation2] sm:$0x88]
        %v6678 = vld [vmem:[#allocation2 + $0x8] sm:$0x8]
        %v6679 = vld [vmem:[#allocation2 + $0xc] sm:$0xff]
        %v6680 = vld [vmem:[#allocation2 + $0x14] sm:$0xf]
        %v6681 = vld [vmem:[#allocation2 + $0x18] sm:$0x77]
        %v6682 = vld [vmem:[#allocation2 + $0x20] sm:$0x7]
        %s6683 = scalar_lea.vmem %s3, 4224
        %v6684 = vld [vmem:[%s6683] sm:$0xff]
        %v6685 = vld [vmem:[%s6683 + $0x8] sm:$0xff]
        %v6686 = vld [vmem:[%s6683 + $0x10] sm:$0xff]
        %v6687 = vld [vmem:[%s6683 + $0x18] sm:$0xff]
        %v6688 = vld [vmem:[%s6683 + $0x20] sm:$0xff]
        %v6689 = vld [vmem:[%s6683 + $0x28] sm:$0xff]
        %v6690 = vld [vmem:[%s6683 + $0x30] sm:$0xff]
        %v6691 = vld [vmem:[%s6683 + $0x38] sm:$0xff]
        %v6692 = vld [vmem:[%s6683 + $0x40] sm:$0xff]
        %v6693 = vld [vmem:[%s6683 + $0x48] sm:$0xff]
        %v6694 = vld [vmem:[%s6683 + $0x50] sm:$0xff]
        %v6695 = vld [vmem:[%s6683 + $0x58] sm:$0xff]
        %v6696 = vld [vmem:[%s6683 + $0x60] sm:$0xff]
        %v6697 = vld [vmem:[%s6683 + $0x68] sm:$0xff]
        %v6698 = vld [vmem:[%s6683 + $0x70] sm:$0xff]
        %v6699 = vld [vmem:[%s6683 + $0x78] sm:$0xff]
        %v6700 = vld [vmem:[%s6683 + $0x80] sm:$0xff]
        %v6701 = vld [vmem:[%s6683 + $0x88] sm:$0xff]
        %v6702 = vld [vmem:[%s6683 + $0x90] sm:$0xff]
        %v6703 = vld [vmem:[%s6683 + $0x98] sm:$0xff]
        %v6704 = vld [vmem:[%s6683 + $0xa0] sm:$0xff]
        %v6705 = vld [vmem:[%s6683 + $0xa8] sm:$0xff]
        %v6706 = vld [vmem:[%s6683 + $0xb0] sm:$0xff]
        %v6707 = vld [vmem:[%s6683 + $0xb8] sm:$0xff]
        %v6708 = vld [vmem:[%s6683 + $0xc0] sm:$0xff]
        %v6709 = vld [vmem:[%s6683 + $0xc8] sm:$0xff]
        %v6710 = vld [vmem:[%s6683 + $0xd0] sm:$0xff]
        %v6711 = vld [vmem:[%s6683 + $0xd8] sm:$0xff]
        %v6712 = vld [vmem:[%s6683 + $0xe0] sm:$0xff]
        %v6713 = vld [vmem:[%s6683 + $0xe8] sm:$0xff]
        %v6714 = vld [vmem:[%s6683 + $0xf0] sm:$0xff]
        %v6715 = vld [vmem:[%s6683 + $0xf8] sm:$0xff]
        %v6716 = vld [vmem:[%s6683 + $0x100] sm:$0xff]
        %v6717 = vld [vmem:[%s6683 + $0x108] sm:$0xff]
        %v6718 = vld [vmem:[%s6683 + $0x110] sm:$0xff]
        %v6719 = vld [vmem:[%s6683 + $0x118] sm:$0xff]
        %v6720 = vld [vmem:[%s6683 + $0x120] sm:$0xff]
        %v6721 = vld [vmem:[%s6683 + $0x128] sm:$0xff]
        %v6722 = vld [vmem:[%s6683 + $0x130] sm:$0xff]
        %v6723 = vld [vmem:[%s6683 + $0x138] sm:$0xff]
        %v6724 = vld [vmem:[%s6683 + $0x140] sm:$0xff]
        %v6725 = vld [vmem:[%s6683 + $0x148] sm:$0xff]
        %v6726 = vld [vmem:[%s6683 + $0x150] sm:$0xff]
        %v6727 = vld [vmem:[%s6683 + $0x158] sm:$0xff]
        %v6728 = vld [vmem:[%s6683 + $0x160] sm:$0xff]
        %v6729 = vld [vmem:[%s6683 + $0x168] sm:$0xff]
        %v6730 = vld [vmem:[%s6683 + $0x170] sm:$0xff]
        %v6731 = vld [vmem:[%s6683 + $0x178] sm:$0xff]
        %v6732 = vld [vmem:[%s6683 + $0x180] sm:$0xff]
        %v6733 = vld [vmem:[%s6683 + $0x188] sm:$0xff]
        %v6734 = vld [vmem:[%s6683 + $0x190] sm:$0xff]
        %v6735 = vld [vmem:[%s6683 + $0x198] sm:$0xff]
        %v6736 = vld [vmem:[%s6683 + $0x1a0] sm:$0xff]
        %v6737 = vld [vmem:[%s6683 + $0x1a8] sm:$0xff]
        %v6738 = vld [vmem:[%s6683 + $0x1b0] sm:$0xff]
        %v6739 = vld [vmem:[%s6683 + $0x1b8] sm:$0xff]
        %v6740 = vld [vmem:[%s6683 + $0x1c0] sm:$0xff]
        %v6741 = vld [vmem:[%s6683 + $0x1c8] sm:$0xff]
        %v6742 = vld [vmem:[%s6683 + $0x1d0] sm:$0xff]
        %v6743 = vld [vmem:[%s6683 + $0x1d8] sm:$0xff]
        %v6744 = vld [vmem:[%s6683 + $0x1e0] sm:$0xff]
        %v6745 = vld [vmem:[%s6683 + $0x1e8] sm:$0xff]
        %v6746 = vld [vmem:[%s6683 + $0x1f0] sm:$0xff]
        %v6747 = vld [vmem:[%s6683 + $0x1f8] sm:$0xff]
        %v6748 = vld [vmem:[%s6683 + $0x200] sm:$0xff]
        %v6749 = vld [vmem:[%s6683 + $0x208] sm:$0xff]
        %v6750 = vld [vmem:[%s6683 + $0x210] sm:$0xff]
        %v6751 = vld [vmem:[%s6683 + $0x218] sm:$0xff]
        %v6752 = vld [vmem:[%s6683 + $0x220] sm:$0xff]
        %v6753 = vld [vmem:[%s6683 + $0x228] sm:$0xff]
        %v6754 = vld [vmem:[%s6683 + $0x230] sm:$0xff]
        %v6755 = vld [vmem:[%s6683 + $0x238] sm:$0xff]
        %v6756 = vld [vmem:[%s6683 + $0x240] sm:$0xff]
        %v6757 = vld [vmem:[%s6683 + $0x248] sm:$0xff]
        %v6758 = vld [vmem:[%s6683 + $0x250] sm:$0xff]
        %v6759 = vld [vmem:[%s6683 + $0x258] sm:$0xff]
        %v6760 = vld [vmem:[%s6683 + $0x260] sm:$0xff]
        %v6761 = vld [vmem:[%s6683 + $0x268] sm:$0xff]
        %v6762 = vld [vmem:[%s6683 + $0x270] sm:$0xff]
        %v6763 = vld [vmem:[%s6683 + $0x278] sm:$0xff]
        %v6764 = vld [vmem:[%s6683 + $0x280] sm:$0xff]
        %v6765 = vld [vmem:[%s6683 + $0x288] sm:$0xff]
        %v6766 = vld [vmem:[%s6683 + $0x290] sm:$0xff]
        %v6767 = vld [vmem:[%s6683 + $0x298] sm:$0xff]
        %v6768 = vld [vmem:[%s6683 + $0x2a0] sm:$0xff]
        %v6769 = vld [vmem:[%s6683 + $0x2a8] sm:$0xff]
        %v6770 = vld [vmem:[%s6683 + $0x2b0] sm:$0xff]
        %v6771 = vld [vmem:[%s6683 + $0x2b8] sm:$0xff]
        %v6778 = vunpack.c.l.b16 %v6677
        %v6779 = vunpack.c.h.b16 %v6677
        %v6780 = vunpack.c.l.b16 %v6678
        %v6781 = vunpack.c.l.b16 %v6679
        %v6782 = vunpack.c.h.b16 %v6679
        %v6783 = vunpack.c.l.b16 %v6680
        %v6784 = vunpack.c.l.b16 %v6681
        %v6785 = vunpack.c.h.b16 %v6681
        %v6786 = vunpack.c.l.b16 %v6682
        %v6787 = vpack.c.b16 %v6781, %v6778
        %v6788 = vpack.c.b16 %v6782, %v6779
        %v6789 = vpack.c.b16 %v6783, %v6780
        %v6790 = vpack.c.b16 %v6784, %v6784
        %v6791 = vpack.c.b16 %v6785, %v6785
        %v6792 = vpack.c.b16 %v6786, %v6786
        %v6793 = vrot.slane %v6787, 3
        %v6794 = vrot.slane %v6790, 3
        %v6795 = vsel %vm1737, %v6793, %v6794
        %v6796 = vrot.slane %v6788, 3
        %v6797 = vrot.slane %v6791, 3
        %v6798 = vsel %vm1737, %v6796, %v6797
        %v6799 = vrot.slane %v6789, 3
        %v6800 = vrot.slane %v6792, 3
        %v6801 = vsel %vm1737, %v6799, %v6800
        %v6892 = vunpack.c.l.b16 %v6684
        %v6893 = vunpack.c.h.b16 %v6684
        %v6894 = vunpack.c.l.b16 %v6685
        %v6895 = vunpack.c.h.b16 %v6685
        %v6896 = vunpack.c.l.b16 %v6686
        %v6897 = vunpack.c.h.b16 %v6686
        %v6898 = vunpack.c.l.b16 %v6687
        %v6899 = vunpack.c.h.b16 %v6687
        %v6900 = vunpack.c.l.b16 %v6688
        %v6901 = vunpack.c.h.b16 %v6688
        %v6902 = vunpack.c.l.b16 %v6689
        %v6903 = vunpack.c.h.b16 %v6689
        %v6904 = vunpack.c.l.b16 %v6690
        %v6905 = vunpack.c.h.b16 %v6690
        %v6906 = vunpack.c.l.b16 %v6691
        %v6907 = vunpack.c.h.b16 %v6691
        %v6908 = vunpack.c.l.b16 %v6692
        %v6909 = vunpack.c.h.b16 %v6692
        %v6910 = vunpack.c.l.b16 %v6693
        %v6911 = vunpack.c.h.b16 %v6693
        %v6912 = vunpack.c.l.b16 %v6694
        %v6913 = vunpack.c.h.b16 %v6694
        %v6914 = vunpack.c.l.b16 %v6695
        %v6915 = vunpack.c.h.b16 %v6695
        %v6916 = vunpack.c.l.b16 %v6696
        %v6917 = vunpack.c.h.b16 %v6696
        %v6918 = vunpack.c.l.b16 %v6697
        %v6919 = vunpack.c.h.b16 %v6697
        %v6920 = vunpack.c.l.b16 %v6698
        %v6921 = vunpack.c.h.b16 %v6698
        %v6922 = vunpack.c.l.b16 %v6699
        %v6923 = vunpack.c.h.b16 %v6699
        %v6924 = vunpack.c.l.b16 %v6700
        %v6925 = vunpack.c.h.b16 %v6700
        %v6926 = vunpack.c.l.b16 %v6701
        %v6927 = vunpack.c.h.b16 %v6701
        %v6928 = vunpack.c.l.b16 %v6702
        %v6929 = vunpack.c.h.b16 %v6702
        %v6930 = vunpack.c.l.b16 %v6703
        %v6931 = vunpack.c.h.b16 %v6703
        %v6932 = vunpack.c.l.b16 %v6704
        %v6933 = vunpack.c.h.b16 %v6704
        %v6934 = vunpack.c.l.b16 %v6705
        %v6935 = vunpack.c.h.b16 %v6705
        %v6936 = vunpack.c.l.b16 %v6706
        %v6937 = vunpack.c.h.b16 %v6706
        %v6938 = vunpack.c.l.b16 %v6707
        %v6939 = vunpack.c.h.b16 %v6707
        %v6940 = vunpack.c.l.b16 %v6708
        %v6941 = vunpack.c.h.b16 %v6708
        %v6942 = vunpack.c.l.b16 %v6709
        %v6943 = vunpack.c.h.b16 %v6709
        %v6944 = vunpack.c.l.b16 %v6710
        %v6945 = vunpack.c.h.b16 %v6710
        %v6946 = vunpack.c.l.b16 %v6711
        %v6947 = vunpack.c.h.b16 %v6711
        %v6948 = vunpack.c.l.b16 %v6712
        %v6949 = vunpack.c.h.b16 %v6712
        %v6950 = vunpack.c.l.b16 %v6713
        %v6951 = vunpack.c.h.b16 %v6713
        %v6952 = vunpack.c.l.b16 %v6714
        %v6953 = vunpack.c.h.b16 %v6714
        %v6954 = vunpack.c.l.b16 %v6715
        %v6955 = vunpack.c.h.b16 %v6715
        %v6956 = vunpack.c.l.b16 %v6716
        %v6957 = vunpack.c.h.b16 %v6716
        %v6958 = vunpack.c.l.b16 %v6717
        %v6959 = vunpack.c.h.b16 %v6717
        %v6960 = vunpack.c.l.b16 %v6718
        %v6961 = vunpack.c.h.b16 %v6718
        %v6962 = vunpack.c.l.b16 %v6719
        %v6963 = vunpack.c.h.b16 %v6719
        %v6964 = vunpack.c.l.b16 %v6720
        %v6965 = vunpack.c.h.b16 %v6720
        %v6966 = vunpack.c.l.b16 %v6721
        %v6967 = vunpack.c.h.b16 %v6721
        %v6968 = vunpack.c.l.b16 %v6722
        %v6969 = vunpack.c.h.b16 %v6722
        %v6970 = vunpack.c.l.b16 %v6723
        %v6971 = vunpack.c.h.b16 %v6723
        %v6972 = vunpack.c.l.b16 %v6724
        %v6973 = vunpack.c.h.b16 %v6724
        %v6974 = vunpack.c.l.b16 %v6725
        %v6975 = vunpack.c.h.b16 %v6725
        %v6976 = vunpack.c.l.b16 %v6726
        %v6977 = vunpack.c.h.b16 %v6726
        %v6978 = vunpack.c.l.b16 %v6727
        %v6979 = vunpack.c.h.b16 %v6727
        %v6980 = vunpack.c.l.b16 %v6728
        %v6981 = vunpack.c.h.b16 %v6728
        %v6982 = vunpack.c.l.b16 %v6729
        %v6983 = vunpack.c.h.b16 %v6729
        %v6984 = vunpack.c.l.b16 %v6730
        %v6985 = vunpack.c.h.b16 %v6730
        %v6986 = vunpack.c.l.b16 %v6731
        %v6987 = vunpack.c.h.b16 %v6731
        %v6988 = vunpack.c.l.b16 %v6732
        %v6989 = vunpack.c.h.b16 %v6732
        %v6990 = vunpack.c.l.b16 %v6733
        %v6991 = vunpack.c.h.b16 %v6733
        %v6992 = vunpack.c.l.b16 %v6734
        %v6993 = vunpack.c.h.b16 %v6734
        %v6994 = vunpack.c.l.b16 %v6735
        %v6995 = vunpack.c.h.b16 %v6735
        %v6996 = vunpack.c.l.b16 %v6736
        %v6997 = vunpack.c.h.b16 %v6736
        %v6998 = vunpack.c.l.b16 %v6737
        %v6999 = vunpack.c.h.b16 %v6737
        %v7000 = vunpack.c.l.b16 %v6738
        %v7001 = vunpack.c.h.b16 %v6738
        %v7002 = vunpack.c.l.b16 %v6739
        %v7003 = vunpack.c.h.b16 %v6739
        %v7004 = vunpack.c.l.b16 %v6740
        %v7005 = vunpack.c.h.b16 %v6740
        %v7006 = vunpack.c.l.b16 %v6741
        %v7007 = vunpack.c.h.b16 %v6741
        %v7008 = vunpack.c.l.b16 %v6742
        %v7009 = vunpack.c.h.b16 %v6742
        %v7010 = vunpack.c.l.b16 %v6743
        %v7011 = vunpack.c.h.b16 %v6743
        %v7012 = vunpack.c.l.b16 %v6744
        %v7013 = vunpack.c.h.b16 %v6744
        %v7014 = vunpack.c.l.b16 %v6745
        %v7015 = vunpack.c.h.b16 %v6745
        %v7016 = vunpack.c.l.b16 %v6746
        %v7017 = vunpack.c.h.b16 %v6746
        %v7018 = vunpack.c.l.b16 %v6747
        %v7019 = vunpack.c.h.b16 %v6747
        %v7020 = vunpack.c.l.b16 %v6748
        %v7021 = vunpack.c.h.b16 %v6748
        %v7022 = vunpack.c.l.b16 %v6749
        %v7023 = vunpack.c.h.b16 %v6749
        %v7024 = vunpack.c.l.b16 %v6750
        %v7025 = vunpack.c.h.b16 %v6750
        %v7026 = vunpack.c.l.b16 %v6751
        %v7027 = vunpack.c.h.b16 %v6751
        %v7028 = vunpack.c.l.b16 %v6752
        %v7029 = vunpack.c.h.b16 %v6752
        %v7030 = vunpack.c.l.b16 %v6753
        %v7031 = vunpack.c.h.b16 %v6753
        %v7032 = vunpack.c.l.b16 %v6754
        %v7033 = vunpack.c.h.b16 %v6754
        %v7034 = vunpack.c.l.b16 %v6755
        %v7035 = vunpack.c.h.b16 %v6755
        %v7036 = vunpack.c.l.b16 %v6756
        %v7037 = vunpack.c.h.b16 %v6756
        %v7038 = vunpack.c.l.b16 %v6757
        %v7039 = vunpack.c.h.b16 %v6757
        %v7040 = vunpack.c.l.b16 %v6758
        %v7041 = vunpack.c.h.b16 %v6758
        %v7042 = vunpack.c.l.b16 %v6759
        %v7043 = vunpack.c.h.b16 %v6759
        %v7044 = vunpack.c.l.b16 %v6760
        %v7045 = vunpack.c.h.b16 %v6760
        %v7046 = vunpack.c.l.b16 %v6761
        %v7047 = vunpack.c.h.b16 %v6761
        %v7048 = vunpack.c.l.b16 %v6762
        %v7049 = vunpack.c.h.b16 %v6762
        %v7050 = vunpack.c.l.b16 %v6763
        %v7051 = vunpack.c.h.b16 %v6763
        %v7052 = vunpack.c.l.b16 %v6764
        %v7053 = vunpack.c.h.b16 %v6764
        %v7054 = vunpack.c.l.b16 %v6765
        %v7055 = vunpack.c.h.b16 %v6765
        %v7056 = vunpack.c.l.b16 %v6766
        %v7057 = vunpack.c.h.b16 %v6766
        %v7058 = vunpack.c.l.b16 %v6767
        %v7059 = vunpack.c.h.b16 %v6767
        %v7060 = vunpack.c.l.b16 %v6768
        %v7061 = vunpack.c.h.b16 %v6768
        %v7062 = vunpack.c.l.b16 %v6769
        %v7063 = vunpack.c.h.b16 %v6769
        %v7064 = vunpack.c.l.b16 %v6770
        %v7065 = vunpack.c.h.b16 %v6770
        %v7066 = vunpack.c.l.b16 %v6771
        %v7067 = vunpack.c.h.b16 %v6771
        %v7068 = vpack.c.b16 %v6896, %v6892
        %v7069 = vpack.c.b16 %v6897, %v6893
        %v7070 = vpack.c.b16 %v6898, %v6894
        %v7071 = vpack.c.b16 %v6899, %v6895
        %v7072 = vpack.c.b16 %v6904, %v6900
        %v7073 = vpack.c.b16 %v6905, %v6901
        %v7074 = vpack.c.b16 %v6906, %v6902
        %v7075 = vpack.c.b16 %v6907, %v6903
        %v7076 = vpack.c.b16 %v6912, %v6908
        %v7077 = vpack.c.b16 %v6913, %v6909
        %v7078 = vpack.c.b16 %v6914, %v6910
        %v7079 = vpack.c.b16 %v6915, %v6911
        %v7080 = vpack.c.b16 %v6920, %v6916
        %v7081 = vpack.c.b16 %v6921, %v6917
        %v7082 = vpack.c.b16 %v6922, %v6918
        %v7083 = vpack.c.b16 %v6923, %v6919
        %v7084 = vpack.c.b16 %v6928, %v6924
        %v7085 = vpack.c.b16 %v6929, %v6925
        %v7086 = vpack.c.b16 %v6930, %v6926
        %v7087 = vpack.c.b16 %v6931, %v6927
        %v7088 = vpack.c.b16 %v6936, %v6932
        %v7089 = vpack.c.b16 %v6937, %v6933
        %v7090 = vpack.c.b16 %v6938, %v6934
        %v7091 = vpack.c.b16 %v6939, %v6935
        %v7092 = vpack.c.b16 %v6944, %v6940
        %v7093 = vpack.c.b16 %v6945, %v6941
        %v7094 = vpack.c.b16 %v6946, %v6942
        %v7095 = vpack.c.b16 %v6947, %v6943
        %v7096 = vpack.c.b16 %v6952, %v6948
        %v7097 = vpack.c.b16 %v6953, %v6949
        %v7098 = vpack.c.b16 %v6954, %v6950
        %v7099 = vpack.c.b16 %v6955, %v6951
        %v7100 = vpack.c.b16 %v6960, %v6956
        %v7101 = vpack.c.b16 %v6961, %v6957
        %v7102 = vpack.c.b16 %v6962, %v6958
        %v7103 = vpack.c.b16 %v6963, %v6959
        %v7104 = vpack.c.b16 %v6968, %v6964
        %v7105 = vpack.c.b16 %v6969, %v6965
        %v7106 = vpack.c.b16 %v6970, %v6966
        %v7107 = vpack.c.b16 %v6971, %v6967
        %v7108 = vpack.c.b16 %v6976, %v6972
        %v7109 = vpack.c.b16 %v6977, %v6973
        %v7110 = vpack.c.b16 %v6978, %v6974
        %v7111 = vpack.c.b16 %v6979, %v6975
        %v7112 = vpack.c.b16 %v6984, %v6980
        %v7113 = vpack.c.b16 %v6985, %v6981
        %v7114 = vpack.c.b16 %v6986, %v6982
        %v7115 = vpack.c.b16 %v6987, %v6983
        %v7116 = vpack.c.b16 %v6992, %v6988
        %v7117 = vpack.c.b16 %v6993, %v6989
        %v7118 = vpack.c.b16 %v6994, %v6990
        %v7119 = vpack.c.b16 %v6995, %v6991
        %v7120 = vpack.c.b16 %v7000, %v6996
        %v7121 = vpack.c.b16 %v7001, %v6997
        %v7122 = vpack.c.b16 %v7002, %v6998
        %v7123 = vpack.c.b16 %v7003, %v6999
        %v7124 = vpack.c.b16 %v7008, %v7004
        %v7125 = vpack.c.b16 %v7009, %v7005
        %v7126 = vpack.c.b16 %v7010, %v7006
        %v7127 = vpack.c.b16 %v7011, %v7007
        %v7128 = vpack.c.b16 %v7016, %v7012
        %v7129 = vpack.c.b16 %v7017, %v7013
        %v7130 = vpack.c.b16 %v7018, %v7014
        %v7131 = vpack.c.b16 %v7019, %v7015
        %v7132 = vpack.c.b16 %v7024, %v7020
        %v7133 = vpack.c.b16 %v7025, %v7021
        %v7134 = vpack.c.b16 %v7026, %v7022
        %v7135 = vpack.c.b16 %v7027, %v7023
        %v7136 = vpack.c.b16 %v7032, %v7028
        %v7137 = vpack.c.b16 %v7033, %v7029
        %v7138 = vpack.c.b16 %v7034, %v7030
        %v7139 = vpack.c.b16 %v7035, %v7031
        %v7140 = vpack.c.b16 %v7040, %v7036
        %v7141 = vpack.c.b16 %v7041, %v7037
        %v7142 = vpack.c.b16 %v7042, %v7038
        %v7143 = vpack.c.b16 %v7043, %v7039
        %v7144 = vpack.c.b16 %v7048, %v7044
        %v7145 = vpack.c.b16 %v7049, %v7045
        %v7146 = vpack.c.b16 %v7050, %v7046
        %v7147 = vpack.c.b16 %v7051, %v7047
        %v7148 = vpack.c.b16 %v7056, %v7052
        %v7149 = vpack.c.b16 %v7057, %v7053
        %v7150 = vpack.c.b16 %v7058, %v7054
        %v7151 = vpack.c.b16 %v7059, %v7055
        %v7152 = vpack.c.b16 %v7064, %v7060
        %v7153 = vpack.c.b16 %v7065, %v7061
        %v7154 = vpack.c.b16 %v7066, %v7062
        %v7155 = vpack.c.b16 %v7067, %v7063
        %v7245 = vsel %vm2576, %v6801, 0
        %7247 = vmatpush.bf16.msra.mxu0 %v7096
        %7248 = vmatpush.bf16.msra.mxu0 %v7092
        %7249 = vmatpush.bf16.msra.mxu0 %v7088
        %7250 = vmatpush.bf16.msra.mxu0 %v7084
        %7251 = vmatpush.bf16.msra.mxu0 %v7080
        %7252 = vmatpush.bf16.msra.mxu0 %v7076
        %7253 = vmatpush.bf16.msra.mxu0 %v7072
        %7254 = vmatpush.bf16.msra.mxu0 %v7068
        %7255 = vmatmul.bf16.gmra.mxu0 %v6795
        %v7256 = vpop.f32.mrf.mxu0
        %v7257 = vadd.f32 0.0, %v7256
        %v7258 = vpop.f32.mrf.mxu0
        %v7259 = vadd.f32 0.0, %v7258
        %7260 = vdwg.mxu0
        %7261 = vmatpush.bf16.msra.mxu0 %v7128
        %7262 = vmatpush.bf16.msra.mxu0 %v7124
        %7263 = vmatpush.bf16.msra.mxu0 %v7120
        %7264 = vmatpush.bf16.msra.mxu0 %v7116
        %7265 = vmatpush.bf16.msra.mxu0 %v7112
        %7266 = vmatpush.bf16.msra.mxu0 %v7108
        %7267 = vmatpush.bf16.msra.mxu0 %v7104
        %7268 = vmatpush.bf16.msra.mxu0 %v7100
        %7269 = vmatmul.bf16.gmra.mxu0 %v6798
        %v7270 = vpop.f32.mrf.mxu0
        %v7271 = vadd.f32 %v7257, %v7270
        %v7272 = vpop.f32.mrf.mxu0
        %v7273 = vadd.f32 %v7259, %v7272
        %7274 = vdwg.mxu0
        %7275 = vmatpush.bf16.msra.mxu0 0
        %7276 = vmatpush.bf16.msra.mxu0 0
        %7277 = vmatpush.bf16.msra.mxu0 %v7152
        %7278 = vmatpush.bf16.msra.mxu0 %v7148
        %7279 = vmatpush.bf16.msra.mxu0 %v7144
        %7280 = vmatpush.bf16.msra.mxu0 %v7140
        %7281 = vmatpush.bf16.msra.mxu0 %v7136
        %7282 = vmatpush.bf16.msra.mxu0 %v7132
        %7283 = vmatmul.bf16.gmra.mxu0 %v7245
        %v7284 = vpop.f32.mrf.mxu0
        %v7285 = vadd.f32 %v7271, %v7284
        %v7286 = vpop.f32.mrf.mxu0
        %v7287 = vadd.f32 %v7273, %v7286
        %7288 = vdwg.mxu0
        %7289 = vmatpush.bf16.msra.mxu0 %v7097
        %7290 = vmatpush.bf16.msra.mxu0 %v7093
        %7291 = vmatpush.bf16.msra.mxu0 %v7089
        %7292 = vmatpush.bf16.msra.mxu0 %v7085
        %7293 = vmatpush.bf16.msra.mxu0 %v7081
        %7294 = vmatpush.bf16.msra.mxu0 %v7077
        %7295 = vmatpush.bf16.msra.mxu0 %v7073
        %7296 = vmatpush.bf16.msra.mxu0 %v7069
        %7297 = vmatmul.bf16.gmra.mxu0 %v6795
        %v7298 = vpop.f32.mrf.mxu0
        %v7299 = vadd.f32 0.0, %v7298
        %v7300 = vpop.f32.mrf.mxu0
        %v7301 = vadd.f32 0.0, %v7300
        %7302 = vdwg.mxu0
        %7303 = vmatpush.bf16.msra.mxu0 %v7129
        %7304 = vmatpush.bf16.msra.mxu0 %v7125
        %7305 = vmatpush.bf16.msra.mxu0 %v7121
        %7306 = vmatpush.bf16.msra.mxu0 %v7117
        %7307 = vmatpush.bf16.msra.mxu0 %v7113
        %7308 = vmatpush.bf16.msra.mxu0 %v7109
        %7309 = vmatpush.bf16.msra.mxu0 %v7105
        %7310 = vmatpush.bf16.msra.mxu0 %v7101
        %7311 = vmatmul.bf16.gmra.mxu0 %v6798
        %v7312 = vpop.f32.mrf.mxu0
        %v7313 = vadd.f32 %v7299, %v7312
        %v7314 = vpop.f32.mrf.mxu0
        %v7315 = vadd.f32 %v7301, %v7314
        %7316 = vdwg.mxu0
        %7317 = vmatpush.bf16.msra.mxu0 0
        %7318 = vmatpush.bf16.msra.mxu0 0
        %7319 = vmatpush.bf16.msra.mxu0 %v7153
        %7320 = vmatpush.bf16.msra.mxu0 %v7149
        %7321 = vmatpush.bf16.msra.mxu0 %v7145
        %7322 = vmatpush.bf16.msra.mxu0 %v7141
        %7323 = vmatpush.bf16.msra.mxu0 %v7137
        %7324 = vmatpush.bf16.msra.mxu0 %v7133
        %7325 = vmatmul.bf16.gmra.mxu0 %v7245
        %v7326 = vpop.f32.mrf.mxu0
        %v7327 = vadd.f32 %v7313, %v7326
        %v7328 = vpop.f32.mrf.mxu0
        %v7329 = vadd.f32 %v7315, %v7328
        %7330 = vdwg.mxu0
        %7331 = vmatpush.bf16.msra.mxu0 %v7098
        %7332 = vmatpush.bf16.msra.mxu0 %v7094
        %7333 = vmatpush.bf16.msra.mxu0 %v7090
        %7334 = vmatpush.bf16.msra.mxu0 %v7086
        %7335 = vmatpush.bf16.msra.mxu0 %v7082
        %7336 = vmatpush.bf16.msra.mxu0 %v7078
        %7337 = vmatpush.bf16.msra.mxu0 %v7074
        %7338 = vmatpush.bf16.msra.mxu0 %v7070
        %7339 = vmatmul.bf16.gmra.mxu0 %v6795
        %v7340 = vpop.f32.mrf.mxu0
        %v7341 = vadd.f32 0.0, %v7340
        %v7342 = vpop.f32.mrf.mxu0
        %v7343 = vadd.f32 0.0, %v7342
        %7344 = vdwg.mxu0
        %7345 = vmatpush.bf16.msra.mxu0 %v7130
        %7346 = vmatpush.bf16.msra.mxu0 %v7126
        %7347 = vmatpush.bf16.msra.mxu0 %v7122
        %7348 = vmatpush.bf16.msra.mxu0 %v7118
        %7349 = vmatpush.bf16.msra.mxu0 %v7114
        %7350 = vmatpush.bf16.msra.mxu0 %v7110
        %7351 = vmatpush.bf16.msra.mxu0 %v7106
        %7352 = vmatpush.bf16.msra.mxu0 %v7102
        %7353 = vmatmul.bf16.gmra.mxu0 %v6798
        %v7354 = vpop.f32.mrf.mxu0
        %v7355 = vadd.f32 %v7341, %v7354
        %v7356 = vpop.f32.mrf.mxu0
        %v7357 = vadd.f32 %v7343, %v7356
        %7358 = vdwg.mxu0
        %7359 = vmatpush.bf16.msra.mxu0 0
        %7360 = vmatpush.bf16.msra.mxu0 0
        %7361 = vmatpush.bf16.msra.mxu0 %v7154
        %7362 = vmatpush.bf16.msra.mxu0 %v7150
        %7363 = vmatpush.bf16.msra.mxu0 %v7146
        %7364 = vmatpush.bf16.msra.mxu0 %v7142
        %7365 = vmatpush.bf16.msra.mxu0 %v7138
        %7366 = vmatpush.bf16.msra.mxu0 %v7134
        %7367 = vmatmul.bf16.gmra.mxu0 %v7245
        %v7368 = vpop.f32.mrf.mxu0
        %v7369 = vadd.f32 %v7355, %v7368
        %v7370 = vpop.f32.mrf.mxu0
        %v7371 = vadd.f32 %v7357, %v7370
        %7372 = vdwg.mxu0
        %7373 = vmatpush.bf16.msra.mxu0 %v7099
        %7374 = vmatpush.bf16.msra.mxu0 %v7095
        %7375 = vmatpush.bf16.msra.mxu0 %v7091
        %7376 = vmatpush.bf16.msra.mxu0 %v7087
        %7377 = vmatpush.bf16.msra.mxu0 %v7083
        %7378 = vmatpush.bf16.msra.mxu0 %v7079
        %7379 = vmatpush.bf16.msra.mxu0 %v7075
        %7380 = vmatpush.bf16.msra.mxu0 %v7071
        %7381 = vmatmul.bf16.gmra.mxu0 %v6795
        %v7382 = vpop.f32.mrf.mxu0
        %v7383 = vadd.f32 0.0, %v7382
        %v7384 = vpop.f32.mrf.mxu0
        %v7385 = vadd.f32 0.0, %v7384
        %7386 = vdwg.mxu0
        %7387 = vmatpush.bf16.msra.mxu0 %v7131
        %7388 = vmatpush.bf16.msra.mxu0 %v7127
        %7389 = vmatpush.bf16.msra.mxu0 %v7123
        %7390 = vmatpush.bf16.msra.mxu0 %v7119
        %7391 = vmatpush.bf16.msra.mxu0 %v7115
        %7392 = vmatpush.bf16.msra.mxu0 %v7111
        %7393 = vmatpush.bf16.msra.mxu0 %v7107
        %7394 = vmatpush.bf16.msra.mxu0 %v7103
        %7395 = vmatmul.bf16.gmra.mxu0 %v6798
        %v7396 = vpop.f32.mrf.mxu0
        %v7397 = vadd.f32 %v7383, %v7396
        %v7398 = vpop.f32.mrf.mxu0
        %v7399 = vadd.f32 %v7385, %v7398
        %7400 = vdwg.mxu0
        %7401 = vmatpush.bf16.msra.mxu0 0
        %7402 = vmatpush.bf16.msra.mxu0 0
        %7403 = vmatpush.bf16.msra.mxu0 %v7155
        %7404 = vmatpush.bf16.msra.mxu0 %v7151
        %7405 = vmatpush.bf16.msra.mxu0 %v7147
        %7406 = vmatpush.bf16.msra.mxu0 %v7143
        %7407 = vmatpush.bf16.msra.mxu0 %v7139
        %7408 = vmatpush.bf16.msra.mxu0 %v7135
        %7409 = vmatmul.bf16.gmra.mxu0 %v7245
        %v7410 = vpop.f32.mrf.mxu0
        %v7411 = vadd.f32 %v7397, %v7410
        %v7412 = vpop.f32.mrf.mxu0
        %v7413 = vadd.f32 %v7399, %v7412
        %7414 = vdwg.mxu0
        %v7415 = vld [vmem:[#allocation4] sm:$0xff]
        %v7416 = vld [vmem:[#allocation4 + $0x8] sm:$0xff]
        %v7417 = vld [vmem:[#allocation4 + $0x10] sm:$0xff]
        %v7418 = vld [vmem:[#allocation4 + $0x18] sm:$0xff]
        %v7419 = vld [vmem:[#allocation4 + $0x20] sm:$0xff]
        %v7420 = vld [vmem:[#allocation4 + $0x28] sm:$0xff]
        %v7421 = vld [vmem:[#allocation4 + $0x30] sm:$0xff]
        %v7422 = vld [vmem:[#allocation4 + $0x38] sm:$0xff]
        %v7423 = vadd.f32 %v7415, %v7285
        %v7424 = vadd.f32 %v7416, %v7327
        %v7425 = vadd.f32 %v7417, %v7369
        %v7426 = vadd.f32 %v7418, %v7411
        %v7427 = vadd.f32 %v7419, %v7287
        %v7428 = vadd.f32 %v7420, %v7329
        %v7429 = vadd.f32 %v7421, %v7371
        %v7430 = vadd.f32 %v7422, %v7413
        %7431 = vst [vmem:[#allocation4] sm:$0xff] %v7423
        %7432 = vst [vmem:[#allocation4 + $0x8] sm:$0xff] %v7424
        %7433 = vst [vmem:[#allocation4 + $0x10] sm:$0xff] %v7425
        %7434 = vst [vmem:[#allocation4 + $0x18] sm:$0xff] %v7426
        %7435 = vst [vmem:[#allocation4 + $0x20] sm:$0xff] %v7427
        %7436 = vst [vmem:[#allocation4 + $0x28] sm:$0xff] %v7428
        %7437 = vst [vmem:[#allocation4 + $0x30] sm:$0xff] %v7429
        %7438 = vst [vmem:[#allocation4 + $0x38] sm:$0xff] %v7430
        %v7439 = vld [vmem:[#allocation4] sm:$0xff]
        %v7440 = vld [vmem:[#allocation4 + $0x8] sm:$0xff]
        %v7441 = vld [vmem:[#allocation4 + $0x10] sm:$0xff]
        %v7442 = vld [vmem:[#allocation4 + $0x18] sm:$0xff]
        %v7443 = vld [vmem:[#allocation4 + $0x20] sm:$0xff]
        %v7444 = vld [vmem:[#allocation4 + $0x28] sm:$0xff]
        %v7445 = vld [vmem:[#allocation4 + $0x30] sm:$0xff]
        %v7446 = vld [vmem:[#allocation4 + $0x38] sm:$0xff]
        %v7447 = vld [vmem:[%s4] sm:$0xf]
        %v7449 = vperm.slane %v7447, 0
        %v7450 = vperm.slane %v7447, 1
        %v7451 = vperm.slane %v7447, 2
        %v7452 = vperm.slane %v7447, 3
        %v7457 = vadd.f32 %v7439, %v7449
        %v7458 = vadd.f32 %v7440, %v7450
        %v7459 = vadd.f32 %v7441, %v7451
        %v7460 = vadd.f32 %v7442, %v7452
        %v7461 = vadd.f32 %v7443, %v7449
        %v7462 = vadd.f32 %v7444, %v7450
        %v7463 = vadd.f32 %v7445, %v7451
        %v7464 = vadd.f32 %v7446, %v7452
        %v7465 = vmax.f32 %v7457, 0.0
        %v7466 = vmax.f32 %v7458, 0.0
        %v7467 = vmax.f32 %v7459, 0.0
        %v7468 = vmax.f32 %v7460, 0.0
        %v7469 = vmax.f32 %v7461, 0.0
        %v7470 = vmax.f32 %v7462, 0.0
        %v7471 = vmax.f32 %v7463, 0.0
        %v7472 = vmax.f32 %v7464, 0.0
        %v7473 = vadd.f32 %v7465, %v7469
        %v7474 = vrot.slane %v7473, 4
        %v7475 = vadd.f32 %v7473, %v7474
        %v7476 = vrot.slane %v7475, 2
        %v7477 = vadd.f32 %v7475, %v7476
        %v7478 = vrot.slane %v7477, 1
        %v7479 = vadd.f32 %v7477, %v7478
        %v7480 = vadd.f32 %v7466, %v7470
        %v7481 = vrot.slane %v7480, 4
        %v7482 = vadd.f32 %v7480, %v7481
        %v7483 = vrot.slane %v7482, 2
        %v7484 = vadd.f32 %v7482, %v7483
        %v7485 = vrot.slane %v7484, 1
        %v7486 = vadd.f32 %v7484, %v7485
        %v7487 = vadd.f32 %v7467, %v7471
        %v7488 = vrot.slane %v7487, 4
        %v7489 = vadd.f32 %v7487, %v7488
        %v7490 = vrot.slane %v7489, 2
        %v7491 = vadd.f32 %v7489, %v7490
        %v7492 = vrot.slane %v7491, 1
        %v7493 = vadd.f32 %v7491, %v7492
        %v7494 = vadd.f32 %v7468, %v7472
        %v7495 = vrot.slane %v7494, 4
        %v7496 = vadd.f32 %v7494, %v7495
        %v7497 = vrot.slane %v7496, 2
        %v7498 = vadd.f32 %v7496, %v7497
        %v7499 = vrot.slane %v7498, 1
        %v7500 = vadd.f32 %v7498, %v7499
        %v7501 = vld [vmem:[%s5] sm:$0xff]
        %v7502 = vld [vmem:[%s5 + $0x8] sm:$0xff]
        %v7503 = vld [vmem:[%s5 + $0x10] sm:$0xff]
        %v7504 = vld [vmem:[%s5 + $0x18] sm:$0xff]
        %v7505 = vld [vmem:[%s5 + $0x20] sm:$0xff]
        %v7506 = vld [vmem:[%s5 + $0x28] sm:$0xff]
        %v7507 = vld [vmem:[%s5 + $0x30] sm:$0xff]
        %v7508 = vld [vmem:[%s5 + $0x38] sm:$0xff]
        %v7509 = vld [vmem:[%s5 + $0x40] sm:$0xff]
        %v7510 = vld [vmem:[%s5 + $0x48] sm:$0xff]
        %v7511 = vld [vmem:[%s5 + $0x50] sm:$0xff]
        %v7512 = vld [vmem:[%s5 + $0x58] sm:$0xff]
        %v7513 = vld [vmem:[%s5 + $0x60] sm:$0xff]
        %v7514 = vld [vmem:[%s5 + $0x68] sm:$0xff]
        %v7515 = vld [vmem:[%s5 + $0x70] sm:$0xff]
        %v7516 = vld [vmem:[%s5 + $0x78] sm:$0xff]
        %v7517 = vld [vmem:[%s5 + $0x80] sm:$0xff]
        %v7518 = vld [vmem:[%s5 + $0x88] sm:$0xff]
        %v7519 = vld [vmem:[%s5 + $0x90] sm:$0xff]
        %v7520 = vld [vmem:[%s5 + $0x98] sm:$0xff]
        %v7521 = vld [vmem:[%s5 + $0xa0] sm:$0xff]
        %v7522 = vld [vmem:[%s5 + $0xa8] sm:$0xff]
        %v7523 = vld [vmem:[%s5 + $0xb0] sm:$0xff]
        %v7524 = vld [vmem:[%s5 + $0xb8] sm:$0xff]
        %v7525 = vld [vmem:[%s5 + $0xc0] sm:$0xff]
        %v7526 = vld [vmem:[%s5 + $0xc8] sm:$0xff]
        %v7527 = vld [vmem:[%s5 + $0xd0] sm:$0xff]
        %v7528 = vld [vmem:[%s5 + $0xd8] sm:$0xff]
        %v7529 = vld [vmem:[%s5 + $0xe0] sm:$0xff]
        %v7530 = vld [vmem:[%s5 + $0xe8] sm:$0xff]
        %v7531 = vld [vmem:[%s5 + $0xf0] sm:$0xff]
        %v7532 = vld [vmem:[%s5 + $0xf8] sm:$0xff]
        %v7533 = vld [vmem:[%s5 + $0x100] sm:$0xff]
        %v7534 = vld [vmem:[%s5 + $0x108] sm:$0xff]
        %v7535 = vld [vmem:[%s5 + $0x110] sm:$0xff]
        %v7536 = vld [vmem:[%s5 + $0x118] sm:$0xff]
        %v7537 = vld [vmem:[%s5 + $0x120] sm:$0xff]
        %v7538 = vld [vmem:[%s5 + $0x128] sm:$0xff]
        %v7539 = vld [vmem:[%s5 + $0x130] sm:$0xff]
        %v7540 = vld [vmem:[%s5 + $0x138] sm:$0xff]
        %v7541 = vld [vmem:[%s5 + $0x140] sm:$0xff]
        %v7542 = vld [vmem:[%s5 + $0x148] sm:$0xff]
        %v7543 = vld [vmem:[%s5 + $0x150] sm:$0xff]
        %v7544 = vld [vmem:[%s5 + $0x158] sm:$0xff]
        %v7545 = vld [vmem:[%s5 + $0x160] sm:$0xff]
        %v7546 = vld [vmem:[%s5 + $0x168] sm:$0xff]
        %v7547 = vld [vmem:[%s5 + $0x170] sm:$0xff]
        %v7548 = vld [vmem:[%s5 + $0x178] sm:$0xff]
        %v7549 = vld [vmem:[%s5 + $0x180] sm:$0xff]
        %v7550 = vld [vmem:[%s5 + $0x188] sm:$0xff]
        %v7551 = vld [vmem:[%s5 + $0x190] sm:$0xff]
        %v7552 = vld [vmem:[%s5 + $0x198] sm:$0xff]
        %v7553 = vld [vmem:[%s5 + $0x1a0] sm:$0xff]
        %v7554 = vld [vmem:[%s5 + $0x1a8] sm:$0xff]
        %v7555 = vld [vmem:[%s5 + $0x1b0] sm:$0xff]
        %v7556 = vld [vmem:[%s5 + $0x1b8] sm:$0xff]
        %v7557 = vld [vmem:[%s5 + $0x1c0] sm:$0xff]
        %v7558 = vld [vmem:[%s5 + $0x1c8] sm:$0xff]
        %v7559 = vld [vmem:[%s5 + $0x1d0] sm:$0xff]
        %v7560 = vld [vmem:[%s5 + $0x1d8] sm:$0xff]
        %v7561 = vld [vmem:[%s5 + $0x1e0] sm:$0xff]
        %v7562 = vld [vmem:[%s5 + $0x1e8] sm:$0xff]
        %v7563 = vld [vmem:[%s5 + $0x1f0] sm:$0xff]
        %v7564 = vld [vmem:[%s5 + $0x1f8] sm:$0xff]
        %v7565 = vld [vmem:[%s6] sm:$0x1]
        %7566 = vmatpush.msra.mxu0 %v7516
        %7567 = vmatpush.msra.mxu0 %v7515
        %7568 = vmatpush.msra.mxu0 %v7514
        %7569 = vmatpush.msra.mxu0 %v7513
        %7570 = vmatpush.msra.mxu0 %v7512
        %7571 = vmatpush.msra.mxu0 %v7511
        %7572 = vmatpush.msra.mxu0 %v7510
        %7573 = vmatpush.msra.mxu0 %v7509
        %7574 = vmatpush.msra.mxu0 %v7508
        %7575 = vmatpush.msra.mxu0 %v7507
        %7576 = vmatpush.msra.mxu0 %v7506
        %7577 = vmatpush.msra.mxu0 %v7505
        %7578 = vmatpush.msra.mxu0 %v7504
        %7579 = vmatpush.msra.mxu0 %v7503
        %7580 = vmatpush.msra.mxu0 %v7502
        %7581 = vmatpush.msra.mxu0 %v7501
        %7582 = vmatmul.f32.gmra.mxu0 %v7479
        %v7583 = vpop.f32.mrf.mxu0
        %v7584 = vadd.f32 %v7565, %v7583
        %7585 = vdwg.mxu0
        %7586 = vmatpush.msra.mxu0 %v7532
        %7587 = vmatpush.msra.mxu0 %v7531
        %7588 = vmatpush.msra.mxu0 %v7530
        %7589 = vmatpush.msra.mxu0 %v7529
        %7590 = vmatpush.msra.mxu0 %v7528
        %7591 = vmatpush.msra.mxu0 %v7527
        %7592 = vmatpush.msra.mxu0 %v7526
        %7593 = vmatpush.msra.mxu0 %v7525
        %7594 = vmatpush.msra.mxu0 %v7524
        %7595 = vmatpush.msra.mxu0 %v7523
        %7596 = vmatpush.msra.mxu0 %v7522
        %7597 = vmatpush.msra.mxu0 %v7521
        %7598 = vmatpush.msra.mxu0 %v7520
        %7599 = vmatpush.msra.mxu0 %v7519
        %7600 = vmatpush.msra.mxu0 %v7518
        %7601 = vmatpush.msra.mxu0 %v7517
        %7602 = vmatmul.f32.gmra.mxu0 %v7486
        %v7603 = vpop.f32.mrf.mxu0
        %v7604 = vadd.f32 %v7584, %v7603
        %7605 = vdwg.mxu0
        %7606 = vmatpush.msra.mxu0 %v7548
        %7607 = vmatpush.msra.mxu0 %v7547
        %7608 = vmatpush.msra.mxu0 %v7546
        %7609 = vmatpush.msra.mxu0 %v7545
        %7610 = vmatpush.msra.mxu0 %v7544
        %7611 = vmatpush.msra.mxu0 %v7543
        %7612 = vmatpush.msra.mxu0 %v7542
        %7613 = vmatpush.msra.mxu0 %v7541
        %7614 = vmatpush.msra.mxu0 %v7540
        %7615 = vmatpush.msra.mxu0 %v7539
        %7616 = vmatpush.msra.mxu0 %v7538
        %7617 = vmatpush.msra.mxu0 %v7537
        %7618 = vmatpush.msra.mxu0 %v7536
        %7619 = vmatpush.msra.mxu0 %v7535
        %7620 = vmatpush.msra.mxu0 %v7534
        %7621 = vmatpush.msra.mxu0 %v7533
        %7622 = vmatmul.f32.gmra.mxu0 %v7493
        %v7623 = vpop.f32.mrf.mxu0
        %v7624 = vadd.f32 %v7604, %v7623
        %7625 = vdwg.mxu0
        %7626 = vmatpush.msra.mxu0 %v7564
        %7627 = vmatpush.msra.mxu0 %v7563
        %7628 = vmatpush.msra.mxu0 %v7562
        %7629 = vmatpush.msra.mxu0 %v7561
        %7630 = vmatpush.msra.mxu0 %v7560
        %7631 = vmatpush.msra.mxu0 %v7559
        %7632 = vmatpush.msra.mxu0 %v7558
        %7633 = vmatpush.msra.mxu0 %v7557
        %7634 = vmatpush.msra.mxu0 %v7556
        %7635 = vmatpush.msra.mxu0 %v7555
        %7636 = vmatpush.msra.mxu0 %v7554
        %7637 = vmatpush.msra.mxu0 %v7553
        %7638 = vmatpush.msra.mxu0 %v7552
        %7639 = vmatpush.msra.mxu0 %v7551
        %7640 = vmatpush.msra.mxu0 %v7550
        %7641 = vmatpush.msra.mxu0 %v7549
        %7642 = vmatmul.f32.gmra.mxu0 %v7500
        %v7643 = vpop.f32.mrf.mxu0
        %v7644 = vadd.f32 %v7624, %v7643
        %7645 = vdwg.mxu0
        %7646 = vst [vmem:[%s270] sm:$0x1] %v7644
        %s7647 = sand.u32 %s181, 1
        %s7648 = scalar_lea.sflag [#allocation6], %s7647
        %s7649 = sand.u32 %s181, 1
        %s7650 = scalar_lea.vmem [#allocation5], %s7649
        // Predicated region
        $region49: #{cnn_kernel7x7_forward.1} parent=47 // pred_check
          %p7651 = pneg %p191
        $region50: #{cnn_kernel7x7_forward.1} parent=47 // pred_check_branch
          %7653 = sbr.rel (%p7651) target = $region52
        $region51: #{cnn_kernel7x7_forward.1} parent=47 // pred_region
          %7655 = vsyncadd %s7648, 0
          %s7656 = scalar_lea.hbm %s7, %s21
          %s7658 = sshll.u32 %s7650, 4
          %s7659 = int_to_ptr.vmem [resolvable:$true] %s7658
          %s7660 = sshll.u32 %s7656, 4
          %s7661 = int_to_ptr.hbm [resolvable:$true] %s7660
          %7663 = dma.vmem_to_hbm [thread:$0]  %s7659, 16, %s7661, %s7648
        $region52: #{cnn_kernel7x7_forward.1} parent=47 // pred_fallthru
          _
      $region48: #{cnn_kernel7x7_forward.1} parent=5 // pred_fallthru
        _
      %p7664 = scmp.le.s32.totalorder 2, %s16
      // Predicated region
      $region53: #{cnn_kernel7x7_forward.1} parent=5 // pred_check
        %p7665 = pneg %p7664
      $region54: #{cnn_kernel7x7_forward.1} parent=5 // pred_check_branch
        %7667 = sbr.rel (%p7665) target = $region56
      $region55: #{cnn_kernel7x7_forward.1} parent=5 // pred_region
        %s7668 = ssub.s32 %s16, 2
        // Predicated region
        $region57: #{cnn_kernel7x7_forward.1} parent=55 // pred_check
          %p7669 = pneg %p197
        $region58: #{cnn_kernel7x7_forward.1} parent=55 // pred_check_branch
          %7671 = sbr.rel (%p7669) target = $region60
        $region59: #{cnn_kernel7x7_forward.1} parent=55 // pred_region
          %s7672 = sand.u32 %s182, 1
          %s7673 = scalar_lea.sflag [#allocation6], %s7672
          %s7674 = sand.u32 %s182, 1
          %s7675 = scalar_lea.vmem [#allocation5], %s7674
          %7677 = dma.done %s7673, 16
        $region60: #{cnn_kernel7x7_forward.1} parent=55 // pred_fallthru
          _
      $region56: #{cnn_kernel7x7_forward.1} parent=5 // pred_fallthru
        _
    $region6: #{cnn_kernel7x7_forward.1} parent=1 // loop_footer
      %s20 = sadd.s32 1, %s16
    $region7: #{cnn_kernel7x7_forward.1} parent=1 // loop_footer_branch
      %15 = sbr.rel target = $region3
    $region8: #{cnn_kernel7x7_forward.1} parent=1 // loop_exit
      _
    %7678 = vsyncpa [#allocation6], 1
    %s7679 = scalar_lea.sflag [#allocation6], 1
    %7680 = vsyncpa %s7679, 1

</llo_original>
